<compile_context>
chip_gen: v6e
topology: v6e:2x2x1
jax: 0.10.0
libtpu: 0.0.40
codegen_flags: <defaults>
</compile_context>

<pallas_src>
import jax
import jax.numpy as jnp
from jax import lax
from jax.experimental import pallas as pl
from jax.experimental.pallas import tpu as pltpu


# -----------------------------------------------------------------------------
# Fused LeNet-5 kernel helpers
# -----------------------------------------------------------------------------
def _maxpool2_relu(x, rows, cols):
    """relu(2x2 max-pool) of a channel-major (rows=C*H, cols=W) tile.

    Implemented with one-hot selection matmuls (MXU) + elementwise max so no
    strided slicing / reshaping is needed.  Channel blocks stay aligned because
    H is even, so the global even/odd row selector is exact.
    """
    f32 = jnp.float32
    # column (lane) pooling: pick even / odd columns via (cols, cols//2) one-hots
    q = lax.broadcasted_iota(jnp.int32, (cols, cols // 2), 0)
    j = lax.broadcasted_iota(jnp.int32, (cols, cols // 2), 1)
    ce = jnp.where(q == 2 * j, 1.0, 0.0).astype(f32)
    co = jnp.where(q == 2 * j + 1, 1.0, 0.0).astype(f32)
    cp = jnp.maximum(jnp.dot(x, ce, preferred_element_type=f32),
                     jnp.dot(x, co, preferred_element_type=f32))
    # row (sublane) pooling: pick even / odd rows via (rows//2, rows) one-hots
    p = lax.broadcasted_iota(jnp.int32, (rows // 2, rows), 0)
    r = lax.broadcasted_iota(jnp.int32, (rows // 2, rows), 1)
    re_ = jnp.where(r == 2 * p, 1.0, 0.0).astype(f32)
    ro_ = jnp.where(r == 2 * p + 1, 1.0, 0.0).astype(f32)
    pooled = jnp.maximum(jnp.dot(re_, cp, preferred_element_type=f32),
                         jnp.dot(ro_, cp, preferred_element_type=f32))
    return jnp.maximum(pooled, 0.0)


def _lenet_kernel(x_ref, w1_ref, b1_ref, w2_ref, b2_ref, w3_ref, b3_ref,
                  wf1_ref, bf1_ref, wf2_ref, bf2_ref, o_ref, s1_ref, s2_ref):
    f32 = jnp.float32
    xp = x_ref[0]                                          # (32, 32) padded image

    # ---- conv1: 1->6, k=5, pad=2  (in-kernel im2col + one MXU matmul) --------
    # tap t = kh*5+kw occupies rows [32*t, 32*t+28) of the scratch patch matrix
    s1_ref[...] = jnp.zeros(s1_ref.shape, f32)             # keep pad rows finite
    for kh in range(5):
        for kw in range(5):
            t = kh * 5 + kw
            s1_ref[32 * t:32 * t + 28, :] = xp[kh:kh + 28, kw:kw + 28]
    # (6*28, 25*32) @ (25*32, 28) -> (168, 28): conv1 output, channel-major rows
    h1 = jnp.dot(w1_ref[...], s1_ref[...], preferred_element_type=f32) + b1_ref[...]

    p1 = _maxpool2_relu(h1, 6 * 28, 28)                    # (84, 14)

    # ---- conv2: 6->16, k=5 ----------------------------------------------------
    s2_ref[...] = jnp.zeros(s2_ref.shape, f32)
    for c in range(6):
        for kh in range(5):
            for kw in range(5):
                t = c * 25 + kh * 5 + kw
                s2_ref[16 * t:16 * t + 10, :] = (
                    p1[c * 14 + kh:c * 14 + kh + 10, kw:kw + 10])
    # (16*10, 150*16) @ (150*16, 10) -> (160, 10)
    h2 = jnp.dot(w2_ref[...], s2_ref[...], preferred_element_type=f32) + b2_ref[...]

    p2 = _maxpool2_relu(h2, 16 * 10, 10)                   # (80, 5)

    # ---- conv3: 16->120, k=5 on a 5x5 map (a dense layer) + relu -------------
    a3 = b3_ref[...]                                       # (120, 1)
    for kw in range(5):                                    # 5 small MXU matmuls
        a3 = a3 + jnp.dot(w3_ref[kw], p2[:, kw:kw + 1],
                          preferred_element_type=f32)
    a3 = jnp.maximum(a3, 0.0)

    # ---- fc1 + relu -----------------------------------------------------------
    a4 = jnp.maximum(
        jnp.dot(wf1_ref[...], a3, preferred_element_type=f32) + bf1_ref[...], 0.0)

    # ---- fc2 + log-softmax (over the 10 class rows) ---------------------------
    z = jnp.dot(wf2_ref[...], a4, preferred_element_type=f32) + bf2_ref[...]   # (10,1)
    m = jnp.max(z, axis=0, keepdims=True)
    lse = jnp.log(jnp.sum(jnp.exp(z - m), axis=0, keepdims=True)) + m
    o_ref[0] = z - lse


# -----------------------------------------------------------------------------
# Parameters (PyTorch layout) + one-time kernel-layout preparation
# -----------------------------------------------------------------------------
def init_params(key):
    ks = jax.random.split(key, 10)
    f32 = jnp.float32
    return {
        "w1": jax.random.normal(ks[0], (6, 1, 5, 5), f32) * 0.1,
        "b1": jax.random.normal(ks[1], (6,), f32) * 0.1,
        "w2": jax.random.normal(ks[2], (16, 6, 5, 5), f32) * 0.05,
        "b2": jax.random.normal(ks[3], (16,), f32) * 0.05,
        "w3": jax.random.normal(ks[4], (120, 16, 5, 5), f32) * 0.03,
        "b3": jax.random.normal(ks[5], (120,), f32) * 0.03,
        "wf1": jax.random.normal(ks[6], (84, 120), f32) * 0.05,   # PyTorch (out, in)
        "bf1": jax.random.normal(ks[7], (84,), f32) * 0.05,
        "wf2": jax.random.normal(ks[8], (10, 84), f32) * 0.05,
        "bf2": jax.random.normal(ks[9], (10,), f32) * 0.05,
    }


def prepare_params(p):
    """One-time weight layout prep (hoisted out of the forward hot path).

    Conv weights are expanded with kron(W, eye) so each convolution becomes a
    single channel-major matmul against the in-kernel im2col scratch, whose tap
    blocks are padded to 32/16 rows for sublane-aligned stores.
    """
    f32 = jnp.float32
    return {
        "w1k": jnp.kron(p["w1"].reshape(6, 25).astype(f32),
                        jnp.eye(28, 32, dtype=f32)),                 # (168, 800)
        "b1e": jnp.repeat(p["b1"].astype(f32), 28)[:, None],          # (168, 1)
        "w2k": jnp.kron(p["w2"].reshape(16, 150).astype(f32),
                        jnp.eye(10, 16, dtype=f32)),                  # (160, 2400)
        "b2e": jnp.repeat(p["b2"].astype(f32), 10)[:, None],          # (160, 1)
        "w3s": jnp.transpose(p["w3"].astype(f32),
                             (3, 0, 1, 2)).reshape(5, 120, 80),       # (5, 120, 80)
        "b3c": p["b3"].astype(f32)[:, None],                          # (120, 1)
        "wf1": p["wf1"].astype(f32),                                  # (84, 120)
        "bf1": p["bf1"].astype(f32)[:, None],                         # (84, 1)
        "wf2": p["wf2"].astype(f32),                                  # (10, 84)
        "bf2": p["bf2"].astype(f32)[:, None],                         # (10, 1)
    }


@jax.jit
def net_forward(x, prep):
    """x: (N, 1, 28, 28) float32 -> log-probabilities (N, 10)."""
    n = x.shape[0]
    xp = jnp.pad(x[:, 0], ((0, 0), (2, 2), (2, 2)))                   # (N, 32, 32)

    full2 = lambda i: (0, 0)
    full3 = lambda i: (0, 0, 0)
    out = pl.pallas_call(
        _lenet_kernel,
        out_shape=jax.ShapeDtypeStruct((n, 10, 1), jnp.float32),
        grid=(n,),
        in_specs=[
            pl.BlockSpec((1, 32, 32), lambda i: (i, 0, 0)),   # padded image
            pl.BlockSpec((168, 800), full2),                  # conv1 kron weight
            pl.BlockSpec((168, 1), full2),
            pl.BlockSpec((160, 2400), full2),                 # conv2 kron weight
            pl.BlockSpec((160, 1), full2),
            pl.BlockSpec((5, 120, 80), full3),                # conv3 per-kw weights
            pl.BlockSpec((120, 1), full2),
            pl.BlockSpec((84, 120), full2),                   # fc1
            pl.BlockSpec((84, 1), full2),
            pl.BlockSpec((10, 84), full2),                    # fc2
            pl.BlockSpec((10, 1), full2),
        ],
        out_specs=pl.BlockSpec((1, 10, 1), lambda i: (i, 0, 0)),
        scratch_shapes=[pltpu.VMEM((800, 28), jnp.float32),   # conv1 im2col
                        pltpu.VMEM((2400, 10), jnp.float32)], # conv2 im2col
        compiler_params=pltpu.CompilerParams(
            dimension_semantics=("parallel",),
            vmem_limit_bytes=32 * 1024 * 1024),
    )(xp, prep["w1k"], prep["b1e"], prep["w2k"], prep["b2e"],
      prep["w3s"], prep["b3c"], prep["wf1"], prep["bf1"],
      prep["wf2"], prep["bf2"])
    return out[:, :, 0]


# -----------------------------------------------------------------------------
# Pure-JAX reference (mirrors the PyTorch module) for a numeric sanity check
# -----------------------------------------------------------------------------
def reference_forward(x, p):
    def conv(y, w, b, pad=0):
        out = lax.conv_general_dilated(
            y, w, window_strides=(1, 1), padding=[(pad, pad), (pad, pad)],
            dimension_numbers=("NCHW", "OIHW", "NCHW"))
        return out + b[None, :, None, None]

    def mp2(y):
        return lax.reduce_window(y, -jnp.inf, lax.max,
                                 (1, 1, 2, 2), (1, 1, 2, 2), "VALID")

    relu = jax.nn.relu
    y = relu(mp2(conv(x, p["w1"], p["b1"], pad=2)))
    y = relu(mp2(conv(y, p["w2"], p["b2"])))
    y = relu(conv(y, p["w3"], p["b3"]))
    y = y.reshape(x.shape[0], -1)
    y = relu(jnp.dot(y, p["wf1"].T) + p["bf1"])
    y = jnp.dot(y, p["wf2"].T) + p["bf2"]
    return jax.nn.log_softmax(y, axis=-1)


if __name__ == "__main__":
    key = jax.random.PRNGKey(0)
    kx, kp = jax.random.split(key)
    # LeNet-5 geometry requires 28x28 single-channel input; small batch = 2.
    x = jax.random.normal(kx, (2, 1, 28, 28), jnp.float32)

    params = init_params(kp)
    prep = prepare_params(params)        # one-time layout prep, outside the hot path

    out = jax.block_until_ready(net_forward(x, prep))                 # (2, 10)
    assert out.shape == (2, 10), out.shape

    # log-softmax rows must exponentiate-sum to 1
    row_sums = jnp.exp(out).sum(axis=1)
    assert jnp.allclose(row_sums, 1.0, atol=1e-4), row_sums

    # cross-check vs plain-JAX reference (loose tol: MXU f32 pass precision)
    ref = reference_forward(x, params)
    assert jnp.allclose(out, ref, atol=5e-2), jnp.max(jnp.abs(out - ref))

    print("KERNEL_OK")
</pallas_src>

<mosaic_0001>
module attributes {stable_mosaic.version = 11 : i64} {
  func.func @_lenet_kernel(%arg0: i32, %arg1: memref<1x32x32xf32, #tpu.memory_space<vmem>>, %arg2: memref<168x800xf32, #tpu.memory_space<vmem>>, %arg3: memref<168x1xf32, #tpu.memory_space<vmem>>, %arg4: memref<160x2400xf32, #tpu.memory_space<vmem>>, %arg5: memref<160x1xf32, #tpu.memory_space<vmem>>, %arg6: memref<5x120x80xf32, #tpu.memory_space<vmem>>, %arg7: memref<120x1xf32, #tpu.memory_space<vmem>>, %arg8: memref<84x120xf32, #tpu.memory_space<vmem>>, %arg9: memref<84x1xf32, #tpu.memory_space<vmem>>, %arg10: memref<10x84xf32, #tpu.memory_space<vmem>>, %arg11: memref<10x1xf32, #tpu.memory_space<vmem>>, %arg12: memref<1x10x1xf32, #tpu.memory_space<vmem>>, %arg13: memref<800x28xf32, #tpu.memory_space<vmem>>, %arg14: memref<2400x10xf32, #tpu.memory_space<vmem>>) attributes {dimension_semantics = [#tpu.dimension_semantics<parallel>], iteration_bounds = array<i64: 2>, scalar_prefetch = 0 : i64, scratch_operands = 2 : i64, tpu.core_type = #tpu.core_type<tc>, window_params = [{transform_indices = @transform_0, window_bounds = array<i64: 1, 32, 32>}, {pipeline_mode = #tpu.pipeline_mode<synchronous>, transform_indices = @transform_1, window_bounds = array<i64: 168, 800>}, {pipeline_mode = #tpu.pipeline_mode<synchronous>, transform_indices = @transform_2, window_bounds = array<i64: 168, 1>}, {pipeline_mode = #tpu.pipeline_mode<synchronous>, transform_indices = @transform_3, window_bounds = array<i64: 160, 2400>}, {pipeline_mode = #tpu.pipeline_mode<synchronous>, transform_indices = @transform_4, window_bounds = array<i64: 160, 1>}, {pipeline_mode = #tpu.pipeline_mode<synchronous>, transform_indices = @transform_5, window_bounds = array<i64: 5, 120, 80>}, {pipeline_mode = #tpu.pipeline_mode<synchronous>, transform_indices = @transform_6, window_bounds = array<i64: 120, 1>}, {pipeline_mode = #tpu.pipeline_mode<synchronous>, transform_indices = @transform_7, window_bounds = array<i64: 84, 120>}, {pipeline_mode = #tpu.pipeline_mode<synchronous>, transform_indices = @transform_8, window_bounds = array<i64: 84, 1>}, {pipeline_mode = #tpu.pipeline_mode<synchronous>, transform_indices = @transform_9, window_bounds = array<i64: 10, 84>}, {pipeline_mode = #tpu.pipeline_mode<synchronous>, transform_indices = @transform_10, window_bounds = array<i64: 10, 1>}, {transform_indices = @transform_11, window_bounds = array<i64: 1, 10, 1>}]} {
    %c0 = arith.constant 0 : index
    %c0_0 = arith.constant 0 : index
    %c0_1 = arith.constant 0 : index
    %0 = vector.load %arg1[%c0, %c0_0, %c0_1] : memref<1x32x32xf32, #tpu.memory_space<vmem>>, vector<1x32x32xf32>
    %1 = vector.shape_cast %0 : vector<1x32x32xf32> to vector<32x32xf32>
    %cst = arith.constant 0.000000e+00 : f32
    %2 = vector.broadcast %cst : f32 to vector<800x28xf32>
    %c0_2 = arith.constant 0 : index
    %c0_3 = arith.constant 0 : index
    %3 = vector.load %arg13[%c0_2, %c0_3] : memref<800x28xf32, #tpu.memory_space<vmem>>, vector<800x28xf32>
    tpu.vector_store %arg13[%c0_2, %c0_3], %2 {strides = array<i32>} : memref<800x28xf32, #tpu.memory_space<vmem>>, vector<800x28xf32>,
    %4 = vector.extract_strided_slice %1 {offsets = [0, 0], sizes = [28, 28], strides = [1, 1]} : vector<32x32xf32> to vector<28x28xf32>
    %c0_4 = arith.constant 0 : index
    %c0_5 = arith.constant 0 : index
    %5 = vector.load %arg13[%c0_4, %c0_5] : memref<800x28xf32, #tpu.memory_space<vmem>>, vector<28x28xf32>
    tpu.vector_store %arg13[%c0_4, %c0_5], %4 {strides = array<i32>} : memref<800x28xf32, #tpu.memory_space<vmem>>, vector<28x28xf32>,
    %6 = vector.extract_strided_slice %1 {offsets = [0, 1], sizes = [28, 28], strides = [1, 1]} : vector<32x32xf32> to vector<28x28xf32>
    %c32 = arith.constant 32 : index
    %c0_6 = arith.constant 0 : index
    %7 = vector.load %arg13[%c32, %c0_6] : memref<800x28xf32, #tpu.memory_space<vmem>>, vector<28x28xf32>
    tpu.vector_store %arg13[%c32, %c0_6], %6 {strides = array<i32>} : memref<800x28xf32, #tpu.memory_space<vmem>>, vector<28x28xf32>,
    %8 = vector.extract_strided_slice %1 {offsets = [0, 2], sizes = [28, 28], strides = [1, 1]} : vector<32x32xf32> to vector<28x28xf32>
    %c64 = arith.constant 64 : index
    %c0_7 = arith.constant 0 : index
    %9 = vector.load %arg13[%c64, %c0_7] : memref<800x28xf32, #tpu.memory_space<vmem>>, vector<28x28xf32>
    tpu.vector_store %arg13[%c64, %c0_7], %8 {strides = array<i32>} : memref<800x28xf32, #tpu.memory_space<vmem>>, vector<28x28xf32>,
    %10 = vector.extract_strided_slice %1 {offsets = [0, 3], sizes = [28, 28], strides = [1, 1]} : vector<32x32xf32> to vector<28x28xf32>
    %c96 = arith.constant 96 : index
    %c0_8 = arith.constant 0 : index
    %11 = vector.load %arg13[%c96, %c0_8] : memref<800x28xf32, #tpu.memory_space<vmem>>, vector<28x28xf32>
    tpu.vector_store %arg13[%c96, %c0_8], %10 {strides = array<i32>} : memref<800x28xf32, #tpu.memory_space<vmem>>, vector<28x28xf32>,
    %12 = vector.extract_strided_slice %1 {offsets = [0, 4], sizes = [28, 28], strides = [1, 1]} : vector<32x32xf32> to vector<28x28xf32>
    %c128 = arith.constant 128 : index
    %c0_9 = arith.constant 0 : index
    %13 = vector.load %arg13[%c128, %c0_9] : memref<800x28xf32, #tpu.memory_space<vmem>>, vector<28x28xf32>
    tpu.vector_store %arg13[%c128, %c0_9], %12 {strides = array<i32>} : memref<800x28xf32, #tpu.memory_space<vmem>>, vector<28x28xf32>,
    %14 = vector.extract_strided_slice %1 {offsets = [1, 0], sizes = [28, 28], strides = [1, 1]} : vector<32x32xf32> to vector<28x28xf32>
    %c160 = arith.constant 160 : index
    %c0_10 = arith.constant 0 : index
    %15 = vector.load %arg13[%c160, %c0_10] : memref<800x28xf32, #tpu.memory_space<vmem>>, vector<28x28xf32>
    tpu.vector_store %arg13[%c160, %c0_10], %14 {strides = array<i32>} : memref<800x28xf32, #tpu.memory_space<vmem>>, vector<28x28xf32>,
    %16 = vector.extract_strided_slice %1 {offsets = [1, 1], sizes = [28, 28], strides = [1, 1]} : vector<32x32xf32> to vector<28x28xf32>
    %c192 = arith.constant 192 : index
    %c0_11 = arith.constant 0 : index
    %17 = vector.load %arg13[%c192, %c0_11] : memref<800x28xf32, #tpu.memory_space<vmem>>, vector<28x28xf32>
    tpu.vector_store %arg13[%c192, %c0_11], %16 {strides = array<i32>} : memref<800x28xf32, #tpu.memory_space<vmem>>, vector<28x28xf32>,
    %18 = vector.extract_strided_slice %1 {offsets = [1, 2], sizes = [28, 28], strides = [1, 1]} : vector<32x32xf32> to vector<28x28xf32>
    %c224 = arith.constant 224 : index
    %c0_12 = arith.constant 0 : index
    %19 = vector.load %arg13[%c224, %c0_12] : memref<800x28xf32, #tpu.memory_space<vmem>>, vector<28x28xf32>
    tpu.vector_store %arg13[%c224, %c0_12], %18 {strides = array<i32>} : memref<800x28xf32, #tpu.memory_space<vmem>>, vector<28x28xf32>,
    %20 = vector.extract_strided_slice %1 {offsets = [1, 3], sizes = [28, 28], strides = [1, 1]} : vector<32x32xf32> to vector<28x28xf32>
    %c256 = arith.constant 256 : index
    %c0_13 = arith.constant 0 : index
    %21 = vector.load %arg13[%c256, %c0_13] : memref<800x28xf32, #tpu.memory_space<vmem>>, vector<28x28xf32>
    tpu.vector_store %arg13[%c256, %c0_13], %20 {strides = array<i32>} : memref<800x28xf32, #tpu.memory_space<vmem>>, vector<28x28xf32>,
    %22 = vector.extract_strided_slice %1 {offsets = [1, 4], sizes = [28, 28], strides = [1, 1]} : vector<32x32xf32> to vector<28x28xf32>
    %c288 = arith.constant 288 : index
    %c0_14 = arith.constant 0 : index
    %23 = vector.load %arg13[%c288, %c0_14] : memref<800x28xf32, #tpu.memory_space<vmem>>, vector<28x28xf32>
    tpu.vector_store %arg13[%c288, %c0_14], %22 {strides = array<i32>} : memref<800x28xf32, #tpu.memory_space<vmem>>, vector<28x28xf32>,
    %24 = vector.extract_strided_slice %1 {offsets = [2, 0], sizes = [28, 28], strides = [1, 1]} : vector<32x32xf32> to vector<28x28xf32>
    %c320 = arith.constant 320 : index
    %c0_15 = arith.constant 0 : index
    %25 = vector.load %arg13[%c320, %c0_15] : memref<800x28xf32, #tpu.memory_space<vmem>>, vector<28x28xf32>
    tpu.vector_store %arg13[%c320, %c0_15], %24 {strides = array<i32>} : memref<800x28xf32, #tpu.memory_space<vmem>>, vector<28x28xf32>,
    %26 = vector.extract_strided_slice %1 {offsets = [2, 1], sizes = [28, 28], strides = [1, 1]} : vector<32x32xf32> to vector<28x28xf32>
    %c352 = arith.constant 352 : index
    %c0_16 = arith.constant 0 : index
    %27 = vector.load %arg13[%c352, %c0_16] : memref<800x28xf32, #tpu.memory_space<vmem>>, vector<28x28xf32>
    tpu.vector_store %arg13[%c352, %c0_16], %26 {strides = array<i32>} : memref<800x28xf32, #tpu.memory_space<vmem>>, vector<28x28xf32>,
    %28 = vector.extract_strided_slice %1 {offsets = [2, 2], sizes = [28, 28], strides = [1, 1]} : vector<32x32xf32> to vector<28x28xf32>
    %c384 = arith.constant 384 : index
    %c0_17 = arith.constant 0 : index
    %29 = vector.load %arg13[%c384, %c0_17] : memref<800x28xf32, #tpu.memory_space<vmem>>, vector<28x28xf32>
    tpu.vector_store %arg13[%c384, %c0_17], %28 {strides = array<i32>} : memref<800x28xf32, #tpu.memory_space<vmem>>, vector<28x28xf32>,
    %30 = vector.extract_strided_slice %1 {offsets = [2, 3], sizes = [28, 28], strides = [1, 1]} : vector<32x32xf32> to vector<28x28xf32>
    %c416 = arith.constant 416 : index
    %c0_18 = arith.constant 0 : index
    %31 = vector.load %arg13[%c416, %c0_18] : memref<800x28xf32, #tpu.memory_space<vmem>>, vector<28x28xf32>
    tpu.vector_store %arg13[%c416, %c0_18], %30 {strides = array<i32>} : memref<800x28xf32, #tpu.memory_space<vmem>>, vector<28x28xf32>,
    %32 = vector.extract_strided_slice %1 {offsets = [2, 4], sizes = [28, 28], strides = [1, 1]} : vector<32x32xf32> to vector<28x28xf32>
    %c448 = arith.constant 448 : index
    %c0_19 = arith.constant 0 : index
    %33 = vector.load %arg13[%c448, %c0_19] : memref<800x28xf32, #tpu.memory_space<vmem>>, vector<28x28xf32>
    tpu.vector_store %arg13[%c448, %c0_19], %32 {strides = array<i32>} : memref<800x28xf32, #tpu.memory_space<vmem>>, vector<28x28xf32>,
    %34 = vector.extract_strided_slice %1 {offsets = [3, 0], sizes = [28, 28], strides = [1, 1]} : vector<32x32xf32> to vector<28x28xf32>
    %c480 = arith.constant 480 : index
    %c0_20 = arith.constant 0 : index
    %35 = vector.load %arg13[%c480, %c0_20] : memref<800x28xf32, #tpu.memory_space<vmem>>, vector<28x28xf32>
    tpu.vector_store %arg13[%c480, %c0_20], %34 {strides = array<i32>} : memref<800x28xf32, #tpu.memory_space<vmem>>, vector<28x28xf32>,
    %36 = vector.extract_strided_slice %1 {offsets = [3, 1], sizes = [28, 28], strides = [1, 1]} : vector<32x32xf32> to vector<28x28xf32>
    %c512 = arith.constant 512 : index
    %c0_21 = arith.constant 0 : index
    %37 = vector.load %arg13[%c512, %c0_21] : memref<800x28xf32, #tpu.memory_space<vmem>>, vector<28x28xf32>
    tpu.vector_store %arg13[%c512, %c0_21], %36 {strides = array<i32>} : memref<800x28xf32, #tpu.memory_space<vmem>>, vector<28x28xf32>,
    %38 = vector.extract_strided_slice %1 {offsets = [3, 2], sizes = [28, 28], strides = [1, 1]} : vector<32x32xf32> to vector<28x28xf32>
    %c544 = arith.constant 544 : index
    %c0_22 = arith.constant 0 : index
    %39 = vector.load %arg13[%c544, %c0_22] : memref<800x28xf32, #tpu.memory_space<vmem>>, vector<28x28xf32>
    tpu.vector_store %arg13[%c544, %c0_22], %38 {strides = array<i32>} : memref<800x28xf32, #tpu.memory_space<vmem>>, vector<28x28xf32>,
    %40 = vector.extract_strided_slice %1 {offsets = [3, 3], sizes = [28, 28], strides = [1, 1]} : vector<32x32xf32> to vector<28x28xf32>
    %c576 = arith.constant 576 : index
    %c0_23 = arith.constant 0 : index
    %41 = vector.load %arg13[%c576, %c0_23] : memref<800x28xf32, #tpu.memory_space<vmem>>, vector<28x28xf32>
    tpu.vector_store %arg13[%c576, %c0_23], %40 {strides = array<i32>} : memref<800x28xf32, #tpu.memory_space<vmem>>, vector<28x28xf32>,
    %42 = vector.extract_strided_slice %1 {offsets = [3, 4], sizes = [28, 28], strides = [1, 1]} : vector<32x32xf32> to vector<28x28xf32>
    %c608 = arith.constant 608 : index
    %c0_24 = arith.constant 0 : index
    %43 = vector.load %arg13[%c608, %c0_24] : memref<800x28xf32, #tpu.memory_space<vmem>>, vector<28x28xf32>
    tpu.vector_store %arg13[%c608, %c0_24], %42 {strides = array<i32>} : memref<800x28xf32, #tpu.memory_space<vmem>>, vector<28x28xf32>,
    %44 = vector.extract_strided_slice %1 {offsets = [4, 0], sizes = [28, 28], strides = [1, 1]} : vector<32x32xf32> to vector<28x28xf32>
    %c640 = arith.constant 640 : index
    %c0_25 = arith.constant 0 : index
    %45 = vector.load %arg13[%c640, %c0_25] : memref<800x28xf32, #tpu.memory_space<vmem>>, vector<28x28xf32>
    tpu.vector_store %arg13[%c640, %c0_25], %44 {strides = array<i32>} : memref<800x28xf32, #tpu.memory_space<vmem>>, vector<28x28xf32>,
    %46 = vector.extract_strided_slice %1 {offsets = [4, 1], sizes = [28, 28], strides = [1, 1]} : vector<32x32xf32> to vector<28x28xf32>
    %c672 = arith.constant 672 : index
    %c0_26 = arith.constant 0 : index
    %47 = vector.load %arg13[%c672, %c0_26] : memref<800x28xf32, #tpu.memory_space<vmem>>, vector<28x28xf32>
    tpu.vector_store %arg13[%c672, %c0_26], %46 {strides = array<i32>} : memref<800x28xf32, #tpu.memory_space<vmem>>, vector<28x28xf32>,
    %48 = vector.extract_strided_slice %1 {offsets = [4, 2], sizes = [28, 28], strides = [1, 1]} : vector<32x32xf32> to vector<28x28xf32>
    %c704 = arith.constant 704 : index
    %c0_27 = arith.constant 0 : index
    %49 = vector.load %arg13[%c704, %c0_27] : memref<800x28xf32, #tpu.memory_space<vmem>>, vector<28x28xf32>
    tpu.vector_store %arg13[%c704, %c0_27], %48 {strides = array<i32>} : memref<800x28xf32, #tpu.memory_space<vmem>>, vector<28x28xf32>,
    %50 = vector.extract_strided_slice %1 {offsets = [4, 3], sizes = [28, 28], strides = [1, 1]} : vector<32x32xf32> to vector<28x28xf32>
    %c736 = arith.constant 736 : index
    %c0_28 = arith.constant 0 : index
    %51 = vector.load %arg13[%c736, %c0_28] : memref<800x28xf32, #tpu.memory_space<vmem>>, vector<28x28xf32>
    tpu.vector_store %arg13[%c736, %c0_28], %50 {strides = array<i32>} : memref<800x28xf32, #tpu.memory_space<vmem>>, vector<28x28xf32>,
    %52 = vector.extract_strided_slice %1 {offsets = [4, 4], sizes = [28, 28], strides = [1, 1]} : vector<32x32xf32> to vector<28x28xf32>
    %c768 = arith.constant 768 : index
    %c0_29 = arith.constant 0 : index
    %53 = vector.load %arg13[%c768, %c0_29] : memref<800x28xf32, #tpu.memory_space<vmem>>, vector<28x28xf32>
    tpu.vector_store %arg13[%c768, %c0_29], %52 {strides = array<i32>} : memref<800x28xf32, #tpu.memory_space<vmem>>, vector<28x28xf32>,
    %c0_30 = arith.constant 0 : index
    %c0_31 = arith.constant 0 : index
    %54 = vector.load %arg2[%c0_30, %c0_31] : memref<168x800xf32, #tpu.memory_space<vmem>>, vector<168x800xf32>
    %c0_32 = arith.constant 0 : index
    %c0_33 = arith.constant 0 : index
    %55 = vector.load %arg13[%c0_32, %c0_33] : memref<800x28xf32, #tpu.memory_space<vmem>>, vector<800x28xf32>
    %cst_34 = arith.constant dense<0.000000e+00> : vector<168x28xf32>
    %56 = tpu.matmul %54, %55, %cst_34 {dimension_numbers = #tpu.dot_dimension_numbers<[1], [0], [0], [1], [0, 0, 1, 1], [], []>} : vector<168x800xf32>, vector<800x28xf32>, vector<168x28xf32> -> vector<168x28xf32>
    %c0_35 = arith.constant 0 : index
    %c0_36 = arith.constant 0 : index
    %57 = vector.load %arg3[%c0_35, %c0_36] : memref<168x1xf32, #tpu.memory_space<vmem>>, vector<168x1xf32>
    %58 = vector.broadcast %57 : vector<168x1xf32> to vector<168x28xf32>
    %59 = arith.addf %56, %58 : vector<168x28xf32>
    %60 = tpu.iota {dimensions = array<i32: 0>} : vector<28x14xi32>
    %61 = tpu.iota {dimensions = array<i32: 1>} : vector<28x14xi32>
    %c2_i32 = arith.constant 2 : i32
    %62 = vector.broadcast %c2_i32 : i32 to vector<28x14xi32>
    %63 = arith.muli %62, %61 : vector<28x14xi32>
    %64 = arith.cmpi eq, %60, %63 : vector<28x14xi32>
    %cst_37 = arith.constant 1.000000e+00 : f32
    %cst_38 = arith.constant 0.000000e+00 : f32
    %65 = vector.broadcast %cst_37 : f32 to vector<28x14xf32>
    %66 = vector.broadcast %cst_38 : f32 to vector<28x14xf32>
    %67 = arith.select %64, %65, %66 : vector<28x14xi1>, vector<28x14xf32>
    %c2_i32_39 = arith.constant 2 : i32
    %68 = vector.broadcast %c2_i32_39 : i32 to vector<28x14xi32>
    %69 = arith.muli %68, %61 : vector<28x14xi32>
    %c1_i32 = arith.constant 1 : i32
    %70 = vector.broadcast %c1_i32 : i32 to vector<28x14xi32>
    %71 = arith.addi %69, %70 : vector<28x14xi32>
    %72 = arith.cmpi eq, %60, %71 : vector<28x14xi32>
    %cst_40 = arith.constant 1.000000e+00 : f32
    %cst_41 = arith.constant 0.000000e+00 : f32
    %73 = vector.broadcast %cst_40 : f32 to vector<28x14xf32>
    %74 = vector.broadcast %cst_41 : f32 to vector<28x14xf32>
    %75 = arith.select %72, %73, %74 : vector<28x14xi1>, vector<28x14xf32>
    %cst_42 = arith.constant dense<0.000000e+00> : vector<168x14xf32>
    %76 = tpu.matmul %59, %67, %cst_42 {dimension_numbers = #tpu.dot_dimension_numbers<[1], [0], [0], [1], [0, 0, 1, 1], [], []>} : vector<168x28xf32>, vector<28x14xf32>, vector<168x14xf32> -> vector<168x14xf32>
    %cst_43 = arith.constant dense<0.000000e+00> : vector<168x14xf32>
    %77 = tpu.matmul %59, %75, %cst_43 {dimension_numbers = #tpu.dot_dimension_numbers<[1], [0], [0], [1], [0, 0, 1, 1], [], []>} : vector<168x28xf32>, vector<28x14xf32>, vector<168x14xf32> -> vector<168x14xf32>
    %78 = arith.maximumf %76, %77 : vector<168x14xf32>
    %79 = tpu.iota {dimensions = array<i32: 0>} : vector<84x168xi32>
    %80 = tpu.iota {dimensions = array<i32: 1>} : vector<84x168xi32>
    %c2_i32_44 = arith.constant 2 : i32
    %81 = vector.broadcast %c2_i32_44 : i32 to vector<84x168xi32>
    %82 = arith.muli %81, %79 : vector<84x168xi32>
    %83 = arith.cmpi eq, %80, %82 : vector<84x168xi32>
    %cst_45 = arith.constant 1.000000e+00 : f32
    %cst_46 = arith.constant 0.000000e+00 : f32
    %84 = vector.broadcast %cst_45 : f32 to vector<84x168xf32>
    %85 = vector.broadcast %cst_46 : f32 to vector<84x168xf32>
    %86 = arith.select %83, %84, %85 : vector<84x168xi1>, vector<84x168xf32>
    %c2_i32_47 = arith.constant 2 : i32
    %87 = vector.broadcast %c2_i32_47 : i32 to vector<84x168xi32>
    %88 = arith.muli %87, %79 : vector<84x168xi32>
    %c1_i32_48 = arith.constant 1 : i32
    %89 = vector.broadcast %c1_i32_48 : i32 to vector<84x168xi32>
    %90 = arith.addi %88, %89 : vector<84x168xi32>
    %91 = arith.cmpi eq, %80, %90 : vector<84x168xi32>
    %cst_49 = arith.constant 1.000000e+00 : f32
    %cst_50 = arith.constant 0.000000e+00 : f32
    %92 = vector.broadcast %cst_49 : f32 to vector<84x168xf32>
    %93 = vector.broadcast %cst_50 : f32 to vector<84x168xf32>
    %94 = arith.select %91, %92, %93 : vector<84x168xi1>, vector<84x168xf32>
    %cst_51 = arith.constant dense<0.000000e+00> : vector<84x14xf32>
    %95 = tpu.matmul %86, %78, %cst_51 {dimension_numbers = #tpu.dot_dimension_numbers<[1], [0], [0], [1], [0, 0, 1, 1], [], []>} : vector<84x168xf32>, vector<168x14xf32>, vector<84x14xf32> -> vector<84x14xf32>
    %cst_52 = arith.constant dense<0.000000e+00> : vector<84x14xf32>
    %96 = tpu.matmul %94, %78, %cst_52 {dimension_numbers = #tpu.dot_dimension_numbers<[1], [0], [0], [1], [0, 0, 1, 1], [], []>} : vector<84x168xf32>, vector<168x14xf32>, vector<84x14xf32> -> vector<84x14xf32>
    %97 = arith.maximumf %95, %96 : vector<84x14xf32>
    %cst_53 = arith.constant 0.000000e+00 : f32
    %98 = vector.broadcast %cst_53 : f32 to vector<84x14xf32>
    %99 = arith.maximumf %97, %98 : vector<84x14xf32>
    %cst_54 = arith.constant 0.000000e+00 : f32
    %100 = vector.broadcast %cst_54 : f32 to vector<2400x10xf32>
    %c0_55 = arith.constant 0 : index
    %c0_56 = arith.constant 0 : index
    %101 = vector.load %arg14[%c0_55, %c0_56] : memref<2400x10xf32, #tpu.memory_space<vmem>>, vector<2400x10xf32>
    tpu.vector_store %arg14[%c0_55, %c0_56], %100 {strides = array<i32>} : memref<2400x10xf32, #tpu.memory_space<vmem>>, vector<2400x10xf32>,
    %102 = vector.extract_strided_slice %99 {offsets = [0, 0], sizes = [10, 10], strides = [1, 1]} : vector<84x14xf32> to vector<10x10xf32>
    %c0_57 = arith.constant 0 : index
    %c0_58 = arith.constant 0 : index
    %103 = vector.load %arg14[%c0_57, %c0_58] : memref<2400x10xf32, #tpu.memory_space<vmem>>, vector<10x10xf32>
    tpu.vector_store %arg14[%c0_57, %c0_58], %102 {strides = array<i32>} : memref<2400x10xf32, #tpu.memory_space<vmem>>, vector<10x10xf32>,
    %104 = vector.extract_strided_slice %99 {offsets = [0, 1], sizes = [10, 10], strides = [1, 1]} : vector<84x14xf32> to vector<10x10xf32>
    %c16 = arith.constant 16 : index
    %c0_59 = arith.constant 0 : index
    %105 = vector.load %arg14[%c16, %c0_59] : memref<2400x10xf32, #tpu.memory_space<vmem>>, vector<10x10xf32>
    tpu.vector_store %arg14[%c16, %c0_59], %104 {strides = array<i32>} : memref<2400x10xf32, #tpu.memory_space<vmem>>, vector<10x10xf32>,
    %106 = vector.extract_strided_slice %99 {offsets = [0, 2], sizes = [10, 10], strides = [1, 1]} : vector<84x14xf32> to vector<10x10xf32>
    %c32_60 = arith.constant 32 : index
    %c0_61 = arith.constant 0 : index
    %107 = vector.load %arg14[%c32_60, %c0_61] : memref<2400x10xf32, #tpu.memory_space<vmem>>, vector<10x10xf32>
    tpu.vector_store %arg14[%c32_60, %c0_61], %106 {strides = array<i32>} : memref<2400x10xf32, #tpu.memory_space<vmem>>, vector<10x10xf32>,
    %108 = vector.extract_strided_slice %99 {offsets = [0, 3], sizes = [10, 10], strides = [1, 1]} : vector<84x14xf32> to vector<10x10xf32>
    %c48 = arith.constant 48 : index
    %c0_62 = arith.constant 0 : index
    %109 = vector.load %arg14[%c48, %c0_62] : memref<2400x10xf32, #tpu.memory_space<vmem>>, vector<10x10xf32>
    tpu.vector_store %arg14[%c48, %c0_62], %108 {strides = array<i32>} : memref<2400x10xf32, #tpu.memory_space<vmem>>, vector<10x10xf32>,
    %110 = vector.extract_strided_slice %99 {offsets = [0, 4], sizes = [10, 10], strides = [1, 1]} : vector<84x14xf32> to vector<10x10xf32>
    %c64_63 = arith.constant 64 : index
    %c0_64 = arith.constant 0 : index
    %111 = vector.load %arg14[%c64_63, %c0_64] : memref<2400x10xf32, #tpu.memory_space<vmem>>, vector<10x10xf32>
    tpu.vector_store %arg14[%c64_63, %c0_64], %110 {strides = array<i32>} : memref<2400x10xf32, #tpu.memory_space<vmem>>, vector<10x10xf32>,
    %112 = vector.extract_strided_slice %99 {offsets = [1, 0], sizes = [10, 10], strides = [1, 1]} : vector<84x14xf32> to vector<10x10xf32>
    %c80 = arith.constant 80 : index
    %c0_65 = arith.constant 0 : index
    %113 = vector.load %arg14[%c80, %c0_65] : memref<2400x10xf32, #tpu.memory_space<vmem>>, vector<10x10xf32>
    tpu.vector_store %arg14[%c80, %c0_65], %112 {strides = array<i32>} : memref<2400x10xf32, #tpu.memory_space<vmem>>, vector<10x10xf32>,
    %114 = vector.extract_strided_slice %99 {offsets = [1, 1], sizes = [10, 10], strides = [1, 1]} : vector<84x14xf32> to vector<10x10xf32>
    %c96_66 = arith.constant 96 : index
    %c0_67 = arith.constant 0 : index
    %115 = vector.load %arg14[%c96_66, %c0_67] : memref<2400x10xf32, #tpu.memory_space<vmem>>, vector<10x10xf32>
    tpu.vector_store %arg14[%c96_66, %c0_67], %114 {strides = array<i32>} : memref<2400x10xf32, #tpu.memory_space<vmem>>, vector<10x10xf32>,
    %116 = vector.extract_strided_slice %99 {offsets = [1, 2], sizes = [10, 10], strides = [1, 1]} : vector<84x14xf32> to vector<10x10xf32>
    %c112 = arith.constant 112 : index
    %c0_68 = arith.constant 0 : index
    %117 = vector.load %arg14[%c112, %c0_68] : memref<2400x10xf32, #tpu.memory_space<vmem>>, vector<10x10xf32>
    tpu.vector_store %arg14[%c112, %c0_68], %116 {strides = array<i32>} : memref<2400x10xf32, #tpu.memory_space<vmem>>, vector<10x10xf32>,
    %118 = vector.extract_strided_slice %99 {offsets = [1, 3], sizes = [10, 10], strides = [1, 1]} : vector<84x14xf32> to vector<10x10xf32>
    %c128_69 = arith.constant 128 : index
    %c0_70 = arith.constant 0 : index
    %119 = vector.load %arg14[%c128_69, %c0_70] : memref<2400x10xf32, #tpu.memory_space<vmem>>, vector<10x10xf32>
    tpu.vector_store %arg14[%c128_69, %c0_70], %118 {strides = array<i32>} : memref<2400x10xf32, #tpu.memory_space<vmem>>, vector<10x10xf32>,
    %120 = vector.extract_strided_slice %99 {offsets = [1, 4], sizes = [10, 10], strides = [1, 1]} : vector<84x14xf32> to vector<10x10xf32>
    %c144 = arith.constant 144 : index
    %c0_71 = arith.constant 0 : index
    %121 = vector.load %arg14[%c144, %c0_71] : memref<2400x10xf32, #tpu.memory_space<vmem>>, vector<10x10xf32>
    tpu.vector_store %arg14[%c144, %c0_71], %120 {strides = array<i32>} : memref<2400x10xf32, #tpu.memory_space<vmem>>, vector<10x10xf32>,
    %122 = vector.extract_strided_slice %99 {offsets = [2, 0], sizes = [10, 10], strides = [1, 1]} : vector<84x14xf32> to vector<10x10xf32>
    %c160_72 = arith.constant 160 : index
    %c0_73 = arith.constant 0 : index
    %123 = vector.load %arg14[%c160_72, %c0_73] : memref<2400x10xf32, #tpu.memory_space<vmem>>, vector<10x10xf32>
    tpu.vector_store %arg14[%c160_72, %c0_73], %122 {strides = array<i32>} : memref<2400x10xf32, #tpu.memory_space<vmem>>, vector<10x10xf32>,
    %124 = vector.extract_strided_slice %99 {offsets = [2, 1], sizes = [10, 10], strides = [1, 1]} : vector<84x14xf32> to vector<10x10xf32>
    %c176 = arith.constant 176 : index
    %c0_74 = arith.constant 0 : index
    %125 = vector.load %arg14[%c176, %c0_74] : memref<2400x10xf32, #tpu.memory_space<vmem>>, vector<10x10xf32>
    tpu.vector_store %arg14[%c176, %c0_74], %124 {strides = array<i32>} : memref<2400x10xf32, #tpu.memory_space<vmem>>, vector<10x10xf32>,
    %126 = vector.extract_strided_slice %99 {offsets = [2, 2], sizes = [10, 10], strides = [1, 1]} : vector<84x14xf32> to vector<10x10xf32>
    %c192_75 = arith.constant 192 : index
    %c0_76 = arith.constant 0 : index
    %127 = vector.load %arg14[%c192_75, %c0_76] : memref<2400x10xf32, #tpu.memory_space<vmem>>, vector<10x10xf32>
    tpu.vector_store %arg14[%c192_75, %c0_76], %126 {strides = array<i32>} : memref<2400x10xf32, #tpu.memory_space<vmem>>, vector<10x10xf32>,
    %128 = vector.extract_strided_slice %99 {offsets = [2, 3], sizes = [10, 10], strides = [1, 1]} : vector<84x14xf32> to vector<10x10xf32>
    %c208 = arith.constant 208 : index
    %c0_77 = arith.constant 0 : index
    %129 = vector.load %arg14[%c208, %c0_77] : memref<2400x10xf32, #tpu.memory_space<vmem>>, vector<10x10xf32>
    tpu.vector_store %arg14[%c208, %c0_77], %128 {strides = array<i32>} : memref<2400x10xf32, #tpu.memory_space<vmem>>, vector<10x10xf32>,
    %130 = vector.extract_strided_slice %99 {offsets = [2, 4], sizes = [10, 10], strides = [1, 1]} : vector<84x14xf32> to vector<10x10xf32>
    %c224_78 = arith.constant 224 : index
    %c0_79 = arith.constant 0 : index
    %131 = vector.load %arg14[%c224_78, %c0_79] : memref<2400x10xf32, #tpu.memory_space<vmem>>, vector<10x10xf32>
    tpu.vector_store %arg14[%c224_78, %c0_79], %130 {strides = array<i32>} : memref<2400x10xf32, #tpu.memory_space<vmem>>, vector<10x10xf32>,
    %132 = vector.extract_strided_slice %99 {offsets = [3, 0], sizes = [10, 10], strides = [1, 1]} : vector<84x14xf32> to vector<10x10xf32>
    %c240 = arith.constant 240 : index
    %c0_80 = arith.constant 0 : index
    %133 = vector.load %arg14[%c240, %c0_80] : memref<2400x10xf32, #tpu.memory_space<vmem>>, vector<10x10xf32>
    tpu.vector_store %arg14[%c240, %c0_80], %132 {strides = array<i32>} : memref<2400x10xf32, #tpu.memory_space<vmem>>, vector<10x10xf32>,
    %134 = vector.extract_strided_slice %99 {offsets = [3, 1], sizes = [10, 10], strides = [1, 1]} : vector<84x14xf32> to vector<10x10xf32>
    %c256_81 = arith.constant 256 : index
    %c0_82 = arith.constant 0 : index
    %135 = vector.load %arg14[%c256_81, %c0_82] : memref<2400x10xf32, #tpu.memory_space<vmem>>, vector<10x10xf32>
    tpu.vector_store %arg14[%c256_81, %c0_82], %134 {strides = array<i32>} : memref<2400x10xf32, #tpu.memory_space<vmem>>, vector<10x10xf32>,
    %136 = vector.extract_strided_slice %99 {offsets = [3, 2], sizes = [10, 10], strides = [1, 1]} : vector<84x14xf32> to vector<10x10xf32>
    %c272 = arith.constant 272 : index
    %c0_83 = arith.constant 0 : index
    %137 = vector.load %arg14[%c272, %c0_83] : memref<2400x10xf32, #tpu.memory_space<vmem>>, vector<10x10xf32>
    tpu.vector_store %arg14[%c272, %c0_83], %136 {strides = array<i32>} : memref<2400x10xf32, #tpu.memory_space<vmem>>, vector<10x10xf32>,
    %138 = vector.extract_strided_slice %99 {offsets = [3, 3], sizes = [10, 10], strides = [1, 1]} : vector<84x14xf32> to vector<10x10xf32>
    %c288_84 = arith.constant 288 : index
    %c0_85 = arith.constant 0 : index
    %139 = vector.load %arg14[%c288_84, %c0_85] : memref<2400x10xf32, #tpu.memory_space<vmem>>, vector<10x10xf32>
    tpu.vector_store %arg14[%c288_84, %c0_85], %138 {strides = array<i32>} : memref<2400x10xf32, #tpu.memory_space<vmem>>, vector<10x10xf32>,
    %140 = vector.extract_strided_slice %99 {offsets = [3, 4], sizes = [10, 10], strides = [1, 1]} : vector<84x14xf32> to vector<10x10xf32>
    %c304 = arith.constant 304 : index
    %c0_86 = arith.constant 0 : index
    %141 = vector.load %arg14[%c304, %c0_86] : memref<2400x10xf32, #tpu.memory_space<vmem>>, vector<10x10xf32>
    tpu.vector_store %arg14[%c304, %c0_86], %140 {strides = array<i32>} : memref<2400x10xf32, #tpu.memory_space<vmem>>, vector<10x10xf32>,
    %142 = vector.extract_strided_slice %99 {offsets = [4, 0], sizes = [10, 10], strides = [1, 1]} : vector<84x14xf32> to vector<10x10xf32>
    %c320_87 = arith.constant 320 : index
    %c0_88 = arith.constant 0 : index
    %143 = vector.load %arg14[%c320_87, %c0_88] : memref<2400x10xf32, #tpu.memory_space<vmem>>, vector<10x10xf32>
    tpu.vector_store %arg14[%c320_87, %c0_88], %142 {strides = array<i32>} : memref<2400x10xf32, #tpu.memory_space<vmem>>, vector<10x10xf32>,
    %144 = vector.extract_strided_slice %99 {offsets = [4, 1], sizes = [10, 10], strides = [1, 1]} : vector<84x14xf32> to vector<10x10xf32>
    %c336 = arith.constant 336 : index
    %c0_89 = arith.constant 0 : index
    %145 = vector.load %arg14[%c336, %c0_89] : memref<2400x10xf32, #tpu.memory_space<vmem>>, vector<10x10xf32>
    tpu.vector_store %arg14[%c336, %c0_89], %144 {strides = array<i32>} : memref<2400x10xf32, #tpu.memory_space<vmem>>, vector<10x10xf32>,
    %146 = vector.extract_strided_slice %99 {offsets = [4, 2], sizes = [10, 10], strides = [1, 1]} : vector<84x14xf32> to vector<10x10xf32>
    %c352_90 = arith.constant 352 : index
    %c0_91 = arith.constant 0 : index
    %147 = vector.load %arg14[%c352_90, %c0_91] : memref<2400x10xf32, #tpu.memory_space<vmem>>, vector<10x10xf32>
    tpu.vector_store %arg14[%c352_90, %c0_91], %146 {strides = array<i32>} : memref<2400x10xf32, #tpu.memory_space<vmem>>, vector<10x10xf32>,
    %148 = vector.extract_strided_slice %99 {offsets = [4, 3], sizes = [10, 10], strides = [1, 1]} : vector<84x14xf32> to vector<10x10xf32>
    %c368 = arith.constant 368 : index
    %c0_92 = arith.constant 0 : index
    %149 = vector.load %arg14[%c368, %c0_92] : memref<2400x10xf32, #tpu.memory_space<vmem>>, vector<10x10xf32>
    tpu.vector_store %arg14[%c368, %c0_92], %148 {strides = array<i32>} : memref<2400x10xf32, #tpu.memory_space<vmem>>, vector<10x10xf32>,
    %150 = vector.extract_strided_slice %99 {offsets = [4, 4], sizes = [10, 10], strides = [1, 1]} : vector<84x14xf32> to vector<10x10xf32>
    %c384_93 = arith.constant 384 : index
    %c0_94 = arith.constant 0 : index
    %151 = vector.load %arg14[%c384_93, %c0_94] : memref<2400x10xf32, #tpu.memory_space<vmem>>, vector<10x10xf32>
    tpu.vector_store %arg14[%c384_93, %c0_94], %150 {strides = array<i32>} : memref<2400x10xf32, #tpu.memory_space<vmem>>, vector<10x10xf32>,
    %152 = vector.extract_strided_slice %99 {offsets = [14, 0], sizes = [10, 10], strides = [1, 1]} : vector<84x14xf32> to vector<10x10xf32>
    %c400 = arith.constant 400 : index
    %c0_95 = arith.constant 0 : index
    %153 = vector.load %arg14[%c400, %c0_95] : memref<2400x10xf32, #tpu.memory_space<vmem>>, vector<10x10xf32>
    tpu.vector_store %arg14[%c400, %c0_95], %152 {strides = array<i32>} : memref<2400x10xf32, #tpu.memory_space<vmem>>, vector<10x10xf32>,
    %154 = vector.extract_strided_slice %99 {offsets = [14, 1], sizes = [10, 10], strides = [1, 1]} : vector<84x14xf32> to vector<10x10xf32>
    %c416_96 = arith.constant 416 : index
    %c0_97 = arith.constant 0 : index
    %155 = vector.load %arg14[%c416_96, %c0_97] : memref<2400x10xf32, #tpu.memory_space<vmem>>, vector<10x10xf32>
    tpu.vector_store %arg14[%c416_96, %c0_97], %154 {strides = array<i32>} : memref<2400x10xf32, #tpu.memory_space<vmem>>, vector<10x10xf32>,
    %156 = vector.extract_strided_slice %99 {offsets = [14, 2], sizes = [10, 10], strides = [1, 1]} : vector<84x14xf32> to vector<10x10xf32>
    %c432 = arith.constant 432 : index
    %c0_98 = arith.constant 0 : index
    %157 = vector.load %arg14[%c432, %c0_98] : memref<2400x10xf32, #tpu.memory_space<vmem>>, vector<10x10xf32>
    tpu.vector_store %arg14[%c432, %c0_98], %156 {strides = array<i32>} : memref<2400x10xf32, #tpu.memory_space<vmem>>, vector<10x10xf32>,
    %158 = vector.extract_strided_slice %99 {offsets = [14, 3], sizes = [10, 10], strides = [1, 1]} : vector<84x14xf32> to vector<10x10xf32>
    %c448_99 = arith.constant 448 : index
    %c0_100 = arith.constant 0 : index
    %159 = vector.load %arg14[%c448_99, %c0_100] : memref<2400x10xf32, #tpu.memory_space<vmem>>, vector<10x10xf32>
    tpu.vector_store %arg14[%c448_99, %c0_100], %158 {strides = array<i32>} : memref<2400x10xf32, #tpu.memory_space<vmem>>, vector<10x10xf32>,
    %160 = vector.extract_strided_slice %99 {offsets = [14, 4], sizes = [10, 10], strides = [1, 1]} : vector<84x14xf32> to vector<10x10xf32>
    %c464 = arith.constant 464 : index
    %c0_101 = arith.constant 0 : index
    %161 = vector.load %arg14[%c464, %c0_101] : memref<2400x10xf32, #tpu.memory_space<vmem>>, vector<10x10xf32>
    tpu.vector_store %arg14[%c464, %c0_101], %160 {strides = array<i32>} : memref<2400x10xf32, #tpu.memory_space<vmem>>, vector<10x10xf32>,
    %162 = vector.extract_strided_slice %99 {offsets = [15, 0], sizes = [10, 10], strides = [1, 1]} : vector<84x14xf32> to vector<10x10xf32>
    %c480_102 = arith.constant 480 : index
    %c0_103 = arith.constant 0 : index
    %163 = vector.load %arg14[%c480_102, %c0_103] : memref<2400x10xf32, #tpu.memory_space<vmem>>, vector<10x10xf32>
    tpu.vector_store %arg14[%c480_102, %c0_103], %162 {strides = array<i32>} : memref<2400x10xf32, #tpu.memory_space<vmem>>, vector<10x10xf32>,
    %164 = vector.extract_strided_slice %99 {offsets = [15, 1], sizes = [10, 10], strides = [1, 1]} : vector<84x14xf32> to vector<10x10xf32>
    %c496 = arith.constant 496 : index
    %c0_104 = arith.constant 0 : index
    %165 = vector.load %arg14[%c496, %c0_104] : memref<2400x10xf32, #tpu.memory_space<vmem>>, vector<10x10xf32>
    tpu.vector_store %arg14[%c496, %c0_104], %164 {strides = array<i32>} : memref<2400x10xf32, #tpu.memory_space<vmem>>, vector<10x10xf32>,
    %166 = vector.extract_strided_slice %99 {offsets = [15, 2], sizes = [10, 10], strides = [1, 1]} : vector<84x14xf32> to vector<10x10xf32>
    %c512_105 = arith.constant 512 : index
    %c0_106 = arith.constant 0 : index
    %167 = vector.load %arg14[%c512_105, %c0_106] : memref<2400x10xf32, #tpu.memory_space<vmem>>, vector<10x10xf32>
    tpu.vector_store %arg14[%c512_105, %c0_106], %166 {strides = array<i32>} : memref<2400x10xf32, #tpu.memory_space<vmem>>, vector<10x10xf32>,
    %168 = vector.extract_strided_slice %99 {offsets = [15, 3], sizes = [10, 10], strides = [1, 1]} : vector<84x14xf32> to vector<10x10xf32>
    %c528 = arith.constant 528 : index
    %c0_107 = arith.constant 0 : index
    %169 = vector.load %arg14[%c528, %c0_107] : memref<2400x10xf32, #tpu.memory_space<vmem>>, vector<10x10xf32>
    tpu.vector_store %arg14[%c528, %c0_107], %168 {strides = array<i32>} : memref<2400x10xf32, #tpu.memory_space<vmem>>, vector<10x10xf32>,
    %170 = vector.extract_strided_slice %99 {offsets = [15, 4], sizes = [10, 10], strides = [1, 1]} : vector<84x14xf32> to vector<10x10xf32>
    %c544_108 = arith.constant 544 : index
    %c0_109 = arith.constant 0 : index
    %171 = vector.load %arg14[%c544_108, %c0_109] : memref<2400x10xf32, #tpu.memory_space<vmem>>, vector<10x10xf32>
    tpu.vector_store %arg14[%c544_108, %c0_109], %170 {strides = array<i32>} : memref<2400x10xf32, #tpu.memory_space<vmem>>, vector<10x10xf32>,
    %172 = vector.extract_strided_slice %99 {offsets = [16, 0], sizes = [10, 10], strides = [1, 1]} : vector<84x14xf32> to vector<10x10xf32>
    %c560 = arith.constant 560 : index
    %c0_110 = arith.constant 0 : index
    %173 = vector.load %arg14[%c560, %c0_110] : memref<2400x10xf32, #tpu.memory_space<vmem>>, vector<10x10xf32>
    tpu.vector_store %arg14[%c560, %c0_110], %172 {strides = array<i32>} : memref<2400x10xf32, #tpu.memory_space<vmem>>, vector<10x10xf32>,
    %174 = vector.extract_strided_slice %99 {offsets = [16, 1], sizes = [10, 10], strides = [1, 1]} : vector<84x14xf32> to vector<10x10xf32>
    %c576_111 = arith.constant 576 : index
    %c0_112 = arith.constant 0 : index
    %175 = vector.load %arg14[%c576_111, %c0_112] : memref<2400x10xf32, #tpu.memory_space<vmem>>, vector<10x10xf32>
    tpu.vector_store %arg14[%c576_111, %c0_112], %174 {strides = array<i32>} : memref<2400x10xf32, #tpu.memory_space<vmem>>, vector<10x10xf32>,
    %176 = vector.extract_strided_slice %99 {offsets = [16, 2], sizes = [10, 10], strides = [1, 1]} : vector<84x14xf32> to vector<10x10xf32>
    %c592 = arith.constant 592 : index
    %c0_113 = arith.constant 0 : index
    %177 = vector.load %arg14[%c592, %c0_113] : memref<2400x10xf32, #tpu.memory_space<vmem>>, vector<10x10xf32>
    tpu.vector_store %arg14[%c592, %c0_113], %176 {strides = array<i32>} : memref<2400x10xf32, #tpu.memory_space<vmem>>, vector<10x10xf32>,
    %178 = vector.extract_strided_slice %99 {offsets = [16, 3], sizes = [10, 10], strides = [1, 1]} : vector<84x14xf32> to vector<10x10xf32>
    %c608_114 = arith.constant 608 : index
    %c0_115 = arith.constant 0 : index
    %179 = vector.load %arg14[%c608_114, %c0_115] : memref<2400x10xf32, #tpu.memory_space<vmem>>, vector<10x10xf32>
    tpu.vector_store %arg14[%c608_114, %c0_115], %178 {strides = array<i32>} : memref<2400x10xf32, #tpu.memory_space<vmem>>, vector<10x10xf32>,
    %180 = vector.extract_strided_slice %99 {offsets = [16, 4], sizes = [10, 10], strides = [1, 1]} : vector<84x14xf32> to vector<10x10xf32>
    %c624 = arith.constant 624 : index
    %c0_116 = arith.constant 0 : index
    %181 = vector.load %arg14[%c624, %c0_116] : memref<2400x10xf32, #tpu.memory_space<vmem>>, vector<10x10xf32>
    tpu.vector_store %arg14[%c624, %c0_116], %180 {strides = array<i32>} : memref<2400x10xf32, #tpu.memory_space<vmem>>, vector<10x10xf32>,
    %182 = vector.extract_strided_slice %99 {offsets = [17, 0], sizes = [10, 10], strides = [1, 1]} : vector<84x14xf32> to vector<10x10xf32>
    %c640_117 = arith.constant 640 : index
    %c0_118 = arith.constant 0 : index
    %183 = vector.load %arg14[%c640_117, %c0_118] : memref<2400x10xf32, #tpu.memory_space<vmem>>, vector<10x10xf32>
    tpu.vector_store %arg14[%c640_117, %c0_118], %182 {strides = array<i32>} : memref<2400x10xf32, #tpu.memory_space<vmem>>, vector<10x10xf32>,
    %184 = vector.extract_strided_slice %99 {offsets = [17, 1], sizes = [10, 10], strides = [1, 1]} : vector<84x14xf32> to vector<10x10xf32>
    %c656 = arith.constant 656 : index
    %c0_119 = arith.constant 0 : index
    %185 = vector.load %arg14[%c656, %c0_119] : memref<2400x10xf32, #tpu.memory_space<vmem>>, vector<10x10xf32>
    tpu.vector_store %arg14[%c656, %c0_119], %184 {strides = array<i32>} : memref<2400x10xf32, #tpu.memory_space<vmem>>, vector<10x10xf32>,
    %186 = vector.extract_strided_slice %99 {offsets = [17, 2], sizes = [10, 10], strides = [1, 1]} : vector<84x14xf32> to vector<10x10xf32>
    %c672_120 = arith.constant 672 : index
    %c0_121 = arith.constant 0 : index
    %187 = vector.load %arg14[%c672_120, %c0_121] : memref<2400x10xf32, #tpu.memory_space<vmem>>, vector<10x10xf32>
    tpu.vector_store %arg14[%c672_120, %c0_121], %186 {strides = array<i32>} : memref<2400x10xf32, #tpu.memory_space<vmem>>, vector<10x10xf32>,
    %188 = vector.extract_strided_slice %99 {offsets = [17, 3], sizes = [10, 10], strides = [1, 1]} : vector<84x14xf32> to vector<10x10xf32>
    %c688 = arith.constant 688 : index
    %c0_122 = arith.constant 0 : index
    %189 = vector.load %arg14[%c688, %c0_122] : memref<2400x10xf32, #tpu.memory_space<vmem>>, vector<10x10xf32>
    tpu.vector_store %arg14[%c688, %c0_122], %188 {strides = array<i32>} : memref<2400x10xf32, #tpu.memory_space<vmem>>, vector<10x10xf32>,
    %190 = vector.extract_strided_slice %99 {offsets = [17, 4], sizes = [10, 10], strides = [1, 1]} : vector<84x14xf32> to vector<10x10xf32>
    %c704_123 = arith.constant 704 : index
    %c0_124 = arith.constant 0 : index
    %191 = vector.load %arg14[%c704_123, %c0_124] : memref<2400x10xf32, #tpu.memory_space<vmem>>, vector<10x10xf32>
    tpu.vector_store %arg14[%c704_123, %c0_124], %190 {strides = array<i32>} : memref<2400x10xf32, #tpu.memory_space<vmem>>, vector<10x10xf32>,
    %192 = vector.extract_strided_slice %99 {offsets = [18, 0], sizes = [10, 10], strides = [1, 1]} : vector<84x14xf32> to vector<10x10xf32>
    %c720 = arith.constant 720 : index
    %c0_125 = arith.constant 0 : index
    %193 = vector.load %arg14[%c720, %c0_125] : memref<2400x10xf32, #tpu.memory_space<vmem>>, vector<10x10xf32>
    tpu.vector_store %arg14[%c720, %c0_125], %192 {strides = array<i32>} : memref<2400x10xf32, #tpu.memory_space<vmem>>, vector<10x10xf32>,
    %194 = vector.extract_strided_slice %99 {offsets = [18, 1], sizes = [10, 10], strides = [1, 1]} : vector<84x14xf32> to vector<10x10xf32>
    %c736_126 = arith.constant 736 : index
    %c0_127 = arith.constant 0 : index
    %195 = vector.load %arg14[%c736_126, %c0_127] : memref<2400x10xf32, #tpu.memory_space<vmem>>, vector<10x10xf32>
    tpu.vector_store %arg14[%c736_126, %c0_127], %194 {strides = array<i32>} : memref<2400x10xf32, #tpu.memory_space<vmem>>, vector<10x10xf32>,
    %196 = vector.extract_strided_slice %99 {offsets = [18, 2], sizes = [10, 10], strides = [1, 1]} : vector<84x14xf32> to vector<10x10xf32>
    %c752 = arith.constant 752 : index
    %c0_128 = arith.constant 0 : index
    %197 = vector.load %arg14[%c752, %c0_128] : memref<2400x10xf32, #tpu.memory_space<vmem>>, vector<10x10xf32>
    tpu.vector_store %arg14[%c752, %c0_128], %196 {strides = array<i32>} : memref<2400x10xf32, #tpu.memory_space<vmem>>, vector<10x10xf32>,
    %198 = vector.extract_strided_slice %99 {offsets = [18, 3], sizes = [10, 10], strides = [1, 1]} : vector<84x14xf32> to vector<10x10xf32>
    %c768_129 = arith.constant 768 : index
    %c0_130 = arith.constant 0 : index
    %199 = vector.load %arg14[%c768_129, %c0_130] : memref<2400x10xf32, #tpu.memory_space<vmem>>, vector<10x10xf32>
    tpu.vector_store %arg14[%c768_129, %c0_130], %198 {strides = array<i32>} : memref<2400x10xf32, #tpu.memory_space<vmem>>, vector<10x10xf32>,
    %200 = vector.extract_strided_slice %99 {offsets = [18, 4], sizes = [10, 10], strides = [1, 1]} : vector<84x14xf32> to vector<10x10xf32>
    %c784 = arith.constant 784 : index
    %c0_131 = arith.constant 0 : index
    %201 = vector.load %arg14[%c784, %c0_131] : memref<2400x10xf32, #tpu.memory_space<vmem>>, vector<10x10xf32>
    tpu.vector_store %arg14[%c784, %c0_131], %200 {strides = array<i32>} : memref<2400x10xf32, #tpu.memory_space<vmem>>, vector<10x10xf32>,
    %202 = vector.extract_strided_slice %99 {offsets = [28, 0], sizes = [10, 10], strides = [1, 1]} : vector<84x14xf32> to vector<10x10xf32>
    %c800 = arith.constant 800 : index
    %c0_132 = arith.constant 0 : index
    %203 = vector.load %arg14[%c800, %c0_132] : memref<2400x10xf32, #tpu.memory_space<vmem>>, vector<10x10xf32>
    tpu.vector_store %arg14[%c800, %c0_132], %202 {strides = array<i32>} : memref<2400x10xf32, #tpu.memory_space<vmem>>, vector<10x10xf32>,
    %204 = vector.extract_strided_slice %99 {offsets = [28, 1], sizes = [10, 10], strides = [1, 1]} : vector<84x14xf32> to vector<10x10xf32>
    %c816 = arith.constant 816 : index
    %c0_133 = arith.constant 0 : index
    %205 = vector.load %arg14[%c816, %c0_133] : memref<2400x10xf32, #tpu.memory_space<vmem>>, vector<10x10xf32>
    tpu.vector_store %arg14[%c816, %c0_133], %204 {strides = array<i32>} : memref<2400x10xf32, #tpu.memory_space<vmem>>, vector<10x10xf32>,
    %206 = vector.extract_strided_slice %99 {offsets = [28, 2], sizes = [10, 10], strides = [1, 1]} : vector<84x14xf32> to vector<10x10xf32>
    %c832 = arith.constant 832 : index
    %c0_134 = arith.constant 0 : index
    %207 = vector.load %arg14[%c832, %c0_134] : memref<2400x10xf32, #tpu.memory_space<vmem>>, vector<10x10xf32>
    tpu.vector_store %arg14[%c832, %c0_134], %206 {strides = array<i32>} : memref<2400x10xf32, #tpu.memory_space<vmem>>, vector<10x10xf32>,
    %208 = vector.extract_strided_slice %99 {offsets = [28, 3], sizes = [10, 10], strides = [1, 1]} : vector<84x14xf32> to vector<10x10xf32>
    %c848 = arith.constant 848 : index
    %c0_135 = arith.constant 0 : index
    %209 = vector.load %arg14[%c848, %c0_135] : memref<2400x10xf32, #tpu.memory_space<vmem>>, vector<10x10xf32>
    tpu.vector_store %arg14[%c848, %c0_135], %208 {strides = array<i32>} : memref<2400x10xf32, #tpu.memory_space<vmem>>, vector<10x10xf32>,
    %210 = vector.extract_strided_slice %99 {offsets = [28, 4], sizes = [10, 10], strides = [1, 1]} : vector<84x14xf32> to vector<10x10xf32>
    %c864 = arith.constant 864 : index
    %c0_136 = arith.constant 0 : index
    %211 = vector.load %arg14[%c864, %c0_136] : memref<2400x10xf32, #tpu.memory_space<vmem>>, vector<10x10xf32>
    tpu.vector_store %arg14[%c864, %c0_136], %210 {strides = array<i32>} : memref<2400x10xf32, #tpu.memory_space<vmem>>, vector<10x10xf32>,
    %212 = vector.extract_strided_slice %99 {offsets = [29, 0], sizes = [10, 10], strides = [1, 1]} : vector<84x14xf32> to vector<10x10xf32>
    %c880 = arith.constant 880 : index
    %c0_137 = arith.constant 0 : index
    %213 = vector.load %arg14[%c880, %c0_137] : memref<2400x10xf32, #tpu.memory_space<vmem>>, vector<10x10xf32>
    tpu.vector_store %arg14[%c880, %c0_137], %212 {strides = array<i32>} : memref<2400x10xf32, #tpu.memory_space<vmem>>, vector<10x10xf32>,
    %214 = vector.extract_strided_slice %99 {offsets = [29, 1], sizes = [10, 10], strides = [1, 1]} : vector<84x14xf32> to vector<10x10xf32>
    %c896 = arith.constant 896 : index
    %c0_138 = arith.constant 0 : index
    %215 = vector.load %arg14[%c896, %c0_138] : memref<2400x10xf32, #tpu.memory_space<vmem>>, vector<10x10xf32>
    tpu.vector_store %arg14[%c896, %c0_138], %214 {strides = array<i32>} : memref<2400x10xf32, #tpu.memory_space<vmem>>, vector<10x10xf32>,
    %216 = vector.extract_strided_slice %99 {offsets = [29, 2], sizes = [10, 10], strides = [1, 1]} : vector<84x14xf32> to vector<10x10xf32>
    %c912 = arith.constant 912 : index
    %c0_139 = arith.constant 0 : index
    %217 = vector.load %arg14[%c912, %c0_139] : memref<2400x10xf32, #tpu.memory_space<vmem>>, vector<10x10xf32>
    tpu.vector_store %arg14[%c912, %c0_139], %216 {strides = array<i32>} : memref<2400x10xf32, #tpu.memory_space<vmem>>, vector<10x10xf32>,
    %218 = vector.extract_strided_slice %99 {offsets = [29, 3], sizes = [10, 10], strides = [1, 1]} : vector<84x14xf32> to vector<10x10xf32>
    %c928 = arith.constant 928 : index
    %c0_140 = arith.constant 0 : index
    %219 = vector.load %arg14[%c928, %c0_140] : memref<2400x10xf32, #tpu.memory_space<vmem>>, vector<10x10xf32>
    tpu.vector_store %arg14[%c928, %c0_140], %218 {strides = array<i32>} : memref<2400x10xf32, #tpu.memory_space<vmem>>, vector<10x10xf32>,
    %220 = vector.extract_strided_slice %99 {offsets = [29, 4], sizes = [10, 10], strides = [1, 1]} : vector<84x14xf32> to vector<10x10xf32>
    %c944 = arith.constant 944 : index
    %c0_141 = arith.constant 0 : index
    %221 = vector.load %arg14[%c944, %c0_141] : memref<2400x10xf32, #tpu.memory_space<vmem>>, vector<10x10xf32>
    tpu.vector_store %arg14[%c944, %c0_141], %220 {strides = array<i32>} : memref<2400x10xf32, #tpu.memory_space<vmem>>, vector<10x10xf32>,
    %222 = vector.extract_strided_slice %99 {offsets = [30, 0], sizes = [10, 10], strides = [1, 1]} : vector<84x14xf32> to vector<10x10xf32>
    %c960 = arith.constant 960 : index
    %c0_142 = arith.constant 0 : index
    %223 = vector.load %arg14[%c960, %c0_142] : memref<2400x10xf32, #tpu.memory_space<vmem>>, vector<10x10xf32>
    tpu.vector_store %arg14[%c960, %c0_142], %222 {strides = array<i32>} : memref<2400x10xf32, #tpu.memory_space<vmem>>, vector<10x10xf32>,
    %224 = vector.extract_strided_slice %99 {offsets = [30, 1], sizes = [10, 10], strides = [1, 1]} : vector<84x14xf32> to vector<10x10xf32>
    %c976 = arith.constant 976 : index
    %c0_143 = arith.constant 0 : index
    %225 = vector.load %arg14[%c976, %c0_143] : memref<2400x10xf32, #tpu.memory_space<vmem>>, vector<10x10xf32>
    tpu.vector_store %arg14[%c976, %c0_143], %224 {strides = array<i32>} : memref<2400x10xf32, #tpu.memory_space<vmem>>, vector<10x10xf32>,
    %226 = vector.extract_strided_slice %99 {offsets = [30, 2], sizes = [10, 10], strides = [1, 1]} : vector<84x14xf32> to vector<10x10xf32>
    %c992 = arith.constant 992 : index
    %c0_144 = arith.constant 0 : index
    %227 = vector.load %arg14[%c992, %c0_144] : memref<2400x10xf32, #tpu.memory_space<vmem>>, vector<10x10xf32>
    tpu.vector_store %arg14[%c992, %c0_144], %226 {strides = array<i32>} : memref<2400x10xf32, #tpu.memory_space<vmem>>, vector<10x10xf32>,
    %228 = vector.extract_strided_slice %99 {offsets = [30, 3], sizes = [10, 10], strides = [1, 1]} : vector<84x14xf32> to vector<10x10xf32>
    %c1008 = arith.constant 1008 : index
    %c0_145 = arith.constant 0 : index
    %229 = vector.load %arg14[%c1008, %c0_145] : memref<2400x10xf32, #tpu.memory_space<vmem>>, vector<10x10xf32>
    tpu.vector_store %arg14[%c1008, %c0_145], %228 {strides = array<i32>} : memref<2400x10xf32, #tpu.memory_space<vmem>>, vector<10x10xf32>,
    %230 = vector.extract_strided_slice %99 {offsets = [30, 4], sizes = [10, 10], strides = [1, 1]} : vector<84x14xf32> to vector<10x10xf32>
    %c1024 = arith.constant 1024 : index
    %c0_146 = arith.constant 0 : index
    %231 = vector.load %arg14[%c1024, %c0_146] : memref<2400x10xf32, #tpu.memory_space<vmem>>, vector<10x10xf32>
    tpu.vector_store %arg14[%c1024, %c0_146], %230 {strides = array<i32>} : memref<2400x10xf32, #tpu.memory_space<vmem>>, vector<10x10xf32>,
    %232 = vector.extract_strided_slice %99 {offsets = [31, 0], sizes = [10, 10], strides = [1, 1]} : vector<84x14xf32> to vector<10x10xf32>
    %c1040 = arith.constant 1040 : index
    %c0_147 = arith.constant 0 : index
    %233 = vector.load %arg14[%c1040, %c0_147] : memref<2400x10xf32, #tpu.memory_space<vmem>>, vector<10x10xf32>
    tpu.vector_store %arg14[%c1040, %c0_147], %232 {strides = array<i32>} : memref<2400x10xf32, #tpu.memory_space<vmem>>, vector<10x10xf32>,
    %234 = vector.extract_strided_slice %99 {offsets = [31, 1], sizes = [10, 10], strides = [1, 1]} : vector<84x14xf32> to vector<10x10xf32>
    %c1056 = arith.constant 1056 : index
    %c0_148 = arith.constant 0 : index
    %235 = vector.load %arg14[%c1056, %c0_148] : memref<2400x10xf32, #tpu.memory_space<vmem>>, vector<10x10xf32>
    tpu.vector_store %arg14[%c1056, %c0_148], %234 {strides = array<i32>} : memref<2400x10xf32, #tpu.memory_space<vmem>>, vector<10x10xf32>,
    %236 = vector.extract_strided_slice %99 {offsets = [31, 2], sizes = [10, 10], strides = [1, 1]} : vector<84x14xf32> to vector<10x10xf32>
    %c1072 = arith.constant 1072 : index
    %c0_149 = arith.constant 0 : index
    %237 = vector.load %arg14[%c1072, %c0_149] : memref<2400x10xf32, #tpu.memory_space<vmem>>, vector<10x10xf32>
    tpu.vector_store %arg14[%c1072, %c0_149], %236 {strides = array<i32>} : memref<2400x10xf32, #tpu.memory_space<vmem>>, vector<10x10xf32>,
    %238 = vector.extract_strided_slice %99 {offsets = [31, 3], sizes = [10, 10], strides = [1, 1]} : vector<84x14xf32> to vector<10x10xf32>
    %c1088 = arith.constant 1088 : index
    %c0_150 = arith.constant 0 : index
    %239 = vector.load %arg14[%c1088, %c0_150] : memref<2400x10xf32, #tpu.memory_space<vmem>>, vector<10x10xf32>
    tpu.vector_store %arg14[%c1088, %c0_150], %238 {strides = array<i32>} : memref<2400x10xf32, #tpu.memory_space<vmem>>, vector<10x10xf32>,
    %240 = vector.extract_strided_slice %99 {offsets = [31, 4], sizes = [10, 10], strides = [1, 1]} : vector<84x14xf32> to vector<10x10xf32>
    %c1104 = arith.constant 1104 : index
    %c0_151 = arith.constant 0 : index
    %241 = vector.load %arg14[%c1104, %c0_151] : memref<2400x10xf32, #tpu.memory_space<vmem>>, vector<10x10xf32>
    tpu.vector_store %arg14[%c1104, %c0_151], %240 {strides = array<i32>} : memref<2400x10xf32, #tpu.memory_space<vmem>>, vector<10x10xf32>,
    %242 = vector.extract_strided_slice %99 {offsets = [32, 0], sizes = [10, 10], strides = [1, 1]} : vector<84x14xf32> to vector<10x10xf32>
    %c1120 = arith.constant 1120 : index
    %c0_152 = arith.constant 0 : index
    %243 = vector.load %arg14[%c1120, %c0_152] : memref<2400x10xf32, #tpu.memory_space<vmem>>, vector<10x10xf32>
    tpu.vector_store %arg14[%c1120, %c0_152], %242 {strides = array<i32>} : memref<2400x10xf32, #tpu.memory_space<vmem>>, vector<10x10xf32>,
    %244 = vector.extract_strided_slice %99 {offsets = [32, 1], sizes = [10, 10], strides = [1, 1]} : vector<84x14xf32> to vector<10x10xf32>
    %c1136 = arith.constant 1136 : index
    %c0_153 = arith.constant 0 : index
    %245 = vector.load %arg14[%c1136, %c0_153] : memref<2400x10xf32, #tpu.memory_space<vmem>>, vector<10x10xf32>
    tpu.vector_store %arg14[%c1136, %c0_153], %244 {strides = array<i32>} : memref<2400x10xf32, #tpu.memory_space<vmem>>, vector<10x10xf32>,
    %246 = vector.extract_strided_slice %99 {offsets = [32, 2], sizes = [10, 10], strides = [1, 1]} : vector<84x14xf32> to vector<10x10xf32>
    %c1152 = arith.constant 1152 : index
    %c0_154 = arith.constant 0 : index
    %247 = vector.load %arg14[%c1152, %c0_154] : memref<2400x10xf32, #tpu.memory_space<vmem>>, vector<10x10xf32>
    tpu.vector_store %arg14[%c1152, %c0_154], %246 {strides = array<i32>} : memref<2400x10xf32, #tpu.memory_space<vmem>>, vector<10x10xf32>,
    %248 = vector.extract_strided_slice %99 {offsets = [32, 3], sizes = [10, 10], strides = [1, 1]} : vector<84x14xf32> to vector<10x10xf32>
    %c1168 = arith.constant 1168 : index
    %c0_155 = arith.constant 0 : index
    %249 = vector.load %arg14[%c1168, %c0_155] : memref<2400x10xf32, #tpu.memory_space<vmem>>, vector<10x10xf32>
    tpu.vector_store %arg14[%c1168, %c0_155], %248 {strides = array<i32>} : memref<2400x10xf32, #tpu.memory_space<vmem>>, vector<10x10xf32>,
    %250 = vector.extract_strided_slice %99 {offsets = [32, 4], sizes = [10, 10], strides = [1, 1]} : vector<84x14xf32> to vector<10x10xf32>
    %c1184 = arith.constant 1184 : index
    %c0_156 = arith.constant 0 : index
    %251 = vector.load %arg14[%c1184, %c0_156] : memref<2400x10xf32, #tpu.memory_space<vmem>>, vector<10x10xf32>
    tpu.vector_store %arg14[%c1184, %c0_156], %250 {strides = array<i32>} : memref<2400x10xf32, #tpu.memory_space<vmem>>, vector<10x10xf32>,
    %252 = vector.extract_strided_slice %99 {offsets = [42, 0], sizes = [10, 10], strides = [1, 1]} : vector<84x14xf32> to vector<10x10xf32>
    %c1200 = arith.constant 1200 : index
    %c0_157 = arith.constant 0 : index
    %253 = vector.load %arg14[%c1200, %c0_157] : memref<2400x10xf32, #tpu.memory_space<vmem>>, vector<10x10xf32>
    tpu.vector_store %arg14[%c1200, %c0_157], %252 {strides = array<i32>} : memref<2400x10xf32, #tpu.memory_space<vmem>>, vector<10x10xf32>,
    %254 = vector.extract_strided_slice %99 {offsets = [42, 1], sizes = [10, 10], strides = [1, 1]} : vector<84x14xf32> to vector<10x10xf32>
    %c1216 = arith.constant 1216 : index
    %c0_158 = arith.constant 0 : index
    %255 = vector.load %arg14[%c1216, %c0_158] : memref<2400x10xf32, #tpu.memory_space<vmem>>, vector<10x10xf32>
    tpu.vector_store %arg14[%c1216, %c0_158], %254 {strides = array<i32>} : memref<2400x10xf32, #tpu.memory_space<vmem>>, vector<10x10xf32>,
    %256 = vector.extract_strided_slice %99 {offsets = [42, 2], sizes = [10, 10], strides = [1, 1]} : vector<84x14xf32> to vector<10x10xf32>
    %c1232 = arith.constant 1232 : index
    %c0_159 = arith.constant 0 : index
    %257 = vector.load %arg14[%c1232, %c0_159] : memref<2400x10xf32, #tpu.memory_space<vmem>>, vector<10x10xf32>
    tpu.vector_store %arg14[%c1232, %c0_159], %256 {strides = array<i32>} : memref<2400x10xf32, #tpu.memory_space<vmem>>, vector<10x10xf32>,
    %258 = vector.extract_strided_slice %99 {offsets = [42, 3], sizes = [10, 10], strides = [1, 1]} : vector<84x14xf32> to vector<10x10xf32>
    %c1248 = arith.constant 1248 : index
    %c0_160 = arith.constant 0 : index
    %259 = vector.load %arg14[%c1248, %c0_160] : memref<2400x10xf32, #tpu.memory_space<vmem>>, vector<10x10xf32>
    tpu.vector_store %arg14[%c1248, %c0_160], %258 {strides = array<i32>} : memref<2400x10xf32, #tpu.memory_space<vmem>>, vector<10x10xf32>,
    %260 = vector.extract_strided_slice %99 {offsets = [42, 4], sizes = [10, 10], strides = [1, 1]} : vector<84x14xf32> to vector<10x10xf32>
    %c1264 = arith.constant 1264 : index
    %c0_161 = arith.constant 0 : index
    %261 = vector.load %arg14[%c1264, %c0_161] : memref<2400x10xf32, #tpu.memory_space<vmem>>, vector<10x10xf32>
    tpu.vector_store %arg14[%c1264, %c0_161], %260 {strides = array<i32>} : memref<2400x10xf32, #tpu.memory_space<vmem>>, vector<10x10xf32>,
    %262 = vector.extract_strided_slice %99 {offsets = [43, 0], sizes = [10, 10], strides = [1, 1]} : vector<84x14xf32> to vector<10x10xf32>
    %c1280 = arith.constant 1280 : index
    %c0_162 = arith.constant 0 : index
    %263 = vector.load %arg14[%c1280, %c0_162] : memref<2400x10xf32, #tpu.memory_space<vmem>>, vector<10x10xf32>
    tpu.vector_store %arg14[%c1280, %c0_162], %262 {strides = array<i32>} : memref<2400x10xf32, #tpu.memory_space<vmem>>, vector<10x10xf32>,
    %264 = vector.extract_strided_slice %99 {offsets = [43, 1], sizes = [10, 10], strides = [1, 1]} : vector<84x14xf32> to vector<10x10xf32>
    %c1296 = arith.constant 1296 : index
    %c0_163 = arith.constant 0 : index
    %265 = vector.load %arg14[%c1296, %c0_163] : memref<2400x10xf32, #tpu.memory_space<vmem>>, vector<10x10xf32>
    tpu.vector_store %arg14[%c1296, %c0_163], %264 {strides = array<i32>} : memref<2400x10xf32, #tpu.memory_space<vmem>>, vector<10x10xf32>,
    %266 = vector.extract_strided_slice %99 {offsets = [43, 2], sizes = [10, 10], strides = [1, 1]} : vector<84x14xf32> to vector<10x10xf32>
    %c1312 = arith.constant 1312 : index
    %c0_164 = arith.constant 0 : index
    %267 = vector.load %arg14[%c1312, %c0_164] : memref<2400x10xf32, #tpu.memory_space<vmem>>, vector<10x10xf32>
    tpu.vector_store %arg14[%c1312, %c0_164], %266 {strides = array<i32>} : memref<2400x10xf32, #tpu.memory_space<vmem>>, vector<10x10xf32>,
    %268 = vector.extract_strided_slice %99 {offsets = [43, 3], sizes = [10, 10], strides = [1, 1]} : vector<84x14xf32> to vector<10x10xf32>
    %c1328 = arith.constant 1328 : index
    %c0_165 = arith.constant 0 : index
    %269 = vector.load %arg14[%c1328, %c0_165] : memref<2400x10xf32, #tpu.memory_space<vmem>>, vector<10x10xf32>
    tpu.vector_store %arg14[%c1328, %c0_165], %268 {strides = array<i32>} : memref<2400x10xf32, #tpu.memory_space<vmem>>, vector<10x10xf32>,
    %270 = vector.extract_strided_slice %99 {offsets = [43, 4], sizes = [10, 10], strides = [1, 1]} : vector<84x14xf32> to vector<10x10xf32>
    %c1344 = arith.constant 1344 : index
    %c0_166 = arith.constant 0 : index
    %271 = vector.load %arg14[%c1344, %c0_166] : memref<2400x10xf32, #tpu.memory_space<vmem>>, vector<10x10xf32>
    tpu.vector_store %arg14[%c1344, %c0_166], %270 {strides = array<i32>} : memref<2400x10xf32, #tpu.memory_space<vmem>>, vector<10x10xf32>,
    %272 = vector.extract_strided_slice %99 {offsets = [44, 0], sizes = [10, 10], strides = [1, 1]} : vector<84x14xf32> to vector<10x10xf32>
    %c1360 = arith.constant 1360 : index
    %c0_167 = arith.constant 0 : index
    %273 = vector.load %arg14[%c1360, %c0_167] : memref<2400x10xf32, #tpu.memory_space<vmem>>, vector<10x10xf32>
    tpu.vector_store %arg14[%c1360, %c0_167], %272 {strides = array<i32>} : memref<2400x10xf32, #tpu.memory_space<vmem>>, vector<10x10xf32>,
    %274 = vector.extract_strided_slice %99 {offsets = [44, 1], sizes = [10, 10], strides = [1, 1]} : vector<84x14xf32> to vector<10x10xf32>
    %c1376 = arith.constant 1376 : index
    %c0_168 = arith.constant 0 : index
    %275 = vector.load %arg14[%c1376, %c0_168] : memref<2400x10xf32, #tpu.memory_space<vmem>>, vector<10x10xf32>
    tpu.vector_store %arg14[%c1376, %c0_168], %274 {strides = array<i32>} : memref<2400x10xf32, #tpu.memory_space<vmem>>, vector<10x10xf32>,
    %276 = vector.extract_strided_slice %99 {offsets = [44, 2], sizes = [10, 10], strides = [1, 1]} : vector<84x14xf32> to vector<10x10xf32>
    %c1392 = arith.constant 1392 : index
    %c0_169 = arith.constant 0 : index
    %277 = vector.load %arg14[%c1392, %c0_169] : memref<2400x10xf32, #tpu.memory_space<vmem>>, vector<10x10xf32>
    tpu.vector_store %arg14[%c1392, %c0_169], %276 {strides = array<i32>} : memref<2400x10xf32, #tpu.memory_space<vmem>>, vector<10x10xf32>,
    %278 = vector.extract_strided_slice %99 {offsets = [44, 3], sizes = [10, 10], strides = [1, 1]} : vector<84x14xf32> to vector<10x10xf32>
    %c1408 = arith.constant 1408 : index
    %c0_170 = arith.constant 0 : index
    %279 = vector.load %arg14[%c1408, %c0_170] : memref<2400x10xf32, #tpu.memory_space<vmem>>, vector<10x10xf32>
    tpu.vector_store %arg14[%c1408, %c0_170], %278 {strides = array<i32>} : memref<2400x10xf32, #tpu.memory_space<vmem>>, vector<10x10xf32>,
    %280 = vector.extract_strided_slice %99 {offsets = [44, 4], sizes = [10, 10], strides = [1, 1]} : vector<84x14xf32> to vector<10x10xf32>
    %c1424 = arith.constant 1424 : index
    %c0_171 = arith.constant 0 : index
    %281 = vector.load %arg14[%c1424, %c0_171] : memref<2400x10xf32, #tpu.memory_space<vmem>>, vector<10x10xf32>
    tpu.vector_store %arg14[%c1424, %c0_171], %280 {strides = array<i32>} : memref<2400x10xf32, #tpu.memory_space<vmem>>, vector<10x10xf32>,
    %282 = vector.extract_strided_slice %99 {offsets = [45, 0], sizes = [10, 10], strides = [1, 1]} : vector<84x14xf32> to vector<10x10xf32>
    %c1440 = arith.constant 1440 : index
    %c0_172 = arith.constant 0 : index
    %283 = vector.load %arg14[%c1440, %c0_172] : memref<2400x10xf32, #tpu.memory_space<vmem>>, vector<10x10xf32>
    tpu.vector_store %arg14[%c1440, %c0_172], %282 {strides = array<i32>} : memref<2400x10xf32, #tpu.memory_space<vmem>>, vector<10x10xf32>,
    %284 = vector.extract_strided_slice %99 {offsets = [45, 1], sizes = [10, 10], strides = [1, 1]} : vector<84x14xf32> to vector<10x10xf32>
    %c1456 = arith.constant 1456 : index
    %c0_173 = arith.constant 0 : index
    %285 = vector.load %arg14[%c1456, %c0_173] : memref<2400x10xf32, #tpu.memory_space<vmem>>, vector<10x10xf32>
    tpu.vector_store %arg14[%c1456, %c0_173], %284 {strides = array<i32>} : memref<2400x10xf32, #tpu.memory_space<vmem>>, vector<10x10xf32>,
    %286 = vector.extract_strided_slice %99 {offsets = [45, 2], sizes = [10, 10], strides = [1, 1]} : vector<84x14xf32> to vector<10x10xf32>
    %c1472 = arith.constant 1472 : index
    %c0_174 = arith.constant 0 : index
    %287 = vector.load %arg14[%c1472, %c0_174] : memref<2400x10xf32, #tpu.memory_space<vmem>>, vector<10x10xf32>
    tpu.vector_store %arg14[%c1472, %c0_174], %286 {strides = array<i32>} : memref<2400x10xf32, #tpu.memory_space<vmem>>, vector<10x10xf32>,
    %288 = vector.extract_strided_slice %99 {offsets = [45, 3], sizes = [10, 10], strides = [1, 1]} : vector<84x14xf32> to vector<10x10xf32>
    %c1488 = arith.constant 1488 : index
    %c0_175 = arith.constant 0 : index
    %289 = vector.load %arg14[%c1488, %c0_175] : memref<2400x10xf32, #tpu.memory_space<vmem>>, vector<10x10xf32>
    tpu.vector_store %arg14[%c1488, %c0_175], %288 {strides = array<i32>} : memref<2400x10xf32, #tpu.memory_space<vmem>>, vector<10x10xf32>,
    %290 = vector.extract_strided_slice %99 {offsets = [45, 4], sizes = [10, 10], strides = [1, 1]} : vector<84x14xf32> to vector<10x10xf32>
    %c1504 = arith.constant 1504 : index
    %c0_176 = arith.constant 0 : index
    %291 = vector.load %arg14[%c1504, %c0_176] : memref<2400x10xf32, #tpu.memory_space<vmem>>, vector<10x10xf32>
    tpu.vector_store %arg14[%c1504, %c0_176], %290 {strides = array<i32>} : memref<2400x10xf32, #tpu.memory_space<vmem>>, vector<10x10xf32>,
    %292 = vector.extract_strided_slice %99 {offsets = [46, 0], sizes = [10, 10], strides = [1, 1]} : vector<84x14xf32> to vector<10x10xf32>
    %c1520 = arith.constant 1520 : index
    %c0_177 = arith.constant 0 : index
    %293 = vector.load %arg14[%c1520, %c0_177] : memref<2400x10xf32, #tpu.memory_space<vmem>>, vector<10x10xf32>
    tpu.vector_store %arg14[%c1520, %c0_177], %292 {strides = array<i32>} : memref<2400x10xf32, #tpu.memory_space<vmem>>, vector<10x10xf32>,
    %294 = vector.extract_strided_slice %99 {offsets = [46, 1], sizes = [10, 10], strides = [1, 1]} : vector<84x14xf32> to vector<10x10xf32>
    %c1536 = arith.constant 1536 : index
    %c0_178 = arith.constant 0 : index
    %295 = vector.load %arg14[%c1536, %c0_178] : memref<2400x10xf32, #tpu.memory_space<vmem>>, vector<10x10xf32>
    tpu.vector_store %arg14[%c1536, %c0_178], %294 {strides = array<i32>} : memref<2400x10xf32, #tpu.memory_space<vmem>>, vector<10x10xf32>,
    %296 = vector.extract_strided_slice %99 {offsets = [46, 2], sizes = [10, 10], strides = [1, 1]} : vector<84x14xf32> to vector<10x10xf32>
    %c1552 = arith.constant 1552 : index
    %c0_179 = arith.constant 0 : index
    %297 = vector.load %arg14[%c1552, %c0_179] : memref<2400x10xf32, #tpu.memory_space<vmem>>, vector<10x10xf32>
    tpu.vector_store %arg14[%c1552, %c0_179], %296 {strides = array<i32>} : memref<2400x10xf32, #tpu.memory_space<vmem>>, vector<10x10xf32>,
    %298 = vector.extract_strided_slice %99 {offsets = [46, 3], sizes = [10, 10], strides = [1, 1]} : vector<84x14xf32> to vector<10x10xf32>
    %c1568 = arith.constant 1568 : index
    %c0_180 = arith.constant 0 : index
    %299 = vector.load %arg14[%c1568, %c0_180] : memref<2400x10xf32, #tpu.memory_space<vmem>>, vector<10x10xf32>
    tpu.vector_store %arg14[%c1568, %c0_180], %298 {strides = array<i32>} : memref<2400x10xf32, #tpu.memory_space<vmem>>, vector<10x10xf32>,
    %300 = vector.extract_strided_slice %99 {offsets = [46, 4], sizes = [10, 10], strides = [1, 1]} : vector<84x14xf32> to vector<10x10xf32>
    %c1584 = arith.constant 1584 : index
    %c0_181 = arith.constant 0 : index
    %301 = vector.load %arg14[%c1584, %c0_181] : memref<2400x10xf32, #tpu.memory_space<vmem>>, vector<10x10xf32>
    tpu.vector_store %arg14[%c1584, %c0_181], %300 {strides = array<i32>} : memref<2400x10xf32, #tpu.memory_space<vmem>>, vector<10x10xf32>,
    %302 = vector.extract_strided_slice %99 {offsets = [56, 0], sizes = [10, 10], strides = [1, 1]} : vector<84x14xf32> to vector<10x10xf32>
    %c1600 = arith.constant 1600 : index
    %c0_182 = arith.constant 0 : index
    %303 = vector.load %arg14[%c1600, %c0_182] : memref<2400x10xf32, #tpu.memory_space<vmem>>, vector<10x10xf32>
    tpu.vector_store %arg14[%c1600, %c0_182], %302 {strides = array<i32>} : memref<2400x10xf32, #tpu.memory_space<vmem>>, vector<10x10xf32>,
    %304 = vector.extract_strided_slice %99 {offsets = [56, 1], sizes = [10, 10], strides = [1, 1]} : vector<84x14xf32> to vector<10x10xf32>
    %c1616 = arith.constant 1616 : index
    %c0_183 = arith.constant 0 : index
    %305 = vector.load %arg14[%c1616, %c0_183] : memref<2400x10xf32, #tpu.memory_space<vmem>>, vector<10x10xf32>
    tpu.vector_store %arg14[%c1616, %c0_183], %304 {strides = array<i32>} : memref<2400x10xf32, #tpu.memory_space<vmem>>, vector<10x10xf32>,
    %306 = vector.extract_strided_slice %99 {offsets = [56, 2], sizes = [10, 10], strides = [1, 1]} : vector<84x14xf32> to vector<10x10xf32>
    %c1632 = arith.constant 1632 : index
    %c0_184 = arith.constant 0 : index
    %307 = vector.load %arg14[%c1632, %c0_184] : memref<2400x10xf32, #tpu.memory_space<vmem>>, vector<10x10xf32>
    tpu.vector_store %arg14[%c1632, %c0_184], %306 {strides = array<i32>} : memref<2400x10xf32, #tpu.memory_space<vmem>>, vector<10x10xf32>,
    %308 = vector.extract_strided_slice %99 {offsets = [56, 3], sizes = [10, 10], strides = [1, 1]} : vector<84x14xf32> to vector<10x10xf32>
    %c1648 = arith.constant 1648 : index
    %c0_185 = arith.constant 0 : index
    %309 = vector.load %arg14[%c1648, %c0_185] : memref<2400x10xf32, #tpu.memory_space<vmem>>, vector<10x10xf32>
    tpu.vector_store %arg14[%c1648, %c0_185], %308 {strides = array<i32>} : memref<2400x10xf32, #tpu.memory_space<vmem>>, vector<10x10xf32>,
    %310 = vector.extract_strided_slice %99 {offsets = [56, 4], sizes = [10, 10], strides = [1, 1]} : vector<84x14xf32> to vector<10x10xf32>
    %c1664 = arith.constant 1664 : index
    %c0_186 = arith.constant 0 : index
    %311 = vector.load %arg14[%c1664, %c0_186] : memref<2400x10xf32, #tpu.memory_space<vmem>>, vector<10x10xf32>
    tpu.vector_store %arg14[%c1664, %c0_186], %310 {strides = array<i32>} : memref<2400x10xf32, #tpu.memory_space<vmem>>, vector<10x10xf32>,
    %312 = vector.extract_strided_slice %99 {offsets = [57, 0], sizes = [10, 10], strides = [1, 1]} : vector<84x14xf32> to vector<10x10xf32>
    %c1680 = arith.constant 1680 : index
    %c0_187 = arith.constant 0 : index
    %313 = vector.load %arg14[%c1680, %c0_187] : memref<2400x10xf32, #tpu.memory_space<vmem>>, vector<10x10xf32>
    tpu.vector_store %arg14[%c1680, %c0_187], %312 {strides = array<i32>} : memref<2400x10xf32, #tpu.memory_space<vmem>>, vector<10x10xf32>,
    %314 = vector.extract_strided_slice %99 {offsets = [57, 1], sizes = [10, 10], strides = [1, 1]} : vector<84x14xf32> to vector<10x10xf32>
    %c1696 = arith.constant 1696 : index
    %c0_188 = arith.constant 0 : index
    %315 = vector.load %arg14[%c1696, %c0_188] : memref<2400x10xf32, #tpu.memory_space<vmem>>, vector<10x10xf32>
    tpu.vector_store %arg14[%c1696, %c0_188], %314 {strides = array<i32>} : memref<2400x10xf32, #tpu.memory_space<vmem>>, vector<10x10xf32>,
    %316 = vector.extract_strided_slice %99 {offsets = [57, 2], sizes = [10, 10], strides = [1, 1]} : vector<84x14xf32> to vector<10x10xf32>
    %c1712 = arith.constant 1712 : index
    %c0_189 = arith.constant 0 : index
    %317 = vector.load %arg14[%c1712, %c0_189] : memref<2400x10xf32, #tpu.memory_space<vmem>>, vector<10x10xf32>
    tpu.vector_store %arg14[%c1712, %c0_189], %316 {strides = array<i32>} : memref<2400x10xf32, #tpu.memory_space<vmem>>, vector<10x10xf32>,
    %318 = vector.extract_strided_slice %99 {offsets = [57, 3], sizes = [10, 10], strides = [1, 1]} : vector<84x14xf32> to vector<10x10xf32>
    %c1728 = arith.constant 1728 : index
    %c0_190 = arith.constant 0 : index
    %319 = vector.load %arg14[%c1728, %c0_190] : memref<2400x10xf32, #tpu.memory_space<vmem>>, vector<10x10xf32>
    tpu.vector_store %arg14[%c1728, %c0_190], %318 {strides = array<i32>} : memref<2400x10xf32, #tpu.memory_space<vmem>>, vector<10x10xf32>,
    %320 = vector.extract_strided_slice %99 {offsets = [57, 4], sizes = [10, 10], strides = [1, 1]} : vector<84x14xf32> to vector<10x10xf32>
    %c1744 = arith.constant 1744 : index
    %c0_191 = arith.constant 0 : index
    %321 = vector.load %arg14[%c1744, %c0_191] : memref<2400x10xf32, #tpu.memory_space<vmem>>, vector<10x10xf32>
    tpu.vector_store %arg14[%c1744, %c0_191], %320 {strides = array<i32>} : memref<2400x10xf32, #tpu.memory_space<vmem>>, vector<10x10xf32>,
    %322 = vector.extract_strided_slice %99 {offsets = [58, 0], sizes = [10, 10], strides = [1, 1]} : vector<84x14xf32> to vector<10x10xf32>
    %c1760 = arith.constant 1760 : index
    %c0_192 = arith.constant 0 : index
    %323 = vector.load %arg14[%c1760, %c0_192] : memref<2400x10xf32, #tpu.memory_space<vmem>>, vector<10x10xf32>
    tpu.vector_store %arg14[%c1760, %c0_192], %322 {strides = array<i32>} : memref<2400x10xf32, #tpu.memory_space<vmem>>, vector<10x10xf32>,
    %324 = vector.extract_strided_slice %99 {offsets = [58, 1], sizes = [10, 10], strides = [1, 1]} : vector<84x14xf32> to vector<10x10xf32>
    %c1776 = arith.constant 1776 : index
    %c0_193 = arith.constant 0 : index
    %325 = vector.load %arg14[%c1776, %c0_193] : memref<2400x10xf32, #tpu.memory_space<vmem>>, vector<10x10xf32>
    tpu.vector_store %arg14[%c1776, %c0_193], %324 {strides = array<i32>} : memref<2400x10xf32, #tpu.memory_space<vmem>>, vector<10x10xf32>,
    %326 = vector.extract_strided_slice %99 {offsets = [58, 2], sizes = [10, 10], strides = [1, 1]} : vector<84x14xf32> to vector<10x10xf32>
    %c1792 = arith.constant 1792 : index
    %c0_194 = arith.constant 0 : index
    %327 = vector.load %arg14[%c1792, %c0_194] : memref<2400x10xf32, #tpu.memory_space<vmem>>, vector<10x10xf32>
    tpu.vector_store %arg14[%c1792, %c0_194], %326 {strides = array<i32>} : memref<2400x10xf32, #tpu.memory_space<vmem>>, vector<10x10xf32>,
    %328 = vector.extract_strided_slice %99 {offsets = [58, 3], sizes = [10, 10], strides = [1, 1]} : vector<84x14xf32> to vector<10x10xf32>
    %c1808 = arith.constant 1808 : index
    %c0_195 = arith.constant 0 : index
    %329 = vector.load %arg14[%c1808, %c0_195] : memref<2400x10xf32, #tpu.memory_space<vmem>>, vector<10x10xf32>
    tpu.vector_store %arg14[%c1808, %c0_195], %328 {strides = array<i32>} : memref<2400x10xf32, #tpu.memory_space<vmem>>, vector<10x10xf32>,
    %330 = vector.extract_strided_slice %99 {offsets = [58, 4], sizes = [10, 10], strides = [1, 1]} : vector<84x14xf32> to vector<10x10xf32>
    %c1824 = arith.constant 1824 : index
    %c0_196 = arith.constant 0 : index
    %331 = vector.load %arg14[%c1824, %c0_196] : memref<2400x10xf32, #tpu.memory_space<vmem>>, vector<10x10xf32>
    tpu.vector_store %arg14[%c1824, %c0_196], %330 {strides = array<i32>} : memref<2400x10xf32, #tpu.memory_space<vmem>>, vector<10x10xf32>,
    %332 = vector.extract_strided_slice %99 {offsets = [59, 0], sizes = [10, 10], strides = [1, 1]} : vector<84x14xf32> to vector<10x10xf32>
    %c1840 = arith.constant 1840 : index
    %c0_197 = arith.constant 0 : index
    %333 = vector.load %arg14[%c1840, %c0_197] : memref<2400x10xf32, #tpu.memory_space<vmem>>, vector<10x10xf32>
    tpu.vector_store %arg14[%c1840, %c0_197], %332 {strides = array<i32>} : memref<2400x10xf32, #tpu.memory_space<vmem>>, vector<10x10xf32>,
    %334 = vector.extract_strided_slice %99 {offsets = [59, 1], sizes = [10, 10], strides = [1, 1]} : vector<84x14xf32> to vector<10x10xf32>
    %c1856 = arith.constant 1856 : index
    %c0_198 = arith.constant 0 : index
    %335 = vector.load %arg14[%c1856, %c0_198] : memref<2400x10xf32, #tpu.memory_space<vmem>>, vector<10x10xf32>
    tpu.vector_store %arg14[%c1856, %c0_198], %334 {strides = array<i32>} : memref<2400x10xf32, #tpu.memory_space<vmem>>, vector<10x10xf32>,
    %336 = vector.extract_strided_slice %99 {offsets = [59, 2], sizes = [10, 10], strides = [1, 1]} : vector<84x14xf32> to vector<10x10xf32>
    %c1872 = arith.constant 1872 : index
    %c0_199 = arith.constant 0 : index
    %337 = vector.load %arg14[%c1872, %c0_199] : memref<2400x10xf32, #tpu.memory_space<vmem>>, vector<10x10xf32>
    tpu.vector_store %arg14[%c1872, %c0_199], %336 {strides = array<i32>} : memref<2400x10xf32, #tpu.memory_space<vmem>>, vector<10x10xf32>,
    %338 = vector.extract_strided_slice %99 {offsets = [59, 3], sizes = [10, 10], strides = [1, 1]} : vector<84x14xf32> to vector<10x10xf32>
    %c1888 = arith.constant 1888 : index
    %c0_200 = arith.constant 0 : index
    %339 = vector.load %arg14[%c1888, %c0_200] : memref<2400x10xf32, #tpu.memory_space<vmem>>, vector<10x10xf32>
    tpu.vector_store %arg14[%c1888, %c0_200], %338 {strides = array<i32>} : memref<2400x10xf32, #tpu.memory_space<vmem>>, vector<10x10xf32>,
    %340 = vector.extract_strided_slice %99 {offsets = [59, 4], sizes = [10, 10], strides = [1, 1]} : vector<84x14xf32> to vector<10x10xf32>
    %c1904 = arith.constant 1904 : index
    %c0_201 = arith.constant 0 : index
    %341 = vector.load %arg14[%c1904, %c0_201] : memref<2400x10xf32, #tpu.memory_space<vmem>>, vector<10x10xf32>
    tpu.vector_store %arg14[%c1904, %c0_201], %340 {strides = array<i32>} : memref<2400x10xf32, #tpu.memory_space<vmem>>, vector<10x10xf32>,
    %342 = vector.extract_strided_slice %99 {offsets = [60, 0], sizes = [10, 10], strides = [1, 1]} : vector<84x14xf32> to vector<10x10xf32>
    %c1920 = arith.constant 1920 : index
    %c0_202 = arith.constant 0 : index
    %343 = vector.load %arg14[%c1920, %c0_202] : memref<2400x10xf32, #tpu.memory_space<vmem>>, vector<10x10xf32>
    tpu.vector_store %arg14[%c1920, %c0_202], %342 {strides = array<i32>} : memref<2400x10xf32, #tpu.memory_space<vmem>>, vector<10x10xf32>,
    %344 = vector.extract_strided_slice %99 {offsets = [60, 1], sizes = [10, 10], strides = [1, 1]} : vector<84x14xf32> to vector<10x10xf32>
    %c1936 = arith.constant 1936 : index
    %c0_203 = arith.constant 0 : index
    %345 = vector.load %arg14[%c1936, %c0_203] : memref<2400x10xf32, #tpu.memory_space<vmem>>, vector<10x10xf32>
    tpu.vector_store %arg14[%c1936, %c0_203], %344 {strides = array<i32>} : memref<2400x10xf32, #tpu.memory_space<vmem>>, vector<10x10xf32>,
    %346 = vector.extract_strided_slice %99 {offsets = [60, 2], sizes = [10, 10], strides = [1, 1]} : vector<84x14xf32> to vector<10x10xf32>
    %c1952 = arith.constant 1952 : index
    %c0_204 = arith.constant 0 : index
    %347 = vector.load %arg14[%c1952, %c0_204] : memref<2400x10xf32, #tpu.memory_space<vmem>>, vector<10x10xf32>
    tpu.vector_store %arg14[%c1952, %c0_204], %346 {strides = array<i32>} : memref<2400x10xf32, #tpu.memory_space<vmem>>, vector<10x10xf32>,
    %348 = vector.extract_strided_slice %99 {offsets = [60, 3], sizes = [10, 10], strides = [1, 1]} : vector<84x14xf32> to vector<10x10xf32>
    %c1968 = arith.constant 1968 : index
    %c0_205 = arith.constant 0 : index
    %349 = vector.load %arg14[%c1968, %c0_205] : memref<2400x10xf32, #tpu.memory_space<vmem>>, vector<10x10xf32>
    tpu.vector_store %arg14[%c1968, %c0_205], %348 {strides = array<i32>} : memref<2400x10xf32, #tpu.memory_space<vmem>>, vector<10x10xf32>,
    %350 = vector.extract_strided_slice %99 {offsets = [60, 4], sizes = [10, 10], strides = [1, 1]} : vector<84x14xf32> to vector<10x10xf32>
    %c1984 = arith.constant 1984 : index
    %c0_206 = arith.constant 0 : index
    %351 = vector.load %arg14[%c1984, %c0_206] : memref<2400x10xf32, #tpu.memory_space<vmem>>, vector<10x10xf32>
    tpu.vector_store %arg14[%c1984, %c0_206], %350 {strides = array<i32>} : memref<2400x10xf32, #tpu.memory_space<vmem>>, vector<10x10xf32>,
    %352 = vector.extract_strided_slice %99 {offsets = [70, 0], sizes = [10, 10], strides = [1, 1]} : vector<84x14xf32> to vector<10x10xf32>
    %c2000 = arith.constant 2000 : index
    %c0_207 = arith.constant 0 : index
    %353 = vector.load %arg14[%c2000, %c0_207] : memref<2400x10xf32, #tpu.memory_space<vmem>>, vector<10x10xf32>
    tpu.vector_store %arg14[%c2000, %c0_207], %352 {strides = array<i32>} : memref<2400x10xf32, #tpu.memory_space<vmem>>, vector<10x10xf32>,
    %354 = vector.extract_strided_slice %99 {offsets = [70, 1], sizes = [10, 10], strides = [1, 1]} : vector<84x14xf32> to vector<10x10xf32>
    %c2016 = arith.constant 2016 : index
    %c0_208 = arith.constant 0 : index
    %355 = vector.load %arg14[%c2016, %c0_208] : memref<2400x10xf32, #tpu.memory_space<vmem>>, vector<10x10xf32>
    tpu.vector_store %arg14[%c2016, %c0_208], %354 {strides = array<i32>} : memref<2400x10xf32, #tpu.memory_space<vmem>>, vector<10x10xf32>,
    %356 = vector.extract_strided_slice %99 {offsets = [70, 2], sizes = [10, 10], strides = [1, 1]} : vector<84x14xf32> to vector<10x10xf32>
    %c2032 = arith.constant 2032 : index
    %c0_209 = arith.constant 0 : index
    %357 = vector.load %arg14[%c2032, %c0_209] : memref<2400x10xf32, #tpu.memory_space<vmem>>, vector<10x10xf32>
    tpu.vector_store %arg14[%c2032, %c0_209], %356 {strides = array<i32>} : memref<2400x10xf32, #tpu.memory_space<vmem>>, vector<10x10xf32>,
    %358 = vector.extract_strided_slice %99 {offsets = [70, 3], sizes = [10, 10], strides = [1, 1]} : vector<84x14xf32> to vector<10x10xf32>
    %c2048 = arith.constant 2048 : index
    %c0_210 = arith.constant 0 : index
    %359 = vector.load %arg14[%c2048, %c0_210] : memref<2400x10xf32, #tpu.memory_space<vmem>>, vector<10x10xf32>
    tpu.vector_store %arg14[%c2048, %c0_210], %358 {strides = array<i32>} : memref<2400x10xf32, #tpu.memory_space<vmem>>, vector<10x10xf32>,
    %360 = vector.extract_strided_slice %99 {offsets = [70, 4], sizes = [10, 10], strides = [1, 1]} : vector<84x14xf32> to vector<10x10xf32>
    %c2064 = arith.constant 2064 : index
    %c0_211 = arith.constant 0 : index
    %361 = vector.load %arg14[%c2064, %c0_211] : memref<2400x10xf32, #tpu.memory_space<vmem>>, vector<10x10xf32>
    tpu.vector_store %arg14[%c2064, %c0_211], %360 {strides = array<i32>} : memref<2400x10xf32, #tpu.memory_space<vmem>>, vector<10x10xf32>,
    %362 = vector.extract_strided_slice %99 {offsets = [71, 0], sizes = [10, 10], strides = [1, 1]} : vector<84x14xf32> to vector<10x10xf32>
    %c2080 = arith.constant 2080 : index
    %c0_212 = arith.constant 0 : index
    %363 = vector.load %arg14[%c2080, %c0_212] : memref<2400x10xf32, #tpu.memory_space<vmem>>, vector<10x10xf32>
    tpu.vector_store %arg14[%c2080, %c0_212], %362 {strides = array<i32>} : memref<2400x10xf32, #tpu.memory_space<vmem>>, vector<10x10xf32>,
    %364 = vector.extract_strided_slice %99 {offsets = [71, 1], sizes = [10, 10], strides = [1, 1]} : vector<84x14xf32> to vector<10x10xf32>
    %c2096 = arith.constant 2096 : index
    %c0_213 = arith.constant 0 : index
    %365 = vector.load %arg14[%c2096, %c0_213] : memref<2400x10xf32, #tpu.memory_space<vmem>>, vector<10x10xf32>
    tpu.vector_store %arg14[%c2096, %c0_213], %364 {strides = array<i32>} : memref<2400x10xf32, #tpu.memory_space<vmem>>, vector<10x10xf32>,
    %366 = vector.extract_strided_slice %99 {offsets = [71, 2], sizes = [10, 10], strides = [1, 1]} : vector<84x14xf32> to vector<10x10xf32>
    %c2112 = arith.constant 2112 : index
    %c0_214 = arith.constant 0 : index
    %367 = vector.load %arg14[%c2112, %c0_214] : memref<2400x10xf32, #tpu.memory_space<vmem>>, vector<10x10xf32>
    tpu.vector_store %arg14[%c2112, %c0_214], %366 {strides = array<i32>} : memref<2400x10xf32, #tpu.memory_space<vmem>>, vector<10x10xf32>,
    %368 = vector.extract_strided_slice %99 {offsets = [71, 3], sizes = [10, 10], strides = [1, 1]} : vector<84x14xf32> to vector<10x10xf32>
    %c2128 = arith.constant 2128 : index
    %c0_215 = arith.constant 0 : index
    %369 = vector.load %arg14[%c2128, %c0_215] : memref<2400x10xf32, #tpu.memory_space<vmem>>, vector<10x10xf32>
    tpu.vector_store %arg14[%c2128, %c0_215], %368 {strides = array<i32>} : memref<2400x10xf32, #tpu.memory_space<vmem>>, vector<10x10xf32>,
    %370 = vector.extract_strided_slice %99 {offsets = [71, 4], sizes = [10, 10], strides = [1, 1]} : vector<84x14xf32> to vector<10x10xf32>
    %c2144 = arith.constant 2144 : index
    %c0_216 = arith.constant 0 : index
    %371 = vector.load %arg14[%c2144, %c0_216] : memref<2400x10xf32, #tpu.memory_space<vmem>>, vector<10x10xf32>
    tpu.vector_store %arg14[%c2144, %c0_216], %370 {strides = array<i32>} : memref<2400x10xf32, #tpu.memory_space<vmem>>, vector<10x10xf32>,
    %372 = vector.extract_strided_slice %99 {offsets = [72, 0], sizes = [10, 10], strides = [1, 1]} : vector<84x14xf32> to vector<10x10xf32>
    %c2160 = arith.constant 2160 : index
    %c0_217 = arith.constant 0 : index
    %373 = vector.load %arg14[%c2160, %c0_217] : memref<2400x10xf32, #tpu.memory_space<vmem>>, vector<10x10xf32>
    tpu.vector_store %arg14[%c2160, %c0_217], %372 {strides = array<i32>} : memref<2400x10xf32, #tpu.memory_space<vmem>>, vector<10x10xf32>,
    %374 = vector.extract_strided_slice %99 {offsets = [72, 1], sizes = [10, 10], strides = [1, 1]} : vector<84x14xf32> to vector<10x10xf32>
    %c2176 = arith.constant 2176 : index
    %c0_218 = arith.constant 0 : index
    %375 = vector.load %arg14[%c2176, %c0_218] : memref<2400x10xf32, #tpu.memory_space<vmem>>, vector<10x10xf32>
    tpu.vector_store %arg14[%c2176, %c0_218], %374 {strides = array<i32>} : memref<2400x10xf32, #tpu.memory_space<vmem>>, vector<10x10xf32>,
    %376 = vector.extract_strided_slice %99 {offsets = [72, 2], sizes = [10, 10], strides = [1, 1]} : vector<84x14xf32> to vector<10x10xf32>
    %c2192 = arith.constant 2192 : index
    %c0_219 = arith.constant 0 : index
    %377 = vector.load %arg14[%c2192, %c0_219] : memref<2400x10xf32, #tpu.memory_space<vmem>>, vector<10x10xf32>
    tpu.vector_store %arg14[%c2192, %c0_219], %376 {strides = array<i32>} : memref<2400x10xf32, #tpu.memory_space<vmem>>, vector<10x10xf32>,
    %378 = vector.extract_strided_slice %99 {offsets = [72, 3], sizes = [10, 10], strides = [1, 1]} : vector<84x14xf32> to vector<10x10xf32>
    %c2208 = arith.constant 2208 : index
    %c0_220 = arith.constant 0 : index
    %379 = vector.load %arg14[%c2208, %c0_220] : memref<2400x10xf32, #tpu.memory_space<vmem>>, vector<10x10xf32>
    tpu.vector_store %arg14[%c2208, %c0_220], %378 {strides = array<i32>} : memref<2400x10xf32, #tpu.memory_space<vmem>>, vector<10x10xf32>,
    %380 = vector.extract_strided_slice %99 {offsets = [72, 4], sizes = [10, 10], strides = [1, 1]} : vector<84x14xf32> to vector<10x10xf32>
    %c2224 = arith.constant 2224 : index
    %c0_221 = arith.constant 0 : index
    %381 = vector.load %arg14[%c2224, %c0_221] : memref<2400x10xf32, #tpu.memory_space<vmem>>, vector<10x10xf32>
    tpu.vector_store %arg14[%c2224, %c0_221], %380 {strides = array<i32>} : memref<2400x10xf32, #tpu.memory_space<vmem>>, vector<10x10xf32>,
    %382 = vector.extract_strided_slice %99 {offsets = [73, 0], sizes = [10, 10], strides = [1, 1]} : vector<84x14xf32> to vector<10x10xf32>
    %c2240 = arith.constant 2240 : index
    %c0_222 = arith.constant 0 : index
    %383 = vector.load %arg14[%c2240, %c0_222] : memref<2400x10xf32, #tpu.memory_space<vmem>>, vector<10x10xf32>
    tpu.vector_store %arg14[%c2240, %c0_222], %382 {strides = array<i32>} : memref<2400x10xf32, #tpu.memory_space<vmem>>, vector<10x10xf32>,
    %384 = vector.extract_strided_slice %99 {offsets = [73, 1], sizes = [10, 10], strides = [1, 1]} : vector<84x14xf32> to vector<10x10xf32>
    %c2256 = arith.constant 2256 : index
    %c0_223 = arith.constant 0 : index
    %385 = vector.load %arg14[%c2256, %c0_223] : memref<2400x10xf32, #tpu.memory_space<vmem>>, vector<10x10xf32>
    tpu.vector_store %arg14[%c2256, %c0_223], %384 {strides = array<i32>} : memref<2400x10xf32, #tpu.memory_space<vmem>>, vector<10x10xf32>,
    %386 = vector.extract_strided_slice %99 {offsets = [73, 2], sizes = [10, 10], strides = [1, 1]} : vector<84x14xf32> to vector<10x10xf32>
    %c2272 = arith.constant 2272 : index
    %c0_224 = arith.constant 0 : index
    %387 = vector.load %arg14[%c2272, %c0_224] : memref<2400x10xf32, #tpu.memory_space<vmem>>, vector<10x10xf32>
    tpu.vector_store %arg14[%c2272, %c0_224], %386 {strides = array<i32>} : memref<2400x10xf32, #tpu.memory_space<vmem>>, vector<10x10xf32>,
    %388 = vector.extract_strided_slice %99 {offsets = [73, 3], sizes = [10, 10], strides = [1, 1]} : vector<84x14xf32> to vector<10x10xf32>
    %c2288 = arith.constant 2288 : index
    %c0_225 = arith.constant 0 : index
    %389 = vector.load %arg14[%c2288, %c0_225] : memref<2400x10xf32, #tpu.memory_space<vmem>>, vector<10x10xf32>
    tpu.vector_store %arg14[%c2288, %c0_225], %388 {strides = array<i32>} : memref<2400x10xf32, #tpu.memory_space<vmem>>, vector<10x10xf32>,
    %390 = vector.extract_strided_slice %99 {offsets = [73, 4], sizes = [10, 10], strides = [1, 1]} : vector<84x14xf32> to vector<10x10xf32>
    %c2304 = arith.constant 2304 : index
    %c0_226 = arith.constant 0 : index
    %391 = vector.load %arg14[%c2304, %c0_226] : memref<2400x10xf32, #tpu.memory_space<vmem>>, vector<10x10xf32>
    tpu.vector_store %arg14[%c2304, %c0_226], %390 {strides = array<i32>} : memref<2400x10xf32, #tpu.memory_space<vmem>>, vector<10x10xf32>,
    %392 = vector.extract_strided_slice %99 {offsets = [74, 0], sizes = [10, 10], strides = [1, 1]} : vector<84x14xf32> to vector<10x10xf32>
    %c2320 = arith.constant 2320 : index
    %c0_227 = arith.constant 0 : index
    %393 = vector.load %arg14[%c2320, %c0_227] : memref<2400x10xf32, #tpu.memory_space<vmem>>, vector<10x10xf32>
    tpu.vector_store %arg14[%c2320, %c0_227], %392 {strides = array<i32>} : memref<2400x10xf32, #tpu.memory_space<vmem>>, vector<10x10xf32>,
    %394 = vector.extract_strided_slice %99 {offsets = [74, 1], sizes = [10, 10], strides = [1, 1]} : vector<84x14xf32> to vector<10x10xf32>
    %c2336 = arith.constant 2336 : index
    %c0_228 = arith.constant 0 : index
    %395 = vector.load %arg14[%c2336, %c0_228] : memref<2400x10xf32, #tpu.memory_space<vmem>>, vector<10x10xf32>
    tpu.vector_store %arg14[%c2336, %c0_228], %394 {strides = array<i32>} : memref<2400x10xf32, #tpu.memory_space<vmem>>, vector<10x10xf32>,
    %396 = vector.extract_strided_slice %99 {offsets = [74, 2], sizes = [10, 10], strides = [1, 1]} : vector<84x14xf32> to vector<10x10xf32>
    %c2352 = arith.constant 2352 : index
    %c0_229 = arith.constant 0 : index
    %397 = vector.load %arg14[%c2352, %c0_229] : memref<2400x10xf32, #tpu.memory_space<vmem>>, vector<10x10xf32>
    tpu.vector_store %arg14[%c2352, %c0_229], %396 {strides = array<i32>} : memref<2400x10xf32, #tpu.memory_space<vmem>>, vector<10x10xf32>,
    %398 = vector.extract_strided_slice %99 {offsets = [74, 3], sizes = [10, 10], strides = [1, 1]} : vector<84x14xf32> to vector<10x10xf32>
    %c2368 = arith.constant 2368 : index
    %c0_230 = arith.constant 0 : index
    %399 = vector.load %arg14[%c2368, %c0_230] : memref<2400x10xf32, #tpu.memory_space<vmem>>, vector<10x10xf32>
    tpu.vector_store %arg14[%c2368, %c0_230], %398 {strides = array<i32>} : memref<2400x10xf32, #tpu.memory_space<vmem>>, vector<10x10xf32>,
    %400 = vector.extract_strided_slice %99 {offsets = [74, 4], sizes = [10, 10], strides = [1, 1]} : vector<84x14xf32> to vector<10x10xf32>
    %c2384 = arith.constant 2384 : index
    %c0_231 = arith.constant 0 : index
    %401 = vector.load %arg14[%c2384, %c0_231] : memref<2400x10xf32, #tpu.memory_space<vmem>>, vector<10x10xf32>
    tpu.vector_store %arg14[%c2384, %c0_231], %400 {strides = array<i32>} : memref<2400x10xf32, #tpu.memory_space<vmem>>, vector<10x10xf32>,
    %c0_232 = arith.constant 0 : index
    %c0_233 = arith.constant 0 : index
    %402 = vector.load %arg4[%c0_232, %c0_233] : memref<160x2400xf32, #tpu.memory_space<vmem>>, vector<160x2400xf32>
    %c0_234 = arith.constant 0 : index
    %c0_235 = arith.constant 0 : index
    %403 = vector.load %arg14[%c0_234, %c0_235] : memref<2400x10xf32, #tpu.memory_space<vmem>>, vector<2400x10xf32>
    %cst_236 = arith.constant dense<0.000000e+00> : vector<160x10xf32>
    %404 = tpu.matmul %402, %403, %cst_236 {dimension_numbers = #tpu.dot_dimension_numbers<[1], [0], [0], [1], [0, 0, 1, 1], [], []>} : vector<160x2400xf32>, vector<2400x10xf32>, vector<160x10xf32> -> vector<160x10xf32>
    %c0_237 = arith.constant 0 : index
    %c0_238 = arith.constant 0 : index
    %405 = vector.load %arg5[%c0_237, %c0_238] : memref<160x1xf32, #tpu.memory_space<vmem>>, vector<160x1xf32>
    %406 = vector.broadcast %405 : vector<160x1xf32> to vector<160x10xf32>
    %407 = arith.addf %404, %406 : vector<160x10xf32>
    %408 = tpu.iota {dimensions = array<i32: 0>} : vector<10x5xi32>
    %409 = tpu.iota {dimensions = array<i32: 1>} : vector<10x5xi32>
    %c2_i32_239 = arith.constant 2 : i32
    %410 = vector.broadcast %c2_i32_239 : i32 to vector<10x5xi32>
    %411 = arith.muli %410, %409 : vector<10x5xi32>
    %412 = arith.cmpi eq, %408, %411 : vector<10x5xi32>
    %cst_240 = arith.constant 1.000000e+00 : f32
    %cst_241 = arith.constant 0.000000e+00 : f32
    %413 = vector.broadcast %cst_240 : f32 to vector<10x5xf32>
    %414 = vector.broadcast %cst_241 : f32 to vector<10x5xf32>
    %415 = arith.select %412, %413, %414 : vector<10x5xi1>, vector<10x5xf32>
    %c2_i32_242 = arith.constant 2 : i32
    %416 = vector.broadcast %c2_i32_242 : i32 to vector<10x5xi32>
    %417 = arith.muli %416, %409 : vector<10x5xi32>
    %c1_i32_243 = arith.constant 1 : i32
    %418 = vector.broadcast %c1_i32_243 : i32 to vector<10x5xi32>
    %419 = arith.addi %417, %418 : vector<10x5xi32>
    %420 = arith.cmpi eq, %408, %419 : vector<10x5xi32>
    %cst_244 = arith.constant 1.000000e+00 : f32
    %cst_245 = arith.constant 0.000000e+00 : f32
    %421 = vector.broadcast %cst_244 : f32 to vector<10x5xf32>
    %422 = vector.broadcast %cst_245 : f32 to vector<10x5xf32>
    %423 = arith.select %420, %421, %422 : vector<10x5xi1>, vector<10x5xf32>
    %cst_246 = arith.constant dense<0.000000e+00> : vector<160x5xf32>
    %424 = tpu.matmul %407, %415, %cst_246 {dimension_numbers = #tpu.dot_dimension_numbers<[1], [0], [0], [1], [0, 0, 1, 1], [], []>} : vector<160x10xf32>, vector<10x5xf32>, vector<160x5xf32> -> vector<160x5xf32>
    %cst_247 = arith.constant dense<0.000000e+00> : vector<160x5xf32>
    %425 = tpu.matmul %407, %423, %cst_247 {dimension_numbers = #tpu.dot_dimension_numbers<[1], [0], [0], [1], [0, 0, 1, 1], [], []>} : vector<160x10xf32>, vector<10x5xf32>, vector<160x5xf32> -> vector<160x5xf32>
    %426 = arith.maximumf %424, %425 : vector<160x5xf32>
    %427 = tpu.iota {dimensions = array<i32: 0>} : vector<80x160xi32>
    %428 = tpu.iota {dimensions = array<i32: 1>} : vector<80x160xi32>
    %c2_i32_248 = arith.constant 2 : i32
    %429 = vector.broadcast %c2_i32_248 : i32 to vector<80x160xi32>
    %430 = arith.muli %429, %427 : vector<80x160xi32>
    %431 = arith.cmpi eq, %428, %430 : vector<80x160xi32>
    %cst_249 = arith.constant 1.000000e+00 : f32
    %cst_250 = arith.constant 0.000000e+00 : f32
    %432 = vector.broadcast %cst_249 : f32 to vector<80x160xf32>
    %433 = vector.broadcast %cst_250 : f32 to vector<80x160xf32>
    %434 = arith.select %431, %432, %433 : vector<80x160xi1>, vector<80x160xf32>
    %c2_i32_251 = arith.constant 2 : i32
    %435 = vector.broadcast %c2_i32_251 : i32 to vector<80x160xi32>
    %436 = arith.muli %435, %427 : vector<80x160xi32>
    %c1_i32_252 = arith.constant 1 : i32
    %437 = vector.broadcast %c1_i32_252 : i32 to vector<80x160xi32>
    %438 = arith.addi %436, %437 : vector<80x160xi32>
    %439 = arith.cmpi eq, %428, %438 : vector<80x160xi32>
    %cst_253 = arith.constant 1.000000e+00 : f32
    %cst_254 = arith.constant 0.000000e+00 : f32
    %440 = vector.broadcast %cst_253 : f32 to vector<80x160xf32>
    %441 = vector.broadcast %cst_254 : f32 to vector<80x160xf32>
    %442 = arith.select %439, %440, %441 : vector<80x160xi1>, vector<80x160xf32>
    %cst_255 = arith.constant dense<0.000000e+00> : vector<80x5xf32>
    %443 = tpu.matmul %434, %426, %cst_255 {dimension_numbers = #tpu.dot_dimension_numbers<[1], [0], [0], [1], [0, 0, 1, 1], [], []>} : vector<80x160xf32>, vector<160x5xf32>, vector<80x5xf32> -> vector<80x5xf32>
    %cst_256 = arith.constant dense<0.000000e+00> : vector<80x5xf32>
    %444 = tpu.matmul %442, %426, %cst_256 {dimension_numbers = #tpu.dot_dimension_numbers<[1], [0], [0], [1], [0, 0, 1, 1], [], []>} : vector<80x160xf32>, vector<160x5xf32>, vector<80x5xf32> -> vector<80x5xf32>
    %445 = arith.maximumf %443, %444 : vector<80x5xf32>
    %cst_257 = arith.constant 0.000000e+00 : f32
    %446 = vector.broadcast %cst_257 : f32 to vector<80x5xf32>
    %447 = arith.maximumf %445, %446 : vector<80x5xf32>
    %c0_258 = arith.constant 0 : index
    %c0_259 = arith.constant 0 : index
    %448 = vector.load %arg7[%c0_258, %c0_259] : memref<120x1xf32, #tpu.memory_space<vmem>>, vector<120x1xf32>
    %c0_260 = arith.constant 0 : index
    %c0_261 = arith.constant 0 : index
    %c0_262 = arith.constant 0 : index
    %449 = vector.load %arg6[%c0_260, %c0_261, %c0_262] : memref<5x120x80xf32, #tpu.memory_space<vmem>>, vector<1x120x80xf32>
    %450 = vector.shape_cast %449 : vector<1x120x80xf32> to vector<120x80xf32>
    %451 = vector.extract_strided_slice %447 {offsets = [0, 0], sizes = [80, 1], strides = [1, 1]} : vector<80x5xf32> to vector<80x1xf32>
    %cst_263 = arith.constant dense<0.000000e+00> : vector<120x1xf32>
    %452 = tpu.matmul %450, %451, %cst_263 {dimension_numbers = #tpu.dot_dimension_numbers<[1], [0], [0], [1], [0, 0, 1, 1], [], []>} : vector<120x80xf32>, vector<80x1xf32>, vector<120x1xf32> -> vector<120x1xf32>
    %453 = arith.addf %448, %452 : vector<120x1xf32>
    %c1 = arith.constant 1 : index
    %c0_264 = arith.constant 0 : index
    %c0_265 = arith.constant 0 : index
    %454 = vector.load %arg6[%c1, %c0_264, %c0_265] : memref<5x120x80xf32, #tpu.memory_space<vmem>>, vector<1x120x80xf32>
    %455 = vector.shape_cast %454 : vector<1x120x80xf32> to vector<120x80xf32>
    %456 = vector.extract_strided_slice %447 {offsets = [0, 1], sizes = [80, 1], strides = [1, 1]} : vector<80x5xf32> to vector<80x1xf32>
    %cst_266 = arith.constant dense<0.000000e+00> : vector<120x1xf32>
    %457 = tpu.matmul %455, %456, %cst_266 {dimension_numbers = #tpu.dot_dimension_numbers<[1], [0], [0], [1], [0, 0, 1, 1], [], []>} : vector<120x80xf32>, vector<80x1xf32>, vector<120x1xf32> -> vector<120x1xf32>
    %458 = arith.addf %453, %457 : vector<120x1xf32>
    %c2 = arith.constant 2 : index
    %c0_267 = arith.constant 0 : index
    %c0_268 = arith.constant 0 : index
    %459 = vector.load %arg6[%c2, %c0_267, %c0_268] : memref<5x120x80xf32, #tpu.memory_space<vmem>>, vector<1x120x80xf32>
    %460 = vector.shape_cast %459 : vector<1x120x80xf32> to vector<120x80xf32>
    %461 = vector.extract_strided_slice %447 {offsets = [0, 2], sizes = [80, 1], strides = [1, 1]} : vector<80x5xf32> to vector<80x1xf32>
    %cst_269 = arith.constant dense<0.000000e+00> : vector<120x1xf32>
    %462 = tpu.matmul %460, %461, %cst_269 {dimension_numbers = #tpu.dot_dimension_numbers<[1], [0], [0], [1], [0, 0, 1, 1], [], []>} : vector<120x80xf32>, vector<80x1xf32>, vector<120x1xf32> -> vector<120x1xf32>
    %463 = arith.addf %458, %462 : vector<120x1xf32>
    %c3 = arith.constant 3 : index
    %c0_270 = arith.constant 0 : index
    %c0_271 = arith.constant 0 : index
    %464 = vector.load %arg6[%c3, %c0_270, %c0_271] : memref<5x120x80xf32, #tpu.memory_space<vmem>>, vector<1x120x80xf32>
    %465 = vector.shape_cast %464 : vector<1x120x80xf32> to vector<120x80xf32>
    %466 = vector.extract_strided_slice %447 {offsets = [0, 3], sizes = [80, 1], strides = [1, 1]} : vector<80x5xf32> to vector<80x1xf32>
    %cst_272 = arith.constant dense<0.000000e+00> : vector<120x1xf32>
    %467 = tpu.matmul %465, %466, %cst_272 {dimension_numbers = #tpu.dot_dimension_numbers<[1], [0], [0], [1], [0, 0, 1, 1], [], []>} : vector<120x80xf32>, vector<80x1xf32>, vector<120x1xf32> -> vector<120x1xf32>
    %468 = arith.addf %463, %467 : vector<120x1xf32>
    %c4 = arith.constant 4 : index
    %c0_273 = arith.constant 0 : index
    %c0_274 = arith.constant 0 : index
    %469 = vector.load %arg6[%c4, %c0_273, %c0_274] : memref<5x120x80xf32, #tpu.memory_space<vmem>>, vector<1x120x80xf32>
    %470 = vector.shape_cast %469 : vector<1x120x80xf32> to vector<120x80xf32>
    %471 = vector.extract_strided_slice %447 {offsets = [0, 4], sizes = [80, 1], strides = [1, 1]} : vector<80x5xf32> to vector<80x1xf32>
    %cst_275 = arith.constant dense<0.000000e+00> : vector<120x1xf32>
    %472 = tpu.matmul %470, %471, %cst_275 {dimension_numbers = #tpu.dot_dimension_numbers<[1], [0], [0], [1], [0, 0, 1, 1], [], []>} : vector<120x80xf32>, vector<80x1xf32>, vector<120x1xf32> -> vector<120x1xf32>
    %473 = arith.addf %468, %472 : vector<120x1xf32>
    %cst_276 = arith.constant 0.000000e+00 : f32
    %474 = vector.broadcast %cst_276 : f32 to vector<120x1xf32>
    %475 = arith.maximumf %473, %474 : vector<120x1xf32>
    %c0_277 = arith.constant 0 : index
    %c0_278 = arith.constant 0 : index
    %476 = vector.load %arg8[%c0_277, %c0_278] : memref<84x120xf32, #tpu.memory_space<vmem>>, vector<84x120xf32>
    %cst_279 = arith.constant dense<0.000000e+00> : vector<84x1xf32>
    %477 = tpu.matmul %476, %475, %cst_279 {dimension_numbers = #tpu.dot_dimension_numbers<[1], [0], [0], [1], [0, 0, 1, 1], [], []>} : vector<84x120xf32>, vector<120x1xf32>, vector<84x1xf32> -> vector<84x1xf32>
    %c0_280 = arith.constant 0 : index
    %c0_281 = arith.constant 0 : index
    %478 = vector.load %arg9[%c0_280, %c0_281] : memref<84x1xf32, #tpu.memory_space<vmem>>, vector<84x1xf32>
    %479 = arith.addf %477, %478 : vector<84x1xf32>
    %cst_282 = arith.constant 0.000000e+00 : f32
    %480 = vector.broadcast %cst_282 : f32 to vector<84x1xf32>
    %481 = arith.maximumf %479, %480 : vector<84x1xf32>
    %c0_283 = arith.constant 0 : index
    %c0_284 = arith.constant 0 : index
    %482 = vector.load %arg10[%c0_283, %c0_284] : memref<10x84xf32, #tpu.memory_space<vmem>>, vector<10x84xf32>
    %cst_285 = arith.constant dense<0.000000e+00> : vector<10x1xf32>
    %483 = tpu.matmul %482, %481, %cst_285 {dimension_numbers = #tpu.dot_dimension_numbers<[1], [0], [0], [1], [0, 0, 1, 1], [], []>} : vector<10x84xf32>, vector<84x1xf32>, vector<10x1xf32> -> vector<10x1xf32>
    %c0_286 = arith.constant 0 : index
    %c0_287 = arith.constant 0 : index
    %484 = vector.load %arg11[%c0_286, %c0_287] : memref<10x1xf32, #tpu.memory_space<vmem>>, vector<10x1xf32>
    %485 = arith.addf %483, %484 : vector<10x1xf32>
    %cst_288 = arith.constant dense<0xFF800000> : vector<1xf32>
    %486 = vector.multi_reduction <maximumf>, %485, %cst_288 [0] : vector<10x1xf32> to vector<1xf32>
    %487 = vector.shape_cast %486 : vector<1xf32> to vector<1x1xf32>
    %488 = vector.broadcast %487 : vector<1x1xf32> to vector<10x1xf32>
    %489 = arith.subf %485, %488 : vector<10x1xf32>
    %490 = math.exp %489 : vector<10x1xf32>
    %cst_289 = arith.constant dense<0.000000e+00> : vector<1xf32>
    %491 = vector.multi_reduction <add>, %490, %cst_289 [0] : vector<10x1xf32> to vector<1xf32>
    %492 = vector.shape_cast %491 : vector<1xf32> to vector<1x1xf32>
    %493 = math.log %492 : vector<1x1xf32>
    %494 = arith.addf %493, %487 : vector<1x1xf32>
    %495 = vector.broadcast %494 : vector<1x1xf32> to vector<10x1xf32>
    %496 = arith.subf %485, %495 : vector<10x1xf32>
    %c0_290 = arith.constant 0 : index
    %c0_291 = arith.constant 0 : index
    %c0_292 = arith.constant 0 : index
    %497 = vector.load %arg12[%c0_290, %c0_291, %c0_292] : memref<1x10x1xf32, #tpu.memory_space<vmem>>, vector<1x10x1xf32>
    %498 = vector.shape_cast %497 : vector<1x10x1xf32> to vector<10x1xf32>
    %499 = vector.shape_cast %496 : vector<10x1xf32> to vector<1x10x1xf32>
    tpu.vector_store %arg12[%c0_290, %c0_291, %c0_292], %499 {strides = array<i32>} : memref<1x10x1xf32, #tpu.memory_space<vmem>>, vector<1x10x1xf32>,
    return
  }
  func.func @transform_0(%arg0: i32) -> (i32, i32, i32) {
    %c0_i32 = arith.constant 0 : i32
    %c0_i32_0 = arith.constant 0 : i32
    %c0_i32_1 = arith.constant 0 : i32
    return %arg0, %c0_i32, %c0_i32_0 : i32, i32, i32
  }
  func.func @transform_1(%arg0: i32) -> (i32, i32) {
    %c0_i32 = arith.constant 0 : i32
    %c0_i32_0 = arith.constant 0 : i32
    %c0_i32_1 = arith.constant 0 : i32
    return %c0_i32, %c0_i32_0 : i32, i32
  }
  func.func @transform_2(%arg0: i32) -> (i32, i32) {
    %c0_i32 = arith.constant 0 : i32
    %c0_i32_0 = arith.constant 0 : i32
    %c0_i32_1 = arith.constant 0 : i32
    return %c0_i32, %c0_i32_0 : i32, i32
  }
  func.func @transform_3(%arg0: i32) -> (i32, i32) {
    %c0_i32 = arith.constant 0 : i32
    %c0_i32_0 = arith.constant 0 : i32
    %c0_i32_1 = arith.constant 0 : i32
    return %c0_i32, %c0_i32_0 : i32, i32
  }
  func.func @transform_4(%arg0: i32) -> (i32, i32) {
    %c0_i32 = arith.constant 0 : i32
    %c0_i32_0 = arith.constant 0 : i32
    %c0_i32_1 = arith.constant 0 : i32
    return %c0_i32, %c0_i32_0 : i32, i32
  }
  func.func @transform_5(%arg0: i32) -> (i32, i32, i32) {
    %c0_i32 = arith.constant 0 : i32
    %c0_i32_0 = arith.constant 0 : i32
    %c0_i32_1 = arith.constant 0 : i32
    %c0_i32_2 = arith.constant 0 : i32
    return %c0_i32, %c0_i32_0, %c0_i32_1 : i32, i32, i32
  }
  func.func @transform_6(%arg0: i32) -> (i32, i32) {
    %c0_i32 = arith.constant 0 : i32
    %c0_i32_0 = arith.constant 0 : i32
    %c0_i32_1 = arith.constant 0 : i32
    return %c0_i32, %c0_i32_0 : i32, i32
  }
  func.func @transform_7(%arg0: i32) -> (i32, i32) {
    %c0_i32 = arith.constant 0 : i32
    %c0_i32_0 = arith.constant 0 : i32
    %c0_i32_1 = arith.constant 0 : i32
    return %c0_i32, %c0_i32_0 : i32, i32
  }
  func.func @transform_8(%arg0: i32) -> (i32, i32) {
    %c0_i32 = arith.constant 0 : i32
    %c0_i32_0 = arith.constant 0 : i32
    %c0_i32_1 = arith.constant 0 : i32
    return %c0_i32, %c0_i32_0 : i32, i32
  }
  func.func @transform_9(%arg0: i32) -> (i32, i32) {
    %c0_i32 = arith.constant 0 : i32
    %c0_i32_0 = arith.constant 0 : i32
    %c0_i32_1 = arith.constant 0 : i32
    return %c0_i32, %c0_i32_0 : i32, i32
  }
  func.func @transform_10(%arg0: i32) -> (i32, i32) {
    %c0_i32 = arith.constant 0 : i32
    %c0_i32_0 = arith.constant 0 : i32
    %c0_i32_1 = arith.constant 0 : i32
    return %c0_i32, %c0_i32_0 : i32, i32
  }
  func.func @transform_11(%arg0: i32) -> (i32, i32, i32) {
    %c0_i32 = arith.constant 0 : i32
    %c0_i32_0 = arith.constant 0 : i32
    %c0_i32_1 = arith.constant 0 : i32
    return %arg0, %c0_i32, %c0_i32_0 : i32, i32, i32
  }
}

</mosaic_0001>

<llo_original>
// kernel: net_forward.1
$region0: #{net_forward.1}
  #allocation0 [shape = 'u32[]', space=smem, size = 0x4, offset = 0x4, fixed_abs, tag = 'smem constant byte address 0x4 - core index']
  #allocation1 [shape = 'u32[144,128]{1,0:T(1,128)}', space=vmem, size = 0x12000, scoped, tag = 'internal scratch']
  #allocation2 [shape = 'f32[800,28]{1,0:T(8,128)}', space=vmem, size = 0x64000, scoped, tag = 'scratch operand']
  #allocation3 [shape = 'f32[2400,10]{1,0:T(8,128)}', space=vmem, size = 0x12c000, scoped, tag = 'scratch operand']
  %s0 = inlined_call_operand.vmem [shape: f32[2,32,32], index: 0, kind: input, shape index: {}]
  %s1 = inlined_call_operand.hbm [shape: f32[168,800], index: 1, kind: input, shape index: {}]
  %s2 = inlined_call_operand.vmem [shape: f32[168,1], index: 2, kind: input, shape index: {}]
  %s3 = inlined_call_operand.hbm [shape: f32[160,2400], index: 3, kind: input, shape index: {}]
  %s4 = inlined_call_operand.vmem [shape: f32[160,1], index: 4, kind: input, shape index: {}]
  %s5 = inlined_call_operand.vmem [shape: f32[5,120,80], index: 5, kind: input, shape index: {}]
  %s6 = inlined_call_operand.vmem [shape: f32[120,1], index: 6, kind: input, shape index: {}]
  %s7 = inlined_call_operand.hbm [shape: f32[84,120], index: 7, kind: input, shape index: {}]
  %s8 = inlined_call_operand.vmem [shape: f32[84,1], index: 8, kind: input, shape index: {}]
  %s9 = inlined_call_operand.hbm [shape: f32[10,84], index: 9, kind: input, shape index: {}]
  %s10 = inlined_call_operand.vmem [shape: f32[10,1], index: 10, kind: input, shape index: {}]
  %s11 = inlined_call_operand.vmem [shape: f32[2,10,1], index: 11, kind: output, shape index: {}]
  %s12 = sld [smem:[#allocation0]]
  $region93: #{net_forward.1} parent=0
    _
  %s14 = ssub.s32 1, %s12
  %s15 = scalar_select 0, %s14, %s12
  $region1: #{net_forward.1} parent=0
    #allocation4 [shape = 'u8[602112]{0}', space=vmem, size = 0x93000, scoped, tag = 'input window, operand 1, single buffered']
    #allocation5 [shape = 's32[2]{0}', space=sflag, size = 0x8, scoped, tag = 'scoped memory for net_forward.1']
    #allocation6 [shape = 'u8[1556480]{0}', space=vmem, size = 0x17c000, scoped, tag = 'input window, operand 3, single buffered']
    #allocation7 [shape = 's32[1]{0}', space=sflag, size = 0x4, scoped, tag = 'scoped memory for net_forward.1']
    #allocation8 [shape = 'u8[45056]{0}', space=vmem, size = 0xb000, scoped, tag = 'input window, operand 7, single buffered']
    #allocation9 [shape = 'u8[8192]{0}', space=vmem, size = 0x2000, scoped, tag = 'input window, operand 9, single buffered']
    #allocation10 [shape = 's32[1]{0}', space=sflag, size = 0x4, scoped, tag = 'scoped memory for net_forward.1']
    %16 = vsyncpa [#allocation5], 0
    %17 = vsyncpa [#allocation7], 0
    %18 = vsyncpa [#allocation10], 0
    loop: start=0, step=1, limit=4
    $region2: #{net_forward.1} parent=1 // loop_pre_header
      _
    $region3: #{net_forward.1} parent=1 // loop_header
      %s20 = sphi 0, %s24
      %p21 = scmp.ge.s32.totalorder %s20, 4
      %s30 = sphi 0, %s32
      %s33 = sphi 0, %s30
      %s34 = sphi 0, %s33
      %s50 = sphi 0, %s34
      %s54 = sphi 0, %s54
      %s56 = sphi 0, %s54
      %s57 = sphi 0, %s56
      %s71 = sphi 0, %s57
      %s75 = sphi 0, %s75
      %s77 = sphi 0, %s75
      %s78 = sphi 0, %s77
      %s92 = sphi 0, %s78
      %s96 = sphi 0, %s96
      %s98 = sphi 0, %s96
      %s99 = sphi 0, %s98
      %s113 = sphi 0, %s99
      %s117 = sphi 0, %s117
      %s119 = sphi 0, %s117
      %s120 = sphi 0, %s119
      %s134 = sphi 0, %s120
      %s138 = sphi 0, %s138
      %s140 = sphi 0, %s138
      %s141 = sphi 0, %s140
      %s155 = sphi 0, %s141
      %s159 = sphi 0, %s159
      %s161 = sphi 0, %s159
      %s162 = sphi 0, %s161
      %s176 = sphi 0, %s162
      %s180 = sphi 0, %s180
      %s182 = sphi 0, %s180
      %s183 = sphi 0, %s182
      %s197 = sphi 0, %s183
      %s201 = sphi 0, %s201
      %s203 = sphi 0, %s201
      %s204 = sphi 0, %s203
      %s218 = sphi 0, %s204
      %s222 = sphi 0, %s222
      %s224 = sphi 0, %s222
      %s225 = sphi 0, %s224
      %s239 = sphi 0, %s225
      %s243 = sphi 0, %s243
      %s245 = sphi 0, %s243
      %s246 = sphi 0, %s245
      %s260 = sphi 0, %s246
      %s266 = sphi 0, %s268
      %s269 = sphi 0, %s266
      %s270 = sphi 0, %s269
      %s286 = sphi 0, %s270
    $region4: #{net_forward.1} parent=1 // loop_header_branch
      %23 = sbr.rel (%p21) target = $region8
    $region5: #{net_forward.1} parent=1 // loop_body
      %s25 = ssub.s32 %s20, 1
      %s26 = ssub.s32 %s20, 2
      %s27 = sadd.s32 %s20, 1
      %s28 = ssub.s32 %s20, %s27
      %p29 = scmp.eq.s32.totalorder %s28, 0
      %s31 = sadd.s32 %s30, 1
      %s32 = scalar_select %p29, %s30, %s31
      %p35 = pneg %p29
      %p36 = scmp.eq.s32.totalorder %s20, 1
      %p37 = por %p35, %p36
      %p38 = scmp.ne.s32.totalorder %s30, %s33
      %p39 = scmp.eq.s32.totalorder %s20, 0
      %p40 = por %p38, %p39
      %p41 = scmp.ne.s32.totalorder %s30, %s33
      %p42 = scmp.eq.s32.totalorder %s25, 1
      %p43 = por %p41, %p42
      %p44 = scmp.ne.s32.totalorder %s33, %s34
      %p45 = scmp.eq.s32.totalorder %s25, 0
      %p46 = por %p44, %p45
      %p47 = scmp.ne.s32.totalorder %s33, %s34
      %p48 = scmp.eq.s32.totalorder %s26, 1
      %p49 = por %p47, %p48
      %p51 = scmp.ne.s32.totalorder %s34, %s50
      %p52 = scmp.eq.s32.totalorder %s26, 0
      %p53 = por %p51, %p52
      %s55 = sadd.s32 %s54, 1
      %p58 = scmp.eq.s32.totalorder %s20, 1
      %p59 = scmp.ne.s32.totalorder %s54, %s56
      %p60 = scmp.eq.s32.totalorder %s20, 0
      %p61 = por %p59, %p60
      %p62 = scmp.ne.s32.totalorder %s54, %s56
      %p63 = scmp.eq.s32.totalorder %s25, 1
      %p64 = por %p62, %p63
      %p65 = scmp.ne.s32.totalorder %s56, %s57
      %p66 = scmp.eq.s32.totalorder %s25, 0
      %p67 = por %p65, %p66
      %p68 = scmp.ne.s32.totalorder %s56, %s57
      %p69 = scmp.eq.s32.totalorder %s26, 1
      %p70 = por %p68, %p69
      %p72 = scmp.ne.s32.totalorder %s57, %s71
      %p73 = scmp.eq.s32.totalorder %s26, 0
      %p74 = por %p72, %p73
      %s76 = sadd.s32 %s75, 1
      %p79 = scmp.eq.s32.totalorder %s20, 1
      %p80 = scmp.ne.s32.totalorder %s75, %s77
      %p81 = scmp.eq.s32.totalorder %s20, 0
      %p82 = por %p80, %p81
      %p83 = scmp.ne.s32.totalorder %s75, %s77
      %p84 = scmp.eq.s32.totalorder %s25, 1
      %p85 = por %p83, %p84
      %p86 = scmp.ne.s32.totalorder %s77, %s78
      %p87 = scmp.eq.s32.totalorder %s25, 0
      %p88 = por %p86, %p87
      %p89 = scmp.ne.s32.totalorder %s77, %s78
      %p90 = scmp.eq.s32.totalorder %s26, 1
      %p91 = por %p89, %p90
      %p93 = scmp.ne.s32.totalorder %s78, %s92
      %p94 = scmp.eq.s32.totalorder %s26, 0
      %p95 = por %p93, %p94
      %s97 = sadd.s32 %s96, 1
      %p100 = scmp.eq.s32.totalorder %s20, 1
      %p101 = scmp.ne.s32.totalorder %s96, %s98
      %p102 = scmp.eq.s32.totalorder %s20, 0
      %p103 = por %p101, %p102
      %p104 = scmp.ne.s32.totalorder %s96, %s98
      %p105 = scmp.eq.s32.totalorder %s25, 1
      %p106 = por %p104, %p105
      %p107 = scmp.ne.s32.totalorder %s98, %s99
      %p108 = scmp.eq.s32.totalorder %s25, 0
      %p109 = por %p107, %p108
      %p110 = scmp.ne.s32.totalorder %s98, %s99
      %p111 = scmp.eq.s32.totalorder %s26, 1
      %p112 = por %p110, %p111
      %p114 = scmp.ne.s32.totalorder %s99, %s113
      %p115 = scmp.eq.s32.totalorder %s26, 0
      %p116 = por %p114, %p115
      %s118 = sadd.s32 %s117, 1
      %p121 = scmp.eq.s32.totalorder %s20, 1
      %p122 = scmp.ne.s32.totalorder %s117, %s119
      %p123 = scmp.eq.s32.totalorder %s20, 0
      %p124 = por %p122, %p123
      %p125 = scmp.ne.s32.totalorder %s117, %s119
      %p126 = scmp.eq.s32.totalorder %s25, 1
      %p127 = por %p125, %p126
      %p128 = scmp.ne.s32.totalorder %s119, %s120
      %p129 = scmp.eq.s32.totalorder %s25, 0
      %p130 = por %p128, %p129
      %p131 = scmp.ne.s32.totalorder %s119, %s120
      %p132 = scmp.eq.s32.totalorder %s26, 1
      %p133 = por %p131, %p132
      %p135 = scmp.ne.s32.totalorder %s120, %s134
      %p136 = scmp.eq.s32.totalorder %s26, 0
      %p137 = por %p135, %p136
      %s139 = sadd.s32 %s138, 1
      %p142 = scmp.eq.s32.totalorder %s20, 1
      %p143 = scmp.ne.s32.totalorder %s138, %s140
      %p144 = scmp.eq.s32.totalorder %s20, 0
      %p145 = por %p143, %p144
      %p146 = scmp.ne.s32.totalorder %s138, %s140
      %p147 = scmp.eq.s32.totalorder %s25, 1
      %p148 = por %p146, %p147
      %p149 = scmp.ne.s32.totalorder %s140, %s141
      %p150 = scmp.eq.s32.totalorder %s25, 0
      %p151 = por %p149, %p150
      %p152 = scmp.ne.s32.totalorder %s140, %s141
      %p153 = scmp.eq.s32.totalorder %s26, 1
      %p154 = por %p152, %p153
      %p156 = scmp.ne.s32.totalorder %s141, %s155
      %p157 = scmp.eq.s32.totalorder %s26, 0
      %p158 = por %p156, %p157
      %s160 = sadd.s32 %s159, 1
      %p163 = scmp.eq.s32.totalorder %s20, 1
      %p164 = scmp.ne.s32.totalorder %s159, %s161
      %p165 = scmp.eq.s32.totalorder %s20, 0
      %p166 = por %p164, %p165
      %p167 = scmp.ne.s32.totalorder %s159, %s161
      %p168 = scmp.eq.s32.totalorder %s25, 1
      %p169 = por %p167, %p168
      %p170 = scmp.ne.s32.totalorder %s161, %s162
      %p171 = scmp.eq.s32.totalorder %s25, 0
      %p172 = por %p170, %p171
      %p173 = scmp.ne.s32.totalorder %s161, %s162
      %p174 = scmp.eq.s32.totalorder %s26, 1
      %p175 = por %p173, %p174
      %p177 = scmp.ne.s32.totalorder %s162, %s176
      %p178 = scmp.eq.s32.totalorder %s26, 0
      %p179 = por %p177, %p178
      %s181 = sadd.s32 %s180, 1
      %p184 = scmp.eq.s32.totalorder %s20, 1
      %p185 = scmp.ne.s32.totalorder %s180, %s182
      %p186 = scmp.eq.s32.totalorder %s20, 0
      %p187 = por %p185, %p186
      %p188 = scmp.ne.s32.totalorder %s180, %s182
      %p189 = scmp.eq.s32.totalorder %s25, 1
      %p190 = por %p188, %p189
      %p191 = scmp.ne.s32.totalorder %s182, %s183
      %p192 = scmp.eq.s32.totalorder %s25, 0
      %p193 = por %p191, %p192
      %p194 = scmp.ne.s32.totalorder %s182, %s183
      %p195 = scmp.eq.s32.totalorder %s26, 1
      %p196 = por %p194, %p195
      %p198 = scmp.ne.s32.totalorder %s183, %s197
      %p199 = scmp.eq.s32.totalorder %s26, 0
      %p200 = por %p198, %p199
      %s202 = sadd.s32 %s201, 1
      %p205 = scmp.eq.s32.totalorder %s20, 1
      %p206 = scmp.ne.s32.totalorder %s201, %s203
      %p207 = scmp.eq.s32.totalorder %s20, 0
      %p208 = por %p206, %p207
      %p209 = scmp.ne.s32.totalorder %s201, %s203
      %p210 = scmp.eq.s32.totalorder %s25, 1
      %p211 = por %p209, %p210
      %p212 = scmp.ne.s32.totalorder %s203, %s204
      %p213 = scmp.eq.s32.totalorder %s25, 0
      %p214 = por %p212, %p213
      %p215 = scmp.ne.s32.totalorder %s203, %s204
      %p216 = scmp.eq.s32.totalorder %s26, 1
      %p217 = por %p215, %p216
      %p219 = scmp.ne.s32.totalorder %s204, %s218
      %p220 = scmp.eq.s32.totalorder %s26, 0
      %p221 = por %p219, %p220
      %s223 = sadd.s32 %s222, 1
      %p226 = scmp.eq.s32.totalorder %s20, 1
      %p227 = scmp.ne.s32.totalorder %s222, %s224
      %p228 = scmp.eq.s32.totalorder %s20, 0
      %p229 = por %p227, %p228
      %p230 = scmp.ne.s32.totalorder %s222, %s224
      %p231 = scmp.eq.s32.totalorder %s25, 1
      %p232 = por %p230, %p231
      %p233 = scmp.ne.s32.totalorder %s224, %s225
      %p234 = scmp.eq.s32.totalorder %s25, 0
      %p235 = por %p233, %p234
      %p236 = scmp.ne.s32.totalorder %s224, %s225
      %p237 = scmp.eq.s32.totalorder %s26, 1
      %p238 = por %p236, %p237
      %p240 = scmp.ne.s32.totalorder %s225, %s239
      %p241 = scmp.eq.s32.totalorder %s26, 0
      %p242 = por %p240, %p241
      %s244 = sadd.s32 %s243, 1
      %p247 = scmp.eq.s32.totalorder %s20, 1
      %p248 = scmp.ne.s32.totalorder %s243, %s245
      %p249 = scmp.eq.s32.totalorder %s20, 0
      %p250 = por %p248, %p249
      %p251 = scmp.ne.s32.totalorder %s243, %s245
      %p252 = scmp.eq.s32.totalorder %s25, 1
      %p253 = por %p251, %p252
      %p254 = scmp.ne.s32.totalorder %s245, %s246
      %p255 = scmp.eq.s32.totalorder %s25, 0
      %p256 = por %p254, %p255
      %p257 = scmp.ne.s32.totalorder %s245, %s246
      %p258 = scmp.eq.s32.totalorder %s26, 1
      %p259 = por %p257, %p258
      %p261 = scmp.ne.s32.totalorder %s246, %s260
      %p262 = scmp.eq.s32.totalorder %s26, 0
      %p263 = por %p261, %p262
      %s264 = ssub.s32 %s20, %s27
      %p265 = scmp.eq.s32.totalorder %s264, 0
      %s267 = sadd.s32 %s266, 1
      %s268 = scalar_select %p265, %s266, %s267
      %p271 = pneg %p265
      %p272 = scmp.eq.s32.totalorder %s20, 1
      %p273 = por %p271, %p272
      %p274 = scmp.ne.s32.totalorder %s266, %s269
      %p275 = scmp.eq.s32.totalorder %s20, 0
      %p276 = por %p274, %p275
      %p277 = scmp.ne.s32.totalorder %s266, %s269
      %p278 = scmp.eq.s32.totalorder %s25, 1
      %p279 = por %p277, %p278
      %p280 = scmp.ne.s32.totalorder %s269, %s270
      %p281 = scmp.eq.s32.totalorder %s25, 0
      %p282 = por %p280, %p281
      %p283 = scmp.ne.s32.totalorder %s269, %s270
      %p284 = scmp.eq.s32.totalorder %s26, 1
      %p285 = por %p283, %p284
      %p287 = scmp.ne.s32.totalorder %s270, %s286
      %p288 = scmp.eq.s32.totalorder %s26, 0
      %p289 = por %p287, %p288
      %p290 = scmp.le.s32.totalorder 1, %s20
      %p291 = scmp.lt.s32.totalorder %s20, 3
      %p292 = pnand %p290, %p291
      %p293 = pneg %p292
      // Predicated region
      $region9: #{net_forward.1} parent=5 // pred_check
        _
      $region10: #{net_forward.1} parent=5 // pred_check_branch
        %295 = sbr.rel (%p292) target = $region12
      $region11: #{net_forward.1} parent=5 // pred_region
        %s296 = ssub.s32 %s20, 1
        // Predicated region
        $region13: #{net_forward.1} parent=11 // pred_check
          %p297 = pneg %p67
        $region14: #{net_forward.1} parent=11 // pred_check_branch
          %299 = sbr.rel (%p297) target = $region16
        $region15: #{net_forward.1} parent=11 // pred_region
          %s301 = ssub.s32 18816, 18816
          %302 = vsyncadd [#allocation5], %s301
          %s303 = sshll.u32 [#allocation4], 4
          %s304 = int_to_ptr.vmem [resolvable:$true] %s303
          %309 = dma.hbm_to_vmem [thread:$0]  %s1, 18816, %s304, [#allocation5], 896, 896, 56
        $region16: #{net_forward.1} parent=11 // pred_fallthru
          _
        // Predicated region
        $region17: #{net_forward.1} parent=11 // pred_check
          %p310 = pneg %p88
        $region18: #{net_forward.1} parent=11 // pred_check_branch
          %312 = sbr.rel (%p310) target = $region20
        $region19: #{net_forward.1} parent=11 // pred_region
          _
        $region20: #{net_forward.1} parent=11 // pred_fallthru
          _
        // Predicated region
        $region21: #{net_forward.1} parent=11 // pred_check
          %p313 = pneg %p109
        $region22: #{net_forward.1} parent=11 // pred_check_branch
          %315 = sbr.rel (%p313) target = $region24
        $region23: #{net_forward.1} parent=11 // pred_region
          %s317 = ssub.s32 48640, 48640
          %318 = vsyncadd [#allocation7], %s317
          %s319 = sshll.u32 [#allocation6], 4
          %s320 = int_to_ptr.vmem [resolvable:$true] %s319
          %325 = dma.hbm_to_vmem [thread:$0]  %s3, 48640, %s320, [#allocation7], 2432, 2432, 152
        $region24: #{net_forward.1} parent=11 // pred_fallthru
          _
        // Predicated region
        $region25: #{net_forward.1} parent=11 // pred_check
          %p326 = pneg %p130
        $region26: #{net_forward.1} parent=11 // pred_check_branch
          %328 = sbr.rel (%p326) target = $region28
        $region27: #{net_forward.1} parent=11 // pred_region
          _
        $region28: #{net_forward.1} parent=11 // pred_fallthru
          _
        // Predicated region
        $region29: #{net_forward.1} parent=11 // pred_check
          %p329 = pneg %p151
        $region30: #{net_forward.1} parent=11 // pred_check_branch
          %331 = sbr.rel (%p329) target = $region32
        $region31: #{net_forward.1} parent=11 // pred_region
          _
        $region32: #{net_forward.1} parent=11 // pred_fallthru
          _
        // Predicated region
        $region33: #{net_forward.1} parent=11 // pred_check
          %p332 = pneg %p172
        $region34: #{net_forward.1} parent=11 // pred_check_branch
          %334 = sbr.rel (%p332) target = $region36
        $region35: #{net_forward.1} parent=11 // pred_region
          _
        $region36: #{net_forward.1} parent=11 // pred_fallthru
          _
        // Predicated region
        $region37: #{net_forward.1} parent=11 // pred_check
          %p335 = pneg %p193
        $region38: #{net_forward.1} parent=11 // pred_check_branch
          %337 = sbr.rel (%p335) target = $region40
        $region39: #{net_forward.1} parent=11 // pred_region
          %s339 = ssub.s32 1408, 1408
          %340 = vsyncadd [#allocation7], %s339
          %s341 = sshll.u32 [#allocation8], 4
          %s342 = int_to_ptr.vmem [resolvable:$true] %s341
          %347 = dma.hbm_to_vmem [thread:$0]  %s7, 1408, %s342, [#allocation7], 128, 128, 8
        $region40: #{net_forward.1} parent=11 // pred_fallthru
          _
        // Predicated region
        $region41: #{net_forward.1} parent=11 // pred_check
          %p348 = pneg %p214
        $region42: #{net_forward.1} parent=11 // pred_check_branch
          %350 = sbr.rel (%p348) target = $region44
        $region43: #{net_forward.1} parent=11 // pred_region
          _
        $region44: #{net_forward.1} parent=11 // pred_fallthru
          _
        // Predicated region
        $region45: #{net_forward.1} parent=11 // pred_check
          %p351 = pneg %p235
        $region46: #{net_forward.1} parent=11 // pred_check_branch
          %353 = sbr.rel (%p351) target = $region48
        $region47: #{net_forward.1} parent=11 // pred_region
          %s355 = ssub.s32 256, 256
          %356 = vsyncadd [#allocation10], %s355
          %s357 = sshll.u32 [#allocation9], 4
          %s358 = int_to_ptr.vmem [resolvable:$true] %s357
          %363 = dma.hbm_to_vmem [thread:$0]  %s9, 256, %s358, [#allocation10], 128, 128, 8
        $region48: #{net_forward.1} parent=11 // pred_fallthru
          _
        // Predicated region
        $region49: #{net_forward.1} parent=11 // pred_check
          %p364 = pneg %p256
        $region50: #{net_forward.1} parent=11 // pred_check_branch
          %366 = sbr.rel (%p364) target = $region52
        $region51: #{net_forward.1} parent=11 // pred_region
          _
        $region52: #{net_forward.1} parent=11 // pred_fallthru
          _
      $region12: #{net_forward.1} parent=5 // pred_fallthru
        _
      %p367 = scmp.lt.s32.totalorder %s20, 2
      // Predicated region
      $region53: #{net_forward.1} parent=5 // pred_check
        %p368 = pneg %p367
      $region54: #{net_forward.1} parent=5 // pred_check_branch
        %370 = sbr.rel (%p368) target = $region56
      $region55: #{net_forward.1} parent=5 // pred_region
        // Predicated region
        $region57: #{net_forward.1} parent=55 // pred_check
          %p371 = pneg %p40
        $region58: #{net_forward.1} parent=55 // pred_check_branch
          %373 = sbr.rel (%p371) target = $region60
        $region59: #{net_forward.1} parent=55 // pred_region
          %p374 = scmp.lt.s32.totalorder %s20, 1
          %s375 = scalar_select %p374, %s20, 1
          %s376 = smul.addr %s375, 4
          %s377 = smul.addr %s376, 8
          %s378 = scalar_lea.vmem %s0, %s377
        $region60: #{net_forward.1} parent=55 // pred_fallthru
          _
      $region56: #{net_forward.1} parent=5 // pred_fallthru
        _
      %p379 = scmp.le.s32.totalorder 1, %s20
      %p380 = scmp.lt.s32.totalorder %s20, 3
      %p381 = pnand %p379, %p380
      %p382 = pneg %p381
      // Predicated region
      $region61: #{net_forward.1} parent=5 // pred_check
        _
      $region62: #{net_forward.1} parent=5 // pred_check_branch
        %384 = sbr.rel (%p381) target = $region64
      $region63: #{net_forward.1} parent=5 // pred_region
        %s385 = ssub.s32 %s20, 1
        // Predicated region
        $region65: #{net_forward.1} parent=63 // pred_check
          %p386 = pneg %p67
        $region66: #{net_forward.1} parent=63 // pred_check_branch
          %388 = sbr.rel (%p386) target = $region68
        $region67: #{net_forward.1} parent=63 // pred_region
          %389 = dma.done [#allocation5], 18816
        $region68: #{net_forward.1} parent=63 // pred_fallthru
          _
        // Predicated region
        $region69: #{net_forward.1} parent=63 // pred_check
          %p390 = pneg %p109
        $region70: #{net_forward.1} parent=63 // pred_check_branch
          %392 = sbr.rel (%p390) target = $region72
        $region71: #{net_forward.1} parent=63 // pred_region
          %393 = dma.done [#allocation7], 48640
        $region72: #{net_forward.1} parent=63 // pred_fallthru
          _
        // Predicated region
        $region73: #{net_forward.1} parent=63 // pred_check
          %p394 = pneg %p193
        $region74: #{net_forward.1} parent=63 // pred_check_branch
          %396 = sbr.rel (%p394) target = $region76
        $region75: #{net_forward.1} parent=63 // pred_region
          %397 = dma.done [#allocation7], 1408
        $region76: #{net_forward.1} parent=63 // pred_fallthru
          _
        // Predicated region
        $region77: #{net_forward.1} parent=63 // pred_check
          %p398 = pneg %p235
        $region78: #{net_forward.1} parent=63 // pred_check_branch
          %400 = sbr.rel (%p398) target = $region80
        $region79: #{net_forward.1} parent=63 // pred_region
          %401 = dma.done [#allocation10], 256
        $region80: #{net_forward.1} parent=63 // pred_fallthru
          _
        %p402 = scmp.lt.s32.totalorder %s25, 1
        %s403 = scalar_select %p402, %s25, 1
        %s404 = smul.addr %s403, 4
        %s405 = smul.addr %s404, 8
        %s406 = scalar_lea.vmem %s0, %s405
        %p407 = pneg %p46
        %p408 = pneg %p43
        %p409 = pneg %p67
        %p410 = pneg %p64
        %p411 = pneg %p88
        %p412 = pneg %p85
        %p413 = pneg %p109
        %p414 = pneg %p106
        %p415 = pneg %p130
        %p416 = pneg %p127
        %p417 = pneg %p151
        %p418 = pneg %p148
        %p419 = pneg %p172
        %p420 = pneg %p169
        %p421 = pneg %p193
        %p422 = pneg %p190
        %p423 = pneg %p214
        %p424 = pneg %p211
        %p425 = pneg %p235
        %p426 = pneg %p232
        %p427 = pneg %p256
        %p428 = pneg %p253
        %p429 = pneg %p282
        %p430 = pneg %p279
        %p431 = scmp.lt.s32.totalorder %s25, 1
        %s432 = scalar_select %p431, %s25, 1
        %s433 = smul.addr %s432, 2
        %s434 = smul.addr %s433, 8
        %s435 = scalar_lea.vmem %s11, %s434
        %p436 = scmp.lt.s32.totalorder %s25, 1
        %s437 = scalar_select %p436, %s25, 1
        %s438 = smul.addr %s437, 4
        %s439 = smul.addr %s438, 8
        %s440 = scalar_lea.vmem %s0, %s439
        %p441 = scmp.lt.s32.totalorder %s25, 1
        %s442 = scalar_select %p441, %s25, 1
        %s443 = smul.addr %s442, 2
        %s444 = smul.addr %s443, 8
        %s445 = scalar_lea.vmem %s11, %s444
        %v446 = vld [vmem:[%s440] sm:$0xff]
        %v447 = vld [vmem:[%s440 + $0x8] sm:$0xff]
        %v448 = vld [vmem:[%s440 + $0x10] sm:$0xff]
        %v449 = vld [vmem:[%s440 + $0x18] sm:$0xff]
        %vm450 = vcmask 228352
        %451 = vst.msk [vmem:[#allocation2] sm:$0xff] %vm450, 0.0
        %452 = vst.msk [vmem:[#allocation2 + $0x8] sm:$0xff] %vm450, 0.0
        %453 = vst.msk [vmem:[#allocation2 + $0x10] sm:$0xff] %vm450, 0.0
        %454 = vst.msk [vmem:[#allocation2 + $0x18] sm:$0xff] %vm450, 0.0
        %455 = vst.msk [vmem:[#allocation2 + $0x20] sm:$0xff] %vm450, 0.0
        %456 = vst.msk [vmem:[#allocation2 + $0x28] sm:$0xff] %vm450, 0.0
        %457 = vst.msk [vmem:[#allocation2 + $0x30] sm:$0xff] %vm450, 0.0
        %458 = vst.msk [vmem:[#allocation2 + $0x38] sm:$0xff] %vm450, 0.0
        %459 = vst.msk [vmem:[#allocation2 + $0x40] sm:$0xff] %vm450, 0.0
        %460 = vst.msk [vmem:[#allocation2 + $0x48] sm:$0xff] %vm450, 0.0
        %461 = vst.msk [vmem:[#allocation2 + $0x50] sm:$0xff] %vm450, 0.0
        %462 = vst.msk [vmem:[#allocation2 + $0x58] sm:$0xff] %vm450, 0.0
        %463 = vst.msk [vmem:[#allocation2 + $0x60] sm:$0xff] %vm450, 0.0
        %464 = vst.msk [vmem:[#allocation2 + $0x68] sm:$0xff] %vm450, 0.0
        %465 = vst.msk [vmem:[#allocation2 + $0x70] sm:$0xff] %vm450, 0.0
        %466 = vst.msk [vmem:[#allocation2 + $0x78] sm:$0xff] %vm450, 0.0
        %467 = vst.msk [vmem:[#allocation2 + $0x80] sm:$0xff] %vm450, 0.0
        %468 = vst.msk [vmem:[#allocation2 + $0x88] sm:$0xff] %vm450, 0.0
        %469 = vst.msk [vmem:[#allocation2 + $0x90] sm:$0xff] %vm450, 0.0
        %470 = vst.msk [vmem:[#allocation2 + $0x98] sm:$0xff] %vm450, 0.0
        %471 = vst.msk [vmem:[#allocation2 + $0xa0] sm:$0xff] %vm450, 0.0
        %472 = vst.msk [vmem:[#allocation2 + $0xa8] sm:$0xff] %vm450, 0.0
        %473 = vst.msk [vmem:[#allocation2 + $0xb0] sm:$0xff] %vm450, 0.0
        %474 = vst.msk [vmem:[#allocation2 + $0xb8] sm:$0xff] %vm450, 0.0
        %475 = vst.msk [vmem:[#allocation2 + $0xc0] sm:$0xff] %vm450, 0.0
        %476 = vst.msk [vmem:[#allocation2 + $0xc8] sm:$0xff] %vm450, 0.0
        %477 = vst.msk [vmem:[#allocation2 + $0xd0] sm:$0xff] %vm450, 0.0
        %478 = vst.msk [vmem:[#allocation2 + $0xd8] sm:$0xff] %vm450, 0.0
        %479 = vst.msk [vmem:[#allocation2 + $0xe0] sm:$0xff] %vm450, 0.0
        %480 = vst.msk [vmem:[#allocation2 + $0xe8] sm:$0xff] %vm450, 0.0
        %481 = vst.msk [vmem:[#allocation2 + $0xf0] sm:$0xff] %vm450, 0.0
        %482 = vst.msk [vmem:[#allocation2 + $0xf8] sm:$0xff] %vm450, 0.0
        %483 = vst.msk [vmem:[#allocation2 + $0x100] sm:$0xff] %vm450, 0.0
        %484 = vst.msk [vmem:[#allocation2 + $0x108] sm:$0xff] %vm450, 0.0
        %485 = vst.msk [vmem:[#allocation2 + $0x110] sm:$0xff] %vm450, 0.0
        %486 = vst.msk [vmem:[#allocation2 + $0x118] sm:$0xff] %vm450, 0.0
        %487 = vst.msk [vmem:[#allocation2 + $0x120] sm:$0xff] %vm450, 0.0
        %488 = vst.msk [vmem:[#allocation2 + $0x128] sm:$0xff] %vm450, 0.0
        %489 = vst.msk [vmem:[#allocation2 + $0x130] sm:$0xff] %vm450, 0.0
        %490 = vst.msk [vmem:[#allocation2 + $0x138] sm:$0xff] %vm450, 0.0
        %491 = vst.msk [vmem:[#allocation2 + $0x140] sm:$0xff] %vm450, 0.0
        %492 = vst.msk [vmem:[#allocation2 + $0x148] sm:$0xff] %vm450, 0.0
        %493 = vst.msk [vmem:[#allocation2 + $0x150] sm:$0xff] %vm450, 0.0
        %494 = vst.msk [vmem:[#allocation2 + $0x158] sm:$0xff] %vm450, 0.0
        %495 = vst.msk [vmem:[#allocation2 + $0x160] sm:$0xff] %vm450, 0.0
        %496 = vst.msk [vmem:[#allocation2 + $0x168] sm:$0xff] %vm450, 0.0
        %497 = vst.msk [vmem:[#allocation2 + $0x170] sm:$0xff] %vm450, 0.0
        %498 = vst.msk [vmem:[#allocation2 + $0x178] sm:$0xff] %vm450, 0.0
        %499 = vst.msk [vmem:[#allocation2 + $0x180] sm:$0xff] %vm450, 0.0
        %500 = vst.msk [vmem:[#allocation2 + $0x188] sm:$0xff] %vm450, 0.0
        %501 = vst.msk [vmem:[#allocation2 + $0x190] sm:$0xff] %vm450, 0.0
        %502 = vst.msk [vmem:[#allocation2 + $0x198] sm:$0xff] %vm450, 0.0
        %503 = vst.msk [vmem:[#allocation2 + $0x1a0] sm:$0xff] %vm450, 0.0
        %504 = vst.msk [vmem:[#allocation2 + $0x1a8] sm:$0xff] %vm450, 0.0
        %505 = vst.msk [vmem:[#allocation2 + $0x1b0] sm:$0xff] %vm450, 0.0
        %506 = vst.msk [vmem:[#allocation2 + $0x1b8] sm:$0xff] %vm450, 0.0
        %507 = vst.msk [vmem:[#allocation2 + $0x1c0] sm:$0xff] %vm450, 0.0
        %508 = vst.msk [vmem:[#allocation2 + $0x1c8] sm:$0xff] %vm450, 0.0
        %509 = vst.msk [vmem:[#allocation2 + $0x1d0] sm:$0xff] %vm450, 0.0
        %510 = vst.msk [vmem:[#allocation2 + $0x1d8] sm:$0xff] %vm450, 0.0
        %511 = vst.msk [vmem:[#allocation2 + $0x1e0] sm:$0xff] %vm450, 0.0
        %512 = vst.msk [vmem:[#allocation2 + $0x1e8] sm:$0xff] %vm450, 0.0
        %513 = vst.msk [vmem:[#allocation2 + $0x1f0] sm:$0xff] %vm450, 0.0
        %514 = vst.msk [vmem:[#allocation2 + $0x1f8] sm:$0xff] %vm450, 0.0
        %515 = vst.msk [vmem:[#allocation2 + $0x200] sm:$0xff] %vm450, 0.0
        %516 = vst.msk [vmem:[#allocation2 + $0x208] sm:$0xff] %vm450, 0.0
        %517 = vst.msk [vmem:[#allocation2 + $0x210] sm:$0xff] %vm450, 0.0
        %518 = vst.msk [vmem:[#allocation2 + $0x218] sm:$0xff] %vm450, 0.0
        %519 = vst.msk [vmem:[#allocation2 + $0x220] sm:$0xff] %vm450, 0.0
        %520 = vst.msk [vmem:[#allocation2 + $0x228] sm:$0xff] %vm450, 0.0
        %521 = vst.msk [vmem:[#allocation2 + $0x230] sm:$0xff] %vm450, 0.0
        %522 = vst.msk [vmem:[#allocation2 + $0x238] sm:$0xff] %vm450, 0.0
        %523 = vst.msk [vmem:[#allocation2 + $0x240] sm:$0xff] %vm450, 0.0
        %524 = vst.msk [vmem:[#allocation2 + $0x248] sm:$0xff] %vm450, 0.0
        %525 = vst.msk [vmem:[#allocation2 + $0x250] sm:$0xff] %vm450, 0.0
        %526 = vst.msk [vmem:[#allocation2 + $0x258] sm:$0xff] %vm450, 0.0
        %527 = vst.msk [vmem:[#allocation2 + $0x260] sm:$0xff] %vm450, 0.0
        %528 = vst.msk [vmem:[#allocation2 + $0x268] sm:$0xff] %vm450, 0.0
        %529 = vst.msk [vmem:[#allocation2 + $0x270] sm:$0xff] %vm450, 0.0
        %530 = vst.msk [vmem:[#allocation2 + $0x278] sm:$0xff] %vm450, 0.0
        %531 = vst.msk [vmem:[#allocation2 + $0x280] sm:$0xff] %vm450, 0.0
        %532 = vst.msk [vmem:[#allocation2 + $0x288] sm:$0xff] %vm450, 0.0
        %533 = vst.msk [vmem:[#allocation2 + $0x290] sm:$0xff] %vm450, 0.0
        %534 = vst.msk [vmem:[#allocation2 + $0x298] sm:$0xff] %vm450, 0.0
        %535 = vst.msk [vmem:[#allocation2 + $0x2a0] sm:$0xff] %vm450, 0.0
        %536 = vst.msk [vmem:[#allocation2 + $0x2a8] sm:$0xff] %vm450, 0.0
        %537 = vst.msk [vmem:[#allocation2 + $0x2b0] sm:$0xff] %vm450, 0.0
        %538 = vst.msk [vmem:[#allocation2 + $0x2b8] sm:$0xff] %vm450, 0.0
        %539 = vst.msk [vmem:[#allocation2 + $0x2c0] sm:$0xff] %vm450, 0.0
        %540 = vst.msk [vmem:[#allocation2 + $0x2c8] sm:$0xff] %vm450, 0.0
        %541 = vst.msk [vmem:[#allocation2 + $0x2d0] sm:$0xff] %vm450, 0.0
        %542 = vst.msk [vmem:[#allocation2 + $0x2d8] sm:$0xff] %vm450, 0.0
        %543 = vst.msk [vmem:[#allocation2 + $0x2e0] sm:$0xff] %vm450, 0.0
        %544 = vst.msk [vmem:[#allocation2 + $0x2e8] sm:$0xff] %vm450, 0.0
        %545 = vst.msk [vmem:[#allocation2 + $0x2f0] sm:$0xff] %vm450, 0.0
        %546 = vst.msk [vmem:[#allocation2 + $0x2f8] sm:$0xff] %vm450, 0.0
        %547 = vst.msk [vmem:[#allocation2 + $0x300] sm:$0xff] %vm450, 0.0
        %548 = vst.msk [vmem:[#allocation2 + $0x308] sm:$0xff] %vm450, 0.0
        %549 = vst.msk [vmem:[#allocation2 + $0x310] sm:$0xff] %vm450, 0.0
        %550 = vst.msk [vmem:[#allocation2 + $0x318] sm:$0xff] %vm450, 0.0
        %551 = vst.msk [vmem:[#allocation2] sm:$0xff] %vm450, %v446
        %552 = vst.msk [vmem:[#allocation2 + $0x8] sm:$0xff] %vm450, %v447
        %553 = vst.msk [vmem:[#allocation2 + $0x10] sm:$0xff] %vm450, %v448
        %vm554 = vcmask 224256
        %555 = vst.msk [vmem:[#allocation2 + $0x18] sm:$0xf] %vm554, %v449
        %560 = vrot.lane.b32.xlu0 %v446, 127
        %v561 = vpop.permute.xlu0 %560
        %562 = vrot.lane.b32.xlu0 %v447, 127
        %v563 = vpop.permute.xlu0 %562
        %564 = vrot.lane.b32.xlu0 %v448, 127
        %v565 = vpop.permute.xlu0 %564
        %566 = vrot.lane.b32.xlu0 %v449, 127
        %v567 = vpop.permute.xlu0 %566
        %572 = vst.msk [vmem:[#allocation2 + $0x20] sm:$0xff] %vm450, %v561
        %573 = vst.msk [vmem:[#allocation2 + $0x28] sm:$0xff] %vm450, %v563
        %574 = vst.msk [vmem:[#allocation2 + $0x30] sm:$0xff] %vm450, %v565
        %575 = vst.msk [vmem:[#allocation2 + $0x38] sm:$0xf] %vm554, %v567
        %576 = vrot.lane.b32.xlu0 %v446, 126
        %v577 = vpop.permute.xlu0 %576
        %578 = vrot.lane.b32.xlu0 %v447, 126
        %v579 = vpop.permute.xlu0 %578
        %580 = vrot.lane.b32.xlu0 %v448, 126
        %v581 = vpop.permute.xlu0 %580
        %582 = vrot.lane.b32.xlu0 %v449, 126
        %v583 = vpop.permute.xlu0 %582
        %588 = vst.msk [vmem:[#allocation2 + $0x40] sm:$0xff] %vm450, %v577
        %589 = vst.msk [vmem:[#allocation2 + $0x48] sm:$0xff] %vm450, %v579
        %590 = vst.msk [vmem:[#allocation2 + $0x50] sm:$0xff] %vm450, %v581
        %591 = vst.msk [vmem:[#allocation2 + $0x58] sm:$0xf] %vm554, %v583
        %592 = vrot.lane.b32.xlu0 %v446, 125
        %v593 = vpop.permute.xlu0 %592
        %594 = vrot.lane.b32.xlu0 %v447, 125
        %v595 = vpop.permute.xlu0 %594
        %596 = vrot.lane.b32.xlu0 %v448, 125
        %v597 = vpop.permute.xlu0 %596
        %598 = vrot.lane.b32.xlu0 %v449, 125
        %v599 = vpop.permute.xlu0 %598
        %604 = vst.msk [vmem:[#allocation2 + $0x60] sm:$0xff] %vm450, %v593
        %605 = vst.msk [vmem:[#allocation2 + $0x68] sm:$0xff] %vm450, %v595
        %606 = vst.msk [vmem:[#allocation2 + $0x70] sm:$0xff] %vm450, %v597
        %607 = vst.msk [vmem:[#allocation2 + $0x78] sm:$0xf] %vm554, %v599
        %608 = vrot.lane.b32.xlu0 %v446, 124
        %v609 = vpop.permute.xlu0 %608
        %610 = vrot.lane.b32.xlu0 %v447, 124
        %v611 = vpop.permute.xlu0 %610
        %612 = vrot.lane.b32.xlu0 %v448, 124
        %v613 = vpop.permute.xlu0 %612
        %614 = vrot.lane.b32.xlu0 %v449, 124
        %v615 = vpop.permute.xlu0 %614
        %620 = vst.msk [vmem:[#allocation2 + $0x80] sm:$0xff] %vm450, %v609
        %621 = vst.msk [vmem:[#allocation2 + $0x88] sm:$0xff] %vm450, %v611
        %622 = vst.msk [vmem:[#allocation2 + $0x90] sm:$0xff] %vm450, %v613
        %623 = vst.msk [vmem:[#allocation2 + $0x98] sm:$0xf] %vm554, %v615
        %vm624 = vcmask 228353
        %625 = vst.msk [vmem:[#allocation2 + $0x9f] sm:$0xfe] %vm624, %v446
        %626 = vst.msk [vmem:[#allocation2 + $0xa7] sm:$0xff] %vm450, %v447
        %627 = vst.msk [vmem:[#allocation2 + $0xaf] sm:$0xff] %vm450, %v448
        %vm628 = vcmask 225280
        %629 = vst.msk [vmem:[#allocation2 + $0xb7] sm:$0x1f] %vm628, %v449
        %630 = vst.msk [vmem:[#allocation2 + $0xbf] sm:$0xfe] %vm624, %v561
        %631 = vst.msk [vmem:[#allocation2 + $0xc7] sm:$0xff] %vm450, %v563
        %632 = vst.msk [vmem:[#allocation2 + $0xcf] sm:$0xff] %vm450, %v565
        %633 = vst.msk [vmem:[#allocation2 + $0xd7] sm:$0x1f] %vm628, %v567
        %634 = vst.msk [vmem:[#allocation2 + $0xdf] sm:$0xfe] %vm624, %v577
        %635 = vst.msk [vmem:[#allocation2 + $0xe7] sm:$0xff] %vm450, %v579
        %636 = vst.msk [vmem:[#allocation2 + $0xef] sm:$0xff] %vm450, %v581
        %637 = vst.msk [vmem:[#allocation2 + $0xf7] sm:$0x1f] %vm628, %v583
        %638 = vst.msk [vmem:[#allocation2 + $0xff] sm:$0xfe] %vm624, %v593
        %639 = vst.msk [vmem:[#allocation2 + $0x107] sm:$0xff] %vm450, %v595
        %640 = vst.msk [vmem:[#allocation2 + $0x10f] sm:$0xff] %vm450, %v597
        %641 = vst.msk [vmem:[#allocation2 + $0x117] sm:$0x1f] %vm628, %v599
        %642 = vst.msk [vmem:[#allocation2 + $0x11f] sm:$0xfe] %vm624, %v609
        %643 = vst.msk [vmem:[#allocation2 + $0x127] sm:$0xff] %vm450, %v611
        %644 = vst.msk [vmem:[#allocation2 + $0x12f] sm:$0xff] %vm450, %v613
        %645 = vst.msk [vmem:[#allocation2 + $0x137] sm:$0x1f] %vm628, %v615
        %vm646 = vcmask 228354
        %647 = vst.msk [vmem:[#allocation2 + $0x13e] sm:$0xfc] %vm646, %v446
        %648 = vst.msk [vmem:[#allocation2 + $0x146] sm:$0xff] %vm450, %v447
        %649 = vst.msk [vmem:[#allocation2 + $0x14e] sm:$0xff] %vm450, %v448
        %vm650 = vcmask 226304
        %651 = vst.msk [vmem:[#allocation2 + $0x156] sm:$0x3f] %vm650, %v449
        %652 = vst.msk [vmem:[#allocation2 + $0x15e] sm:$0xfc] %vm646, %v561
        %653 = vst.msk [vmem:[#allocation2 + $0x166] sm:$0xff] %vm450, %v563
        %654 = vst.msk [vmem:[#allocation2 + $0x16e] sm:$0xff] %vm450, %v565
        %655 = vst.msk [vmem:[#allocation2 + $0x176] sm:$0x3f] %vm650, %v567
        %656 = vst.msk [vmem:[#allocation2 + $0x17e] sm:$0xfc] %vm646, %v577
        %657 = vst.msk [vmem:[#allocation2 + $0x186] sm:$0xff] %vm450, %v579
        %658 = vst.msk [vmem:[#allocation2 + $0x18e] sm:$0xff] %vm450, %v581
        %659 = vst.msk [vmem:[#allocation2 + $0x196] sm:$0x3f] %vm650, %v583
        %660 = vst.msk [vmem:[#allocation2 + $0x19e] sm:$0xfc] %vm646, %v593
        %661 = vst.msk [vmem:[#allocation2 + $0x1a6] sm:$0xff] %vm450, %v595
        %662 = vst.msk [vmem:[#allocation2 + $0x1ae] sm:$0xff] %vm450, %v597
        %663 = vst.msk [vmem:[#allocation2 + $0x1b6] sm:$0x3f] %vm650, %v599
        %664 = vst.msk [vmem:[#allocation2 + $0x1be] sm:$0xfc] %vm646, %v609
        %665 = vst.msk [vmem:[#allocation2 + $0x1c6] sm:$0xff] %vm450, %v611
        %666 = vst.msk [vmem:[#allocation2 + $0x1ce] sm:$0xff] %vm450, %v613
        %667 = vst.msk [vmem:[#allocation2 + $0x1d6] sm:$0x3f] %vm650, %v615
        %vm668 = vcmask 228355
        %669 = vst.msk [vmem:[#allocation2 + $0x1dd] sm:$0xf8] %vm668, %v446
        %670 = vst.msk [vmem:[#allocation2 + $0x1e5] sm:$0xff] %vm450, %v447
        %671 = vst.msk [vmem:[#allocation2 + $0x1ed] sm:$0xff] %vm450, %v448
        %vm672 = vcmask 227328
        %673 = vst.msk [vmem:[#allocation2 + $0x1f5] sm:$0x7f] %vm672, %v449
        %674 = vst.msk [vmem:[#allocation2 + $0x1fd] sm:$0xf8] %vm668, %v561
        %675 = vst.msk [vmem:[#allocation2 + $0x205] sm:$0xff] %vm450, %v563
        %676 = vst.msk [vmem:[#allocation2 + $0x20d] sm:$0xff] %vm450, %v565
        %677 = vst.msk [vmem:[#allocation2 + $0x215] sm:$0x7f] %vm672, %v567
        %678 = vst.msk [vmem:[#allocation2 + $0x21d] sm:$0xf8] %vm668, %v577
        %679 = vst.msk [vmem:[#allocation2 + $0x225] sm:$0xff] %vm450, %v579
        %680 = vst.msk [vmem:[#allocation2 + $0x22d] sm:$0xff] %vm450, %v581
        %681 = vst.msk [vmem:[#allocation2 + $0x235] sm:$0x7f] %vm672, %v583
        %682 = vst.msk [vmem:[#allocation2 + $0x23d] sm:$0xf8] %vm668, %v593
        %683 = vst.msk [vmem:[#allocation2 + $0x245] sm:$0xff] %vm450, %v595
        %684 = vst.msk [vmem:[#allocation2 + $0x24d] sm:$0xff] %vm450, %v597
        %685 = vst.msk [vmem:[#allocation2 + $0x255] sm:$0x7f] %vm672, %v599
        %686 = vst.msk [vmem:[#allocation2 + $0x25d] sm:$0xf8] %vm668, %v609
        %687 = vst.msk [vmem:[#allocation2 + $0x265] sm:$0xff] %vm450, %v611
        %688 = vst.msk [vmem:[#allocation2 + $0x26d] sm:$0xff] %vm450, %v613
        %689 = vst.msk [vmem:[#allocation2 + $0x275] sm:$0x7f] %vm672, %v615
        %vm690 = vcmask 228356
        %691 = vst.msk [vmem:[#allocation2 + $0x27c] sm:$0xf0] %vm690, %v446
        %692 = vst.msk [vmem:[#allocation2 + $0x284] sm:$0xff] %vm450, %v447
        %693 = vst.msk [vmem:[#allocation2 + $0x28c] sm:$0xff] %vm450, %v448
        %694 = vst.msk [vmem:[#allocation2 + $0x294] sm:$0xff] %vm450, %v449
        %695 = vst.msk [vmem:[#allocation2 + $0x29c] sm:$0xf0] %vm690, %v561
        %696 = vst.msk [vmem:[#allocation2 + $0x2a4] sm:$0xff] %vm450, %v563
        %697 = vst.msk [vmem:[#allocation2 + $0x2ac] sm:$0xff] %vm450, %v565
        %698 = vst.msk [vmem:[#allocation2 + $0x2b4] sm:$0xff] %vm450, %v567
        %699 = vst.msk [vmem:[#allocation2 + $0x2bc] sm:$0xf0] %vm690, %v577
        %700 = vst.msk [vmem:[#allocation2 + $0x2c4] sm:$0xff] %vm450, %v579
        %701 = vst.msk [vmem:[#allocation2 + $0x2cc] sm:$0xff] %vm450, %v581
        %702 = vst.msk [vmem:[#allocation2 + $0x2d4] sm:$0xff] %vm450, %v583
        %703 = vst.msk [vmem:[#allocation2 + $0x2dc] sm:$0xf0] %vm690, %v593
        %704 = vst.msk [vmem:[#allocation2 + $0x2e4] sm:$0xff] %vm450, %v595
        %705 = vst.msk [vmem:[#allocation2 + $0x2ec] sm:$0xff] %vm450, %v597
        %706 = vst.msk [vmem:[#allocation2 + $0x2f4] sm:$0xff] %vm450, %v599
        %707 = vst.msk [vmem:[#allocation2 + $0x2fc] sm:$0xf0] %vm690, %v609
        %708 = vst.msk [vmem:[#allocation2 + $0x304] sm:$0xff] %vm450, %v611
        %709 = vst.msk [vmem:[#allocation2 + $0x30c] sm:$0xff] %vm450, %v613
        %710 = vst.msk [vmem:[#allocation2 + $0x314] sm:$0xff] %vm450, %v615
        %v711 = vld [vmem:[#allocation4] sm:$0xff]
        %v712 = vld [vmem:[#allocation4 + $0x8] sm:$0xff]
        %v713 = vld [vmem:[#allocation4 + $0x10] sm:$0xff]
        %v714 = vld [vmem:[#allocation4 + $0x18] sm:$0xff]
        %v715 = vld [vmem:[#allocation4 + $0x20] sm:$0xff]
        %v716 = vld [vmem:[#allocation4 + $0x28] sm:$0xff]
        %v717 = vld [vmem:[#allocation4 + $0x30] sm:$0xff]
        %v718 = vld [vmem:[#allocation4 + $0x38] sm:$0xff]
        %v719 = vld [vmem:[#allocation4 + $0x40] sm:$0xff]
        %v720 = vld [vmem:[#allocation4 + $0x48] sm:$0xff]
        %v721 = vld [vmem:[#allocation4 + $0x50] sm:$0xff]
        %v722 = vld [vmem:[#allocation4 + $0x58] sm:$0xff]
        %v723 = vld [vmem:[#allocation4 + $0x60] sm:$0xff]
        %v724 = vld [vmem:[#allocation4 + $0x68] sm:$0xff]
        %v725 = vld [vmem:[#allocation4 + $0x70] sm:$0xff]
        %v726 = vld [vmem:[#allocation4 + $0x78] sm:$0xff]
        %v727 = vld [vmem:[#allocation4 + $0x80] sm:$0xff]
        %v728 = vld [vmem:[#allocation4 + $0x88] sm:$0xff]
        %v729 = vld [vmem:[#allocation4 + $0x90] sm:$0xff]
        %v730 = vld [vmem:[#allocation4 + $0x98] sm:$0xff]
        %v731 = vld [vmem:[#allocation4 + $0xa0] sm:$0xff]
        %v732 = vld [vmem:[#allocation4 + $0xa8] sm:$0xff]
        %v733 = vld [vmem:[#allocation4 + $0xb0] sm:$0xff]
        %v734 = vld [vmem:[#allocation4 + $0xb8] sm:$0xff]
        %v735 = vld [vmem:[#allocation4 + $0xc0] sm:$0xff]
        %v736 = vld [vmem:[#allocation4 + $0xc8] sm:$0xff]
        %v737 = vld [vmem:[#allocation4 + $0xd0] sm:$0xff]
        %v738 = vld [vmem:[#allocation4 + $0xd8] sm:$0xff]
        %v739 = vld [vmem:[#allocation4 + $0xe0] sm:$0xff]
        %v740 = vld [vmem:[#allocation4 + $0xe8] sm:$0xff]
        %v741 = vld [vmem:[#allocation4 + $0xf0] sm:$0xff]
        %v742 = vld [vmem:[#allocation4 + $0xf8] sm:$0xff]
        %v743 = vld [vmem:[#allocation4 + $0x100] sm:$0xff]
        %v744 = vld [vmem:[#allocation4 + $0x108] sm:$0xff]
        %v745 = vld [vmem:[#allocation4 + $0x110] sm:$0xff]
        %v746 = vld [vmem:[#allocation4 + $0x118] sm:$0xff]
        %v747 = vld [vmem:[#allocation4 + $0x120] sm:$0xff]
        %v748 = vld [vmem:[#allocation4 + $0x128] sm:$0xff]
        %v749 = vld [vmem:[#allocation4 + $0x130] sm:$0xff]
        %v750 = vld [vmem:[#allocation4 + $0x138] sm:$0xff]
        %v751 = vld [vmem:[#allocation4 + $0x140] sm:$0xff]
        %v752 = vld [vmem:[#allocation4 + $0x148] sm:$0xff]
        %v753 = vld [vmem:[#allocation4 + $0x150] sm:$0xff]
        %v754 = vld [vmem:[#allocation4 + $0x158] sm:$0xff]
        %v755 = vld [vmem:[#allocation4 + $0x160] sm:$0xff]
        %v756 = vld [vmem:[#allocation4 + $0x168] sm:$0xff]
        %v757 = vld [vmem:[#allocation4 + $0x170] sm:$0xff]
        %v758 = vld [vmem:[#allocation4 + $0x178] sm:$0xff]
        %v759 = vld [vmem:[#allocation4 + $0x180] sm:$0xff]
        %v760 = vld [vmem:[#allocation4 + $0x188] sm:$0xff]
        %v761 = vld [vmem:[#allocation4 + $0x190] sm:$0xff]
        %v762 = vld [vmem:[#allocation4 + $0x198] sm:$0xff]
        %v763 = vld [vmem:[#allocation4 + $0x1a0] sm:$0xff]
        %v764 = vld [vmem:[#allocation4 + $0x1a8] sm:$0xff]
        %v765 = vld [vmem:[#allocation4 + $0x1b0] sm:$0xff]
        %v766 = vld [vmem:[#allocation4 + $0x1b8] sm:$0xff]
        %v767 = vld [vmem:[#allocation4 + $0x1c0] sm:$0xff]
        %v768 = vld [vmem:[#allocation4 + $0x1c8] sm:$0xff]
        %v769 = vld [vmem:[#allocation4 + $0x1d0] sm:$0xff]
        %v770 = vld [vmem:[#allocation4 + $0x1d8] sm:$0xff]
        %v771 = vld [vmem:[#allocation4 + $0x1e0] sm:$0xff]
        %v772 = vld [vmem:[#allocation4 + $0x1e8] sm:$0xff]
        %v773 = vld [vmem:[#allocation4 + $0x1f0] sm:$0xff]
        %v774 = vld [vmem:[#allocation4 + $0x1f8] sm:$0xff]
        %v775 = vld [vmem:[#allocation4 + $0x200] sm:$0xff]
        %v776 = vld [vmem:[#allocation4 + $0x208] sm:$0xff]
        %v777 = vld [vmem:[#allocation4 + $0x210] sm:$0xff]
        %v778 = vld [vmem:[#allocation4 + $0x218] sm:$0xff]
        %v779 = vld [vmem:[#allocation4 + $0x220] sm:$0xff]
        %v780 = vld [vmem:[#allocation4 + $0x228] sm:$0xff]
        %v781 = vld [vmem:[#allocation4 + $0x230] sm:$0xff]
        %v782 = vld [vmem:[#allocation4 + $0x238] sm:$0xff]
        %v783 = vld [vmem:[#allocation4 + $0x240] sm:$0xff]
        %v784 = vld [vmem:[#allocation4 + $0x248] sm:$0xff]
        %v785 = vld [vmem:[#allocation4 + $0x250] sm:$0xff]
        %v786 = vld [vmem:[#allocation4 + $0x258] sm:$0xff]
        %v787 = vld [vmem:[#allocation4 + $0x260] sm:$0xff]
        %v788 = vld [vmem:[#allocation4 + $0x268] sm:$0xff]
        %v789 = vld [vmem:[#allocation4 + $0x270] sm:$0xff]
        %v790 = vld [vmem:[#allocation4 + $0x278] sm:$0xff]
        %v791 = vld [vmem:[#allocation4 + $0x280] sm:$0xff]
        %v792 = vld [vmem:[#allocation4 + $0x288] sm:$0xff]
        %v793 = vld [vmem:[#allocation4 + $0x290] sm:$0xff]
        %v794 = vld [vmem:[#allocation4 + $0x298] sm:$0xff]
        %v795 = vld [vmem:[#allocation4 + $0x2a0] sm:$0xff]
        %v796 = vld [vmem:[#allocation4 + $0x2a8] sm:$0xff]
        %v797 = vld [vmem:[#allocation4 + $0x2b0] sm:$0xff]
        %v798 = vld [vmem:[#allocation4 + $0x2b8] sm:$0xff]
        %v799 = vld [vmem:[#allocation4 + $0x2c0] sm:$0xff]
        %v800 = vld [vmem:[#allocation4 + $0x2c8] sm:$0xff]
        %v801 = vld [vmem:[#allocation4 + $0x2d0] sm:$0xff]
        %v802 = vld [vmem:[#allocation4 + $0x2d8] sm:$0xff]
        %v803 = vld [vmem:[#allocation4 + $0x2e0] sm:$0xff]
        %v804 = vld [vmem:[#allocation4 + $0x2e8] sm:$0xff]
        %v805 = vld [vmem:[#allocation4 + $0x2f0] sm:$0xff]
        %v806 = vld [vmem:[#allocation4 + $0x2f8] sm:$0xff]
        %v807 = vld [vmem:[#allocation4 + $0x300] sm:$0xff]
        %v808 = vld [vmem:[#allocation4 + $0x308] sm:$0xff]
        %v809 = vld [vmem:[#allocation4 + $0x310] sm:$0xff]
        %v810 = vld [vmem:[#allocation4 + $0x318] sm:$0xff]
        %v811 = vld [vmem:[#allocation4 + $0x320] sm:$0xff]
        %v812 = vld [vmem:[#allocation4 + $0x328] sm:$0xff]
        %v813 = vld [vmem:[#allocation4 + $0x330] sm:$0xff]
        %v814 = vld [vmem:[#allocation4 + $0x338] sm:$0xff]
        %v815 = vld [vmem:[#allocation4 + $0x340] sm:$0xff]
        %v816 = vld [vmem:[#allocation4 + $0x348] sm:$0xff]
        %v817 = vld [vmem:[#allocation4 + $0x350] sm:$0xff]
        %v818 = vld [vmem:[#allocation4 + $0x358] sm:$0xff]
        %v819 = vld [vmem:[#allocation4 + $0x360] sm:$0xff]
        %v820 = vld [vmem:[#allocation4 + $0x368] sm:$0xff]
        %v821 = vld [vmem:[#allocation4 + $0x370] sm:$0xff]
        %v822 = vld [vmem:[#allocation4 + $0x378] sm:$0xff]
        %v823 = vld [vmem:[#allocation4 + $0x380] sm:$0xff]
        %v824 = vld [vmem:[#allocation4 + $0x388] sm:$0xff]
        %v825 = vld [vmem:[#allocation4 + $0x390] sm:$0xff]
        %v826 = vld [vmem:[#allocation4 + $0x398] sm:$0xff]
        %v827 = vld [vmem:[#allocation4 + $0x3a0] sm:$0xff]
        %v828 = vld [vmem:[#allocation4 + $0x3a8] sm:$0xff]
        %v829 = vld [vmem:[#allocation4 + $0x3b0] sm:$0xff]
        %v830 = vld [vmem:[#allocation4 + $0x3b8] sm:$0xff]
        %v831 = vld [vmem:[#allocation4 + $0x3c0] sm:$0xff]
        %v832 = vld [vmem:[#allocation4 + $0x3c8] sm:$0xff]
        %v833 = vld [vmem:[#allocation4 + $0x3d0] sm:$0xff]
        %v834 = vld [vmem:[#allocation4 + $0x3d8] sm:$0xff]
        %v835 = vld [vmem:[#allocation4 + $0x3e0] sm:$0xff]
        %v836 = vld [vmem:[#allocation4 + $0x3e8] sm:$0xff]
        %v837 = vld [vmem:[#allocation4 + $0x3f0] sm:$0xff]
        %v838 = vld [vmem:[#allocation4 + $0x3f8] sm:$0xff]
        %v839 = vld [vmem:[#allocation4 + $0x400] sm:$0xff]
        %v840 = vld [vmem:[#allocation4 + $0x408] sm:$0xff]
        %v841 = vld [vmem:[#allocation4 + $0x410] sm:$0xff]
        %v842 = vld [vmem:[#allocation4 + $0x418] sm:$0xff]
        %v843 = vld [vmem:[#allocation4 + $0x420] sm:$0xff]
        %v844 = vld [vmem:[#allocation4 + $0x428] sm:$0xff]
        %v845 = vld [vmem:[#allocation4 + $0x430] sm:$0xff]
        %v846 = vld [vmem:[#allocation4 + $0x438] sm:$0xff]
        %v847 = vld [vmem:[#allocation4 + $0x440] sm:$0xff]
        %v848 = vld [vmem:[#allocation4 + $0x448] sm:$0xff]
        %v849 = vld [vmem:[#allocation4 + $0x450] sm:$0xff]
        %v850 = vld [vmem:[#allocation4 + $0x458] sm:$0xff]
        %v851 = vld [vmem:[#allocation4 + $0x460] sm:$0xff]
        %v852 = vld [vmem:[#allocation4 + $0x468] sm:$0xff]
        %v853 = vld [vmem:[#allocation4 + $0x470] sm:$0xff]
        %v854 = vld [vmem:[#allocation4 + $0x478] sm:$0xff]
        %v855 = vld [vmem:[#allocation4 + $0x480] sm:$0xff]
        %v856 = vld [vmem:[#allocation4 + $0x488] sm:$0xff]
        %v857 = vld [vmem:[#allocation4 + $0x490] sm:$0xff]
        %v858 = vld [vmem:[#allocation2] sm:$0xff]
        %v859 = vld [vmem:[#allocation2 + $0x8] sm:$0xff]
        %v860 = vld [vmem:[#allocation2 + $0x10] sm:$0xff]
        %v861 = vld [vmem:[#allocation2 + $0x18] sm:$0xff]
        %v862 = vld [vmem:[#allocation2 + $0x20] sm:$0xff]
        %v863 = vld [vmem:[#allocation2 + $0x28] sm:$0xff]
        %v864 = vld [vmem:[#allocation2 + $0x30] sm:$0xff]
        %v865 = vld [vmem:[#allocation2 + $0x38] sm:$0xff]
        %v866 = vld [vmem:[#allocation2 + $0x40] sm:$0xff]
        %v867 = vld [vmem:[#allocation2 + $0x48] sm:$0xff]
        %v868 = vld [vmem:[#allocation2 + $0x50] sm:$0xff]
        %v869 = vld [vmem:[#allocation2 + $0x58] sm:$0xff]
        %v870 = vld [vmem:[#allocation2 + $0x60] sm:$0xff]
        %v871 = vld [vmem:[#allocation2 + $0x68] sm:$0xff]
        %v872 = vld [vmem:[#allocation2 + $0x70] sm:$0xff]
        %v873 = vld [vmem:[#allocation2 + $0x78] sm:$0xff]
        %v874 = vld [vmem:[#allocation2 + $0x80] sm:$0xff]
        %v875 = vld [vmem:[#allocation2 + $0x88] sm:$0xff]
        %v876 = vld [vmem:[#allocation2 + $0x90] sm:$0xff]
        %v877 = vld [vmem:[#allocation2 + $0x98] sm:$0xff]
        %v878 = vld [vmem:[#allocation2 + $0xa0] sm:$0xff]
        %v879 = vld [vmem:[#allocation2 + $0xa8] sm:$0xff]
        %v880 = vld [vmem:[#allocation2 + $0xb0] sm:$0xff]
        %v881 = vld [vmem:[#allocation2 + $0xb8] sm:$0xff]
        %v882 = vld [vmem:[#allocation2 + $0xc0] sm:$0xff]
        %v883 = vld [vmem:[#allocation2 + $0xc8] sm:$0xff]
        %v884 = vld [vmem:[#allocation2 + $0xd0] sm:$0xff]
        %v885 = vld [vmem:[#allocation2 + $0xd8] sm:$0xff]
        %v886 = vld [vmem:[#allocation2 + $0xe0] sm:$0xff]
        %v887 = vld [vmem:[#allocation2 + $0xe8] sm:$0xff]
        %v888 = vld [vmem:[#allocation2 + $0xf0] sm:$0xff]
        %v889 = vld [vmem:[#allocation2 + $0xf8] sm:$0xff]
        %v890 = vld [vmem:[#allocation2 + $0x100] sm:$0xff]
        %v891 = vld [vmem:[#allocation2 + $0x108] sm:$0xff]
        %v892 = vld [vmem:[#allocation2 + $0x110] sm:$0xff]
        %v893 = vld [vmem:[#allocation2 + $0x118] sm:$0xff]
        %v894 = vld [vmem:[#allocation2 + $0x120] sm:$0xff]
        %v895 = vld [vmem:[#allocation2 + $0x128] sm:$0xff]
        %v896 = vld [vmem:[#allocation2 + $0x130] sm:$0xff]
        %v897 = vld [vmem:[#allocation2 + $0x138] sm:$0xff]
        %v898 = vld [vmem:[#allocation2 + $0x140] sm:$0xff]
        %v899 = vld [vmem:[#allocation2 + $0x148] sm:$0xff]
        %v900 = vld [vmem:[#allocation2 + $0x150] sm:$0xff]
        %v901 = vld [vmem:[#allocation2 + $0x158] sm:$0xff]
        %v902 = vld [vmem:[#allocation2 + $0x160] sm:$0xff]
        %v903 = vld [vmem:[#allocation2 + $0x168] sm:$0xff]
        %v904 = vld [vmem:[#allocation2 + $0x170] sm:$0xff]
        %v905 = vld [vmem:[#allocation2 + $0x178] sm:$0xff]
        %v906 = vld [vmem:[#allocation2 + $0x180] sm:$0xff]
        %v907 = vld [vmem:[#allocation2 + $0x188] sm:$0xff]
        %v908 = vld [vmem:[#allocation2 + $0x190] sm:$0xff]
        %v909 = vld [vmem:[#allocation2 + $0x198] sm:$0xff]
        %v910 = vld [vmem:[#allocation2 + $0x1a0] sm:$0xff]
        %v911 = vld [vmem:[#allocation2 + $0x1a8] sm:$0xff]
        %v912 = vld [vmem:[#allocation2 + $0x1b0] sm:$0xff]
        %v913 = vld [vmem:[#allocation2 + $0x1b8] sm:$0xff]
        %v914 = vld [vmem:[#allocation2 + $0x1c0] sm:$0xff]
        %v915 = vld [vmem:[#allocation2 + $0x1c8] sm:$0xff]
        %v916 = vld [vmem:[#allocation2 + $0x1d0] sm:$0xff]
        %v917 = vld [vmem:[#allocation2 + $0x1d8] sm:$0xff]
        %v918 = vld [vmem:[#allocation2 + $0x1e0] sm:$0xff]
        %v919 = vld [vmem:[#allocation2 + $0x1e8] sm:$0xff]
        %v920 = vld [vmem:[#allocation2 + $0x1f0] sm:$0xff]
        %v921 = vld [vmem:[#allocation2 + $0x1f8] sm:$0xff]
        %v922 = vld [vmem:[#allocation2 + $0x200] sm:$0xff]
        %v923 = vld [vmem:[#allocation2 + $0x208] sm:$0xff]
        %v924 = vld [vmem:[#allocation2 + $0x210] sm:$0xff]
        %v925 = vld [vmem:[#allocation2 + $0x218] sm:$0xff]
        %v926 = vld [vmem:[#allocation2 + $0x220] sm:$0xff]
        %v927 = vld [vmem:[#allocation2 + $0x228] sm:$0xff]
        %v928 = vld [vmem:[#allocation2 + $0x230] sm:$0xff]
        %v929 = vld [vmem:[#allocation2 + $0x238] sm:$0xff]
        %v930 = vld [vmem:[#allocation2 + $0x240] sm:$0xff]
        %v931 = vld [vmem:[#allocation2 + $0x248] sm:$0xff]
        %v932 = vld [vmem:[#allocation2 + $0x250] sm:$0xff]
        %v933 = vld [vmem:[#allocation2 + $0x258] sm:$0xff]
        %v934 = vld [vmem:[#allocation2 + $0x260] sm:$0xff]
        %v935 = vld [vmem:[#allocation2 + $0x268] sm:$0xff]
        %v936 = vld [vmem:[#allocation2 + $0x270] sm:$0xff]
        %v937 = vld [vmem:[#allocation2 + $0x278] sm:$0xff]
        %v938 = vld [vmem:[#allocation2 + $0x280] sm:$0xff]
        %v939 = vld [vmem:[#allocation2 + $0x288] sm:$0xff]
        %v940 = vld [vmem:[#allocation2 + $0x290] sm:$0xff]
        %v941 = vld [vmem:[#allocation2 + $0x298] sm:$0xff]
        %v942 = vld [vmem:[#allocation2 + $0x2a0] sm:$0xff]
        %v943 = vld [vmem:[#allocation2 + $0x2a8] sm:$0xff]
        %v944 = vld [vmem:[#allocation2 + $0x2b0] sm:$0xff]
        %v945 = vld [vmem:[#allocation2 + $0x2b8] sm:$0xff]
        %v946 = vld [vmem:[#allocation2 + $0x2c0] sm:$0xff]
        %v947 = vld [vmem:[#allocation2 + $0x2c8] sm:$0xff]
        %v948 = vld [vmem:[#allocation2 + $0x2d0] sm:$0xff]
        %v949 = vld [vmem:[#allocation2 + $0x2d8] sm:$0xff]
        %v950 = vld [vmem:[#allocation2 + $0x2e0] sm:$0xff]
        %v951 = vld [vmem:[#allocation2 + $0x2e8] sm:$0xff]
        %v952 = vld [vmem:[#allocation2 + $0x2f0] sm:$0xff]
        %v953 = vld [vmem:[#allocation2 + $0x2f8] sm:$0xff]
        %v954 = vld [vmem:[#allocation2 + $0x300] sm:$0xff]
        %v955 = vld [vmem:[#allocation2 + $0x308] sm:$0xff]
        %v956 = vld [vmem:[#allocation2 + $0x310] sm:$0xff]
        %v957 = vld [vmem:[#allocation2 + $0x318] sm:$0xff]
        %v958 = vld [vmem:[%s2] sm:$0xff]
        %v959 = vld [vmem:[%s2 + $0x8] sm:$0xff]
        %v960 = vld [vmem:[%s2 + $0x10] sm:$0xff]
        %v961 = vld [vmem:[%s2 + $0x18] sm:$0xff]
        %v962 = vld [vmem:[%s2 + $0x20] sm:$0xff]
        %v963 = vld [vmem:[%s2 + $0x28] sm:$0xff]
        %v964 = vld [vmem:[%s2 + $0x30] sm:$0xff]
        %v965 = vld [vmem:[%s2 + $0x38] sm:$0xff]
        %v966 = vld [vmem:[%s2 + $0x40] sm:$0xff]
        %v967 = vld [vmem:[%s2 + $0x48] sm:$0xff]
        %v968 = vld [vmem:[%s2 + $0x50] sm:$0xff]
        %v969 = vld [vmem:[%s2 + $0x58] sm:$0xff]
        %v970 = vld [vmem:[%s2 + $0x60] sm:$0xff]
        %v971 = vld [vmem:[%s2 + $0x68] sm:$0xff]
        %v972 = vld [vmem:[%s2 + $0x70] sm:$0xff]
        %v973 = vld [vmem:[%s2 + $0x78] sm:$0xff]
        %v974 = vld [vmem:[%s2 + $0x80] sm:$0xff]
        %v975 = vld [vmem:[%s2 + $0x88] sm:$0xff]
        %v976 = vld [vmem:[%s2 + $0x90] sm:$0xff]
        %v977 = vld [vmem:[%s2 + $0x98] sm:$0xff]
        %v978 = vld [vmem:[%s2 + $0xa0] sm:$0xff]
        %980 = vset.pattern.permute.xlu0 0
        %981 = vperm.xlu0 %980, %v958
        %v982 = vpop.permute.xlu0 %981
        %985 = vset.pattern.permute.xlu0 0
        %986 = vperm.xlu0 %985, %v959
        %v987 = vpop.permute.xlu0 %986
        %990 = vset.pattern.permute.xlu0 0
        %991 = vperm.xlu0 %990, %v960
        %v992 = vpop.permute.xlu0 %991
        %995 = vset.pattern.permute.xlu0 0
        %996 = vperm.xlu0 %995, %v961
        %v997 = vpop.permute.xlu0 %996
        %1000 = vset.pattern.permute.xlu0 0
        %1001 = vperm.xlu0 %1000, %v962
        %v1002 = vpop.permute.xlu0 %1001
        %1005 = vset.pattern.permute.xlu0 0
        %1006 = vperm.xlu0 %1005, %v963
        %v1007 = vpop.permute.xlu0 %1006
        %1010 = vset.pattern.permute.xlu0 0
        %1011 = vperm.xlu0 %1010, %v964
        %v1012 = vpop.permute.xlu0 %1011
        %1015 = vset.pattern.permute.xlu0 0
        %1016 = vperm.xlu0 %1015, %v965
        %v1017 = vpop.permute.xlu0 %1016
        %1020 = vset.pattern.permute.xlu0 0
        %1021 = vperm.xlu0 %1020, %v966
        %v1022 = vpop.permute.xlu0 %1021
        %1025 = vset.pattern.permute.xlu0 0
        %1026 = vperm.xlu0 %1025, %v967
        %v1027 = vpop.permute.xlu0 %1026
        %1030 = vset.pattern.permute.xlu0 0
        %1031 = vperm.xlu0 %1030, %v968
        %v1032 = vpop.permute.xlu0 %1031
        %1035 = vset.pattern.permute.xlu0 0
        %1036 = vperm.xlu0 %1035, %v969
        %v1037 = vpop.permute.xlu0 %1036
        %1040 = vset.pattern.permute.xlu0 0
        %1041 = vperm.xlu0 %1040, %v970
        %v1042 = vpop.permute.xlu0 %1041
        %1045 = vset.pattern.permute.xlu0 0
        %1046 = vperm.xlu0 %1045, %v971
        %v1047 = vpop.permute.xlu0 %1046
        %1050 = vset.pattern.permute.xlu0 0
        %1051 = vperm.xlu0 %1050, %v972
        %v1052 = vpop.permute.xlu0 %1051
        %1055 = vset.pattern.permute.xlu0 0
        %1056 = vperm.xlu0 %1055, %v973
        %v1057 = vpop.permute.xlu0 %1056
        %1060 = vset.pattern.permute.xlu0 0
        %1061 = vperm.xlu0 %1060, %v974
        %v1062 = vpop.permute.xlu0 %1061
        %1065 = vset.pattern.permute.xlu0 0
        %1066 = vperm.xlu0 %1065, %v975
        %v1067 = vpop.permute.xlu0 %1066
        %1070 = vset.pattern.permute.xlu0 0
        %1071 = vperm.xlu0 %1070, %v976
        %v1072 = vpop.permute.xlu0 %1071
        %1075 = vset.pattern.permute.xlu0 0
        %1076 = vperm.xlu0 %1075, %v977
        %v1077 = vpop.permute.xlu0 %1076
        %1080 = vset.pattern.permute.xlu0 0
        %1081 = vperm.xlu0 %1080, %v978
        %v1082 = vpop.permute.xlu0 %1081
        %vm1084 = vcmask 261120
        %v1086 = vsel %vm1084, %v717, 0
        %v1089 = vsel %vm1084, %v724, 0
        %v1092 = vsel %vm1084, %v731, 0
        %v1095 = vsel %vm1084, %v738, 0
        %v1098 = vsel %vm1084, %v745, 0
        %v1101 = vsel %vm1084, %v752, 0
        %v1104 = vsel %vm1084, %v759, 0
        %v1107 = vsel %vm1084, %v766, 0
        %v1110 = vsel %vm1084, %v773, 0
        %v1113 = vsel %vm1084, %v780, 0
        %v1116 = vsel %vm1084, %v787, 0
        %v1119 = vsel %vm1084, %v794, 0
        %v1122 = vsel %vm1084, %v801, 0
        %v1125 = vsel %vm1084, %v808, 0
        %v1128 = vsel %vm1084, %v815, 0
        %v1131 = vsel %vm1084, %v822, 0
        %v1134 = vsel %vm1084, %v829, 0
        %v1137 = vsel %vm1084, %v836, 0
        %v1140 = vsel %vm1084, %v843, 0
        %v1143 = vsel %vm1084, %v850, 0
        %v1146 = vsel %vm1084, %v857, 0
        %1148 = vmatprep.subr.mxu0 0.0
        %1149 = vmatpush1.msra.mxu0 %v873
        %1150 = vmatprep.subr.mxu0 0.0
        %1151 = vmatpush1.msra.mxu0 %v872
        %1152 = vmatprep.subr.mxu0 0.0
        %1153 = vmatpush1.msra.mxu0 %v871
        %1154 = vmatprep.subr.mxu0 0.0
        %1155 = vmatpush1.msra.mxu0 %v870
        %1156 = vmatprep.subr.mxu0 0.0
        %1157 = vmatpush1.msra.mxu0 %v869
        %1158 = vmatprep.subr.mxu0 0.0
        %1159 = vmatpush1.msra.mxu0 %v868
        %1160 = vmatprep.subr.mxu0 0.0
        %1161 = vmatpush1.msra.mxu0 %v867
        %1162 = vmatprep.subr.mxu0 0.0
        %1163 = vmatpush1.msra.mxu0 %v866
        %1164 = vmatprep.subr.mxu0 0.0
        %1165 = vmatpush1.msra.mxu0 %v865
        %1166 = vmatprep.subr.mxu0 0.0
        %1167 = vmatpush1.msra.mxu0 %v864
        %1168 = vmatprep.subr.mxu0 0.0
        %1169 = vmatpush1.msra.mxu0 %v863
        %1170 = vmatprep.subr.mxu0 0.0
        %1171 = vmatpush1.msra.mxu0 %v862
        %1172 = vmatprep.subr.mxu0 0.0
        %1173 = vmatpush1.msra.mxu0 %v861
        %1174 = vmatprep.subr.mxu0 0.0
        %1175 = vmatpush1.msra.mxu0 %v860
        %1176 = vmatprep.subr.mxu0 0.0
        %1177 = vmatpush1.msra.mxu0 %v859
        %1178 = vmatprep.subr.mxu0 0.0
        %1179 = vmatpush1.msra.mxu0 %v858
        %1180 = vmatprep.subr.mxu0 0.0
        %1181 = vmatpush2.msra.mxu0 %v889
        %1182 = vmatprep.subr.mxu0 0.0
        %1183 = vmatpush2.msra.mxu0 %v888
        %1184 = vmatprep.subr.mxu0 0.0
        %1185 = vmatpush2.msra.mxu0 %v887
        %1186 = vmatprep.subr.mxu0 0.0
        %1187 = vmatpush2.msra.mxu0 %v886
        %1188 = vmatprep.subr.mxu0 0.0
        %1189 = vmatpush2.msra.mxu0 %v885
        %1190 = vmatprep.subr.mxu0 0.0
        %1191 = vmatpush2.msra.mxu0 %v884
        %1192 = vmatprep.subr.mxu0 0.0
        %1193 = vmatpush2.msra.mxu0 %v883
        %1194 = vmatprep.subr.mxu0 0.0
        %1195 = vmatpush2.msra.mxu0 %v882
        %1196 = vmatprep.subr.mxu0 0.0
        %1197 = vmatpush2.msra.mxu0 %v881
        %1198 = vmatprep.subr.mxu0 0.0
        %1199 = vmatpush2.msra.mxu0 %v880
        %1200 = vmatprep.subr.mxu0 0.0
        %1201 = vmatpush2.msra.mxu0 %v879
        %1202 = vmatprep.subr.mxu0 0.0
        %1203 = vmatpush2.msra.mxu0 %v878
        %1204 = vmatprep.subr.mxu0 0.0
        %1205 = vmatpush2.msra.mxu0 %v877
        %1206 = vmatprep.subr.mxu0 0.0
        %1207 = vmatpush2.msra.mxu0 %v876
        %1208 = vmatprep.subr.mxu0 0.0
        %1209 = vmatpush2.msra.mxu0 %v875
        %1210 = vmatprep.subr.mxu0 0.0
        %1211 = vmatpush2.msra.mxu0 %v874
        %1212 = vmatprep.mubr.f32.mxu0 %v712
        %1213 = vmatmul.mubr.f32.gmra.mxu0 %v711
        %v1214 = vpop.f32.mrf.mxu0
        %v1215 = vadd.f32 %v982, %v1214
        %v1216 = vpop.f32.mrf.mxu0
        %1217 = vmatprep.mubr.f32.mxu0 %v719
        %1218 = vmatmul.mubr.f32.gmra.mxu0 %v718
        %v1219 = vpop.f32.mrf.mxu0
        %v1220 = vadd.f32 %v987, %v1219
        %v1221 = vpop.f32.mrf.mxu0
        %1222 = vmatprep.mubr.f32.mxu0 %v726
        %1223 = vmatmul.mubr.f32.gmra.mxu0 %v725
        %v1224 = vpop.f32.mrf.mxu0
        %v1225 = vadd.f32 %v992, %v1224
        %v1226 = vpop.f32.mrf.mxu0
        %1227 = vmatprep.mubr.f32.mxu0 %v733
        %1228 = vmatmul.mubr.f32.gmra.mxu0 %v732
        %v1229 = vpop.f32.mrf.mxu0
        %v1230 = vadd.f32 %v997, %v1229
        %v1231 = vpop.f32.mrf.mxu0
        %1232 = vmatprep.mubr.f32.mxu0 %v740
        %1233 = vmatmul.mubr.f32.gmra.mxu0 %v739
        %v1234 = vpop.f32.mrf.mxu0
        %v1235 = vadd.f32 %v1002, %v1234
        %v1236 = vpop.f32.mrf.mxu0
        %1237 = vmatprep.mubr.f32.mxu0 %v747
        %1238 = vmatmul.mubr.f32.gmra.mxu0 %v746
        %v1239 = vpop.f32.mrf.mxu0
        %v1240 = vadd.f32 %v1007, %v1239
        %v1241 = vpop.f32.mrf.mxu0
        %1242 = vmatprep.mubr.f32.mxu0 %v754
        %1243 = vmatmul.mubr.f32.gmra.mxu0 %v753
        %v1244 = vpop.f32.mrf.mxu0
        %v1245 = vadd.f32 %v1012, %v1244
        %v1246 = vpop.f32.mrf.mxu0
        %1247 = vmatprep.mubr.f32.mxu0 %v761
        %1248 = vmatmul.mubr.f32.gmra.mxu0 %v760
        %v1249 = vpop.f32.mrf.mxu0
        %v1250 = vadd.f32 %v1017, %v1249
        %v1251 = vpop.f32.mrf.mxu0
        %1252 = vmatprep.mubr.f32.mxu0 %v768
        %1253 = vmatmul.mubr.f32.gmra.mxu0 %v767
        %v1254 = vpop.f32.mrf.mxu0
        %v1255 = vadd.f32 %v1022, %v1254
        %v1256 = vpop.f32.mrf.mxu0
        %1257 = vmatprep.mubr.f32.mxu0 %v775
        %1258 = vmatmul.mubr.f32.gmra.mxu0 %v774
        %v1259 = vpop.f32.mrf.mxu0
        %v1260 = vadd.f32 %v1027, %v1259
        %v1261 = vpop.f32.mrf.mxu0
        %1262 = vmatprep.mubr.f32.mxu0 %v782
        %1263 = vmatmul.mubr.f32.gmra.mxu0 %v781
        %v1264 = vpop.f32.mrf.mxu0
        %v1265 = vadd.f32 %v1032, %v1264
        %v1266 = vpop.f32.mrf.mxu0
        %1267 = vmatprep.mubr.f32.mxu0 %v789
        %1268 = vmatmul.mubr.f32.gmra.mxu0 %v788
        %v1269 = vpop.f32.mrf.mxu0
        %v1270 = vadd.f32 %v1037, %v1269
        %v1271 = vpop.f32.mrf.mxu0
        %1272 = vmatprep.mubr.f32.mxu0 %v796
        %1273 = vmatmul.mubr.f32.gmra.mxu0 %v795
        %v1274 = vpop.f32.mrf.mxu0
        %v1275 = vadd.f32 %v1042, %v1274
        %v1276 = vpop.f32.mrf.mxu0
        %1277 = vmatprep.mubr.f32.mxu0 %v803
        %1278 = vmatmul.mubr.f32.gmra.mxu0 %v802
        %v1279 = vpop.f32.mrf.mxu0
        %v1280 = vadd.f32 %v1047, %v1279
        %v1281 = vpop.f32.mrf.mxu0
        %1282 = vmatprep.mubr.f32.mxu0 %v810
        %1283 = vmatmul.mubr.f32.gmra.mxu0 %v809
        %v1284 = vpop.f32.mrf.mxu0
        %v1285 = vadd.f32 %v1052, %v1284
        %v1286 = vpop.f32.mrf.mxu0
        %1287 = vmatprep.mubr.f32.mxu0 %v817
        %1288 = vmatmul.mubr.f32.gmra.mxu0 %v816
        %v1289 = vpop.f32.mrf.mxu0
        %v1290 = vadd.f32 %v1057, %v1289
        %v1291 = vpop.f32.mrf.mxu0
        %1292 = vmatprep.mubr.f32.mxu0 %v824
        %1293 = vmatmul.mubr.f32.gmra.mxu0 %v823
        %v1294 = vpop.f32.mrf.mxu0
        %v1295 = vadd.f32 %v1062, %v1294
        %v1296 = vpop.f32.mrf.mxu0
        %1297 = vmatprep.mubr.f32.mxu0 %v831
        %1298 = vmatmul.mubr.f32.gmra.mxu0 %v830
        %v1299 = vpop.f32.mrf.mxu0
        %v1300 = vadd.f32 %v1067, %v1299
        %v1301 = vpop.f32.mrf.mxu0
        %1302 = vmatprep.mubr.f32.mxu0 %v838
        %1303 = vmatmul.mubr.f32.gmra.mxu0 %v837
        %v1304 = vpop.f32.mrf.mxu0
        %v1305 = vadd.f32 %v1072, %v1304
        %v1306 = vpop.f32.mrf.mxu0
        %1307 = vmatprep.mubr.f32.mxu0 %v845
        %1308 = vmatmul.mubr.f32.gmra.mxu0 %v844
        %v1309 = vpop.f32.mrf.mxu0
        %v1310 = vadd.f32 %v1077, %v1309
        %v1311 = vpop.f32.mrf.mxu0
        %1312 = vmatprep.mubr.f32.mxu0 %v852
        %1313 = vmatmul.mubr.f32.gmra.mxu0 %v851
        %v1314 = vpop.f32.mrf.mxu0
        %v1315 = vadd.f32 %v1082, %v1314
        %v1316 = vpop.f32.mrf.mxu0
        %1317 = vdwg.mxu0
        %1318 = vmatprep.subr.mxu0 0.0
        %1319 = vmatpush1.msra.mxu0 %v905
        %1320 = vmatprep.subr.mxu0 0.0
        %1321 = vmatpush1.msra.mxu0 %v904
        %1322 = vmatprep.subr.mxu0 0.0
        %1323 = vmatpush1.msra.mxu0 %v903
        %1324 = vmatprep.subr.mxu0 0.0
        %1325 = vmatpush1.msra.mxu0 %v902
        %1326 = vmatprep.subr.mxu0 0.0
        %1327 = vmatpush1.msra.mxu0 %v901
        %1328 = vmatprep.subr.mxu0 0.0
        %1329 = vmatpush1.msra.mxu0 %v900
        %1330 = vmatprep.subr.mxu0 0.0
        %1331 = vmatpush1.msra.mxu0 %v899
        %1332 = vmatprep.subr.mxu0 0.0
        %1333 = vmatpush1.msra.mxu0 %v898
        %1334 = vmatprep.subr.mxu0 0.0
        %1335 = vmatpush1.msra.mxu0 %v897
        %1336 = vmatprep.subr.mxu0 0.0
        %1337 = vmatpush1.msra.mxu0 %v896
        %1338 = vmatprep.subr.mxu0 0.0
        %1339 = vmatpush1.msra.mxu0 %v895
        %1340 = vmatprep.subr.mxu0 0.0
        %1341 = vmatpush1.msra.mxu0 %v894
        %1342 = vmatprep.subr.mxu0 0.0
        %1343 = vmatpush1.msra.mxu0 %v893
        %1344 = vmatprep.subr.mxu0 0.0
        %1345 = vmatpush1.msra.mxu0 %v892
        %1346 = vmatprep.subr.mxu0 0.0
        %1347 = vmatpush1.msra.mxu0 %v891
        %1348 = vmatprep.subr.mxu0 0.0
        %1349 = vmatpush1.msra.mxu0 %v890
        %1350 = vmatprep.subr.mxu0 0.0
        %1351 = vmatpush2.msra.mxu0 %v921
        %1352 = vmatprep.subr.mxu0 0.0
        %1353 = vmatpush2.msra.mxu0 %v920
        %1354 = vmatprep.subr.mxu0 0.0
        %1355 = vmatpush2.msra.mxu0 %v919
        %1356 = vmatprep.subr.mxu0 0.0
        %1357 = vmatpush2.msra.mxu0 %v918
        %1358 = vmatprep.subr.mxu0 0.0
        %1359 = vmatpush2.msra.mxu0 %v917
        %1360 = vmatprep.subr.mxu0 0.0
        %1361 = vmatpush2.msra.mxu0 %v916
        %1362 = vmatprep.subr.mxu0 0.0
        %1363 = vmatpush2.msra.mxu0 %v915
        %1364 = vmatprep.subr.mxu0 0.0
        %1365 = vmatpush2.msra.mxu0 %v914
        %1366 = vmatprep.subr.mxu0 0.0
        %1367 = vmatpush2.msra.mxu0 %v913
        %1368 = vmatprep.subr.mxu0 0.0
        %1369 = vmatpush2.msra.mxu0 %v912
        %1370 = vmatprep.subr.mxu0 0.0
        %1371 = vmatpush2.msra.mxu0 %v911
        %1372 = vmatprep.subr.mxu0 0.0
        %1373 = vmatpush2.msra.mxu0 %v910
        %1374 = vmatprep.subr.mxu0 0.0
        %1375 = vmatpush2.msra.mxu0 %v909
        %1376 = vmatprep.subr.mxu0 0.0
        %1377 = vmatpush2.msra.mxu0 %v908
        %1378 = vmatprep.subr.mxu0 0.0
        %1379 = vmatpush2.msra.mxu0 %v907
        %1380 = vmatprep.subr.mxu0 0.0
        %1381 = vmatpush2.msra.mxu0 %v906
        %1382 = vmatprep.mubr.f32.mxu0 %v714
        %1383 = vmatmul.mubr.f32.gmra.mxu0 %v713
        %v1384 = vpop.f32.mrf.mxu0
        %v1385 = vadd.f32 %v1215, %v1384
        %v1386 = vpop.f32.mrf.mxu0
        %1387 = vmatprep.mubr.f32.mxu0 %v721
        %1388 = vmatmul.mubr.f32.gmra.mxu0 %v720
        %v1389 = vpop.f32.mrf.mxu0
        %v1390 = vadd.f32 %v1220, %v1389
        %v1391 = vpop.f32.mrf.mxu0
        %1392 = vmatprep.mubr.f32.mxu0 %v728
        %1393 = vmatmul.mubr.f32.gmra.mxu0 %v727
        %v1394 = vpop.f32.mrf.mxu0
        %v1395 = vadd.f32 %v1225, %v1394
        %v1396 = vpop.f32.mrf.mxu0
        %1397 = vmatprep.mubr.f32.mxu0 %v735
        %1398 = vmatmul.mubr.f32.gmra.mxu0 %v734
        %v1399 = vpop.f32.mrf.mxu0
        %v1400 = vadd.f32 %v1230, %v1399
        %v1401 = vpop.f32.mrf.mxu0
        %1402 = vmatprep.mubr.f32.mxu0 %v742
        %1403 = vmatmul.mubr.f32.gmra.mxu0 %v741
        %v1404 = vpop.f32.mrf.mxu0
        %v1405 = vadd.f32 %v1235, %v1404
        %v1406 = vpop.f32.mrf.mxu0
        %1407 = vmatprep.mubr.f32.mxu0 %v749
        %1408 = vmatmul.mubr.f32.gmra.mxu0 %v748
        %v1409 = vpop.f32.mrf.mxu0
        %v1410 = vadd.f32 %v1240, %v1409
        %v1411 = vpop.f32.mrf.mxu0
        %1412 = vmatprep.mubr.f32.mxu0 %v756
        %1413 = vmatmul.mubr.f32.gmra.mxu0 %v755
        %v1414 = vpop.f32.mrf.mxu0
        %v1415 = vadd.f32 %v1245, %v1414
        %v1416 = vpop.f32.mrf.mxu0
        %1417 = vmatprep.mubr.f32.mxu0 %v763
        %1418 = vmatmul.mubr.f32.gmra.mxu0 %v762
        %v1419 = vpop.f32.mrf.mxu0
        %v1420 = vadd.f32 %v1250, %v1419
        %v1421 = vpop.f32.mrf.mxu0
        %1422 = vmatprep.mubr.f32.mxu0 %v770
        %1423 = vmatmul.mubr.f32.gmra.mxu0 %v769
        %v1424 = vpop.f32.mrf.mxu0
        %v1425 = vadd.f32 %v1255, %v1424
        %v1426 = vpop.f32.mrf.mxu0
        %1427 = vmatprep.mubr.f32.mxu0 %v777
        %1428 = vmatmul.mubr.f32.gmra.mxu0 %v776
        %v1429 = vpop.f32.mrf.mxu0
        %v1430 = vadd.f32 %v1260, %v1429
        %v1431 = vpop.f32.mrf.mxu0
        %1432 = vmatprep.mubr.f32.mxu0 %v784
        %1433 = vmatmul.mubr.f32.gmra.mxu0 %v783
        %v1434 = vpop.f32.mrf.mxu0
        %v1435 = vadd.f32 %v1265, %v1434
        %v1436 = vpop.f32.mrf.mxu0
        %1437 = vmatprep.mubr.f32.mxu0 %v791
        %1438 = vmatmul.mubr.f32.gmra.mxu0 %v790
        %v1439 = vpop.f32.mrf.mxu0
        %v1440 = vadd.f32 %v1270, %v1439
        %v1441 = vpop.f32.mrf.mxu0
        %1442 = vmatprep.mubr.f32.mxu0 %v798
        %1443 = vmatmul.mubr.f32.gmra.mxu0 %v797
        %v1444 = vpop.f32.mrf.mxu0
        %v1445 = vadd.f32 %v1275, %v1444
        %v1446 = vpop.f32.mrf.mxu0
        %1447 = vmatprep.mubr.f32.mxu0 %v805
        %1448 = vmatmul.mubr.f32.gmra.mxu0 %v804
        %v1449 = vpop.f32.mrf.mxu0
        %v1450 = vadd.f32 %v1280, %v1449
        %v1451 = vpop.f32.mrf.mxu0
        %1452 = vmatprep.mubr.f32.mxu0 %v812
        %1453 = vmatmul.mubr.f32.gmra.mxu0 %v811
        %v1454 = vpop.f32.mrf.mxu0
        %v1455 = vadd.f32 %v1285, %v1454
        %v1456 = vpop.f32.mrf.mxu0
        %1457 = vmatprep.mubr.f32.mxu0 %v819
        %1458 = vmatmul.mubr.f32.gmra.mxu0 %v818
        %v1459 = vpop.f32.mrf.mxu0
        %v1460 = vadd.f32 %v1290, %v1459
        %v1461 = vpop.f32.mrf.mxu0
        %1462 = vmatprep.mubr.f32.mxu0 %v826
        %1463 = vmatmul.mubr.f32.gmra.mxu0 %v825
        %v1464 = vpop.f32.mrf.mxu0
        %v1465 = vadd.f32 %v1295, %v1464
        %v1466 = vpop.f32.mrf.mxu0
        %1467 = vmatprep.mubr.f32.mxu0 %v833
        %1468 = vmatmul.mubr.f32.gmra.mxu0 %v832
        %v1469 = vpop.f32.mrf.mxu0
        %v1470 = vadd.f32 %v1300, %v1469
        %v1471 = vpop.f32.mrf.mxu0
        %1472 = vmatprep.mubr.f32.mxu0 %v840
        %1473 = vmatmul.mubr.f32.gmra.mxu0 %v839
        %v1474 = vpop.f32.mrf.mxu0
        %v1475 = vadd.f32 %v1305, %v1474
        %v1476 = vpop.f32.mrf.mxu0
        %1477 = vmatprep.mubr.f32.mxu0 %v847
        %1478 = vmatmul.mubr.f32.gmra.mxu0 %v846
        %v1479 = vpop.f32.mrf.mxu0
        %v1480 = vadd.f32 %v1310, %v1479
        %v1481 = vpop.f32.mrf.mxu0
        %1482 = vmatprep.mubr.f32.mxu0 %v854
        %1483 = vmatmul.mubr.f32.gmra.mxu0 %v853
        %v1484 = vpop.f32.mrf.mxu0
        %v1485 = vadd.f32 %v1315, %v1484
        %v1486 = vpop.f32.mrf.mxu0
        %1487 = vdwg.mxu0
        %1488 = vmatprep.subr.mxu0 0.0
        %1489 = vmatpush1.msra.mxu0 %v937
        %1490 = vmatprep.subr.mxu0 0.0
        %1491 = vmatpush1.msra.mxu0 %v936
        %1492 = vmatprep.subr.mxu0 0.0
        %1493 = vmatpush1.msra.mxu0 %v935
        %1494 = vmatprep.subr.mxu0 0.0
        %1495 = vmatpush1.msra.mxu0 %v934
        %1496 = vmatprep.subr.mxu0 0.0
        %1497 = vmatpush1.msra.mxu0 %v933
        %1498 = vmatprep.subr.mxu0 0.0
        %1499 = vmatpush1.msra.mxu0 %v932
        %1500 = vmatprep.subr.mxu0 0.0
        %1501 = vmatpush1.msra.mxu0 %v931
        %1502 = vmatprep.subr.mxu0 0.0
        %1503 = vmatpush1.msra.mxu0 %v930
        %1504 = vmatprep.subr.mxu0 0.0
        %1505 = vmatpush1.msra.mxu0 %v929
        %1506 = vmatprep.subr.mxu0 0.0
        %1507 = vmatpush1.msra.mxu0 %v928
        %1508 = vmatprep.subr.mxu0 0.0
        %1509 = vmatpush1.msra.mxu0 %v927
        %1510 = vmatprep.subr.mxu0 0.0
        %1511 = vmatpush1.msra.mxu0 %v926
        %1512 = vmatprep.subr.mxu0 0.0
        %1513 = vmatpush1.msra.mxu0 %v925
        %1514 = vmatprep.subr.mxu0 0.0
        %1515 = vmatpush1.msra.mxu0 %v924
        %1516 = vmatprep.subr.mxu0 0.0
        %1517 = vmatpush1.msra.mxu0 %v923
        %1518 = vmatprep.subr.mxu0 0.0
        %1519 = vmatpush1.msra.mxu0 %v922
        %1520 = vmatprep.subr.mxu0 0.0
        %1521 = vmatpush2.msra.mxu0 %v953
        %1522 = vmatprep.subr.mxu0 0.0
        %1523 = vmatpush2.msra.mxu0 %v952
        %1524 = vmatprep.subr.mxu0 0.0
        %1525 = vmatpush2.msra.mxu0 %v951
        %1526 = vmatprep.subr.mxu0 0.0
        %1527 = vmatpush2.msra.mxu0 %v950
        %1528 = vmatprep.subr.mxu0 0.0
        %1529 = vmatpush2.msra.mxu0 %v949
        %1530 = vmatprep.subr.mxu0 0.0
        %1531 = vmatpush2.msra.mxu0 %v948
        %1532 = vmatprep.subr.mxu0 0.0
        %1533 = vmatpush2.msra.mxu0 %v947
        %1534 = vmatprep.subr.mxu0 0.0
        %1535 = vmatpush2.msra.mxu0 %v946
        %1536 = vmatprep.subr.mxu0 0.0
        %1537 = vmatpush2.msra.mxu0 %v945
        %1538 = vmatprep.subr.mxu0 0.0
        %1539 = vmatpush2.msra.mxu0 %v944
        %1540 = vmatprep.subr.mxu0 0.0
        %1541 = vmatpush2.msra.mxu0 %v943
        %1542 = vmatprep.subr.mxu0 0.0
        %1543 = vmatpush2.msra.mxu0 %v942
        %1544 = vmatprep.subr.mxu0 0.0
        %1545 = vmatpush2.msra.mxu0 %v941
        %1546 = vmatprep.subr.mxu0 0.0
        %1547 = vmatpush2.msra.mxu0 %v940
        %1548 = vmatprep.subr.mxu0 0.0
        %1549 = vmatpush2.msra.mxu0 %v939
        %1550 = vmatprep.subr.mxu0 0.0
        %1551 = vmatpush2.msra.mxu0 %v938
        %1552 = vmatprep.mubr.f32.mxu0 %v716
        %1553 = vmatmul.mubr.f32.gmra.mxu0 %v715
        %v1554 = vpop.f32.mrf.mxu0
        %v1555 = vadd.f32 %v1385, %v1554
        %v1556 = vpop.f32.mrf.mxu0
        %1557 = vmatprep.mubr.f32.mxu0 %v723
        %1558 = vmatmul.mubr.f32.gmra.mxu0 %v722
        %v1559 = vpop.f32.mrf.mxu0
        %v1560 = vadd.f32 %v1390, %v1559
        %v1561 = vpop.f32.mrf.mxu0
        %1562 = vmatprep.mubr.f32.mxu0 %v730
        %1563 = vmatmul.mubr.f32.gmra.mxu0 %v729
        %v1564 = vpop.f32.mrf.mxu0
        %v1565 = vadd.f32 %v1395, %v1564
        %v1566 = vpop.f32.mrf.mxu0
        %1567 = vmatprep.mubr.f32.mxu0 %v737
        %1568 = vmatmul.mubr.f32.gmra.mxu0 %v736
        %v1569 = vpop.f32.mrf.mxu0
        %v1570 = vadd.f32 %v1400, %v1569
        %v1571 = vpop.f32.mrf.mxu0
        %1572 = vmatprep.mubr.f32.mxu0 %v744
        %1573 = vmatmul.mubr.f32.gmra.mxu0 %v743
        %v1574 = vpop.f32.mrf.mxu0
        %v1575 = vadd.f32 %v1405, %v1574
        %v1576 = vpop.f32.mrf.mxu0
        %1577 = vmatprep.mubr.f32.mxu0 %v751
        %1578 = vmatmul.mubr.f32.gmra.mxu0 %v750
        %v1579 = vpop.f32.mrf.mxu0
        %v1580 = vadd.f32 %v1410, %v1579
        %v1581 = vpop.f32.mrf.mxu0
        %1582 = vmatprep.mubr.f32.mxu0 %v758
        %1583 = vmatmul.mubr.f32.gmra.mxu0 %v757
        %v1584 = vpop.f32.mrf.mxu0
        %v1585 = vadd.f32 %v1415, %v1584
        %v1586 = vpop.f32.mrf.mxu0
        %1587 = vmatprep.mubr.f32.mxu0 %v765
        %1588 = vmatmul.mubr.f32.gmra.mxu0 %v764
        %v1589 = vpop.f32.mrf.mxu0
        %v1590 = vadd.f32 %v1420, %v1589
        %v1591 = vpop.f32.mrf.mxu0
        %1592 = vmatprep.mubr.f32.mxu0 %v772
        %1593 = vmatmul.mubr.f32.gmra.mxu0 %v771
        %v1594 = vpop.f32.mrf.mxu0
        %v1595 = vadd.f32 %v1425, %v1594
        %v1596 = vpop.f32.mrf.mxu0
        %1597 = vmatprep.mubr.f32.mxu0 %v779
        %1598 = vmatmul.mubr.f32.gmra.mxu0 %v778
        %v1599 = vpop.f32.mrf.mxu0
        %v1600 = vadd.f32 %v1430, %v1599
        %v1601 = vpop.f32.mrf.mxu0
        %1602 = vmatprep.mubr.f32.mxu0 %v786
        %1603 = vmatmul.mubr.f32.gmra.mxu0 %v785
        %v1604 = vpop.f32.mrf.mxu0
        %v1605 = vadd.f32 %v1435, %v1604
        %v1606 = vpop.f32.mrf.mxu0
        %1607 = vmatprep.mubr.f32.mxu0 %v793
        %1608 = vmatmul.mubr.f32.gmra.mxu0 %v792
        %v1609 = vpop.f32.mrf.mxu0
        %v1610 = vadd.f32 %v1440, %v1609
        %v1611 = vpop.f32.mrf.mxu0
        %1612 = vmatprep.mubr.f32.mxu0 %v800
        %1613 = vmatmul.mubr.f32.gmra.mxu0 %v799
        %v1614 = vpop.f32.mrf.mxu0
        %v1615 = vadd.f32 %v1445, %v1614
        %v1616 = vpop.f32.mrf.mxu0
        %1617 = vmatprep.mubr.f32.mxu0 %v807
        %1618 = vmatmul.mubr.f32.gmra.mxu0 %v806
        %v1619 = vpop.f32.mrf.mxu0
        %v1620 = vadd.f32 %v1450, %v1619
        %v1621 = vpop.f32.mrf.mxu0
        %1622 = vmatprep.mubr.f32.mxu0 %v814
        %1623 = vmatmul.mubr.f32.gmra.mxu0 %v813
        %v1624 = vpop.f32.mrf.mxu0
        %v1625 = vadd.f32 %v1455, %v1624
        %v1626 = vpop.f32.mrf.mxu0
        %1627 = vmatprep.mubr.f32.mxu0 %v821
        %1628 = vmatmul.mubr.f32.gmra.mxu0 %v820
        %v1629 = vpop.f32.mrf.mxu0
        %v1630 = vadd.f32 %v1460, %v1629
        %v1631 = vpop.f32.mrf.mxu0
        %1632 = vmatprep.mubr.f32.mxu0 %v828
        %1633 = vmatmul.mubr.f32.gmra.mxu0 %v827
        %v1634 = vpop.f32.mrf.mxu0
        %v1635 = vadd.f32 %v1465, %v1634
        %v1636 = vpop.f32.mrf.mxu0
        %1637 = vmatprep.mubr.f32.mxu0 %v835
        %1638 = vmatmul.mubr.f32.gmra.mxu0 %v834
        %v1639 = vpop.f32.mrf.mxu0
        %v1640 = vadd.f32 %v1470, %v1639
        %v1641 = vpop.f32.mrf.mxu0
        %1642 = vmatprep.mubr.f32.mxu0 %v842
        %1643 = vmatmul.mubr.f32.gmra.mxu0 %v841
        %v1644 = vpop.f32.mrf.mxu0
        %v1645 = vadd.f32 %v1475, %v1644
        %v1646 = vpop.f32.mrf.mxu0
        %1647 = vmatprep.mubr.f32.mxu0 %v849
        %1648 = vmatmul.mubr.f32.gmra.mxu0 %v848
        %v1649 = vpop.f32.mrf.mxu0
        %v1650 = vadd.f32 %v1480, %v1649
        %v1651 = vpop.f32.mrf.mxu0
        %1652 = vmatprep.mubr.f32.mxu0 %v856
        %1653 = vmatmul.mubr.f32.gmra.mxu0 %v855
        %v1654 = vpop.f32.mrf.mxu0
        %v1655 = vadd.f32 %v1485, %v1654
        %v1656 = vpop.f32.mrf.mxu0
        %1657 = vdwg.mxu0
        %1658 = vmatprep.subr.mxu0 0.0
        %1659 = vmatpush1.msra.mxu0 0.0
        %1660 = vmatprep.subr.mxu0 0.0
        %1661 = vmatpush1.msra.mxu0 0.0
        %1662 = vmatprep.subr.mxu0 0.0
        %1663 = vmatpush1.msra.mxu0 0.0
        %1664 = vmatprep.subr.mxu0 0.0
        %1665 = vmatpush1.msra.mxu0 0.0
        %1666 = vmatprep.subr.mxu0 0.0
        %1667 = vmatpush1.msra.mxu0 0.0
        %1668 = vmatprep.subr.mxu0 0.0
        %1669 = vmatpush1.msra.mxu0 0.0
        %1670 = vmatprep.subr.mxu0 0.0
        %1671 = vmatpush1.msra.mxu0 0.0
        %1672 = vmatprep.subr.mxu0 0.0
        %1673 = vmatpush1.msra.mxu0 0.0
        %1674 = vmatprep.subr.mxu0 0.0
        %1675 = vmatpush1.msra.mxu0 0.0
        %1676 = vmatprep.subr.mxu0 0.0
        %1677 = vmatpush1.msra.mxu0 0.0
        %1678 = vmatprep.subr.mxu0 0.0
        %1679 = vmatpush1.msra.mxu0 0.0
        %1680 = vmatprep.subr.mxu0 0.0
        %1681 = vmatpush1.msra.mxu0 0.0
        %1682 = vmatprep.subr.mxu0 0.0
        %1683 = vmatpush1.msra.mxu0 %v957
        %1684 = vmatprep.subr.mxu0 0.0
        %1685 = vmatpush1.msra.mxu0 %v956
        %1686 = vmatprep.subr.mxu0 0.0
        %1687 = vmatpush1.msra.mxu0 %v955
        %1688 = vmatprep.subr.mxu0 0.0
        %1689 = vmatpush1.msra.mxu0 %v954
        %1690 = vmatprep.subr.mxu0 0.0
        %1691 = vmatpush2.msra.mxu0 0.0
        %1692 = vmatprep.subr.mxu0 0.0
        %1693 = vmatpush2.msra.mxu0 0.0
        %1694 = vmatprep.subr.mxu0 0.0
        %1695 = vmatpush2.msra.mxu0 0.0
        %1696 = vmatprep.subr.mxu0 0.0
        %1697 = vmatpush2.msra.mxu0 0.0
        %1698 = vmatprep.subr.mxu0 0.0
        %1699 = vmatpush2.msra.mxu0 0.0
        %1700 = vmatprep.subr.mxu0 0.0
        %1701 = vmatpush2.msra.mxu0 0.0
        %1702 = vmatprep.subr.mxu0 0.0
        %1703 = vmatpush2.msra.mxu0 0.0
        %1704 = vmatprep.subr.mxu0 0.0
        %1705 = vmatpush2.msra.mxu0 0.0
        %1706 = vmatprep.subr.mxu0 0.0
        %1707 = vmatpush2.msra.mxu0 0.0
        %1708 = vmatprep.subr.mxu0 0.0
        %1709 = vmatpush2.msra.mxu0 0.0
        %1710 = vmatprep.subr.mxu0 0.0
        %1711 = vmatpush2.msra.mxu0 0.0
        %1712 = vmatprep.subr.mxu0 0.0
        %1713 = vmatpush2.msra.mxu0 0.0
        %1714 = vmatprep.subr.mxu0 0.0
        %1715 = vmatpush2.msra.mxu0 0.0
        %1716 = vmatprep.subr.mxu0 0.0
        %1717 = vmatpush2.msra.mxu0 0.0
        %1718 = vmatprep.subr.mxu0 0.0
        %1719 = vmatpush2.msra.mxu0 0.0
        %1720 = vmatprep.subr.mxu0 0.0
        %1721 = vmatpush2.msra.mxu0 0.0
        %1722 = vmatprep.mubr.f32.mxu0 0.0
        %1723 = vmatmul.mubr.f32.gmra.mxu0 %v1086
        %v1724 = vpop.f32.mrf.mxu0
        %v1725 = vadd.f32 %v1555, %v1724
        %v1726 = vpop.f32.mrf.mxu0
        %1727 = vmatprep.mubr.f32.mxu0 0.0
        %1728 = vmatmul.mubr.f32.gmra.mxu0 %v1089
        %v1729 = vpop.f32.mrf.mxu0
        %v1730 = vadd.f32 %v1560, %v1729
        %v1731 = vpop.f32.mrf.mxu0
        %1732 = vmatprep.mubr.f32.mxu0 0.0
        %1733 = vmatmul.mubr.f32.gmra.mxu0 %v1092
        %v1734 = vpop.f32.mrf.mxu0
        %v1735 = vadd.f32 %v1565, %v1734
        %v1736 = vpop.f32.mrf.mxu0
        %1737 = vmatprep.mubr.f32.mxu0 0.0
        %1738 = vmatmul.mubr.f32.gmra.mxu0 %v1095
        %v1739 = vpop.f32.mrf.mxu0
        %v1740 = vadd.f32 %v1570, %v1739
        %v1741 = vpop.f32.mrf.mxu0
        %1742 = vmatprep.mubr.f32.mxu0 0.0
        %1743 = vmatmul.mubr.f32.gmra.mxu0 %v1098
        %v1744 = vpop.f32.mrf.mxu0
        %v1745 = vadd.f32 %v1575, %v1744
        %v1746 = vpop.f32.mrf.mxu0
        %1747 = vmatprep.mubr.f32.mxu0 0.0
        %1748 = vmatmul.mubr.f32.gmra.mxu0 %v1101
        %v1749 = vpop.f32.mrf.mxu0
        %v1750 = vadd.f32 %v1580, %v1749
        %v1751 = vpop.f32.mrf.mxu0
        %1752 = vmatprep.mubr.f32.mxu0 0.0
        %1753 = vmatmul.mubr.f32.gmra.mxu0 %v1104
        %v1754 = vpop.f32.mrf.mxu0
        %v1755 = vadd.f32 %v1585, %v1754
        %v1756 = vpop.f32.mrf.mxu0
        %1757 = vmatprep.mubr.f32.mxu0 0.0
        %1758 = vmatmul.mubr.f32.gmra.mxu0 %v1107
        %v1759 = vpop.f32.mrf.mxu0
        %v1760 = vadd.f32 %v1590, %v1759
        %v1761 = vpop.f32.mrf.mxu0
        %1762 = vmatprep.mubr.f32.mxu0 0.0
        %1763 = vmatmul.mubr.f32.gmra.mxu0 %v1110
        %v1764 = vpop.f32.mrf.mxu0
        %v1765 = vadd.f32 %v1595, %v1764
        %v1766 = vpop.f32.mrf.mxu0
        %1767 = vmatprep.mubr.f32.mxu0 0.0
        %1768 = vmatmul.mubr.f32.gmra.mxu0 %v1113
        %v1769 = vpop.f32.mrf.mxu0
        %v1770 = vadd.f32 %v1600, %v1769
        %v1771 = vpop.f32.mrf.mxu0
        %1772 = vmatprep.mubr.f32.mxu0 0.0
        %1773 = vmatmul.mubr.f32.gmra.mxu0 %v1116
        %v1774 = vpop.f32.mrf.mxu0
        %v1775 = vadd.f32 %v1605, %v1774
        %v1776 = vpop.f32.mrf.mxu0
        %1777 = vmatprep.mubr.f32.mxu0 0.0
        %1778 = vmatmul.mubr.f32.gmra.mxu0 %v1119
        %v1779 = vpop.f32.mrf.mxu0
        %v1780 = vadd.f32 %v1610, %v1779
        %v1781 = vpop.f32.mrf.mxu0
        %1782 = vmatprep.mubr.f32.mxu0 0.0
        %1783 = vmatmul.mubr.f32.gmra.mxu0 %v1122
        %v1784 = vpop.f32.mrf.mxu0
        %v1785 = vadd.f32 %v1615, %v1784
        %v1786 = vpop.f32.mrf.mxu0
        %1787 = vmatprep.mubr.f32.mxu0 0.0
        %1788 = vmatmul.mubr.f32.gmra.mxu0 %v1125
        %v1789 = vpop.f32.mrf.mxu0
        %v1790 = vadd.f32 %v1620, %v1789
        %v1791 = vpop.f32.mrf.mxu0
        %1792 = vmatprep.mubr.f32.mxu0 0.0
        %1793 = vmatmul.mubr.f32.gmra.mxu0 %v1128
        %v1794 = vpop.f32.mrf.mxu0
        %v1795 = vadd.f32 %v1625, %v1794
        %v1796 = vpop.f32.mrf.mxu0
        %1797 = vmatprep.mubr.f32.mxu0 0.0
        %1798 = vmatmul.mubr.f32.gmra.mxu0 %v1131
        %v1799 = vpop.f32.mrf.mxu0
        %v1800 = vadd.f32 %v1630, %v1799
        %v1801 = vpop.f32.mrf.mxu0
        %1802 = vmatprep.mubr.f32.mxu0 0.0
        %1803 = vmatmul.mubr.f32.gmra.mxu0 %v1134
        %v1804 = vpop.f32.mrf.mxu0
        %v1805 = vadd.f32 %v1635, %v1804
        %v1806 = vpop.f32.mrf.mxu0
        %1807 = vmatprep.mubr.f32.mxu0 0.0
        %1808 = vmatmul.mubr.f32.gmra.mxu0 %v1137
        %v1809 = vpop.f32.mrf.mxu0
        %v1810 = vadd.f32 %v1640, %v1809
        %v1811 = vpop.f32.mrf.mxu0
        %1812 = vmatprep.mubr.f32.mxu0 0.0
        %1813 = vmatmul.mubr.f32.gmra.mxu0 %v1140
        %v1814 = vpop.f32.mrf.mxu0
        %v1815 = vadd.f32 %v1645, %v1814
        %v1816 = vpop.f32.mrf.mxu0
        %1817 = vmatprep.mubr.f32.mxu0 0.0
        %1818 = vmatmul.mubr.f32.gmra.mxu0 %v1143
        %v1819 = vpop.f32.mrf.mxu0
        %v1820 = vadd.f32 %v1650, %v1819
        %v1821 = vpop.f32.mrf.mxu0
        %1822 = vmatprep.mubr.f32.mxu0 0.0
        %1823 = vmatmul.mubr.f32.gmra.mxu0 %v1146
        %v1824 = vpop.f32.mrf.mxu0
        %v1825 = vadd.f32 %v1655, %v1824
        %v1826 = vpop.f32.mrf.mxu0
        %1827 = vdwg.mxu0
        %v1828 = vlaneseq
        %v1829 = vshrl.u32 %v1828, 7
        %v1830 = vadd.s32 %v1829, 8
        %v1831 = vadd.s32 %v1829, 16
        %v1832 = vadd.s32 %v1829, 24
        %v1833 = vlaneseq
        %v1834 = vand.u32 %v1833, 127
        %v1835 = vmul.u32 %v1834, 2
        %vm1836 = vcmp.eq.s32.totalorder %v1829, %v1835
        %vm1837 = vcmp.eq.s32.totalorder %v1830, %v1835
        %vm1838 = vcmp.eq.s32.totalorder %v1831, %v1835
        %vm1839 = vcmp.eq.s32.totalorder %v1832, %v1835
        %v1840 = vsel %vm1836, 1.0, 0.0
        %v1841 = vsel %vm1837, 1.0, 0.0
        %v1842 = vsel %vm1838, 1.0, 0.0
        %v1843 = vsel %vm1839, 1.0, 0.0
        %v1844 = vadd.s32 %v1835, 1
        %vm1845 = vcmp.eq.s32.totalorder %v1829, %v1844
        %vm1846 = vcmp.eq.s32.totalorder %v1830, %v1844
        %vm1847 = vcmp.eq.s32.totalorder %v1831, %v1844
        %vm1848 = vcmp.eq.s32.totalorder %v1832, %v1844
        %v1849 = vsel %vm1845, 1.0, 0.0
        %v1850 = vsel %vm1846, 1.0, 0.0
        %v1851 = vsel %vm1847, 1.0, 0.0
        %v1852 = vsel %vm1848, 1.0, 0.0
        %v1854 = vsel %vm450, %v1725, 0
        %v1857 = vsel %vm450, %v1730, 0
        %v1860 = vsel %vm450, %v1735, 0
        %v1863 = vsel %vm450, %v1740, 0
        %v1866 = vsel %vm450, %v1745, 0
        %v1869 = vsel %vm450, %v1750, 0
        %v1872 = vsel %vm450, %v1755, 0
        %v1875 = vsel %vm450, %v1760, 0
        %v1878 = vsel %vm450, %v1765, 0
        %v1881 = vsel %vm450, %v1770, 0
        %v1884 = vsel %vm450, %v1775, 0
        %v1887 = vsel %vm450, %v1780, 0
        %v1890 = vsel %vm450, %v1785, 0
        %v1893 = vsel %vm450, %v1790, 0
        %v1896 = vsel %vm450, %v1795, 0
        %v1899 = vsel %vm450, %v1800, 0
        %v1902 = vsel %vm450, %v1805, 0
        %v1905 = vsel %vm450, %v1810, 0
        %v1908 = vsel %vm450, %v1815, 0
        %v1911 = vsel %vm450, %v1820, 0
        %v1914 = vsel %vm450, %v1825, 0
        %vm1916 = vcmask 1043456
        %v1918 = vsel %vm1916, %v1843, 0
        %1920 = vmatprep.subr.mxu0 0.0
        %1921 = vmatpush1.msra.mxu0 0.0
        %1922 = vmatprep.subr.mxu0 0.0
        %1923 = vmatpush1.msra.mxu0 0.0
        %1924 = vmatprep.subr.mxu0 0.0
        %1925 = vmatpush1.msra.mxu0 0.0
        %1926 = vmatprep.subr.mxu0 0.0
        %1927 = vmatpush1.msra.mxu0 0.0
        %1928 = vmatprep.subr.mxu0 0.0
        %1929 = vmatpush1.msra.mxu0 0.0
        %1930 = vmatprep.subr.mxu0 0.0
        %1931 = vmatpush1.msra.mxu0 0.0
        %1932 = vmatprep.subr.mxu0 0.0
        %1933 = vmatpush1.msra.mxu0 0.0
        %1934 = vmatprep.subr.mxu0 0.0
        %1935 = vmatpush1.msra.mxu0 0.0
        %1936 = vmatprep.subr.mxu0 0.0
        %1937 = vmatpush1.msra.mxu0 0.0
        %1938 = vmatprep.subr.mxu0 0.0
        %1939 = vmatpush1.msra.mxu0 0.0
        %1940 = vmatprep.subr.mxu0 0.0
        %1941 = vmatpush1.msra.mxu0 0.0
        %1942 = vmatprep.subr.mxu0 0.0
        %1943 = vmatpush1.msra.mxu0 0.0
        %1944 = vmatprep.subr.mxu0 0.0
        %1945 = vmatpush1.msra.mxu0 %v1918
        %1946 = vmatprep.subr.mxu0 0.0
        %1947 = vmatpush1.msra.mxu0 %v1842
        %1948 = vmatprep.subr.mxu0 0.0
        %1949 = vmatpush1.msra.mxu0 %v1841
        %1950 = vmatprep.subr.mxu0 0.0
        %1951 = vmatpush1.msra.mxu0 %v1840
        %1952 = vmatprep.subr.mxu0 0.0
        %1953 = vmatpush2.msra.mxu0 0.0
        %1954 = vmatprep.subr.mxu0 0.0
        %1955 = vmatpush2.msra.mxu0 0.0
        %1956 = vmatprep.subr.mxu0 0.0
        %1957 = vmatpush2.msra.mxu0 0.0
        %1958 = vmatprep.subr.mxu0 0.0
        %1959 = vmatpush2.msra.mxu0 0.0
        %1960 = vmatprep.subr.mxu0 0.0
        %1961 = vmatpush2.msra.mxu0 0.0
        %1962 = vmatprep.subr.mxu0 0.0
        %1963 = vmatpush2.msra.mxu0 0.0
        %1964 = vmatprep.subr.mxu0 0.0
        %1965 = vmatpush2.msra.mxu0 0.0
        %1966 = vmatprep.subr.mxu0 0.0
        %1967 = vmatpush2.msra.mxu0 0.0
        %1968 = vmatprep.subr.mxu0 0.0
        %1969 = vmatpush2.msra.mxu0 0.0
        %1970 = vmatprep.subr.mxu0 0.0
        %1971 = vmatpush2.msra.mxu0 0.0
        %1972 = vmatprep.subr.mxu0 0.0
        %1973 = vmatpush2.msra.mxu0 0.0
        %1974 = vmatprep.subr.mxu0 0.0
        %1975 = vmatpush2.msra.mxu0 0.0
        %1976 = vmatprep.subr.mxu0 0.0
        %1977 = vmatpush2.msra.mxu0 0.0
        %1978 = vmatprep.subr.mxu0 0.0
        %1979 = vmatpush2.msra.mxu0 0.0
        %1980 = vmatprep.subr.mxu0 0.0
        %1981 = vmatpush2.msra.mxu0 0.0
        %1982 = vmatprep.subr.mxu0 0.0
        %1983 = vmatpush2.msra.mxu0 0.0
        %1984 = vmatprep.mubr.f32.mxu0 0.0
        %1985 = vmatmul.mubr.f32.gmra.mxu0 %v1854
        %v1986 = vpop.f32.mrf.mxu0
        %v1987 = vadd.f32 0.0, %v1986
        %v1988 = vpop.f32.mrf.mxu0
        %1989 = vmatprep.mubr.f32.mxu0 0.0
        %1990 = vmatmul.mubr.f32.gmra.mxu0 %v1857
        %v1991 = vpop.f32.mrf.mxu0
        %v1992 = vadd.f32 0.0, %v1991
        %v1993 = vpop.f32.mrf.mxu0
        %1994 = vmatprep.mubr.f32.mxu0 0.0
        %1995 = vmatmul.mubr.f32.gmra.mxu0 %v1860
        %v1996 = vpop.f32.mrf.mxu0
        %v1997 = vadd.f32 0.0, %v1996
        %v1998 = vpop.f32.mrf.mxu0
        %1999 = vmatprep.mubr.f32.mxu0 0.0
        %2000 = vmatmul.mubr.f32.gmra.mxu0 %v1863
        %v2001 = vpop.f32.mrf.mxu0
        %v2002 = vadd.f32 0.0, %v2001
        %v2003 = vpop.f32.mrf.mxu0
        %2004 = vmatprep.mubr.f32.mxu0 0.0
        %2005 = vmatmul.mubr.f32.gmra.mxu0 %v1866
        %v2006 = vpop.f32.mrf.mxu0
        %v2007 = vadd.f32 0.0, %v2006
        %v2008 = vpop.f32.mrf.mxu0
        %2009 = vmatprep.mubr.f32.mxu0 0.0
        %2010 = vmatmul.mubr.f32.gmra.mxu0 %v1869
        %v2011 = vpop.f32.mrf.mxu0
        %v2012 = vadd.f32 0.0, %v2011
        %v2013 = vpop.f32.mrf.mxu0
        %2014 = vmatprep.mubr.f32.mxu0 0.0
        %2015 = vmatmul.mubr.f32.gmra.mxu0 %v1872
        %v2016 = vpop.f32.mrf.mxu0
        %v2017 = vadd.f32 0.0, %v2016
        %v2018 = vpop.f32.mrf.mxu0
        %2019 = vmatprep.mubr.f32.mxu0 0.0
        %2020 = vmatmul.mubr.f32.gmra.mxu0 %v1875
        %v2021 = vpop.f32.mrf.mxu0
        %v2022 = vadd.f32 0.0, %v2021
        %v2023 = vpop.f32.mrf.mxu0
        %2024 = vmatprep.mubr.f32.mxu0 0.0
        %2025 = vmatmul.mubr.f32.gmra.mxu0 %v1878
        %v2026 = vpop.f32.mrf.mxu0
        %v2027 = vadd.f32 0.0, %v2026
        %v2028 = vpop.f32.mrf.mxu0
        %2029 = vmatprep.mubr.f32.mxu0 0.0
        %2030 = vmatmul.mubr.f32.gmra.mxu0 %v1881
        %v2031 = vpop.f32.mrf.mxu0
        %v2032 = vadd.f32 0.0, %v2031
        %v2033 = vpop.f32.mrf.mxu0
        %2034 = vmatprep.mubr.f32.mxu0 0.0
        %2035 = vmatmul.mubr.f32.gmra.mxu0 %v1884
        %v2036 = vpop.f32.mrf.mxu0
        %v2037 = vadd.f32 0.0, %v2036
        %v2038 = vpop.f32.mrf.mxu0
        %2039 = vmatprep.mubr.f32.mxu0 0.0
        %2040 = vmatmul.mubr.f32.gmra.mxu0 %v1887
        %v2041 = vpop.f32.mrf.mxu0
        %v2042 = vadd.f32 0.0, %v2041
        %v2043 = vpop.f32.mrf.mxu0
        %2044 = vmatprep.mubr.f32.mxu0 0.0
        %2045 = vmatmul.mubr.f32.gmra.mxu0 %v1890
        %v2046 = vpop.f32.mrf.mxu0
        %v2047 = vadd.f32 0.0, %v2046
        %v2048 = vpop.f32.mrf.mxu0
        %2049 = vmatprep.mubr.f32.mxu0 0.0
        %2050 = vmatmul.mubr.f32.gmra.mxu0 %v1893
        %v2051 = vpop.f32.mrf.mxu0
        %v2052 = vadd.f32 0.0, %v2051
        %v2053 = vpop.f32.mrf.mxu0
        %2054 = vmatprep.mubr.f32.mxu0 0.0
        %2055 = vmatmul.mubr.f32.gmra.mxu0 %v1896
        %v2056 = vpop.f32.mrf.mxu0
        %v2057 = vadd.f32 0.0, %v2056
        %v2058 = vpop.f32.mrf.mxu0
        %2059 = vmatprep.mubr.f32.mxu0 0.0
        %2060 = vmatmul.mubr.f32.gmra.mxu0 %v1899
        %v2061 = vpop.f32.mrf.mxu0
        %v2062 = vadd.f32 0.0, %v2061
        %v2063 = vpop.f32.mrf.mxu0
        %2064 = vmatprep.mubr.f32.mxu0 0.0
        %2065 = vmatmul.mubr.f32.gmra.mxu0 %v1902
        %v2066 = vpop.f32.mrf.mxu0
        %v2067 = vadd.f32 0.0, %v2066
        %v2068 = vpop.f32.mrf.mxu0
        %2069 = vmatprep.mubr.f32.mxu0 0.0
        %2070 = vmatmul.mubr.f32.gmra.mxu0 %v1905
        %v2071 = vpop.f32.mrf.mxu0
        %v2072 = vadd.f32 0.0, %v2071
        %v2073 = vpop.f32.mrf.mxu0
        %2074 = vmatprep.mubr.f32.mxu0 0.0
        %2075 = vmatmul.mubr.f32.gmra.mxu0 %v1908
        %v2076 = vpop.f32.mrf.mxu0
        %v2077 = vadd.f32 0.0, %v2076
        %v2078 = vpop.f32.mrf.mxu0
        %2079 = vmatprep.mubr.f32.mxu0 0.0
        %2080 = vmatmul.mubr.f32.gmra.mxu0 %v1911
        %v2081 = vpop.f32.mrf.mxu0
        %v2082 = vadd.f32 0.0, %v2081
        %v2083 = vpop.f32.mrf.mxu0
        %2084 = vmatprep.mubr.f32.mxu0 0.0
        %2085 = vmatmul.mubr.f32.gmra.mxu0 %v1914
        %v2086 = vpop.f32.mrf.mxu0
        %v2087 = vadd.f32 0.0, %v2086
        %v2088 = vpop.f32.mrf.mxu0
        %2089 = vdwg.mxu0
        %v2091 = vsel %vm1916, %v1852, 0
        %2093 = vmatprep.subr.mxu0 0.0
        %2094 = vmatpush1.msra.mxu0 0.0
        %2095 = vmatprep.subr.mxu0 0.0
        %2096 = vmatpush1.msra.mxu0 0.0
        %2097 = vmatprep.subr.mxu0 0.0
        %2098 = vmatpush1.msra.mxu0 0.0
        %2099 = vmatprep.subr.mxu0 0.0
        %2100 = vmatpush1.msra.mxu0 0.0
        %2101 = vmatprep.subr.mxu0 0.0
        %2102 = vmatpush1.msra.mxu0 0.0
        %2103 = vmatprep.subr.mxu0 0.0
        %2104 = vmatpush1.msra.mxu0 0.0
        %2105 = vmatprep.subr.mxu0 0.0
        %2106 = vmatpush1.msra.mxu0 0.0
        %2107 = vmatprep.subr.mxu0 0.0
        %2108 = vmatpush1.msra.mxu0 0.0
        %2109 = vmatprep.subr.mxu0 0.0
        %2110 = vmatpush1.msra.mxu0 0.0
        %2111 = vmatprep.subr.mxu0 0.0
        %2112 = vmatpush1.msra.mxu0 0.0
        %2113 = vmatprep.subr.mxu0 0.0
        %2114 = vmatpush1.msra.mxu0 0.0
        %2115 = vmatprep.subr.mxu0 0.0
        %2116 = vmatpush1.msra.mxu0 0.0
        %2117 = vmatprep.subr.mxu0 0.0
        %2118 = vmatpush1.msra.mxu0 %v2091
        %2119 = vmatprep.subr.mxu0 0.0
        %2120 = vmatpush1.msra.mxu0 %v1851
        %2121 = vmatprep.subr.mxu0 0.0
        %2122 = vmatpush1.msra.mxu0 %v1850
        %2123 = vmatprep.subr.mxu0 0.0
        %2124 = vmatpush1.msra.mxu0 %v1849
        %2125 = vmatprep.subr.mxu0 0.0
        %2126 = vmatpush2.msra.mxu0 0.0
        %2127 = vmatprep.subr.mxu0 0.0
        %2128 = vmatpush2.msra.mxu0 0.0
        %2129 = vmatprep.subr.mxu0 0.0
        %2130 = vmatpush2.msra.mxu0 0.0
        %2131 = vmatprep.subr.mxu0 0.0
        %2132 = vmatpush2.msra.mxu0 0.0
        %2133 = vmatprep.subr.mxu0 0.0
        %2134 = vmatpush2.msra.mxu0 0.0
        %2135 = vmatprep.subr.mxu0 0.0
        %2136 = vmatpush2.msra.mxu0 0.0
        %2137 = vmatprep.subr.mxu0 0.0
        %2138 = vmatpush2.msra.mxu0 0.0
        %2139 = vmatprep.subr.mxu0 0.0
        %2140 = vmatpush2.msra.mxu0 0.0
        %2141 = vmatprep.subr.mxu0 0.0
        %2142 = vmatpush2.msra.mxu0 0.0
        %2143 = vmatprep.subr.mxu0 0.0
        %2144 = vmatpush2.msra.mxu0 0.0
        %2145 = vmatprep.subr.mxu0 0.0
        %2146 = vmatpush2.msra.mxu0 0.0
        %2147 = vmatprep.subr.mxu0 0.0
        %2148 = vmatpush2.msra.mxu0 0.0
        %2149 = vmatprep.subr.mxu0 0.0
        %2150 = vmatpush2.msra.mxu0 0.0
        %2151 = vmatprep.subr.mxu0 0.0
        %2152 = vmatpush2.msra.mxu0 0.0
        %2153 = vmatprep.subr.mxu0 0.0
        %2154 = vmatpush2.msra.mxu0 0.0
        %2155 = vmatprep.subr.mxu0 0.0
        %2156 = vmatpush2.msra.mxu0 0.0
        %2157 = vmatprep.mubr.f32.mxu0 0.0
        %2158 = vmatmul.mubr.f32.gmra.mxu0 %v1854
        %v2159 = vpop.f32.mrf.mxu0
        %v2160 = vadd.f32 0.0, %v2159
        %v2161 = vpop.f32.mrf.mxu0
        %2162 = vmatprep.mubr.f32.mxu0 0.0
        %2163 = vmatmul.mubr.f32.gmra.mxu0 %v1857
        %v2164 = vpop.f32.mrf.mxu0
        %v2165 = vadd.f32 0.0, %v2164
        %v2166 = vpop.f32.mrf.mxu0
        %2167 = vmatprep.mubr.f32.mxu0 0.0
        %2168 = vmatmul.mubr.f32.gmra.mxu0 %v1860
        %v2169 = vpop.f32.mrf.mxu0
        %v2170 = vadd.f32 0.0, %v2169
        %v2171 = vpop.f32.mrf.mxu0
        %2172 = vmatprep.mubr.f32.mxu0 0.0
        %2173 = vmatmul.mubr.f32.gmra.mxu0 %v1863
        %v2174 = vpop.f32.mrf.mxu0
        %v2175 = vadd.f32 0.0, %v2174
        %v2176 = vpop.f32.mrf.mxu0
        %2177 = vmatprep.mubr.f32.mxu0 0.0
        %2178 = vmatmul.mubr.f32.gmra.mxu0 %v1866
        %v2179 = vpop.f32.mrf.mxu0
        %v2180 = vadd.f32 0.0, %v2179
        %v2181 = vpop.f32.mrf.mxu0
        %2182 = vmatprep.mubr.f32.mxu0 0.0
        %2183 = vmatmul.mubr.f32.gmra.mxu0 %v1869
        %v2184 = vpop.f32.mrf.mxu0
        %v2185 = vadd.f32 0.0, %v2184
        %v2186 = vpop.f32.mrf.mxu0
        %2187 = vmatprep.mubr.f32.mxu0 0.0
        %2188 = vmatmul.mubr.f32.gmra.mxu0 %v1872
        %v2189 = vpop.f32.mrf.mxu0
        %v2190 = vadd.f32 0.0, %v2189
        %v2191 = vpop.f32.mrf.mxu0
        %2192 = vmatprep.mubr.f32.mxu0 0.0
        %2193 = vmatmul.mubr.f32.gmra.mxu0 %v1875
        %v2194 = vpop.f32.mrf.mxu0
        %v2195 = vadd.f32 0.0, %v2194
        %v2196 = vpop.f32.mrf.mxu0
        %2197 = vmatprep.mubr.f32.mxu0 0.0
        %2198 = vmatmul.mubr.f32.gmra.mxu0 %v1878
        %v2199 = vpop.f32.mrf.mxu0
        %v2200 = vadd.f32 0.0, %v2199
        %v2201 = vpop.f32.mrf.mxu0
        %2202 = vmatprep.mubr.f32.mxu0 0.0
        %2203 = vmatmul.mubr.f32.gmra.mxu0 %v1881
        %v2204 = vpop.f32.mrf.mxu0
        %v2205 = vadd.f32 0.0, %v2204
        %v2206 = vpop.f32.mrf.mxu0
        %2207 = vmatprep.mubr.f32.mxu0 0.0
        %2208 = vmatmul.mubr.f32.gmra.mxu0 %v1884
        %v2209 = vpop.f32.mrf.mxu0
        %v2210 = vadd.f32 0.0, %v2209
        %v2211 = vpop.f32.mrf.mxu0
        %2212 = vmatprep.mubr.f32.mxu0 0.0
        %2213 = vmatmul.mubr.f32.gmra.mxu0 %v1887
        %v2214 = vpop.f32.mrf.mxu0
        %v2215 = vadd.f32 0.0, %v2214
        %v2216 = vpop.f32.mrf.mxu0
        %2217 = vmatprep.mubr.f32.mxu0 0.0
        %2218 = vmatmul.mubr.f32.gmra.mxu0 %v1890
        %v2219 = vpop.f32.mrf.mxu0
        %v2220 = vadd.f32 0.0, %v2219
        %v2221 = vpop.f32.mrf.mxu0
        %2222 = vmatprep.mubr.f32.mxu0 0.0
        %2223 = vmatmul.mubr.f32.gmra.mxu0 %v1893
        %v2224 = vpop.f32.mrf.mxu0
        %v2225 = vadd.f32 0.0, %v2224
        %v2226 = vpop.f32.mrf.mxu0
        %2227 = vmatprep.mubr.f32.mxu0 0.0
        %2228 = vmatmul.mubr.f32.gmra.mxu0 %v1896
        %v2229 = vpop.f32.mrf.mxu0
        %v2230 = vadd.f32 0.0, %v2229
        %v2231 = vpop.f32.mrf.mxu0
        %2232 = vmatprep.mubr.f32.mxu0 0.0
        %2233 = vmatmul.mubr.f32.gmra.mxu0 %v1899
        %v2234 = vpop.f32.mrf.mxu0
        %v2235 = vadd.f32 0.0, %v2234
        %v2236 = vpop.f32.mrf.mxu0
        %2237 = vmatprep.mubr.f32.mxu0 0.0
        %2238 = vmatmul.mubr.f32.gmra.mxu0 %v1902
        %v2239 = vpop.f32.mrf.mxu0
        %v2240 = vadd.f32 0.0, %v2239
        %v2241 = vpop.f32.mrf.mxu0
        %2242 = vmatprep.mubr.f32.mxu0 0.0
        %2243 = vmatmul.mubr.f32.gmra.mxu0 %v1905
        %v2244 = vpop.f32.mrf.mxu0
        %v2245 = vadd.f32 0.0, %v2244
        %v2246 = vpop.f32.mrf.mxu0
        %2247 = vmatprep.mubr.f32.mxu0 0.0
        %2248 = vmatmul.mubr.f32.gmra.mxu0 %v1908
        %v2249 = vpop.f32.mrf.mxu0
        %v2250 = vadd.f32 0.0, %v2249
        %v2251 = vpop.f32.mrf.mxu0
        %2252 = vmatprep.mubr.f32.mxu0 0.0
        %2253 = vmatmul.mubr.f32.gmra.mxu0 %v1911
        %v2254 = vpop.f32.mrf.mxu0
        %v2255 = vadd.f32 0.0, %v2254
        %v2256 = vpop.f32.mrf.mxu0
        %2257 = vmatprep.mubr.f32.mxu0 0.0
        %2258 = vmatmul.mubr.f32.gmra.mxu0 %v1914
        %v2259 = vpop.f32.mrf.mxu0
        %v2260 = vadd.f32 0.0, %v2259
        %v2261 = vpop.f32.mrf.mxu0
        %2262 = vdwg.mxu0
        %v2263 = vmax.f32 %v1987, %v2160
        %v2264 = vmax.f32 %v1992, %v2165
        %v2265 = vmax.f32 %v1997, %v2170
        %v2266 = vmax.f32 %v2002, %v2175
        %v2267 = vmax.f32 %v2007, %v2180
        %v2268 = vmax.f32 %v2012, %v2185
        %v2269 = vmax.f32 %v2017, %v2190
        %v2270 = vmax.f32 %v2022, %v2195
        %v2271 = vmax.f32 %v2027, %v2200
        %v2272 = vmax.f32 %v2032, %v2205
        %v2273 = vmax.f32 %v2037, %v2210
        %v2274 = vmax.f32 %v2042, %v2215
        %v2275 = vmax.f32 %v2047, %v2220
        %v2276 = vmax.f32 %v2052, %v2225
        %v2277 = vmax.f32 %v2057, %v2230
        %v2278 = vmax.f32 %v2062, %v2235
        %v2279 = vmax.f32 %v2067, %v2240
        %v2280 = vmax.f32 %v2072, %v2245
        %v2281 = vmax.f32 %v2077, %v2250
        %v2282 = vmax.f32 %v2082, %v2255
        %v2283 = vmax.f32 %v2087, %v2260
        %v2284 = vadd.s32 %v1829, 32
        %v2285 = vadd.s32 %v1829, 40
        %v2286 = vadd.s32 %v1829, 48
        %v2287 = vadd.s32 %v1829, 56
        %v2288 = vadd.s32 %v1829, 64
        %v2289 = vadd.s32 %v1829, 72
        %v2290 = vadd.s32 %v1829, 80
        %v2291 = vadd.s32 %v1834, 128
        %v2292 = vmul.u32 %v1829, 2
        %v2293 = vmul.u32 %v1830, 2
        %v2294 = vmul.u32 %v1831, 2
        %v2295 = vmul.u32 %v1832, 2
        %v2296 = vmul.u32 %v2284, 2
        %v2297 = vmul.u32 %v2285, 2
        %v2298 = vmul.u32 %v2286, 2
        %v2299 = vmul.u32 %v2287, 2
        %v2300 = vmul.u32 %v2288, 2
        %v2301 = vmul.u32 %v2289, 2
        %v2302 = vmul.u32 %v2290, 2
        %vm2303 = vcmp.eq.s32.totalorder %v1834, %v2292
        %vm2304 = vcmp.eq.s32.totalorder %v2291, %v2292
        %vm2305 = vcmp.eq.s32.totalorder %v1834, %v2293
        %vm2306 = vcmp.eq.s32.totalorder %v2291, %v2293
        %vm2307 = vcmp.eq.s32.totalorder %v1834, %v2294
        %vm2308 = vcmp.eq.s32.totalorder %v2291, %v2294
        %vm2309 = vcmp.eq.s32.totalorder %v1834, %v2295
        %vm2310 = vcmp.eq.s32.totalorder %v2291, %v2295
        %vm2311 = vcmp.eq.s32.totalorder %v1834, %v2296
        %vm2312 = vcmp.eq.s32.totalorder %v2291, %v2296
        %vm2313 = vcmp.eq.s32.totalorder %v1834, %v2297
        %vm2314 = vcmp.eq.s32.totalorder %v2291, %v2297
        %vm2315 = vcmp.eq.s32.totalorder %v1834, %v2298
        %vm2316 = vcmp.eq.s32.totalorder %v2291, %v2298
        %vm2317 = vcmp.eq.s32.totalorder %v1834, %v2299
        %vm2318 = vcmp.eq.s32.totalorder %v2291, %v2299
        %vm2319 = vcmp.eq.s32.totalorder %v1834, %v2300
        %vm2320 = vcmp.eq.s32.totalorder %v2291, %v2300
        %vm2321 = vcmp.eq.s32.totalorder %v1834, %v2301
        %vm2322 = vcmp.eq.s32.totalorder %v2291, %v2301
        %vm2323 = vcmp.eq.s32.totalorder %v1834, %v2302
        %vm2324 = vcmp.eq.s32.totalorder %v2291, %v2302
        %v2325 = vsel %vm2303, 1.0, 0.0
        %v2326 = vsel %vm2304, 1.0, 0.0
        %v2327 = vsel %vm2305, 1.0, 0.0
        %v2328 = vsel %vm2306, 1.0, 0.0
        %v2329 = vsel %vm2307, 1.0, 0.0
        %v2330 = vsel %vm2308, 1.0, 0.0
        %v2331 = vsel %vm2309, 1.0, 0.0
        %v2332 = vsel %vm2310, 1.0, 0.0
        %v2333 = vsel %vm2311, 1.0, 0.0
        %v2334 = vsel %vm2312, 1.0, 0.0
        %v2335 = vsel %vm2313, 1.0, 0.0
        %v2336 = vsel %vm2314, 1.0, 0.0
        %v2337 = vsel %vm2315, 1.0, 0.0
        %v2338 = vsel %vm2316, 1.0, 0.0
        %v2339 = vsel %vm2317, 1.0, 0.0
        %v2340 = vsel %vm2318, 1.0, 0.0
        %v2341 = vsel %vm2319, 1.0, 0.0
        %v2342 = vsel %vm2320, 1.0, 0.0
        %v2343 = vsel %vm2321, 1.0, 0.0
        %v2344 = vsel %vm2322, 1.0, 0.0
        %v2345 = vsel %vm2323, 1.0, 0.0
        %v2346 = vsel %vm2324, 1.0, 0.0
        %v2347 = vadd.s32 %v2292, 1
        %v2348 = vadd.s32 %v2293, 1
        %v2349 = vadd.s32 %v2294, 1
        %v2350 = vadd.s32 %v2295, 1
        %v2351 = vadd.s32 %v2296, 1
        %v2352 = vadd.s32 %v2297, 1
        %v2353 = vadd.s32 %v2298, 1
        %v2354 = vadd.s32 %v2299, 1
        %v2355 = vadd.s32 %v2300, 1
        %v2356 = vadd.s32 %v2301, 1
        %v2357 = vadd.s32 %v2302, 1
        %vm2358 = vcmp.eq.s32.totalorder %v1834, %v2347
        %vm2359 = vcmp.eq.s32.totalorder %v2291, %v2347
        %vm2360 = vcmp.eq.s32.totalorder %v1834, %v2348
        %vm2361 = vcmp.eq.s32.totalorder %v2291, %v2348
        %vm2362 = vcmp.eq.s32.totalorder %v1834, %v2349
        %vm2363 = vcmp.eq.s32.totalorder %v2291, %v2349
        %vm2364 = vcmp.eq.s32.totalorder %v1834, %v2350
        %vm2365 = vcmp.eq.s32.totalorder %v2291, %v2350
        %vm2366 = vcmp.eq.s32.totalorder %v1834, %v2351
        %vm2367 = vcmp.eq.s32.totalorder %v2291, %v2351
        %vm2368 = vcmp.eq.s32.totalorder %v1834, %v2352
        %vm2369 = vcmp.eq.s32.totalorder %v2291, %v2352
        %vm2370 = vcmp.eq.s32.totalorder %v1834, %v2353
        %vm2371 = vcmp.eq.s32.totalorder %v2291, %v2353
        %vm2372 = vcmp.eq.s32.totalorder %v1834, %v2354
        %vm2373 = vcmp.eq.s32.totalorder %v2291, %v2354
        %vm2374 = vcmp.eq.s32.totalorder %v1834, %v2355
        %vm2375 = vcmp.eq.s32.totalorder %v2291, %v2355
        %vm2376 = vcmp.eq.s32.totalorder %v1834, %v2356
        %vm2377 = vcmp.eq.s32.totalorder %v2291, %v2356
        %vm2378 = vcmp.eq.s32.totalorder %v1834, %v2357
        %vm2379 = vcmp.eq.s32.totalorder %v2291, %v2357
        %v2380 = vsel %vm2358, 1.0, 0.0
        %v2381 = vsel %vm2359, 1.0, 0.0
        %v2382 = vsel %vm2360, 1.0, 0.0
        %v2383 = vsel %vm2361, 1.0, 0.0
        %v2384 = vsel %vm2362, 1.0, 0.0
        %v2385 = vsel %vm2363, 1.0, 0.0
        %v2386 = vsel %vm2364, 1.0, 0.0
        %v2387 = vsel %vm2365, 1.0, 0.0
        %v2388 = vsel %vm2366, 1.0, 0.0
        %v2389 = vsel %vm2367, 1.0, 0.0
        %v2390 = vsel %vm2368, 1.0, 0.0
        %v2391 = vsel %vm2369, 1.0, 0.0
        %v2392 = vsel %vm2370, 1.0, 0.0
        %v2393 = vsel %vm2371, 1.0, 0.0
        %v2394 = vsel %vm2372, 1.0, 0.0
        %v2395 = vsel %vm2373, 1.0, 0.0
        %v2396 = vsel %vm2374, 1.0, 0.0
        %v2397 = vsel %vm2375, 1.0, 0.0
        %v2398 = vsel %vm2376, 1.0, 0.0
        %v2399 = vsel %vm2377, 1.0, 0.0
        %v2400 = vsel %vm2378, 1.0, 0.0
        %v2401 = vsel %vm2379, 1.0, 0.0
        %vm2402 = vcmask 326656
        %v2404 = vsel %vm2402, %v2326, 0
        %v2407 = vsel %vm2402, %v2328, 0
        %v2410 = vsel %vm2402, %v2330, 0
        %v2413 = vsel %vm2402, %v2332, 0
        %v2416 = vsel %vm2402, %v2334, 0
        %v2419 = vsel %vm2402, %v2336, 0
        %v2422 = vsel %vm2402, %v2338, 0
        %v2425 = vsel %vm2402, %v2340, 0
        %v2428 = vsel %vm2402, %v2342, 0
        %v2431 = vsel %vm2402, %v2344, 0
        %v2434 = vsel %vm2402, %v2346, 0
        %2436 = vmatprep.subr.mxu0 0.0
        %2437 = vmatpush1.msra.mxu0 %v2278
        %2438 = vmatprep.subr.mxu0 0.0
        %2439 = vmatpush1.msra.mxu0 %v2277
        %2440 = vmatprep.subr.mxu0 0.0
        %2441 = vmatpush1.msra.mxu0 %v2276
        %2442 = vmatprep.subr.mxu0 0.0
        %2443 = vmatpush1.msra.mxu0 %v2275
        %2444 = vmatprep.subr.mxu0 0.0
        %2445 = vmatpush1.msra.mxu0 %v2274
        %2446 = vmatprep.subr.mxu0 0.0
        %2447 = vmatpush1.msra.mxu0 %v2273
        %2448 = vmatprep.subr.mxu0 0.0
        %2449 = vmatpush1.msra.mxu0 %v2272
        %2450 = vmatprep.subr.mxu0 0.0
        %2451 = vmatpush1.msra.mxu0 %v2271
        %2452 = vmatprep.subr.mxu0 0.0
        %2453 = vmatpush1.msra.mxu0 %v2270
        %2454 = vmatprep.subr.mxu0 0.0
        %2455 = vmatpush1.msra.mxu0 %v2269
        %2456 = vmatprep.subr.mxu0 0.0
        %2457 = vmatpush1.msra.mxu0 %v2268
        %2458 = vmatprep.subr.mxu0 0.0
        %2459 = vmatpush1.msra.mxu0 %v2267
        %2460 = vmatprep.subr.mxu0 0.0
        %2461 = vmatpush1.msra.mxu0 %v2266
        %2462 = vmatprep.subr.mxu0 0.0
        %2463 = vmatpush1.msra.mxu0 %v2265
        %2464 = vmatprep.subr.mxu0 0.0
        %2465 = vmatpush1.msra.mxu0 %v2264
        %2466 = vmatprep.subr.mxu0 0.0
        %2467 = vmatpush1.msra.mxu0 %v2263
        %2468 = vmatprep.subr.mxu0 0.0
        %2469 = vmatpush2.msra.mxu0 0.0
        %2470 = vmatprep.subr.mxu0 0.0
        %2471 = vmatpush2.msra.mxu0 0.0
        %2472 = vmatprep.subr.mxu0 0.0
        %2473 = vmatpush2.msra.mxu0 0.0
        %2474 = vmatprep.subr.mxu0 0.0
        %2475 = vmatpush2.msra.mxu0 0.0
        %2476 = vmatprep.subr.mxu0 0.0
        %2477 = vmatpush2.msra.mxu0 0.0
        %2478 = vmatprep.subr.mxu0 0.0
        %2479 = vmatpush2.msra.mxu0 0.0
        %2480 = vmatprep.subr.mxu0 0.0
        %2481 = vmatpush2.msra.mxu0 0.0
        %2482 = vmatprep.subr.mxu0 0.0
        %2483 = vmatpush2.msra.mxu0 0.0
        %2484 = vmatprep.subr.mxu0 0.0
        %2485 = vmatpush2.msra.mxu0 0.0
        %2486 = vmatprep.subr.mxu0 0.0
        %2487 = vmatpush2.msra.mxu0 0.0
        %2488 = vmatprep.subr.mxu0 0.0
        %2489 = vmatpush2.msra.mxu0 0.0
        %2490 = vmatprep.subr.mxu0 0.0
        %2491 = vmatpush2.msra.mxu0 %v2283
        %2492 = vmatprep.subr.mxu0 0.0
        %2493 = vmatpush2.msra.mxu0 %v2282
        %2494 = vmatprep.subr.mxu0 0.0
        %2495 = vmatpush2.msra.mxu0 %v2281
        %2496 = vmatprep.subr.mxu0 0.0
        %2497 = vmatpush2.msra.mxu0 %v2280
        %2498 = vmatprep.subr.mxu0 0.0
        %2499 = vmatpush2.msra.mxu0 %v2279
        %2500 = vmatprep.mubr.f32.mxu0 %v2404
        %2501 = vmatmul.mubr.f32.gmra.mxu0 %v2325
        %v2502 = vpop.f32.mrf.mxu0
        %v2503 = vadd.f32 0.0, %v2502
        %v2504 = vpop.f32.mrf.mxu0
        %2505 = vmatprep.mubr.f32.mxu0 %v2407
        %2506 = vmatmul.mubr.f32.gmra.mxu0 %v2327
        %v2507 = vpop.f32.mrf.mxu0
        %v2508 = vadd.f32 0.0, %v2507
        %v2509 = vpop.f32.mrf.mxu0
        %2510 = vmatprep.mubr.f32.mxu0 %v2410
        %2511 = vmatmul.mubr.f32.gmra.mxu0 %v2329
        %v2512 = vpop.f32.mrf.mxu0
        %v2513 = vadd.f32 0.0, %v2512
        %v2514 = vpop.f32.mrf.mxu0
        %2515 = vmatprep.mubr.f32.mxu0 %v2413
        %2516 = vmatmul.mubr.f32.gmra.mxu0 %v2331
        %v2517 = vpop.f32.mrf.mxu0
        %v2518 = vadd.f32 0.0, %v2517
        %v2519 = vpop.f32.mrf.mxu0
        %2520 = vmatprep.mubr.f32.mxu0 %v2416
        %2521 = vmatmul.mubr.f32.gmra.mxu0 %v2333
        %v2522 = vpop.f32.mrf.mxu0
        %v2523 = vadd.f32 0.0, %v2522
        %v2524 = vpop.f32.mrf.mxu0
        %2525 = vmatprep.mubr.f32.mxu0 %v2419
        %2526 = vmatmul.mubr.f32.gmra.mxu0 %v2335
        %v2527 = vpop.f32.mrf.mxu0
        %v2528 = vadd.f32 0.0, %v2527
        %v2529 = vpop.f32.mrf.mxu0
        %2530 = vmatprep.mubr.f32.mxu0 %v2422
        %2531 = vmatmul.mubr.f32.gmra.mxu0 %v2337
        %v2532 = vpop.f32.mrf.mxu0
        %v2533 = vadd.f32 0.0, %v2532
        %v2534 = vpop.f32.mrf.mxu0
        %2535 = vmatprep.mubr.f32.mxu0 %v2425
        %2536 = vmatmul.mubr.f32.gmra.mxu0 %v2339
        %v2537 = vpop.f32.mrf.mxu0
        %v2538 = vadd.f32 0.0, %v2537
        %v2539 = vpop.f32.mrf.mxu0
        %2540 = vmatprep.mubr.f32.mxu0 %v2428
        %2541 = vmatmul.mubr.f32.gmra.mxu0 %v2341
        %v2542 = vpop.f32.mrf.mxu0
        %v2543 = vadd.f32 0.0, %v2542
        %v2544 = vpop.f32.mrf.mxu0
        %2545 = vmatprep.mubr.f32.mxu0 %v2431
        %2546 = vmatmul.mubr.f32.gmra.mxu0 %v2343
        %v2547 = vpop.f32.mrf.mxu0
        %v2548 = vadd.f32 0.0, %v2547
        %v2549 = vpop.f32.mrf.mxu0
        %2550 = vmatprep.mubr.f32.mxu0 %v2434
        %2551 = vmatmul.mubr.f32.gmra.mxu0 %v2345
        %v2552 = vpop.f32.mrf.mxu0
        %v2553 = vadd.f32 0.0, %v2552
        %v2554 = vpop.f32.mrf.mxu0
        %2555 = vdwg.mxu0
        %v2557 = vsel %vm2402, %v2381, 0
        %v2560 = vsel %vm2402, %v2383, 0
        %v2563 = vsel %vm2402, %v2385, 0
        %v2566 = vsel %vm2402, %v2387, 0
        %v2569 = vsel %vm2402, %v2389, 0
        %v2572 = vsel %vm2402, %v2391, 0
        %v2575 = vsel %vm2402, %v2393, 0
        %v2578 = vsel %vm2402, %v2395, 0
        %v2581 = vsel %vm2402, %v2397, 0
        %v2584 = vsel %vm2402, %v2399, 0
        %v2587 = vsel %vm2402, %v2401, 0
        %2589 = vmatprep.subr.mxu0 0.0
        %2590 = vmatpush1.msra.mxu0 %v2278
        %2591 = vmatprep.subr.mxu0 0.0
        %2592 = vmatpush1.msra.mxu0 %v2277
        %2593 = vmatprep.subr.mxu0 0.0
        %2594 = vmatpush1.msra.mxu0 %v2276
        %2595 = vmatprep.subr.mxu0 0.0
        %2596 = vmatpush1.msra.mxu0 %v2275
        %2597 = vmatprep.subr.mxu0 0.0
        %2598 = vmatpush1.msra.mxu0 %v2274
        %2599 = vmatprep.subr.mxu0 0.0
        %2600 = vmatpush1.msra.mxu0 %v2273
        %2601 = vmatprep.subr.mxu0 0.0
        %2602 = vmatpush1.msra.mxu0 %v2272
        %2603 = vmatprep.subr.mxu0 0.0
        %2604 = vmatpush1.msra.mxu0 %v2271
        %2605 = vmatprep.subr.mxu0 0.0
        %2606 = vmatpush1.msra.mxu0 %v2270
        %2607 = vmatprep.subr.mxu0 0.0
        %2608 = vmatpush1.msra.mxu0 %v2269
        %2609 = vmatprep.subr.mxu0 0.0
        %2610 = vmatpush1.msra.mxu0 %v2268
        %2611 = vmatprep.subr.mxu0 0.0
        %2612 = vmatpush1.msra.mxu0 %v2267
        %2613 = vmatprep.subr.mxu0 0.0
        %2614 = vmatpush1.msra.mxu0 %v2266
        %2615 = vmatprep.subr.mxu0 0.0
        %2616 = vmatpush1.msra.mxu0 %v2265
        %2617 = vmatprep.subr.mxu0 0.0
        %2618 = vmatpush1.msra.mxu0 %v2264
        %2619 = vmatprep.subr.mxu0 0.0
        %2620 = vmatpush1.msra.mxu0 %v2263
        %2621 = vmatprep.subr.mxu0 0.0
        %2622 = vmatpush2.msra.mxu0 0.0
        %2623 = vmatprep.subr.mxu0 0.0
        %2624 = vmatpush2.msra.mxu0 0.0
        %2625 = vmatprep.subr.mxu0 0.0
        %2626 = vmatpush2.msra.mxu0 0.0
        %2627 = vmatprep.subr.mxu0 0.0
        %2628 = vmatpush2.msra.mxu0 0.0
        %2629 = vmatprep.subr.mxu0 0.0
        %2630 = vmatpush2.msra.mxu0 0.0
        %2631 = vmatprep.subr.mxu0 0.0
        %2632 = vmatpush2.msra.mxu0 0.0
        %2633 = vmatprep.subr.mxu0 0.0
        %2634 = vmatpush2.msra.mxu0 0.0
        %2635 = vmatprep.subr.mxu0 0.0
        %2636 = vmatpush2.msra.mxu0 0.0
        %2637 = vmatprep.subr.mxu0 0.0
        %2638 = vmatpush2.msra.mxu0 0.0
        %2639 = vmatprep.subr.mxu0 0.0
        %2640 = vmatpush2.msra.mxu0 0.0
        %2641 = vmatprep.subr.mxu0 0.0
        %2642 = vmatpush2.msra.mxu0 0.0
        %2643 = vmatprep.subr.mxu0 0.0
        %2644 = vmatpush2.msra.mxu0 %v2283
        %2645 = vmatprep.subr.mxu0 0.0
        %2646 = vmatpush2.msra.mxu0 %v2282
        %2647 = vmatprep.subr.mxu0 0.0
        %2648 = vmatpush2.msra.mxu0 %v2281
        %2649 = vmatprep.subr.mxu0 0.0
        %2650 = vmatpush2.msra.mxu0 %v2280
        %2651 = vmatprep.subr.mxu0 0.0
        %2652 = vmatpush2.msra.mxu0 %v2279
        %2653 = vmatprep.mubr.f32.mxu0 %v2557
        %2654 = vmatmul.mubr.f32.gmra.mxu0 %v2380
        %v2655 = vpop.f32.mrf.mxu0
        %v2656 = vadd.f32 0.0, %v2655
        %v2657 = vpop.f32.mrf.mxu0
        %2658 = vmatprep.mubr.f32.mxu0 %v2560
        %2659 = vmatmul.mubr.f32.gmra.mxu0 %v2382
        %v2660 = vpop.f32.mrf.mxu0
        %v2661 = vadd.f32 0.0, %v2660
        %v2662 = vpop.f32.mrf.mxu0
        %2663 = vmatprep.mubr.f32.mxu0 %v2563
        %2664 = vmatmul.mubr.f32.gmra.mxu0 %v2384
        %v2665 = vpop.f32.mrf.mxu0
        %v2666 = vadd.f32 0.0, %v2665
        %v2667 = vpop.f32.mrf.mxu0
        %2668 = vmatprep.mubr.f32.mxu0 %v2566
        %2669 = vmatmul.mubr.f32.gmra.mxu0 %v2386
        %v2670 = vpop.f32.mrf.mxu0
        %v2671 = vadd.f32 0.0, %v2670
        %v2672 = vpop.f32.mrf.mxu0
        %2673 = vmatprep.mubr.f32.mxu0 %v2569
        %2674 = vmatmul.mubr.f32.gmra.mxu0 %v2388
        %v2675 = vpop.f32.mrf.mxu0
        %v2676 = vadd.f32 0.0, %v2675
        %v2677 = vpop.f32.mrf.mxu0
        %2678 = vmatprep.mubr.f32.mxu0 %v2572
        %2679 = vmatmul.mubr.f32.gmra.mxu0 %v2390
        %v2680 = vpop.f32.mrf.mxu0
        %v2681 = vadd.f32 0.0, %v2680
        %v2682 = vpop.f32.mrf.mxu0
        %2683 = vmatprep.mubr.f32.mxu0 %v2575
        %2684 = vmatmul.mubr.f32.gmra.mxu0 %v2392
        %v2685 = vpop.f32.mrf.mxu0
        %v2686 = vadd.f32 0.0, %v2685
        %v2687 = vpop.f32.mrf.mxu0
        %2688 = vmatprep.mubr.f32.mxu0 %v2578
        %2689 = vmatmul.mubr.f32.gmra.mxu0 %v2394
        %v2690 = vpop.f32.mrf.mxu0
        %v2691 = vadd.f32 0.0, %v2690
        %v2692 = vpop.f32.mrf.mxu0
        %2693 = vmatprep.mubr.f32.mxu0 %v2581
        %2694 = vmatmul.mubr.f32.gmra.mxu0 %v2396
        %v2695 = vpop.f32.mrf.mxu0
        %v2696 = vadd.f32 0.0, %v2695
        %v2697 = vpop.f32.mrf.mxu0
        %2698 = vmatprep.mubr.f32.mxu0 %v2584
        %2699 = vmatmul.mubr.f32.gmra.mxu0 %v2398
        %v2700 = vpop.f32.mrf.mxu0
        %v2701 = vadd.f32 0.0, %v2700
        %v2702 = vpop.f32.mrf.mxu0
        %2703 = vmatprep.mubr.f32.mxu0 %v2587
        %2704 = vmatmul.mubr.f32.gmra.mxu0 %v2400
        %v2705 = vpop.f32.mrf.mxu0
        %v2706 = vadd.f32 0.0, %v2705
        %v2707 = vpop.f32.mrf.mxu0
        %2708 = vdwg.mxu0
        %v2709 = vmax.f32 %v2503, %v2656
        %v2710 = vmax.f32 %v2508, %v2661
        %v2711 = vmax.f32 %v2513, %v2666
        %v2712 = vmax.f32 %v2518, %v2671
        %v2713 = vmax.f32 %v2523, %v2676
        %v2714 = vmax.f32 %v2528, %v2681
        %v2715 = vmax.f32 %v2533, %v2686
        %v2716 = vmax.f32 %v2538, %v2691
        %v2717 = vmax.f32 %v2543, %v2696
        %v2718 = vmax.f32 %v2548, %v2701
        %v2719 = vmax.f32 %v2553, %v2706
        %v2720 = vmax.f32 %v2709, 0.0
        %v2721 = vmax.f32 %v2710, 0.0
        %v2722 = vmax.f32 %v2711, 0.0
        %v2723 = vmax.f32 %v2712, 0.0
        %v2724 = vmax.f32 %v2713, 0.0
        %v2725 = vmax.f32 %v2714, 0.0
        %v2726 = vmax.f32 %v2715, 0.0
        %v2727 = vmax.f32 %v2716, 0.0
        %v2728 = vmax.f32 %v2717, 0.0
        %v2729 = vmax.f32 %v2718, 0.0
        %v2730 = vmax.f32 %v2719, 0.0
        %vm2731 = vcmask 80896
        %2732 = vst.msk [vmem:[#allocation3] sm:$0xff] %vm2731, 0.0
        %2733 = vst.msk [vmem:[#allocation3 + $0x8] sm:$0xff] %vm2731, 0.0
        %2734 = vst.msk [vmem:[#allocation3 + $0x10] sm:$0xff] %vm2731, 0.0
        %2735 = vst.msk [vmem:[#allocation3 + $0x18] sm:$0xff] %vm2731, 0.0
        %2736 = vst.msk [vmem:[#allocation3 + $0x20] sm:$0xff] %vm2731, 0.0
        %2737 = vst.msk [vmem:[#allocation3 + $0x28] sm:$0xff] %vm2731, 0.0
        %2738 = vst.msk [vmem:[#allocation3 + $0x30] sm:$0xff] %vm2731, 0.0
        %2739 = vst.msk [vmem:[#allocation3 + $0x38] sm:$0xff] %vm2731, 0.0
        %2740 = vst.msk [vmem:[#allocation3 + $0x40] sm:$0xff] %vm2731, 0.0
        %2741 = vst.msk [vmem:[#allocation3 + $0x48] sm:$0xff] %vm2731, 0.0
        %2742 = vst.msk [vmem:[#allocation3 + $0x50] sm:$0xff] %vm2731, 0.0
        %2743 = vst.msk [vmem:[#allocation3 + $0x58] sm:$0xff] %vm2731, 0.0
        %2744 = vst.msk [vmem:[#allocation3 + $0x60] sm:$0xff] %vm2731, 0.0
        %2745 = vst.msk [vmem:[#allocation3 + $0x68] sm:$0xff] %vm2731, 0.0
        %2746 = vst.msk [vmem:[#allocation3 + $0x70] sm:$0xff] %vm2731, 0.0
        %2747 = vst.msk [vmem:[#allocation3 + $0x78] sm:$0xff] %vm2731, 0.0
        %2748 = vst.msk [vmem:[#allocation3 + $0x80] sm:$0xff] %vm2731, 0.0
        %2749 = vst.msk [vmem:[#allocation3 + $0x88] sm:$0xff] %vm2731, 0.0
        %2750 = vst.msk [vmem:[#allocation3 + $0x90] sm:$0xff] %vm2731, 0.0
        %2751 = vst.msk [vmem:[#allocation3 + $0x98] sm:$0xff] %vm2731, 0.0
        %2752 = vst.msk [vmem:[#allocation3 + $0xa0] sm:$0xff] %vm2731, 0.0
        %2753 = vst.msk [vmem:[#allocation3 + $0xa8] sm:$0xff] %vm2731, 0.0
        %2754 = vst.msk [vmem:[#allocation3 + $0xb0] sm:$0xff] %vm2731, 0.0
        %2755 = vst.msk [vmem:[#allocation3 + $0xb8] sm:$0xff] %vm2731, 0.0
        %2756 = vst.msk [vmem:[#allocation3 + $0xc0] sm:$0xff] %vm2731, 0.0
        %2757 = vst.msk [vmem:[#allocation3 + $0xc8] sm:$0xff] %vm2731, 0.0
        %2758 = vst.msk [vmem:[#allocation3 + $0xd0] sm:$0xff] %vm2731, 0.0
        %2759 = vst.msk [vmem:[#allocation3 + $0xd8] sm:$0xff] %vm2731, 0.0
        %2760 = vst.msk [vmem:[#allocation3 + $0xe0] sm:$0xff] %vm2731, 0.0
        %2761 = vst.msk [vmem:[#allocation3 + $0xe8] sm:$0xff] %vm2731, 0.0
        %2762 = vst.msk [vmem:[#allocation3 + $0xf0] sm:$0xff] %vm2731, 0.0
        %2763 = vst.msk [vmem:[#allocation3 + $0xf8] sm:$0xff] %vm2731, 0.0
        %2764 = vst.msk [vmem:[#allocation3 + $0x100] sm:$0xff] %vm2731, 0.0
        %2765 = vst.msk [vmem:[#allocation3 + $0x108] sm:$0xff] %vm2731, 0.0
        %2766 = vst.msk [vmem:[#allocation3 + $0x110] sm:$0xff] %vm2731, 0.0
        %2767 = vst.msk [vmem:[#allocation3 + $0x118] sm:$0xff] %vm2731, 0.0
        %2768 = vst.msk [vmem:[#allocation3 + $0x120] sm:$0xff] %vm2731, 0.0
        %2769 = vst.msk [vmem:[#allocation3 + $0x128] sm:$0xff] %vm2731, 0.0
        %2770 = vst.msk [vmem:[#allocation3 + $0x130] sm:$0xff] %vm2731, 0.0
        %2771 = vst.msk [vmem:[#allocation3 + $0x138] sm:$0xff] %vm2731, 0.0
        %2772 = vst.msk [vmem:[#allocation3 + $0x140] sm:$0xff] %vm2731, 0.0
        %2773 = vst.msk [vmem:[#allocation3 + $0x148] sm:$0xff] %vm2731, 0.0
        %2774 = vst.msk [vmem:[#allocation3 + $0x150] sm:$0xff] %vm2731, 0.0
        %2775 = vst.msk [vmem:[#allocation3 + $0x158] sm:$0xff] %vm2731, 0.0
        %2776 = vst.msk [vmem:[#allocation3 + $0x160] sm:$0xff] %vm2731, 0.0
        %2777 = vst.msk [vmem:[#allocation3 + $0x168] sm:$0xff] %vm2731, 0.0
        %2778 = vst.msk [vmem:[#allocation3 + $0x170] sm:$0xff] %vm2731, 0.0
        %2779 = vst.msk [vmem:[#allocation3 + $0x178] sm:$0xff] %vm2731, 0.0
        %2780 = vst.msk [vmem:[#allocation3 + $0x180] sm:$0xff] %vm2731, 0.0
        %2781 = vst.msk [vmem:[#allocation3 + $0x188] sm:$0xff] %vm2731, 0.0
        %2782 = vst.msk [vmem:[#allocation3 + $0x190] sm:$0xff] %vm2731, 0.0
        %2783 = vst.msk [vmem:[#allocation3 + $0x198] sm:$0xff] %vm2731, 0.0
        %2784 = vst.msk [vmem:[#allocation3 + $0x1a0] sm:$0xff] %vm2731, 0.0
        %2785 = vst.msk [vmem:[#allocation3 + $0x1a8] sm:$0xff] %vm2731, 0.0
        %2786 = vst.msk [vmem:[#allocation3 + $0x1b0] sm:$0xff] %vm2731, 0.0
        %2787 = vst.msk [vmem:[#allocation3 + $0x1b8] sm:$0xff] %vm2731, 0.0
        %2788 = vst.msk [vmem:[#allocation3 + $0x1c0] sm:$0xff] %vm2731, 0.0
        %2789 = vst.msk [vmem:[#allocation3 + $0x1c8] sm:$0xff] %vm2731, 0.0
        %2790 = vst.msk [vmem:[#allocation3 + $0x1d0] sm:$0xff] %vm2731, 0.0
        %2791 = vst.msk [vmem:[#allocation3 + $0x1d8] sm:$0xff] %vm2731, 0.0
        %2792 = vst.msk [vmem:[#allocation3 + $0x1e0] sm:$0xff] %vm2731, 0.0
        %2793 = vst.msk [vmem:[#allocation3 + $0x1e8] sm:$0xff] %vm2731, 0.0
        %2794 = vst.msk [vmem:[#allocation3 + $0x1f0] sm:$0xff] %vm2731, 0.0
        %2795 = vst.msk [vmem:[#allocation3 + $0x1f8] sm:$0xff] %vm2731, 0.0
        %2796 = vst.msk [vmem:[#allocation3 + $0x200] sm:$0xff] %vm2731, 0.0
        %2797 = vst.msk [vmem:[#allocation3 + $0x208] sm:$0xff] %vm2731, 0.0
        %2798 = vst.msk [vmem:[#allocation3 + $0x210] sm:$0xff] %vm2731, 0.0
        %2799 = vst.msk [vmem:[#allocation3 + $0x218] sm:$0xff] %vm2731, 0.0
        %2800 = vst.msk [vmem:[#allocation3 + $0x220] sm:$0xff] %vm2731, 0.0
        %2801 = vst.msk [vmem:[#allocation3 + $0x228] sm:$0xff] %vm2731, 0.0
        %2802 = vst.msk [vmem:[#allocation3 + $0x230] sm:$0xff] %vm2731, 0.0
        %2803 = vst.msk [vmem:[#allocation3 + $0x238] sm:$0xff] %vm2731, 0.0
        %2804 = vst.msk [vmem:[#allocation3 + $0x240] sm:$0xff] %vm2731, 0.0
        %2805 = vst.msk [vmem:[#allocation3 + $0x248] sm:$0xff] %vm2731, 0.0
        %2806 = vst.msk [vmem:[#allocation3 + $0x250] sm:$0xff] %vm2731, 0.0
        %2807 = vst.msk [vmem:[#allocation3 + $0x258] sm:$0xff] %vm2731, 0.0
        %2808 = vst.msk [vmem:[#allocation3 + $0x260] sm:$0xff] %vm2731, 0.0
        %2809 = vst.msk [vmem:[#allocation3 + $0x268] sm:$0xff] %vm2731, 0.0
        %2810 = vst.msk [vmem:[#allocation3 + $0x270] sm:$0xff] %vm2731, 0.0
        %2811 = vst.msk [vmem:[#allocation3 + $0x278] sm:$0xff] %vm2731, 0.0
        %2812 = vst.msk [vmem:[#allocation3 + $0x280] sm:$0xff] %vm2731, 0.0
        %2813 = vst.msk [vmem:[#allocation3 + $0x288] sm:$0xff] %vm2731, 0.0
        %2814 = vst.msk [vmem:[#allocation3 + $0x290] sm:$0xff] %vm2731, 0.0
        %2815 = vst.msk [vmem:[#allocation3 + $0x298] sm:$0xff] %vm2731, 0.0
        %2816 = vst.msk [vmem:[#allocation3 + $0x2a0] sm:$0xff] %vm2731, 0.0
        %2817 = vst.msk [vmem:[#allocation3 + $0x2a8] sm:$0xff] %vm2731, 0.0
        %2818 = vst.msk [vmem:[#allocation3 + $0x2b0] sm:$0xff] %vm2731, 0.0
        %2819 = vst.msk [vmem:[#allocation3 + $0x2b8] sm:$0xff] %vm2731, 0.0
        %2820 = vst.msk [vmem:[#allocation3 + $0x2c0] sm:$0xff] %vm2731, 0.0
        %2821 = vst.msk [vmem:[#allocation3 + $0x2c8] sm:$0xff] %vm2731, 0.0
        %2822 = vst.msk [vmem:[#allocation3 + $0x2d0] sm:$0xff] %vm2731, 0.0
        %2823 = vst.msk [vmem:[#allocation3 + $0x2d8] sm:$0xff] %vm2731, 0.0
        %2824 = vst.msk [vmem:[#allocation3 + $0x2e0] sm:$0xff] %vm2731, 0.0
        %2825 = vst.msk [vmem:[#allocation3 + $0x2e8] sm:$0xff] %vm2731, 0.0
        %2826 = vst.msk [vmem:[#allocation3 + $0x2f0] sm:$0xff] %vm2731, 0.0
        %2827 = vst.msk [vmem:[#allocation3 + $0x2f8] sm:$0xff] %vm2731, 0.0
        %2828 = vst.msk [vmem:[#allocation3 + $0x300] sm:$0xff] %vm2731, 0.0
        %2829 = vst.msk [vmem:[#allocation3 + $0x308] sm:$0xff] %vm2731, 0.0
        %2830 = vst.msk [vmem:[#allocation3 + $0x310] sm:$0xff] %vm2731, 0.0
        %2831 = vst.msk [vmem:[#allocation3 + $0x318] sm:$0xff] %vm2731, 0.0
        %2832 = vst.msk [vmem:[#allocation3 + $0x320] sm:$0xff] %vm2731, 0.0
        %2833 = vst.msk [vmem:[#allocation3 + $0x328] sm:$0xff] %vm2731, 0.0
        %2834 = vst.msk [vmem:[#allocation3 + $0x330] sm:$0xff] %vm2731, 0.0
        %2835 = vst.msk [vmem:[#allocation3 + $0x338] sm:$0xff] %vm2731, 0.0
        %2836 = vst.msk [vmem:[#allocation3 + $0x340] sm:$0xff] %vm2731, 0.0
        %2837 = vst.msk [vmem:[#allocation3 + $0x348] sm:$0xff] %vm2731, 0.0
        %2838 = vst.msk [vmem:[#allocation3 + $0x350] sm:$0xff] %vm2731, 0.0
        %2839 = vst.msk [vmem:[#allocation3 + $0x358] sm:$0xff] %vm2731, 0.0
        %2840 = vst.msk [vmem:[#allocation3 + $0x360] sm:$0xff] %vm2731, 0.0
        %2841 = vst.msk [vmem:[#allocation3 + $0x368] sm:$0xff] %vm2731, 0.0
        %2842 = vst.msk [vmem:[#allocation3 + $0x370] sm:$0xff] %vm2731, 0.0
        %2843 = vst.msk [vmem:[#allocation3 + $0x378] sm:$0xff] %vm2731, 0.0
        %2844 = vst.msk [vmem:[#allocation3 + $0x380] sm:$0xff] %vm2731, 0.0
        %2845 = vst.msk [vmem:[#allocation3 + $0x388] sm:$0xff] %vm2731, 0.0
        %2846 = vst.msk [vmem:[#allocation3 + $0x390] sm:$0xff] %vm2731, 0.0
        %2847 = vst.msk [vmem:[#allocation3 + $0x398] sm:$0xff] %vm2731, 0.0
        %2848 = vst.msk [vmem:[#allocation3 + $0x3a0] sm:$0xff] %vm2731, 0.0
        %2849 = vst.msk [vmem:[#allocation3 + $0x3a8] sm:$0xff] %vm2731, 0.0
        %2850 = vst.msk [vmem:[#allocation3 + $0x3b0] sm:$0xff] %vm2731, 0.0
        %2851 = vst.msk [vmem:[#allocation3 + $0x3b8] sm:$0xff] %vm2731, 0.0
        %2852 = vst.msk [vmem:[#allocation3 + $0x3c0] sm:$0xff] %vm2731, 0.0
        %2853 = vst.msk [vmem:[#allocation3 + $0x3c8] sm:$0xff] %vm2731, 0.0
        %2854 = vst.msk [vmem:[#allocation3 + $0x3d0] sm:$0xff] %vm2731, 0.0
        %2855 = vst.msk [vmem:[#allocation3 + $0x3d8] sm:$0xff] %vm2731, 0.0
        %2856 = vst.msk [vmem:[#allocation3 + $0x3e0] sm:$0xff] %vm2731, 0.0
        %2857 = vst.msk [vmem:[#allocation3 + $0x3e8] sm:$0xff] %vm2731, 0.0
        %2858 = vst.msk [vmem:[#allocation3 + $0x3f0] sm:$0xff] %vm2731, 0.0
        %2859 = vst.msk [vmem:[#allocation3 + $0x3f8] sm:$0xff] %vm2731, 0.0
        %2860 = vst.msk [vmem:[#allocation3 + $0x400] sm:$0xff] %vm2731, 0.0
        %2861 = vst.msk [vmem:[#allocation3 + $0x408] sm:$0xff] %vm2731, 0.0
        %2862 = vst.msk [vmem:[#allocation3 + $0x410] sm:$0xff] %vm2731, 0.0
        %2863 = vst.msk [vmem:[#allocation3 + $0x418] sm:$0xff] %vm2731, 0.0
        %2864 = vst.msk [vmem:[#allocation3 + $0x420] sm:$0xff] %vm2731, 0.0
        %2865 = vst.msk [vmem:[#allocation3 + $0x428] sm:$0xff] %vm2731, 0.0
        %2866 = vst.msk [vmem:[#allocation3 + $0x430] sm:$0xff] %vm2731, 0.0
        %2867 = vst.msk [vmem:[#allocation3 + $0x438] sm:$0xff] %vm2731, 0.0
        %2868 = vst.msk [vmem:[#allocation3 + $0x440] sm:$0xff] %vm2731, 0.0
        %2869 = vst.msk [vmem:[#allocation3 + $0x448] sm:$0xff] %vm2731, 0.0
        %2870 = vst.msk [vmem:[#allocation3 + $0x450] sm:$0xff] %vm2731, 0.0
        %2871 = vst.msk [vmem:[#allocation3 + $0x458] sm:$0xff] %vm2731, 0.0
        %2872 = vst.msk [vmem:[#allocation3 + $0x460] sm:$0xff] %vm2731, 0.0
        %2873 = vst.msk [vmem:[#allocation3 + $0x468] sm:$0xff] %vm2731, 0.0
        %2874 = vst.msk [vmem:[#allocation3 + $0x470] sm:$0xff] %vm2731, 0.0
        %2875 = vst.msk [vmem:[#allocation3 + $0x478] sm:$0xff] %vm2731, 0.0
        %2876 = vst.msk [vmem:[#allocation3 + $0x480] sm:$0xff] %vm2731, 0.0
        %2877 = vst.msk [vmem:[#allocation3 + $0x488] sm:$0xff] %vm2731, 0.0
        %2878 = vst.msk [vmem:[#allocation3 + $0x490] sm:$0xff] %vm2731, 0.0
        %2879 = vst.msk [vmem:[#allocation3 + $0x498] sm:$0xff] %vm2731, 0.0
        %2880 = vst.msk [vmem:[#allocation3 + $0x4a0] sm:$0xff] %vm2731, 0.0
        %2881 = vst.msk [vmem:[#allocation3 + $0x4a8] sm:$0xff] %vm2731, 0.0
        %2882 = vst.msk [vmem:[#allocation3 + $0x4b0] sm:$0xff] %vm2731, 0.0
        %2883 = vst.msk [vmem:[#allocation3 + $0x4b8] sm:$0xff] %vm2731, 0.0
        %2884 = vst.msk [vmem:[#allocation3 + $0x4c0] sm:$0xff] %vm2731, 0.0
        %2885 = vst.msk [vmem:[#allocation3 + $0x4c8] sm:$0xff] %vm2731, 0.0
        %2886 = vst.msk [vmem:[#allocation3 + $0x4d0] sm:$0xff] %vm2731, 0.0
        %2887 = vst.msk [vmem:[#allocation3 + $0x4d8] sm:$0xff] %vm2731, 0.0
        %2888 = vst.msk [vmem:[#allocation3 + $0x4e0] sm:$0xff] %vm2731, 0.0
        %2889 = vst.msk [vmem:[#allocation3 + $0x4e8] sm:$0xff] %vm2731, 0.0
        %2890 = vst.msk [vmem:[#allocation3 + $0x4f0] sm:$0xff] %vm2731, 0.0
        %2891 = vst.msk [vmem:[#allocation3 + $0x4f8] sm:$0xff] %vm2731, 0.0
        %2892 = vst.msk [vmem:[#allocation3 + $0x500] sm:$0xff] %vm2731, 0.0
        %2893 = vst.msk [vmem:[#allocation3 + $0x508] sm:$0xff] %vm2731, 0.0
        %2894 = vst.msk [vmem:[#allocation3 + $0x510] sm:$0xff] %vm2731, 0.0
        %2895 = vst.msk [vmem:[#allocation3 + $0x518] sm:$0xff] %vm2731, 0.0
        %2896 = vst.msk [vmem:[#allocation3 + $0x520] sm:$0xff] %vm2731, 0.0
        %2897 = vst.msk [vmem:[#allocation3 + $0x528] sm:$0xff] %vm2731, 0.0
        %2898 = vst.msk [vmem:[#allocation3 + $0x530] sm:$0xff] %vm2731, 0.0
        %2899 = vst.msk [vmem:[#allocation3 + $0x538] sm:$0xff] %vm2731, 0.0
        %2900 = vst.msk [vmem:[#allocation3 + $0x540] sm:$0xff] %vm2731, 0.0
        %2901 = vst.msk [vmem:[#allocation3 + $0x548] sm:$0xff] %vm2731, 0.0
        %2902 = vst.msk [vmem:[#allocation3 + $0x550] sm:$0xff] %vm2731, 0.0
        %2903 = vst.msk [vmem:[#allocation3 + $0x558] sm:$0xff] %vm2731, 0.0
        %2904 = vst.msk [vmem:[#allocation3 + $0x560] sm:$0xff] %vm2731, 0.0
        %2905 = vst.msk [vmem:[#allocation3 + $0x568] sm:$0xff] %vm2731, 0.0
        %2906 = vst.msk [vmem:[#allocation3 + $0x570] sm:$0xff] %vm2731, 0.0
        %2907 = vst.msk [vmem:[#allocation3 + $0x578] sm:$0xff] %vm2731, 0.0
        %2908 = vst.msk [vmem:[#allocation3 + $0x580] sm:$0xff] %vm2731, 0.0
        %2909 = vst.msk [vmem:[#allocation3 + $0x588] sm:$0xff] %vm2731, 0.0
        %2910 = vst.msk [vmem:[#allocation3 + $0x590] sm:$0xff] %vm2731, 0.0
        %2911 = vst.msk [vmem:[#allocation3 + $0x598] sm:$0xff] %vm2731, 0.0
        %2912 = vst.msk [vmem:[#allocation3 + $0x5a0] sm:$0xff] %vm2731, 0.0
        %2913 = vst.msk [vmem:[#allocation3 + $0x5a8] sm:$0xff] %vm2731, 0.0
        %2914 = vst.msk [vmem:[#allocation3 + $0x5b0] sm:$0xff] %vm2731, 0.0
        %2915 = vst.msk [vmem:[#allocation3 + $0x5b8] sm:$0xff] %vm2731, 0.0
        %2916 = vst.msk [vmem:[#allocation3 + $0x5c0] sm:$0xff] %vm2731, 0.0
        %2917 = vst.msk [vmem:[#allocation3 + $0x5c8] sm:$0xff] %vm2731, 0.0
        %2918 = vst.msk [vmem:[#allocation3 + $0x5d0] sm:$0xff] %vm2731, 0.0
        %2919 = vst.msk [vmem:[#allocation3 + $0x5d8] sm:$0xff] %vm2731, 0.0
        %2920 = vst.msk [vmem:[#allocation3 + $0x5e0] sm:$0xff] %vm2731, 0.0
        %2921 = vst.msk [vmem:[#allocation3 + $0x5e8] sm:$0xff] %vm2731, 0.0
        %2922 = vst.msk [vmem:[#allocation3 + $0x5f0] sm:$0xff] %vm2731, 0.0
        %2923 = vst.msk [vmem:[#allocation3 + $0x5f8] sm:$0xff] %vm2731, 0.0
        %2924 = vst.msk [vmem:[#allocation3 + $0x600] sm:$0xff] %vm2731, 0.0
        %2925 = vst.msk [vmem:[#allocation3 + $0x608] sm:$0xff] %vm2731, 0.0
        %2926 = vst.msk [vmem:[#allocation3 + $0x610] sm:$0xff] %vm2731, 0.0
        %2927 = vst.msk [vmem:[#allocation3 + $0x618] sm:$0xff] %vm2731, 0.0
        %2928 = vst.msk [vmem:[#allocation3 + $0x620] sm:$0xff] %vm2731, 0.0
        %2929 = vst.msk [vmem:[#allocation3 + $0x628] sm:$0xff] %vm2731, 0.0
        %2930 = vst.msk [vmem:[#allocation3 + $0x630] sm:$0xff] %vm2731, 0.0
        %2931 = vst.msk [vmem:[#allocation3 + $0x638] sm:$0xff] %vm2731, 0.0
        %2932 = vst.msk [vmem:[#allocation3 + $0x640] sm:$0xff] %vm2731, 0.0
        %2933 = vst.msk [vmem:[#allocation3 + $0x648] sm:$0xff] %vm2731, 0.0
        %2934 = vst.msk [vmem:[#allocation3 + $0x650] sm:$0xff] %vm2731, 0.0
        %2935 = vst.msk [vmem:[#allocation3 + $0x658] sm:$0xff] %vm2731, 0.0
        %2936 = vst.msk [vmem:[#allocation3 + $0x660] sm:$0xff] %vm2731, 0.0
        %2937 = vst.msk [vmem:[#allocation3 + $0x668] sm:$0xff] %vm2731, 0.0
        %2938 = vst.msk [vmem:[#allocation3 + $0x670] sm:$0xff] %vm2731, 0.0
        %2939 = vst.msk [vmem:[#allocation3 + $0x678] sm:$0xff] %vm2731, 0.0
        %2940 = vst.msk [vmem:[#allocation3 + $0x680] sm:$0xff] %vm2731, 0.0
        %2941 = vst.msk [vmem:[#allocation3 + $0x688] sm:$0xff] %vm2731, 0.0
        %2942 = vst.msk [vmem:[#allocation3 + $0x690] sm:$0xff] %vm2731, 0.0
        %2943 = vst.msk [vmem:[#allocation3 + $0x698] sm:$0xff] %vm2731, 0.0
        %2944 = vst.msk [vmem:[#allocation3 + $0x6a0] sm:$0xff] %vm2731, 0.0
        %2945 = vst.msk [vmem:[#allocation3 + $0x6a8] sm:$0xff] %vm2731, 0.0
        %2946 = vst.msk [vmem:[#allocation3 + $0x6b0] sm:$0xff] %vm2731, 0.0
        %2947 = vst.msk [vmem:[#allocation3 + $0x6b8] sm:$0xff] %vm2731, 0.0
        %2948 = vst.msk [vmem:[#allocation3 + $0x6c0] sm:$0xff] %vm2731, 0.0
        %2949 = vst.msk [vmem:[#allocation3 + $0x6c8] sm:$0xff] %vm2731, 0.0
        %2950 = vst.msk [vmem:[#allocation3 + $0x6d0] sm:$0xff] %vm2731, 0.0
        %2951 = vst.msk [vmem:[#allocation3 + $0x6d8] sm:$0xff] %vm2731, 0.0
        %2952 = vst.msk [vmem:[#allocation3 + $0x6e0] sm:$0xff] %vm2731, 0.0
        %2953 = vst.msk [vmem:[#allocation3 + $0x6e8] sm:$0xff] %vm2731, 0.0
        %2954 = vst.msk [vmem:[#allocation3 + $0x6f0] sm:$0xff] %vm2731, 0.0
        %2955 = vst.msk [vmem:[#allocation3 + $0x6f8] sm:$0xff] %vm2731, 0.0
        %2956 = vst.msk [vmem:[#allocation3 + $0x700] sm:$0xff] %vm2731, 0.0
        %2957 = vst.msk [vmem:[#allocation3 + $0x708] sm:$0xff] %vm2731, 0.0
        %2958 = vst.msk [vmem:[#allocation3 + $0x710] sm:$0xff] %vm2731, 0.0
        %2959 = vst.msk [vmem:[#allocation3 + $0x718] sm:$0xff] %vm2731, 0.0
        %2960 = vst.msk [vmem:[#allocation3 + $0x720] sm:$0xff] %vm2731, 0.0
        %2961 = vst.msk [vmem:[#allocation3 + $0x728] sm:$0xff] %vm2731, 0.0
        %2962 = vst.msk [vmem:[#allocation3 + $0x730] sm:$0xff] %vm2731, 0.0
        %2963 = vst.msk [vmem:[#allocation3 + $0x738] sm:$0xff] %vm2731, 0.0
        %2964 = vst.msk [vmem:[#allocation3 + $0x740] sm:$0xff] %vm2731, 0.0
        %2965 = vst.msk [vmem:[#allocation3 + $0x748] sm:$0xff] %vm2731, 0.0
        %2966 = vst.msk [vmem:[#allocation3 + $0x750] sm:$0xff] %vm2731, 0.0
        %2967 = vst.msk [vmem:[#allocation3 + $0x758] sm:$0xff] %vm2731, 0.0
        %2968 = vst.msk [vmem:[#allocation3 + $0x760] sm:$0xff] %vm2731, 0.0
        %2969 = vst.msk [vmem:[#allocation3 + $0x768] sm:$0xff] %vm2731, 0.0
        %2970 = vst.msk [vmem:[#allocation3 + $0x770] sm:$0xff] %vm2731, 0.0
        %2971 = vst.msk [vmem:[#allocation3 + $0x778] sm:$0xff] %vm2731, 0.0
        %2972 = vst.msk [vmem:[#allocation3 + $0x780] sm:$0xff] %vm2731, 0.0
        %2973 = vst.msk [vmem:[#allocation3 + $0x788] sm:$0xff] %vm2731, 0.0
        %2974 = vst.msk [vmem:[#allocation3 + $0x790] sm:$0xff] %vm2731, 0.0
        %2975 = vst.msk [vmem:[#allocation3 + $0x798] sm:$0xff] %vm2731, 0.0
        %2976 = vst.msk [vmem:[#allocation3 + $0x7a0] sm:$0xff] %vm2731, 0.0
        %2977 = vst.msk [vmem:[#allocation3 + $0x7a8] sm:$0xff] %vm2731, 0.0
        %2978 = vst.msk [vmem:[#allocation3 + $0x7b0] sm:$0xff] %vm2731, 0.0
        %2979 = vst.msk [vmem:[#allocation3 + $0x7b8] sm:$0xff] %vm2731, 0.0
        %2980 = vst.msk [vmem:[#allocation3 + $0x7c0] sm:$0xff] %vm2731, 0.0
        %2981 = vst.msk [vmem:[#allocation3 + $0x7c8] sm:$0xff] %vm2731, 0.0
        %2982 = vst.msk [vmem:[#allocation3 + $0x7d0] sm:$0xff] %vm2731, 0.0
        %2983 = vst.msk [vmem:[#allocation3 + $0x7d8] sm:$0xff] %vm2731, 0.0
        %2984 = vst.msk [vmem:[#allocation3 + $0x7e0] sm:$0xff] %vm2731, 0.0
        %2985 = vst.msk [vmem:[#allocation3 + $0x7e8] sm:$0xff] %vm2731, 0.0
        %2986 = vst.msk [vmem:[#allocation3 + $0x7f0] sm:$0xff] %vm2731, 0.0
        %2987 = vst.msk [vmem:[#allocation3 + $0x7f8] sm:$0xff] %vm2731, 0.0
        %2988 = vst.msk [vmem:[#allocation3 + $0x800] sm:$0xff] %vm2731, 0.0
        %2989 = vst.msk [vmem:[#allocation3 + $0x808] sm:$0xff] %vm2731, 0.0
        %2990 = vst.msk [vmem:[#allocation3 + $0x810] sm:$0xff] %vm2731, 0.0
        %2991 = vst.msk [vmem:[#allocation3 + $0x818] sm:$0xff] %vm2731, 0.0
        %2992 = vst.msk [vmem:[#allocation3 + $0x820] sm:$0xff] %vm2731, 0.0
        %2993 = vst.msk [vmem:[#allocation3 + $0x828] sm:$0xff] %vm2731, 0.0
        %2994 = vst.msk [vmem:[#allocation3 + $0x830] sm:$0xff] %vm2731, 0.0
        %2995 = vst.msk [vmem:[#allocation3 + $0x838] sm:$0xff] %vm2731, 0.0
        %2996 = vst.msk [vmem:[#allocation3 + $0x840] sm:$0xff] %vm2731, 0.0
        %2997 = vst.msk [vmem:[#allocation3 + $0x848] sm:$0xff] %vm2731, 0.0
        %2998 = vst.msk [vmem:[#allocation3 + $0x850] sm:$0xff] %vm2731, 0.0
        %2999 = vst.msk [vmem:[#allocation3 + $0x858] sm:$0xff] %vm2731, 0.0
        %3000 = vst.msk [vmem:[#allocation3 + $0x860] sm:$0xff] %vm2731, 0.0
        %3001 = vst.msk [vmem:[#allocation3 + $0x868] sm:$0xff] %vm2731, 0.0
        %3002 = vst.msk [vmem:[#allocation3 + $0x870] sm:$0xff] %vm2731, 0.0
        %3003 = vst.msk [vmem:[#allocation3 + $0x878] sm:$0xff] %vm2731, 0.0
        %3004 = vst.msk [vmem:[#allocation3 + $0x880] sm:$0xff] %vm2731, 0.0
        %3005 = vst.msk [vmem:[#allocation3 + $0x888] sm:$0xff] %vm2731, 0.0
        %3006 = vst.msk [vmem:[#allocation3 + $0x890] sm:$0xff] %vm2731, 0.0
        %3007 = vst.msk [vmem:[#allocation3 + $0x898] sm:$0xff] %vm2731, 0.0
        %3008 = vst.msk [vmem:[#allocation3 + $0x8a0] sm:$0xff] %vm2731, 0.0
        %3009 = vst.msk [vmem:[#allocation3 + $0x8a8] sm:$0xff] %vm2731, 0.0
        %3010 = vst.msk [vmem:[#allocation3 + $0x8b0] sm:$0xff] %vm2731, 0.0
        %3011 = vst.msk [vmem:[#allocation3 + $0x8b8] sm:$0xff] %vm2731, 0.0
        %3012 = vst.msk [vmem:[#allocation3 + $0x8c0] sm:$0xff] %vm2731, 0.0
        %3013 = vst.msk [vmem:[#allocation3 + $0x8c8] sm:$0xff] %vm2731, 0.0
        %3014 = vst.msk [vmem:[#allocation3 + $0x8d0] sm:$0xff] %vm2731, 0.0
        %3015 = vst.msk [vmem:[#allocation3 + $0x8d8] sm:$0xff] %vm2731, 0.0
        %3016 = vst.msk [vmem:[#allocation3 + $0x8e0] sm:$0xff] %vm2731, 0.0
        %3017 = vst.msk [vmem:[#allocation3 + $0x8e8] sm:$0xff] %vm2731, 0.0
        %3018 = vst.msk [vmem:[#allocation3 + $0x8f0] sm:$0xff] %vm2731, 0.0
        %3019 = vst.msk [vmem:[#allocation3 + $0x8f8] sm:$0xff] %vm2731, 0.0
        %3020 = vst.msk [vmem:[#allocation3 + $0x900] sm:$0xff] %vm2731, 0.0
        %3021 = vst.msk [vmem:[#allocation3 + $0x908] sm:$0xff] %vm2731, 0.0
        %3022 = vst.msk [vmem:[#allocation3 + $0x910] sm:$0xff] %vm2731, 0.0
        %3023 = vst.msk [vmem:[#allocation3 + $0x918] sm:$0xff] %vm2731, 0.0
        %3024 = vst.msk [vmem:[#allocation3 + $0x920] sm:$0xff] %vm2731, 0.0
        %3025 = vst.msk [vmem:[#allocation3 + $0x928] sm:$0xff] %vm2731, 0.0
        %3026 = vst.msk [vmem:[#allocation3 + $0x930] sm:$0xff] %vm2731, 0.0
        %3027 = vst.msk [vmem:[#allocation3 + $0x938] sm:$0xff] %vm2731, 0.0
        %3028 = vst.msk [vmem:[#allocation3 + $0x940] sm:$0xff] %vm2731, 0.0
        %3029 = vst.msk [vmem:[#allocation3 + $0x948] sm:$0xff] %vm2731, 0.0
        %3030 = vst.msk [vmem:[#allocation3 + $0x950] sm:$0xff] %vm2731, 0.0
        %3031 = vst.msk [vmem:[#allocation3 + $0x958] sm:$0xff] %vm2731, 0.0
        %3032 = vst.msk [vmem:[#allocation3] sm:$0xff] %vm2731, %v2720
        %vm3033 = vcmask 74752
        %3034 = vst.msk [vmem:[#allocation3 + $0x8] sm:$0x3] %vm3033, %v2721
        %3037 = vrot.lane.b32.xlu0 %v2720, 127
        %v3038 = vpop.permute.xlu0 %3037
        %3039 = vrot.lane.b32.xlu0 %v2721, 127
        %v3040 = vpop.permute.xlu0 %3039
        %3043 = vst.msk [vmem:[#allocation3 + $0x10] sm:$0xff] %vm2731, %v3038
        %3044 = vst.msk [vmem:[#allocation3 + $0x18] sm:$0x3] %vm3033, %v3040
        %3045 = vrot.lane.b32.xlu0 %v2720, 126
        %v3046 = vpop.permute.xlu0 %3045
        %3047 = vrot.lane.b32.xlu0 %v2721, 126
        %v3048 = vpop.permute.xlu0 %3047
        %3051 = vst.msk [vmem:[#allocation3 + $0x20] sm:$0xff] %vm2731, %v3046
        %3052 = vst.msk [vmem:[#allocation3 + $0x28] sm:$0x3] %vm3033, %v3048
        %3053 = vrot.lane.b32.xlu0 %v2720, 125
        %v3054 = vpop.permute.xlu0 %3053
        %3055 = vrot.lane.b32.xlu0 %v2721, 125
        %v3056 = vpop.permute.xlu0 %3055
        %3059 = vst.msk [vmem:[#allocation3 + $0x30] sm:$0xff] %vm2731, %v3054
        %3060 = vst.msk [vmem:[#allocation3 + $0x38] sm:$0x3] %vm3033, %v3056
        %3061 = vrot.lane.b32.xlu0 %v2720, 124
        %v3062 = vpop.permute.xlu0 %3061
        %3063 = vrot.lane.b32.xlu0 %v2721, 124
        %v3064 = vpop.permute.xlu0 %3063
        %3067 = vst.msk [vmem:[#allocation3 + $0x40] sm:$0xff] %vm2731, %v3062
        %3068 = vst.msk [vmem:[#allocation3 + $0x48] sm:$0x3] %vm3033, %v3064
        %vm3069 = vcmask 80897
        %3070 = vst.msk [vmem:[#allocation3 + $0x4f] sm:$0xfe] %vm3069, %v2720
        %vm3071 = vcmask 75776
        %3072 = vst.msk [vmem:[#allocation3 + $0x57] sm:$0x7] %vm3071, %v2721
        %3073 = vst.msk [vmem:[#allocation3 + $0x5f] sm:$0xfe] %vm3069, %v3038
        %3074 = vst.msk [vmem:[#allocation3 + $0x67] sm:$0x7] %vm3071, %v3040
        %3075 = vst.msk [vmem:[#allocation3 + $0x6f] sm:$0xfe] %vm3069, %v3046
        %3076 = vst.msk [vmem:[#allocation3 + $0x77] sm:$0x7] %vm3071, %v3048
        %3077 = vst.msk [vmem:[#allocation3 + $0x7f] sm:$0xfe] %vm3069, %v3054
        %3078 = vst.msk [vmem:[#allocation3 + $0x87] sm:$0x7] %vm3071, %v3056
        %3079 = vst.msk [vmem:[#allocation3 + $0x8f] sm:$0xfe] %vm3069, %v3062
        %3080 = vst.msk [vmem:[#allocation3 + $0x97] sm:$0x7] %vm3071, %v3064
        %vm3081 = vcmask 80898
        %3082 = vst.msk [vmem:[#allocation3 + $0x9e] sm:$0xfc] %vm3081, %v2720
        %vm3083 = vcmask 76800
        %3084 = vst.msk [vmem:[#allocation3 + $0xa6] sm:$0xf] %vm3083, %v2721
        %3085 = vst.msk [vmem:[#allocation3 + $0xae] sm:$0xfc] %vm3081, %v3038
        %3086 = vst.msk [vmem:[#allocation3 + $0xb6] sm:$0xf] %vm3083, %v3040
        %3087 = vst.msk [vmem:[#allocation3 + $0xbe] sm:$0xfc] %vm3081, %v3046
        %3088 = vst.msk [vmem:[#allocation3 + $0xc6] sm:$0xf] %vm3083, %v3048
        %3089 = vst.msk [vmem:[#allocation3 + $0xce] sm:$0xfc] %vm3081, %v3054
        %3090 = vst.msk [vmem:[#allocation3 + $0xd6] sm:$0xf] %vm3083, %v3056
        %3091 = vst.msk [vmem:[#allocation3 + $0xde] sm:$0xfc] %vm3081, %v3062
        %3092 = vst.msk [vmem:[#allocation3 + $0xe6] sm:$0xf] %vm3083, %v3064
        %vm3093 = vcmask 80899
        %3094 = vst.msk [vmem:[#allocation3 + $0xed] sm:$0xf8] %vm3093, %v2720
        %vm3095 = vcmask 77824
        %3096 = vst.msk [vmem:[#allocation3 + $0xf5] sm:$0x1f] %vm3095, %v2721
        %3097 = vst.msk [vmem:[#allocation3 + $0xfd] sm:$0xf8] %vm3093, %v3038
        %3098 = vst.msk [vmem:[#allocation3 + $0x105] sm:$0x1f] %vm3095, %v3040
        %3099 = vst.msk [vmem:[#allocation3 + $0x10d] sm:$0xf8] %vm3093, %v3046
        %3100 = vst.msk [vmem:[#allocation3 + $0x115] sm:$0x1f] %vm3095, %v3048
        %3101 = vst.msk [vmem:[#allocation3 + $0x11d] sm:$0xf8] %vm3093, %v3054
        %3102 = vst.msk [vmem:[#allocation3 + $0x125] sm:$0x1f] %vm3095, %v3056
        %3103 = vst.msk [vmem:[#allocation3 + $0x12d] sm:$0xf8] %vm3093, %v3062
        %3104 = vst.msk [vmem:[#allocation3 + $0x135] sm:$0x1f] %vm3095, %v3064
        %vm3105 = vcmask 80900
        %3106 = vst.msk [vmem:[#allocation3 + $0x13c] sm:$0xf0] %vm3105, %v2720
        %vm3107 = vcmask 78848
        %3108 = vst.msk [vmem:[#allocation3 + $0x144] sm:$0x3f] %vm3107, %v2721
        %3109 = vst.msk [vmem:[#allocation3 + $0x14c] sm:$0xf0] %vm3105, %v3038
        %3110 = vst.msk [vmem:[#allocation3 + $0x154] sm:$0x3f] %vm3107, %v3040
        %3111 = vst.msk [vmem:[#allocation3 + $0x15c] sm:$0xf0] %vm3105, %v3046
        %3112 = vst.msk [vmem:[#allocation3 + $0x164] sm:$0x3f] %vm3107, %v3048
        %3113 = vst.msk [vmem:[#allocation3 + $0x16c] sm:$0xf0] %vm3105, %v3054
        %3114 = vst.msk [vmem:[#allocation3 + $0x174] sm:$0x3f] %vm3107, %v3056
        %3115 = vst.msk [vmem:[#allocation3 + $0x17c] sm:$0xf0] %vm3105, %v3062
        %3116 = vst.msk [vmem:[#allocation3 + $0x184] sm:$0x3f] %vm3107, %v3064
        %vm3117 = vcmask 80902
        %3118 = vst.msk [vmem:[#allocation3 + $0x18a] sm:$0xc0] %vm3117, %v2721
        %3119 = vst.msk [vmem:[#allocation3 + $0x192] sm:$0xff] %vm2731, %v2722
        %3121 = vrot.lane.b32.xlu0 %v2722, 127
        %v3122 = vpop.permute.xlu0 %3121
        %3124 = vst.msk [vmem:[#allocation3 + $0x19a] sm:$0xc0] %vm3117, %v3040
        %3125 = vst.msk [vmem:[#allocation3 + $0x1a2] sm:$0xff] %vm2731, %v3122
        %3126 = vrot.lane.b32.xlu0 %v2722, 126
        %v3127 = vpop.permute.xlu0 %3126
        %3129 = vst.msk [vmem:[#allocation3 + $0x1aa] sm:$0xc0] %vm3117, %v3048
        %3130 = vst.msk [vmem:[#allocation3 + $0x1b2] sm:$0xff] %vm2731, %v3127
        %3131 = vrot.lane.b32.xlu0 %v2722, 125
        %v3132 = vpop.permute.xlu0 %3131
        %3134 = vst.msk [vmem:[#allocation3 + $0x1ba] sm:$0xc0] %vm3117, %v3056
        %3135 = vst.msk [vmem:[#allocation3 + $0x1c2] sm:$0xff] %vm2731, %v3132
        %3136 = vrot.lane.b32.xlu0 %v2722, 124
        %v3137 = vpop.permute.xlu0 %3136
        %3139 = vst.msk [vmem:[#allocation3 + $0x1ca] sm:$0xc0] %vm3117, %v3064
        %3140 = vst.msk [vmem:[#allocation3 + $0x1d2] sm:$0xff] %vm2731, %v3137
        %vm3141 = vcmask 80903
        %3142 = vst.msk [vmem:[#allocation3 + $0x1d9] sm:$0x80] %vm3141, %v2721
        %3143 = vst.msk [vmem:[#allocation3 + $0x1e1] sm:$0xff] %vm2731, %v2722
        %vm3144 = vcmask 73728
        %3145 = vst.msk [vmem:[#allocation3 + $0x1e9] sm:$0x1] %vm3144, %v2723
        %3147 = vrot.lane.b32.xlu0 %v2723, 127
        %v3148 = vpop.permute.xlu0 %3147
        %3150 = vst.msk [vmem:[#allocation3 + $0x1e9] sm:$0x80] %vm3141, %v3040
        %3151 = vst.msk [vmem:[#allocation3 + $0x1f1] sm:$0xff] %vm2731, %v3122
        %3152 = vst.msk [vmem:[#allocation3 + $0x1f9] sm:$0x1] %vm3144, %v3148
        %3153 = vrot.lane.b32.xlu0 %v2723, 126
        %v3154 = vpop.permute.xlu0 %3153
        %3156 = vst.msk [vmem:[#allocation3 + $0x1f9] sm:$0x80] %vm3141, %v3048
        %3157 = vst.msk [vmem:[#allocation3 + $0x201] sm:$0xff] %vm2731, %v3127
        %3158 = vst.msk [vmem:[#allocation3 + $0x209] sm:$0x1] %vm3144, %v3154
        %3159 = vrot.lane.b32.xlu0 %v2723, 125
        %v3160 = vpop.permute.xlu0 %3159
        %3162 = vst.msk [vmem:[#allocation3 + $0x209] sm:$0x80] %vm3141, %v3056
        %3163 = vst.msk [vmem:[#allocation3 + $0x211] sm:$0xff] %vm2731, %v3132
        %3164 = vst.msk [vmem:[#allocation3 + $0x219] sm:$0x1] %vm3144, %v3160
        %3165 = vrot.lane.b32.xlu0 %v2723, 124
        %v3166 = vpop.permute.xlu0 %3165
        %3168 = vst.msk [vmem:[#allocation3 + $0x219] sm:$0x80] %vm3141, %v3064
        %3169 = vst.msk [vmem:[#allocation3 + $0x221] sm:$0xff] %vm2731, %v3137
        %3170 = vst.msk [vmem:[#allocation3 + $0x229] sm:$0x1] %vm3144, %v3166
        %3171 = vst.msk [vmem:[#allocation3 + $0x230] sm:$0xff] %vm2731, %v2722
        %3172 = vst.msk [vmem:[#allocation3 + $0x238] sm:$0x3] %vm3033, %v2723
        %3173 = vst.msk [vmem:[#allocation3 + $0x240] sm:$0xff] %vm2731, %v3122
        %3174 = vst.msk [vmem:[#allocation3 + $0x248] sm:$0x3] %vm3033, %v3148
        %3175 = vst.msk [vmem:[#allocation3 + $0x250] sm:$0xff] %vm2731, %v3127
        %3176 = vst.msk [vmem:[#allocation3 + $0x258] sm:$0x3] %vm3033, %v3154
        %3177 = vst.msk [vmem:[#allocation3 + $0x260] sm:$0xff] %vm2731, %v3132
        %3178 = vst.msk [vmem:[#allocation3 + $0x268] sm:$0x3] %vm3033, %v3160
        %3179 = vst.msk [vmem:[#allocation3 + $0x270] sm:$0xff] %vm2731, %v3137
        %3180 = vst.msk [vmem:[#allocation3 + $0x278] sm:$0x3] %vm3033, %v3166
        %3181 = vst.msk [vmem:[#allocation3 + $0x27f] sm:$0xfe] %vm3069, %v2722
        %3182 = vst.msk [vmem:[#allocation3 + $0x287] sm:$0x7] %vm3071, %v2723
        %3183 = vst.msk [vmem:[#allocation3 + $0x28f] sm:$0xfe] %vm3069, %v3122
        %3184 = vst.msk [vmem:[#allocation3 + $0x297] sm:$0x7] %vm3071, %v3148
        %3185 = vst.msk [vmem:[#allocation3 + $0x29f] sm:$0xfe] %vm3069, %v3127
        %3186 = vst.msk [vmem:[#allocation3 + $0x2a7] sm:$0x7] %vm3071, %v3154
        %3187 = vst.msk [vmem:[#allocation3 + $0x2af] sm:$0xfe] %vm3069, %v3132
        %3188 = vst.msk [vmem:[#allocation3 + $0x2b7] sm:$0x7] %vm3071, %v3160
        %3189 = vst.msk [vmem:[#allocation3 + $0x2bf] sm:$0xfe] %vm3069, %v3137
        %3190 = vst.msk [vmem:[#allocation3 + $0x2c7] sm:$0x7] %vm3071, %v3166
        %3191 = vst.msk [vmem:[#allocation3 + $0x2ce] sm:$0xfc] %vm3081, %v2722
        %3192 = vst.msk [vmem:[#allocation3 + $0x2d6] sm:$0xf] %vm3083, %v2723
        %3193 = vst.msk [vmem:[#allocation3 + $0x2de] sm:$0xfc] %vm3081, %v3122
        %3194 = vst.msk [vmem:[#allocation3 + $0x2e6] sm:$0xf] %vm3083, %v3148
        %3195 = vst.msk [vmem:[#allocation3 + $0x2ee] sm:$0xfc] %vm3081, %v3127
        %3196 = vst.msk [vmem:[#allocation3 + $0x2f6] sm:$0xf] %vm3083, %v3154
        %3197 = vst.msk [vmem:[#allocation3 + $0x2fe] sm:$0xfc] %vm3081, %v3132
        %3198 = vst.msk [vmem:[#allocation3 + $0x306] sm:$0xf] %vm3083, %v3160
        %3199 = vst.msk [vmem:[#allocation3 + $0x30e] sm:$0xfc] %vm3081, %v3137
        %3200 = vst.msk [vmem:[#allocation3 + $0x316] sm:$0xf] %vm3083, %v3166
        %3201 = vst.msk [vmem:[#allocation3 + $0x31c] sm:$0xf0] %vm3105, %v2723
        %3202 = vst.msk [vmem:[#allocation3 + $0x324] sm:$0x3f] %vm3107, %v2724
        %3204 = vrot.lane.b32.xlu0 %v2724, 127
        %v3205 = vpop.permute.xlu0 %3204
        %3207 = vst.msk [vmem:[#allocation3 + $0x32c] sm:$0xf0] %vm3105, %v3148
        %3208 = vst.msk [vmem:[#allocation3 + $0x334] sm:$0x3f] %vm3107, %v3205
        %3209 = vrot.lane.b32.xlu0 %v2724, 126
        %v3210 = vpop.permute.xlu0 %3209
        %3212 = vst.msk [vmem:[#allocation3 + $0x33c] sm:$0xf0] %vm3105, %v3154
        %3213 = vst.msk [vmem:[#allocation3 + $0x344] sm:$0x3f] %vm3107, %v3210
        %3214 = vrot.lane.b32.xlu0 %v2724, 125
        %v3215 = vpop.permute.xlu0 %3214
        %3217 = vst.msk [vmem:[#allocation3 + $0x34c] sm:$0xf0] %vm3105, %v3160
        %3218 = vst.msk [vmem:[#allocation3 + $0x354] sm:$0x3f] %vm3107, %v3215
        %3219 = vrot.lane.b32.xlu0 %v2724, 124
        %v3220 = vpop.permute.xlu0 %3219
        %3222 = vst.msk [vmem:[#allocation3 + $0x35c] sm:$0xf0] %vm3105, %v3166
        %3223 = vst.msk [vmem:[#allocation3 + $0x364] sm:$0x3f] %vm3107, %v3220
        %vm3224 = vcmask 80901
        %3225 = vst.msk [vmem:[#allocation3 + $0x36b] sm:$0xe0] %vm3224, %v2723
        %vm3226 = vcmask 79872
        %3227 = vst.msk [vmem:[#allocation3 + $0x373] sm:$0x7f] %vm3226, %v2724
        %3228 = vst.msk [vmem:[#allocation3 + $0x37b] sm:$0xe0] %vm3224, %v3148
        %3229 = vst.msk [vmem:[#allocation3 + $0x383] sm:$0x7f] %vm3226, %v3205
        %3230 = vst.msk [vmem:[#allocation3 + $0x38b] sm:$0xe0] %vm3224, %v3154
        %3231 = vst.msk [vmem:[#allocation3 + $0x393] sm:$0x7f] %vm3226, %v3210
        %3232 = vst.msk [vmem:[#allocation3 + $0x39b] sm:$0xe0] %vm3224, %v3160
        %3233 = vst.msk [vmem:[#allocation3 + $0x3a3] sm:$0x7f] %vm3226, %v3215
        %3234 = vst.msk [vmem:[#allocation3 + $0x3ab] sm:$0xe0] %vm3224, %v3166
        %3235 = vst.msk [vmem:[#allocation3 + $0x3b3] sm:$0x7f] %vm3226, %v3220
        %3236 = vst.msk [vmem:[#allocation3 + $0x3ba] sm:$0xc0] %vm3117, %v2723
        %3237 = vst.msk [vmem:[#allocation3 + $0x3c2] sm:$0xff] %vm2731, %v2724
        %3238 = vst.msk [vmem:[#allocation3 + $0x3ca] sm:$0xc0] %vm3117, %v3148
        %3239 = vst.msk [vmem:[#allocation3 + $0x3d2] sm:$0xff] %vm2731, %v3205
        %3240 = vst.msk [vmem:[#allocation3 + $0x3da] sm:$0xc0] %vm3117, %v3154
        %3241 = vst.msk [vmem:[#allocation3 + $0x3e2] sm:$0xff] %vm2731, %v3210
        %3242 = vst.msk [vmem:[#allocation3 + $0x3ea] sm:$0xc0] %vm3117, %v3160
        %3243 = vst.msk [vmem:[#allocation3 + $0x3f2] sm:$0xff] %vm2731, %v3215
        %3244 = vst.msk [vmem:[#allocation3 + $0x3fa] sm:$0xc0] %vm3117, %v3166
        %3245 = vst.msk [vmem:[#allocation3 + $0x402] sm:$0xff] %vm2731, %v3220
        %3246 = vst.msk [vmem:[#allocation3 + $0x409] sm:$0x80] %vm3141, %v2723
        %3247 = vst.msk [vmem:[#allocation3 + $0x411] sm:$0xff] %vm2731, %v2724
        %3248 = vst.msk [vmem:[#allocation3 + $0x419] sm:$0x1] %vm3144, %v2725
        %3250 = vrot.lane.b32.xlu0 %v2725, 127
        %v3251 = vpop.permute.xlu0 %3250
        %3253 = vst.msk [vmem:[#allocation3 + $0x419] sm:$0x80] %vm3141, %v3148
        %3254 = vst.msk [vmem:[#allocation3 + $0x421] sm:$0xff] %vm2731, %v3205
        %3255 = vst.msk [vmem:[#allocation3 + $0x429] sm:$0x1] %vm3144, %v3251
        %3256 = vrot.lane.b32.xlu0 %v2725, 126
        %v3257 = vpop.permute.xlu0 %3256
        %3259 = vst.msk [vmem:[#allocation3 + $0x429] sm:$0x80] %vm3141, %v3154
        %3260 = vst.msk [vmem:[#allocation3 + $0x431] sm:$0xff] %vm2731, %v3210
        %3261 = vst.msk [vmem:[#allocation3 + $0x439] sm:$0x1] %vm3144, %v3257
        %3262 = vrot.lane.b32.xlu0 %v2725, 125
        %v3263 = vpop.permute.xlu0 %3262
        %3265 = vst.msk [vmem:[#allocation3 + $0x439] sm:$0x80] %vm3141, %v3160
        %3266 = vst.msk [vmem:[#allocation3 + $0x441] sm:$0xff] %vm2731, %v3215
        %3267 = vst.msk [vmem:[#allocation3 + $0x449] sm:$0x1] %vm3144, %v3263
        %3268 = vrot.lane.b32.xlu0 %v2725, 124
        %v3269 = vpop.permute.xlu0 %3268
        %3271 = vst.msk [vmem:[#allocation3 + $0x449] sm:$0x80] %vm3141, %v3166
        %3272 = vst.msk [vmem:[#allocation3 + $0x451] sm:$0xff] %vm2731, %v3220
        %3273 = vst.msk [vmem:[#allocation3 + $0x459] sm:$0x1] %vm3144, %v3269
        %3274 = vst.msk [vmem:[#allocation3 + $0x460] sm:$0xff] %vm2731, %v2724
        %3275 = vst.msk [vmem:[#allocation3 + $0x468] sm:$0x3] %vm3033, %v2725
        %3276 = vst.msk [vmem:[#allocation3 + $0x470] sm:$0xff] %vm2731, %v3205
        %3277 = vst.msk [vmem:[#allocation3 + $0x478] sm:$0x3] %vm3033, %v3251
        %3278 = vst.msk [vmem:[#allocation3 + $0x480] sm:$0xff] %vm2731, %v3210
        %3279 = vst.msk [vmem:[#allocation3 + $0x488] sm:$0x3] %vm3033, %v3257
        %3280 = vst.msk [vmem:[#allocation3 + $0x490] sm:$0xff] %vm2731, %v3215
        %3281 = vst.msk [vmem:[#allocation3 + $0x498] sm:$0x3] %vm3033, %v3263
        %3282 = vst.msk [vmem:[#allocation3 + $0x4a0] sm:$0xff] %vm2731, %v3220
        %3283 = vst.msk [vmem:[#allocation3 + $0x4a8] sm:$0x3] %vm3033, %v3269
        %3284 = vst.msk [vmem:[#allocation3 + $0x4ae] sm:$0xfc] %vm3081, %v2725
        %3285 = vst.msk [vmem:[#allocation3 + $0x4b6] sm:$0xf] %vm3083, %v2726
        %3287 = vrot.lane.b32.xlu0 %v2726, 127
        %v3288 = vpop.permute.xlu0 %3287
        %3290 = vst.msk [vmem:[#allocation3 + $0x4be] sm:$0xfc] %vm3081, %v3251
        %3291 = vst.msk [vmem:[#allocation3 + $0x4c6] sm:$0xf] %vm3083, %v3288
        %3292 = vrot.lane.b32.xlu0 %v2726, 126
        %v3293 = vpop.permute.xlu0 %3292
        %3295 = vst.msk [vmem:[#allocation3 + $0x4ce] sm:$0xfc] %vm3081, %v3257
        %3296 = vst.msk [vmem:[#allocation3 + $0x4d6] sm:$0xf] %vm3083, %v3293
        %3297 = vrot.lane.b32.xlu0 %v2726, 125
        %v3298 = vpop.permute.xlu0 %3297
        %3300 = vst.msk [vmem:[#allocation3 + $0x4de] sm:$0xfc] %vm3081, %v3263
        %3301 = vst.msk [vmem:[#allocation3 + $0x4e6] sm:$0xf] %vm3083, %v3298
        %3302 = vrot.lane.b32.xlu0 %v2726, 124
        %v3303 = vpop.permute.xlu0 %3302
        %3305 = vst.msk [vmem:[#allocation3 + $0x4ee] sm:$0xfc] %vm3081, %v3269
        %3306 = vst.msk [vmem:[#allocation3 + $0x4f6] sm:$0xf] %vm3083, %v3303
        %3307 = vst.msk [vmem:[#allocation3 + $0x4fd] sm:$0xf8] %vm3093, %v2725
        %3308 = vst.msk [vmem:[#allocation3 + $0x505] sm:$0x1f] %vm3095, %v2726
        %3309 = vst.msk [vmem:[#allocation3 + $0x50d] sm:$0xf8] %vm3093, %v3251
        %3310 = vst.msk [vmem:[#allocation3 + $0x515] sm:$0x1f] %vm3095, %v3288
        %3311 = vst.msk [vmem:[#allocation3 + $0x51d] sm:$0xf8] %vm3093, %v3257
        %3312 = vst.msk [vmem:[#allocation3 + $0x525] sm:$0x1f] %vm3095, %v3293
        %3313 = vst.msk [vmem:[#allocation3 + $0x52d] sm:$0xf8] %vm3093, %v3263
        %3314 = vst.msk [vmem:[#allocation3 + $0x535] sm:$0x1f] %vm3095, %v3298
        %3315 = vst.msk [vmem:[#allocation3 + $0x53d] sm:$0xf8] %vm3093, %v3269
        %3316 = vst.msk [vmem:[#allocation3 + $0x545] sm:$0x1f] %vm3095, %v3303
        %3317 = vst.msk [vmem:[#allocation3 + $0x54c] sm:$0xf0] %vm3105, %v2725
        %3318 = vst.msk [vmem:[#allocation3 + $0x554] sm:$0x3f] %vm3107, %v2726
        %3319 = vst.msk [vmem:[#allocation3 + $0x55c] sm:$0xf0] %vm3105, %v3251
        %3320 = vst.msk [vmem:[#allocation3 + $0x564] sm:$0x3f] %vm3107, %v3288
        %3321 = vst.msk [vmem:[#allocation3 + $0x56c] sm:$0xf0] %vm3105, %v3257
        %3322 = vst.msk [vmem:[#allocation3 + $0x574] sm:$0x3f] %vm3107, %v3293
        %3323 = vst.msk [vmem:[#allocation3 + $0x57c] sm:$0xf0] %vm3105, %v3263
        %3324 = vst.msk [vmem:[#allocation3 + $0x584] sm:$0x3f] %vm3107, %v3298
        %3325 = vst.msk [vmem:[#allocation3 + $0x58c] sm:$0xf0] %vm3105, %v3269
        %3326 = vst.msk [vmem:[#allocation3 + $0x594] sm:$0x3f] %vm3107, %v3303
        %3327 = vst.msk [vmem:[#allocation3 + $0x59b] sm:$0xe0] %vm3224, %v2725
        %3328 = vst.msk [vmem:[#allocation3 + $0x5a3] sm:$0x7f] %vm3226, %v2726
        %3329 = vst.msk [vmem:[#allocation3 + $0x5ab] sm:$0xe0] %vm3224, %v3251
        %3330 = vst.msk [vmem:[#allocation3 + $0x5b3] sm:$0x7f] %vm3226, %v3288
        %3331 = vst.msk [vmem:[#allocation3 + $0x5bb] sm:$0xe0] %vm3224, %v3257
        %3332 = vst.msk [vmem:[#allocation3 + $0x5c3] sm:$0x7f] %vm3226, %v3293
        %3333 = vst.msk [vmem:[#allocation3 + $0x5cb] sm:$0xe0] %vm3224, %v3263
        %3334 = vst.msk [vmem:[#allocation3 + $0x5d3] sm:$0x7f] %vm3226, %v3298
        %3335 = vst.msk [vmem:[#allocation3 + $0x5db] sm:$0xe0] %vm3224, %v3269
        %3336 = vst.msk [vmem:[#allocation3 + $0x5e3] sm:$0x7f] %vm3226, %v3303
        %3337 = vst.msk [vmem:[#allocation3 + $0x5ea] sm:$0xc0] %vm3117, %v2725
        %3338 = vst.msk [vmem:[#allocation3 + $0x5f2] sm:$0xff] %vm2731, %v2726
        %3339 = vst.msk [vmem:[#allocation3 + $0x5fa] sm:$0xc0] %vm3117, %v3251
        %3340 = vst.msk [vmem:[#allocation3 + $0x602] sm:$0xff] %vm2731, %v3288
        %3341 = vst.msk [vmem:[#allocation3 + $0x60a] sm:$0xc0] %vm3117, %v3257
        %3342 = vst.msk [vmem:[#allocation3 + $0x612] sm:$0xff] %vm2731, %v3293
        %3343 = vst.msk [vmem:[#allocation3 + $0x61a] sm:$0xc0] %vm3117, %v3263
        %3344 = vst.msk [vmem:[#allocation3 + $0x622] sm:$0xff] %vm2731, %v3298
        %3345 = vst.msk [vmem:[#allocation3 + $0x62a] sm:$0xc0] %vm3117, %v3269
        %3346 = vst.msk [vmem:[#allocation3 + $0x632] sm:$0xff] %vm2731, %v3303
        %3347 = vst.msk [vmem:[#allocation3 + $0x640] sm:$0xff] %vm2731, %v2727
        %3348 = vst.msk [vmem:[#allocation3 + $0x648] sm:$0x3] %vm3033, %v2728
        %3351 = vrot.lane.b32.xlu0 %v2727, 127
        %v3352 = vpop.permute.xlu0 %3351
        %3353 = vrot.lane.b32.xlu0 %v2728, 127
        %v3354 = vpop.permute.xlu0 %3353
        %3357 = vst.msk [vmem:[#allocation3 + $0x650] sm:$0xff] %vm2731, %v3352
        %3358 = vst.msk [vmem:[#allocation3 + $0x658] sm:$0x3] %vm3033, %v3354
        %3359 = vrot.lane.b32.xlu0 %v2727, 126
        %v3360 = vpop.permute.xlu0 %3359
        %3361 = vrot.lane.b32.xlu0 %v2728, 126
        %v3362 = vpop.permute.xlu0 %3361
        %3365 = vst.msk [vmem:[#allocation3 + $0x660] sm:$0xff] %vm2731, %v3360
        %3366 = vst.msk [vmem:[#allocation3 + $0x668] sm:$0x3] %vm3033, %v3362
        %3367 = vrot.lane.b32.xlu0 %v2727, 125
        %v3368 = vpop.permute.xlu0 %3367
        %3369 = vrot.lane.b32.xlu0 %v2728, 125
        %v3370 = vpop.permute.xlu0 %3369
        %3373 = vst.msk [vmem:[#allocation3 + $0x670] sm:$0xff] %vm2731, %v3368
        %3374 = vst.msk [vmem:[#allocation3 + $0x678] sm:$0x3] %vm3033, %v3370
        %3375 = vrot.lane.b32.xlu0 %v2727, 124
        %v3376 = vpop.permute.xlu0 %3375
        %3377 = vrot.lane.b32.xlu0 %v2728, 124
        %v3378 = vpop.permute.xlu0 %3377
        %3381 = vst.msk [vmem:[#allocation3 + $0x680] sm:$0xff] %vm2731, %v3376
        %3382 = vst.msk [vmem:[#allocation3 + $0x688] sm:$0x3] %vm3033, %v3378
        %3383 = vst.msk [vmem:[#allocation3 + $0x68f] sm:$0xfe] %vm3069, %v2727
        %3384 = vst.msk [vmem:[#allocation3 + $0x697] sm:$0x7] %vm3071, %v2728
        %3385 = vst.msk [vmem:[#allocation3 + $0x69f] sm:$0xfe] %vm3069, %v3352
        %3386 = vst.msk [vmem:[#allocation3 + $0x6a7] sm:$0x7] %vm3071, %v3354
        %3387 = vst.msk [vmem:[#allocation3 + $0x6af] sm:$0xfe] %vm3069, %v3360
        %3388 = vst.msk [vmem:[#allocation3 + $0x6b7] sm:$0x7] %vm3071, %v3362
        %3389 = vst.msk [vmem:[#allocation3 + $0x6bf] sm:$0xfe] %vm3069, %v3368
        %3390 = vst.msk [vmem:[#allocation3 + $0x6c7] sm:$0x7] %vm3071, %v3370
        %3391 = vst.msk [vmem:[#allocation3 + $0x6cf] sm:$0xfe] %vm3069, %v3376
        %3392 = vst.msk [vmem:[#allocation3 + $0x6d7] sm:$0x7] %vm3071, %v3378
        %3393 = vst.msk [vmem:[#allocation3 + $0x6de] sm:$0xfc] %vm3081, %v2727
        %3394 = vst.msk [vmem:[#allocation3 + $0x6e6] sm:$0xf] %vm3083, %v2728
        %3395 = vst.msk [vmem:[#allocation3 + $0x6ee] sm:$0xfc] %vm3081, %v3352
        %3396 = vst.msk [vmem:[#allocation3 + $0x6f6] sm:$0xf] %vm3083, %v3354
        %3397 = vst.msk [vmem:[#allocation3 + $0x6fe] sm:$0xfc] %vm3081, %v3360
        %3398 = vst.msk [vmem:[#allocation3 + $0x706] sm:$0xf] %vm3083, %v3362
        %3399 = vst.msk [vmem:[#allocation3 + $0x70e] sm:$0xfc] %vm3081, %v3368
        %3400 = vst.msk [vmem:[#allocation3 + $0x716] sm:$0xf] %vm3083, %v3370
        %3401 = vst.msk [vmem:[#allocation3 + $0x71e] sm:$0xfc] %vm3081, %v3376
        %3402 = vst.msk [vmem:[#allocation3 + $0x726] sm:$0xf] %vm3083, %v3378
        %3403 = vst.msk [vmem:[#allocation3 + $0x72d] sm:$0xf8] %vm3093, %v2727
        %3404 = vst.msk [vmem:[#allocation3 + $0x735] sm:$0x1f] %vm3095, %v2728
        %3405 = vst.msk [vmem:[#allocation3 + $0x73d] sm:$0xf8] %vm3093, %v3352
        %3406 = vst.msk [vmem:[#allocation3 + $0x745] sm:$0x1f] %vm3095, %v3354
        %3407 = vst.msk [vmem:[#allocation3 + $0x74d] sm:$0xf8] %vm3093, %v3360
        %3408 = vst.msk [vmem:[#allocation3 + $0x755] sm:$0x1f] %vm3095, %v3362
        %3409 = vst.msk [vmem:[#allocation3 + $0x75d] sm:$0xf8] %vm3093, %v3368
        %3410 = vst.msk [vmem:[#allocation3 + $0x765] sm:$0x1f] %vm3095, %v3370
        %3411 = vst.msk [vmem:[#allocation3 + $0x76d] sm:$0xf8] %vm3093, %v3376
        %3412 = vst.msk [vmem:[#allocation3 + $0x775] sm:$0x1f] %vm3095, %v3378
        %3413 = vst.msk [vmem:[#allocation3 + $0x77c] sm:$0xf0] %vm3105, %v2727
        %3414 = vst.msk [vmem:[#allocation3 + $0x784] sm:$0x3f] %vm3107, %v2728
        %3415 = vst.msk [vmem:[#allocation3 + $0x78c] sm:$0xf0] %vm3105, %v3352
        %3416 = vst.msk [vmem:[#allocation3 + $0x794] sm:$0x3f] %vm3107, %v3354
        %3417 = vst.msk [vmem:[#allocation3 + $0x79c] sm:$0xf0] %vm3105, %v3360
        %3418 = vst.msk [vmem:[#allocation3 + $0x7a4] sm:$0x3f] %vm3107, %v3362
        %3419 = vst.msk [vmem:[#allocation3 + $0x7ac] sm:$0xf0] %vm3105, %v3368
        %3420 = vst.msk [vmem:[#allocation3 + $0x7b4] sm:$0x3f] %vm3107, %v3370
        %3421 = vst.msk [vmem:[#allocation3 + $0x7bc] sm:$0xf0] %vm3105, %v3376
        %3422 = vst.msk [vmem:[#allocation3 + $0x7c4] sm:$0x3f] %vm3107, %v3378
        %3423 = vst.msk [vmem:[#allocation3 + $0x7ca] sm:$0xc0] %vm3117, %v2728
        %3424 = vst.msk [vmem:[#allocation3 + $0x7d2] sm:$0xff] %vm2731, %v2729
        %3426 = vrot.lane.b32.xlu0 %v2729, 127
        %v3427 = vpop.permute.xlu0 %3426
        %3429 = vst.msk [vmem:[#allocation3 + $0x7da] sm:$0xc0] %vm3117, %v3354
        %3430 = vst.msk [vmem:[#allocation3 + $0x7e2] sm:$0xff] %vm2731, %v3427
        %3431 = vrot.lane.b32.xlu0 %v2729, 126
        %v3432 = vpop.permute.xlu0 %3431
        %3434 = vst.msk [vmem:[#allocation3 + $0x7ea] sm:$0xc0] %vm3117, %v3362
        %3435 = vst.msk [vmem:[#allocation3 + $0x7f2] sm:$0xff] %vm2731, %v3432
        %3436 = vrot.lane.b32.xlu0 %v2729, 125
        %v3437 = vpop.permute.xlu0 %3436
        %3439 = vst.msk [vmem:[#allocation3 + $0x7fa] sm:$0xc0] %vm3117, %v3370
        %3440 = vst.msk [vmem:[#allocation3 + $0x802] sm:$0xff] %vm2731, %v3437
        %3441 = vrot.lane.b32.xlu0 %v2729, 124
        %v3442 = vpop.permute.xlu0 %3441
        %3444 = vst.msk [vmem:[#allocation3 + $0x80a] sm:$0xc0] %vm3117, %v3378
        %3445 = vst.msk [vmem:[#allocation3 + $0x812] sm:$0xff] %vm2731, %v3442
        %3446 = vst.msk [vmem:[#allocation3 + $0x819] sm:$0x80] %vm3141, %v2728
        %3447 = vst.msk [vmem:[#allocation3 + $0x821] sm:$0xff] %vm2731, %v2729
        %3448 = vst.msk [vmem:[#allocation3 + $0x829] sm:$0x1] %vm3144, %v2730
        %3450 = vrot.lane.b32.xlu0 %v2730, 127
        %v3451 = vpop.permute.xlu0 %3450
        %3453 = vst.msk [vmem:[#allocation3 + $0x829] sm:$0x80] %vm3141, %v3354
        %3454 = vst.msk [vmem:[#allocation3 + $0x831] sm:$0xff] %vm2731, %v3427
        %3455 = vst.msk [vmem:[#allocation3 + $0x839] sm:$0x1] %vm3144, %v3451
        %3456 = vrot.lane.b32.xlu0 %v2730, 126
        %v3457 = vpop.permute.xlu0 %3456
        %3459 = vst.msk [vmem:[#allocation3 + $0x839] sm:$0x80] %vm3141, %v3362
        %3460 = vst.msk [vmem:[#allocation3 + $0x841] sm:$0xff] %vm2731, %v3432
        %3461 = vst.msk [vmem:[#allocation3 + $0x849] sm:$0x1] %vm3144, %v3457
        %3462 = vrot.lane.b32.xlu0 %v2730, 125
        %v3463 = vpop.permute.xlu0 %3462
        %3465 = vst.msk [vmem:[#allocation3 + $0x849] sm:$0x80] %vm3141, %v3370
        %3466 = vst.msk [vmem:[#allocation3 + $0x851] sm:$0xff] %vm2731, %v3437
        %3467 = vst.msk [vmem:[#allocation3 + $0x859] sm:$0x1] %vm3144, %v3463
        %3468 = vrot.lane.b32.xlu0 %v2730, 124
        %v3469 = vpop.permute.xlu0 %3468
        %3471 = vst.msk [vmem:[#allocation3 + $0x859] sm:$0x80] %vm3141, %v3378
        %3472 = vst.msk [vmem:[#allocation3 + $0x861] sm:$0xff] %vm2731, %v3442
        %3473 = vst.msk [vmem:[#allocation3 + $0x869] sm:$0x1] %vm3144, %v3469
        %3474 = vst.msk [vmem:[#allocation3 + $0x870] sm:$0xff] %vm2731, %v2729
        %3475 = vst.msk [vmem:[#allocation3 + $0x878] sm:$0x3] %vm3033, %v2730
        %3476 = vst.msk [vmem:[#allocation3 + $0x880] sm:$0xff] %vm2731, %v3427
        %3477 = vst.msk [vmem:[#allocation3 + $0x888] sm:$0x3] %vm3033, %v3451
        %3478 = vst.msk [vmem:[#allocation3 + $0x890] sm:$0xff] %vm2731, %v3432
        %3479 = vst.msk [vmem:[#allocation3 + $0x898] sm:$0x3] %vm3033, %v3457
        %3480 = vst.msk [vmem:[#allocation3 + $0x8a0] sm:$0xff] %vm2731, %v3437
        %3481 = vst.msk [vmem:[#allocation3 + $0x8a8] sm:$0x3] %vm3033, %v3463
        %3482 = vst.msk [vmem:[#allocation3 + $0x8b0] sm:$0xff] %vm2731, %v3442
        %3483 = vst.msk [vmem:[#allocation3 + $0x8b8] sm:$0x3] %vm3033, %v3469
        %3484 = vst.msk [vmem:[#allocation3 + $0x8bf] sm:$0xfe] %vm3069, %v2729
        %3485 = vst.msk [vmem:[#allocation3 + $0x8c7] sm:$0x7] %vm3071, %v2730
        %3486 = vst.msk [vmem:[#allocation3 + $0x8cf] sm:$0xfe] %vm3069, %v3427
        %3487 = vst.msk [vmem:[#allocation3 + $0x8d7] sm:$0x7] %vm3071, %v3451
        %3488 = vst.msk [vmem:[#allocation3 + $0x8df] sm:$0xfe] %vm3069, %v3432
        %3489 = vst.msk [vmem:[#allocation3 + $0x8e7] sm:$0x7] %vm3071, %v3457
        %3490 = vst.msk [vmem:[#allocation3 + $0x8ef] sm:$0xfe] %vm3069, %v3437
        %3491 = vst.msk [vmem:[#allocation3 + $0x8f7] sm:$0x7] %vm3071, %v3463
        %3492 = vst.msk [vmem:[#allocation3 + $0x8ff] sm:$0xfe] %vm3069, %v3442
        %3493 = vst.msk [vmem:[#allocation3 + $0x907] sm:$0x7] %vm3071, %v3469
        %3494 = vst.msk [vmem:[#allocation3 + $0x90e] sm:$0xfc] %vm3081, %v2729
        %3495 = vst.msk [vmem:[#allocation3 + $0x916] sm:$0xf] %vm3083, %v2730
        %3496 = vst.msk [vmem:[#allocation3 + $0x91e] sm:$0xfc] %vm3081, %v3427
        %3497 = vst.msk [vmem:[#allocation3 + $0x926] sm:$0xf] %vm3083, %v3451
        %3498 = vst.msk [vmem:[#allocation3 + $0x92e] sm:$0xfc] %vm3081, %v3432
        %3499 = vst.msk [vmem:[#allocation3 + $0x936] sm:$0xf] %vm3083, %v3457
        %3500 = vst.msk [vmem:[#allocation3 + $0x93e] sm:$0xfc] %vm3081, %v3437
        %3501 = vst.msk [vmem:[#allocation3 + $0x946] sm:$0xf] %vm3083, %v3463
        %3502 = vst.msk [vmem:[#allocation3 + $0x94e] sm:$0xfc] %vm3081, %v3442
        %3503 = vst.msk [vmem:[#allocation3 + $0x956] sm:$0xf] %vm3083, %v3469
        %v3504 = vld [vmem:[#allocation6] sm:$0xff]
        %v3505 = vld [vmem:[#allocation6 + $0x8] sm:$0xff]
        %v3506 = vld [vmem:[#allocation6 + $0x10] sm:$0xff]
        %v3507 = vld [vmem:[#allocation6 + $0x18] sm:$0xff]
        %v3508 = vld [vmem:[#allocation6 + $0x20] sm:$0xff]
        %v3509 = vld [vmem:[#allocation6 + $0x28] sm:$0xff]
        %v3510 = vld [vmem:[#allocation6 + $0x30] sm:$0xff]
        %v3511 = vld [vmem:[#allocation6 + $0x38] sm:$0xff]
        %v3512 = vld [vmem:[#allocation6 + $0x40] sm:$0xff]
        %v3513 = vld [vmem:[#allocation6 + $0x48] sm:$0xff]
        %v3514 = vld [vmem:[#allocation6 + $0x50] sm:$0xff]
        %v3515 = vld [vmem:[#allocation6 + $0x58] sm:$0xff]
        %v3516 = vld [vmem:[#allocation6 + $0x60] sm:$0xff]
        %v3517 = vld [vmem:[#allocation6 + $0x68] sm:$0xff]
        %v3518 = vld [vmem:[#allocation6 + $0x70] sm:$0xff]
        %v3519 = vld [vmem:[#allocation6 + $0x78] sm:$0xff]
        %v3520 = vld [vmem:[#allocation6 + $0x80] sm:$0xff]
        %v3521 = vld [vmem:[#allocation6 + $0x88] sm:$0xff]
        %v3522 = vld [vmem:[#allocation6 + $0x90] sm:$0xff]
        %v3523 = vld [vmem:[#allocation6 + $0x98] sm:$0xff]
        %v3524 = vld [vmem:[#allocation6 + $0xa0] sm:$0xff]
        %v3525 = vld [vmem:[#allocation6 + $0xa8] sm:$0xff]
        %v3526 = vld [vmem:[#allocation6 + $0xb0] sm:$0xff]
        %v3527 = vld [vmem:[#allocation6 + $0xb8] sm:$0xff]
        %v3528 = vld [vmem:[#allocation6 + $0xc0] sm:$0xff]
        %v3529 = vld [vmem:[#allocation6 + $0xc8] sm:$0xff]
        %v3530 = vld [vmem:[#allocation6 + $0xd0] sm:$0xff]
        %v3531 = vld [vmem:[#allocation6 + $0xd8] sm:$0xff]
        %v3532 = vld [vmem:[#allocation6 + $0xe0] sm:$0xff]
        %v3533 = vld [vmem:[#allocation6 + $0xe8] sm:$0xff]
        %v3534 = vld [vmem:[#allocation6 + $0xf0] sm:$0xff]
        %v3535 = vld [vmem:[#allocation6 + $0xf8] sm:$0xff]
        %v3536 = vld [vmem:[#allocation6 + $0x100] sm:$0xff]
        %v3537 = vld [vmem:[#allocation6 + $0x108] sm:$0xff]
        %v3538 = vld [vmem:[#allocation6 + $0x110] sm:$0xff]
        %v3539 = vld [vmem:[#allocation6 + $0x118] sm:$0xff]
        %v3540 = vld [vmem:[#allocation6 + $0x120] sm:$0xff]
        %v3541 = vld [vmem:[#allocation6 + $0x128] sm:$0xff]
        %v3542 = vld [vmem:[#allocation6 + $0x130] sm:$0xff]
        %v3543 = vld [vmem:[#allocation6 + $0x138] sm:$0xff]
        %v3544 = vld [vmem:[#allocation6 + $0x140] sm:$0xff]
        %v3545 = vld [vmem:[#allocation6 + $0x148] sm:$0xff]
        %v3546 = vld [vmem:[#allocation6 + $0x150] sm:$0xff]
        %v3547 = vld [vmem:[#allocation6 + $0x158] sm:$0xff]
        %v3548 = vld [vmem:[#allocation6 + $0x160] sm:$0xff]
        %v3549 = vld [vmem:[#allocation6 + $0x168] sm:$0xff]
        %v3550 = vld [vmem:[#allocation6 + $0x170] sm:$0xff]
        %v3551 = vld [vmem:[#allocation6 + $0x178] sm:$0xff]
        %v3552 = vld [vmem:[#allocation6 + $0x180] sm:$0xff]
        %v3553 = vld [vmem:[#allocation6 + $0x188] sm:$0xff]
        %v3554 = vld [vmem:[#allocation6 + $0x190] sm:$0xff]
        %v3555 = vld [vmem:[#allocation6 + $0x198] sm:$0xff]
        %v3556 = vld [vmem:[#allocation6 + $0x1a0] sm:$0xff]
        %v3557 = vld [vmem:[#allocation6 + $0x1a8] sm:$0xff]
        %v3558 = vld [vmem:[#allocation6 + $0x1b0] sm:$0xff]
        %v3559 = vld [vmem:[#allocation6 + $0x1b8] sm:$0xff]
        %v3560 = vld [vmem:[#allocation6 + $0x1c0] sm:$0xff]
        %v3561 = vld [vmem:[#allocation6 + $0x1c8] sm:$0xff]
        %v3562 = vld [vmem:[#allocation6 + $0x1d0] sm:$0xff]
        %v3563 = vld [vmem:[#allocation6 + $0x1d8] sm:$0xff]
        %v3564 = vld [vmem:[#allocation6 + $0x1e0] sm:$0xff]
        %v3565 = vld [vmem:[#allocation6 + $0x1e8] sm:$0xff]
        %v3566 = vld [vmem:[#allocation6 + $0x1f0] sm:$0xff]
        %v3567 = vld [vmem:[#allocation6 + $0x1f8] sm:$0xff]
        %v3568 = vld [vmem:[#allocation6 + $0x200] sm:$0xff]
        %v3569 = vld [vmem:[#allocation6 + $0x208] sm:$0xff]
        %v3570 = vld [vmem:[#allocation6 + $0x210] sm:$0xff]
        %v3571 = vld [vmem:[#allocation6 + $0x218] sm:$0xff]
        %v3572 = vld [vmem:[#allocation6 + $0x220] sm:$0xff]
        %v3573 = vld [vmem:[#allocation6 + $0x228] sm:$0xff]
        %v3574 = vld [vmem:[#allocation6 + $0x230] sm:$0xff]
        %v3575 = vld [vmem:[#allocation6 + $0x238] sm:$0xff]
        %v3576 = vld [vmem:[#allocation6 + $0x240] sm:$0xff]
        %v3577 = vld [vmem:[#allocation6 + $0x248] sm:$0xff]
        %v3578 = vld [vmem:[#allocation6 + $0x250] sm:$0xff]
        %v3579 = vld [vmem:[#allocation6 + $0x258] sm:$0xff]
        %v3580 = vld [vmem:[#allocation6 + $0x260] sm:$0xff]
        %v3581 = vld [vmem:[#allocation6 + $0x268] sm:$0xff]
        %v3582 = vld [vmem:[#allocation6 + $0x270] sm:$0xff]
        %v3583 = vld [vmem:[#allocation6 + $0x278] sm:$0xff]
        %v3584 = vld [vmem:[#allocation6 + $0x280] sm:$0xff]
        %v3585 = vld [vmem:[#allocation6 + $0x288] sm:$0xff]
        %v3586 = vld [vmem:[#allocation6 + $0x290] sm:$0xff]
        %v3587 = vld [vmem:[#allocation6 + $0x298] sm:$0xff]
        %v3588 = vld [vmem:[#allocation6 + $0x2a0] sm:$0xff]
        %v3589 = vld [vmem:[#allocation6 + $0x2a8] sm:$0xff]
        %v3590 = vld [vmem:[#allocation6 + $0x2b0] sm:$0xff]
        %v3591 = vld [vmem:[#allocation6 + $0x2b8] sm:$0xff]
        %v3592 = vld [vmem:[#allocation6 + $0x2c0] sm:$0xff]
        %v3593 = vld [vmem:[#allocation6 + $0x2c8] sm:$0xff]
        %v3594 = vld [vmem:[#allocation6 + $0x2d0] sm:$0xff]
        %v3595 = vld [vmem:[#allocation6 + $0x2d8] sm:$0xff]
        %v3596 = vld [vmem:[#allocation6 + $0x2e0] sm:$0xff]
        %v3597 = vld [vmem:[#allocation6 + $0x2e8] sm:$0xff]
        %v3598 = vld [vmem:[#allocation6 + $0x2f0] sm:$0xff]
        %v3599 = vld [vmem:[#allocation6 + $0x2f8] sm:$0xff]
        %v3600 = vld [vmem:[#allocation6 + $0x300] sm:$0xff]
        %v3601 = vld [vmem:[#allocation6 + $0x308] sm:$0xff]
        %v3602 = vld [vmem:[#allocation6 + $0x310] sm:$0xff]
        %v3603 = vld [vmem:[#allocation6 + $0x318] sm:$0xff]
        %v3604 = vld [vmem:[#allocation6 + $0x320] sm:$0xff]
        %v3605 = vld [vmem:[#allocation6 + $0x328] sm:$0xff]
        %v3606 = vld [vmem:[#allocation6 + $0x330] sm:$0xff]
        %v3607 = vld [vmem:[#allocation6 + $0x338] sm:$0xff]
        %v3608 = vld [vmem:[#allocation6 + $0x340] sm:$0xff]
        %v3609 = vld [vmem:[#allocation6 + $0x348] sm:$0xff]
        %v3610 = vld [vmem:[#allocation6 + $0x350] sm:$0xff]
        %v3611 = vld [vmem:[#allocation6 + $0x358] sm:$0xff]
        %v3612 = vld [vmem:[#allocation6 + $0x360] sm:$0xff]
        %v3613 = vld [vmem:[#allocation6 + $0x368] sm:$0xff]
        %v3614 = vld [vmem:[#allocation6 + $0x370] sm:$0xff]
        %v3615 = vld [vmem:[#allocation6 + $0x378] sm:$0xff]
        %v3616 = vld [vmem:[#allocation6 + $0x380] sm:$0xff]
        %v3617 = vld [vmem:[#allocation6 + $0x388] sm:$0xff]
        %v3618 = vld [vmem:[#allocation6 + $0x390] sm:$0xff]
        %v3619 = vld [vmem:[#allocation6 + $0x398] sm:$0xff]
        %v3620 = vld [vmem:[#allocation6 + $0x3a0] sm:$0xff]
        %v3621 = vld [vmem:[#allocation6 + $0x3a8] sm:$0xff]
        %v3622 = vld [vmem:[#allocation6 + $0x3b0] sm:$0xff]
        %v3623 = vld [vmem:[#allocation6 + $0x3b8] sm:$0xff]
        %v3624 = vld [vmem:[#allocation6 + $0x3c0] sm:$0xff]
        %v3625 = vld [vmem:[#allocation6 + $0x3c8] sm:$0xff]
        %v3626 = vld [vmem:[#allocation6 + $0x3d0] sm:$0xff]
        %v3627 = vld [vmem:[#allocation6 + $0x3d8] sm:$0xff]
        %v3628 = vld [vmem:[#allocation6 + $0x3e0] sm:$0xff]
        %v3629 = vld [vmem:[#allocation6 + $0x3e8] sm:$0xff]
        %v3630 = vld [vmem:[#allocation6 + $0x3f0] sm:$0xff]
        %v3631 = vld [vmem:[#allocation6 + $0x3f8] sm:$0xff]
        %v3632 = vld [vmem:[#allocation6 + $0x400] sm:$0xff]
        %v3633 = vld [vmem:[#allocation6 + $0x408] sm:$0xff]
        %v3634 = vld [vmem:[#allocation6 + $0x410] sm:$0xff]
        %v3635 = vld [vmem:[#allocation6 + $0x418] sm:$0xff]
        %v3636 = vld [vmem:[#allocation6 + $0x420] sm:$0xff]
        %v3637 = vld [vmem:[#allocation6 + $0x428] sm:$0xff]
        %v3638 = vld [vmem:[#allocation6 + $0x430] sm:$0xff]
        %v3639 = vld [vmem:[#allocation6 + $0x438] sm:$0xff]
        %v3640 = vld [vmem:[#allocation6 + $0x440] sm:$0xff]
        %v3641 = vld [vmem:[#allocation6 + $0x448] sm:$0xff]
        %v3642 = vld [vmem:[#allocation6 + $0x450] sm:$0xff]
        %v3643 = vld [vmem:[#allocation6 + $0x458] sm:$0xff]
        %v3644 = vld [vmem:[#allocation6 + $0x460] sm:$0xff]
        %v3645 = vld [vmem:[#allocation6 + $0x468] sm:$0xff]
        %v3646 = vld [vmem:[#allocation6 + $0x470] sm:$0xff]
        %v3647 = vld [vmem:[#allocation6 + $0x478] sm:$0xff]
        %v3648 = vld [vmem:[#allocation6 + $0x480] sm:$0xff]
        %v3649 = vld [vmem:[#allocation6 + $0x488] sm:$0xff]
        %v3650 = vld [vmem:[#allocation6 + $0x490] sm:$0xff]
        %v3651 = vld [vmem:[#allocation6 + $0x498] sm:$0xff]
        %v3652 = vld [vmem:[#allocation6 + $0x4a0] sm:$0xff]
        %v3653 = vld [vmem:[#allocation6 + $0x4a8] sm:$0xff]
        %v3654 = vld [vmem:[#allocation6 + $0x4b0] sm:$0xff]
        %v3655 = vld [vmem:[#allocation6 + $0x4b8] sm:$0xff]
        %v3656 = vld [vmem:[#allocation6 + $0x4c0] sm:$0xff]
        %v3657 = vld [vmem:[#allocation6 + $0x4c8] sm:$0xff]
        %v3658 = vld [vmem:[#allocation6 + $0x4d0] sm:$0xff]
        %v3659 = vld [vmem:[#allocation6 + $0x4d8] sm:$0xff]
        %v3660 = vld [vmem:[#allocation6 + $0x4e0] sm:$0xff]
        %v3661 = vld [vmem:[#allocation6 + $0x4e8] sm:$0xff]
        %v3662 = vld [vmem:[#allocation6 + $0x4f0] sm:$0xff]
        %v3663 = vld [vmem:[#allocation6 + $0x4f8] sm:$0xff]
        %v3664 = vld [vmem:[#allocation6 + $0x500] sm:$0xff]
        %v3665 = vld [vmem:[#allocation6 + $0x508] sm:$0xff]
        %v3666 = vld [vmem:[#allocation6 + $0x510] sm:$0xff]
        %v3667 = vld [vmem:[#allocation6 + $0x518] sm:$0xff]
        %v3668 = vld [vmem:[#allocation6 + $0x520] sm:$0xff]
        %v3669 = vld [vmem:[#allocation6 + $0x528] sm:$0xff]
        %v3670 = vld [vmem:[#allocation6 + $0x530] sm:$0xff]
        %v3671 = vld [vmem:[#allocation6 + $0x538] sm:$0xff]
        %v3672 = vld [vmem:[#allocation6 + $0x540] sm:$0xff]
        %v3673 = vld [vmem:[#allocation6 + $0x548] sm:$0xff]
        %v3674 = vld [vmem:[#allocation6 + $0x550] sm:$0xff]
        %v3675 = vld [vmem:[#allocation6 + $0x558] sm:$0xff]
        %v3676 = vld [vmem:[#allocation6 + $0x560] sm:$0xff]
        %v3677 = vld [vmem:[#allocation6 + $0x568] sm:$0xff]
        %v3678 = vld [vmem:[#allocation6 + $0x570] sm:$0xff]
        %v3679 = vld [vmem:[#allocation6 + $0x578] sm:$0xff]
        %v3680 = vld [vmem:[#allocation6 + $0x580] sm:$0xff]
        %v3681 = vld [vmem:[#allocation6 + $0x588] sm:$0xff]
        %v3682 = vld [vmem:[#allocation6 + $0x590] sm:$0xff]
        %v3683 = vld [vmem:[#allocation6 + $0x598] sm:$0xff]
        %v3684 = vld [vmem:[#allocation6 + $0x5a0] sm:$0xff]
        %v3685 = vld [vmem:[#allocation6 + $0x5a8] sm:$0xff]
        %v3686 = vld [vmem:[#allocation6 + $0x5b0] sm:$0xff]
        %v3687 = vld [vmem:[#allocation6 + $0x5b8] sm:$0xff]
        %v3688 = vld [vmem:[#allocation6 + $0x5c0] sm:$0xff]
        %v3689 = vld [vmem:[#allocation6 + $0x5c8] sm:$0xff]
        %v3690 = vld [vmem:[#allocation6 + $0x5d0] sm:$0xff]
        %v3691 = vld [vmem:[#allocation6 + $0x5d8] sm:$0xff]
        %v3692 = vld [vmem:[#allocation6 + $0x5e0] sm:$0xff]
        %v3693 = vld [vmem:[#allocation6 + $0x5e8] sm:$0xff]
        %v3694 = vld [vmem:[#allocation6 + $0x5f0] sm:$0xff]
        %v3695 = vld [vmem:[#allocation6 + $0x5f8] sm:$0xff]
        %v3696 = vld [vmem:[#allocation6 + $0x600] sm:$0xff]
        %v3697 = vld [vmem:[#allocation6 + $0x608] sm:$0xff]
        %v3698 = vld [vmem:[#allocation6 + $0x610] sm:$0xff]
        %v3699 = vld [vmem:[#allocation6 + $0x618] sm:$0xff]
        %v3700 = vld [vmem:[#allocation6 + $0x620] sm:$0xff]
        %v3701 = vld [vmem:[#allocation6 + $0x628] sm:$0xff]
        %v3702 = vld [vmem:[#allocation6 + $0x630] sm:$0xff]
        %v3703 = vld [vmem:[#allocation6 + $0x638] sm:$0xff]
        %v3704 = vld [vmem:[#allocation6 + $0x640] sm:$0xff]
        %v3705 = vld [vmem:[#allocation6 + $0x648] sm:$0xff]
        %v3706 = vld [vmem:[#allocation6 + $0x650] sm:$0xff]
        %v3707 = vld [vmem:[#allocation6 + $0x658] sm:$0xff]
        %v3708 = vld [vmem:[#allocation6 + $0x660] sm:$0xff]
        %v3709 = vld [vmem:[#allocation6 + $0x668] sm:$0xff]
        %v3710 = vld [vmem:[#allocation6 + $0x670] sm:$0xff]
        %v3711 = vld [vmem:[#allocation6 + $0x678] sm:$0xff]
        %v3712 = vld [vmem:[#allocation6 + $0x680] sm:$0xff]
        %v3713 = vld [vmem:[#allocation6 + $0x688] sm:$0xff]
        %v3714 = vld [vmem:[#allocation6 + $0x690] sm:$0xff]
        %v3715 = vld [vmem:[#allocation6 + $0x698] sm:$0xff]
        %v3716 = vld [vmem:[#allocation6 + $0x6a0] sm:$0xff]
        %v3717 = vld [vmem:[#allocation6 + $0x6a8] sm:$0xff]
        %v3718 = vld [vmem:[#allocation6 + $0x6b0] sm:$0xff]
        %v3719 = vld [vmem:[#allocation6 + $0x6b8] sm:$0xff]
        %v3720 = vld [vmem:[#allocation6 + $0x6c0] sm:$0xff]
        %v3721 = vld [vmem:[#allocation6 + $0x6c8] sm:$0xff]
        %v3722 = vld [vmem:[#allocation6 + $0x6d0] sm:$0xff]
        %v3723 = vld [vmem:[#allocation6 + $0x6d8] sm:$0xff]
        %v3724 = vld [vmem:[#allocation6 + $0x6e0] sm:$0xff]
        %v3725 = vld [vmem:[#allocation6 + $0x6e8] sm:$0xff]
        %v3726 = vld [vmem:[#allocation6 + $0x6f0] sm:$0xff]
        %v3727 = vld [vmem:[#allocation6 + $0x6f8] sm:$0xff]
        %v3728 = vld [vmem:[#allocation6 + $0x700] sm:$0xff]
        %v3729 = vld [vmem:[#allocation6 + $0x708] sm:$0xff]
        %v3730 = vld [vmem:[#allocation6 + $0x710] sm:$0xff]
        %v3731 = vld [vmem:[#allocation6 + $0x718] sm:$0xff]
        %v3732 = vld [vmem:[#allocation6 + $0x720] sm:$0xff]
        %v3733 = vld [vmem:[#allocation6 + $0x728] sm:$0xff]
        %v3734 = vld [vmem:[#allocation6 + $0x730] sm:$0xff]
        %v3735 = vld [vmem:[#allocation6 + $0x738] sm:$0xff]
        %v3736 = vld [vmem:[#allocation6 + $0x740] sm:$0xff]
        %v3737 = vld [vmem:[#allocation6 + $0x748] sm:$0xff]
        %v3738 = vld [vmem:[#allocation6 + $0x750] sm:$0xff]
        %v3739 = vld [vmem:[#allocation6 + $0x758] sm:$0xff]
        %v3740 = vld [vmem:[#allocation6 + $0x760] sm:$0xff]
        %v3741 = vld [vmem:[#allocation6 + $0x768] sm:$0xff]
        %v3742 = vld [vmem:[#allocation6 + $0x770] sm:$0xff]
        %v3743 = vld [vmem:[#allocation6 + $0x778] sm:$0xff]
        %v3744 = vld [vmem:[#allocation6 + $0x780] sm:$0xff]
        %v3745 = vld [vmem:[#allocation6 + $0x788] sm:$0xff]
        %v3746 = vld [vmem:[#allocation6 + $0x790] sm:$0xff]
        %v3747 = vld [vmem:[#allocation6 + $0x798] sm:$0xff]
        %v3748 = vld [vmem:[#allocation6 + $0x7a0] sm:$0xff]
        %v3749 = vld [vmem:[#allocation6 + $0x7a8] sm:$0xff]
        %v3750 = vld [vmem:[#allocation6 + $0x7b0] sm:$0xff]
        %v3751 = vld [vmem:[#allocation6 + $0x7b8] sm:$0xff]
        %v3752 = vld [vmem:[#allocation6 + $0x7c0] sm:$0xff]
        %v3753 = vld [vmem:[#allocation6 + $0x7c8] sm:$0xff]
        %v3754 = vld [vmem:[#allocation6 + $0x7d0] sm:$0xff]
        %v3755 = vld [vmem:[#allocation6 + $0x7d8] sm:$0xff]
        %v3756 = vld [vmem:[#allocation6 + $0x7e0] sm:$0xff]
        %v3757 = vld [vmem:[#allocation6 + $0x7e8] sm:$0xff]
        %v3758 = vld [vmem:[#allocation6 + $0x7f0] sm:$0xff]
        %v3759 = vld [vmem:[#allocation6 + $0x7f8] sm:$0xff]
        %v3760 = vld [vmem:[#allocation6 + $0x800] sm:$0xff]
        %v3761 = vld [vmem:[#allocation6 + $0x808] sm:$0xff]
        %v3762 = vld [vmem:[#allocation6 + $0x810] sm:$0xff]
        %v3763 = vld [vmem:[#allocation6 + $0x818] sm:$0xff]
        %v3764 = vld [vmem:[#allocation6 + $0x820] sm:$0xff]
        %v3765 = vld [vmem:[#allocation6 + $0x828] sm:$0xff]
        %v3766 = vld [vmem:[#allocation6 + $0x830] sm:$0xff]
        %v3767 = vld [vmem:[#allocation6 + $0x838] sm:$0xff]
        %v3768 = vld [vmem:[#allocation6 + $0x840] sm:$0xff]
        %v3769 = vld [vmem:[#allocation6 + $0x848] sm:$0xff]
        %v3770 = vld [vmem:[#allocation6 + $0x850] sm:$0xff]
        %v3771 = vld [vmem:[#allocation6 + $0x858] sm:$0xff]
        %v3772 = vld [vmem:[#allocation6 + $0x860] sm:$0xff]
        %v3773 = vld [vmem:[#allocation6 + $0x868] sm:$0xff]
        %v3774 = vld [vmem:[#allocation6 + $0x870] sm:$0xff]
        %v3775 = vld [vmem:[#allocation6 + $0x878] sm:$0xff]
        %v3776 = vld [vmem:[#allocation6 + $0x880] sm:$0xff]
        %v3777 = vld [vmem:[#allocation6 + $0x888] sm:$0xff]
        %v3778 = vld [vmem:[#allocation6 + $0x890] sm:$0xff]
        %v3779 = vld [vmem:[#allocation6 + $0x898] sm:$0xff]
        %v3780 = vld [vmem:[#allocation6 + $0x8a0] sm:$0xff]
        %v3781 = vld [vmem:[#allocation6 + $0x8a8] sm:$0xff]
        %v3782 = vld [vmem:[#allocation6 + $0x8b0] sm:$0xff]
        %v3783 = vld [vmem:[#allocation6 + $0x8b8] sm:$0xff]
        %v3784 = vld [vmem:[#allocation6 + $0x8c0] sm:$0xff]
        %v3785 = vld [vmem:[#allocation6 + $0x8c8] sm:$0xff]
        %v3786 = vld [vmem:[#allocation6 + $0x8d0] sm:$0xff]
        %v3787 = vld [vmem:[#allocation6 + $0x8d8] sm:$0xff]
        %v3788 = vld [vmem:[#allocation6 + $0x8e0] sm:$0xff]
        %v3789 = vld [vmem:[#allocation6 + $0x8e8] sm:$0xff]
        %v3790 = vld [vmem:[#allocation6 + $0x8f0] sm:$0xff]
        %v3791 = vld [vmem:[#allocation6 + $0x8f8] sm:$0xff]
        %v3792 = vld [vmem:[#allocation6 + $0x900] sm:$0xff]
        %v3793 = vld [vmem:[#allocation6 + $0x908] sm:$0xff]
        %v3794 = vld [vmem:[#allocation6 + $0x910] sm:$0xff]
        %v3795 = vld [vmem:[#allocation6 + $0x918] sm:$0xff]
        %v3796 = vld [vmem:[#allocation6 + $0x920] sm:$0xff]
        %v3797 = vld [vmem:[#allocation6 + $0x928] sm:$0xff]
        %v3798 = vld [vmem:[#allocation6 + $0x930] sm:$0xff]
        %v3799 = vld [vmem:[#allocation6 + $0x938] sm:$0xff]
        %v3800 = vld [vmem:[#allocation6 + $0x940] sm:$0xff]
        %v3801 = vld [vmem:[#allocation6 + $0x948] sm:$0xff]
        %v3802 = vld [vmem:[#allocation6 + $0x950] sm:$0xff]
        %v3803 = vld [vmem:[#allocation6 + $0x958] sm:$0xff]
        %v3804 = vld [vmem:[#allocation6 + $0x960] sm:$0xff]
        %v3805 = vld [vmem:[#allocation6 + $0x968] sm:$0xff]
        %v3806 = vld [vmem:[#allocation6 + $0x970] sm:$0xff]
        %v3807 = vld [vmem:[#allocation6 + $0x978] sm:$0xff]
        %v3808 = vld [vmem:[#allocation6 + $0x980] sm:$0xff]
        %v3809 = vld [vmem:[#allocation6 + $0x988] sm:$0xff]
        %v3810 = vld [vmem:[#allocation6 + $0x990] sm:$0xff]
        %v3811 = vld [vmem:[#allocation6 + $0x998] sm:$0xff]
        %v3812 = vld [vmem:[#allocation6 + $0x9a0] sm:$0xff]
        %v3813 = vld [vmem:[#allocation6 + $0x9a8] sm:$0xff]
        %v3814 = vld [vmem:[#allocation6 + $0x9b0] sm:$0xff]
        %v3815 = vld [vmem:[#allocation6 + $0x9b8] sm:$0xff]
        %v3816 = vld [vmem:[#allocation6 + $0x9c0] sm:$0xff]
        %v3817 = vld [vmem:[#allocation6 + $0x9c8] sm:$0xff]
        %v3818 = vld [vmem:[#allocation6 + $0x9d0] sm:$0xff]
        %v3819 = vld [vmem:[#allocation6 + $0x9d8] sm:$0xff]
        %v3820 = vld [vmem:[#allocation6 + $0x9e0] sm:$0xff]
        %v3821 = vld [vmem:[#allocation6 + $0x9e8] sm:$0xff]
        %v3822 = vld [vmem:[#allocation6 + $0x9f0] sm:$0xff]
        %v3823 = vld [vmem:[#allocation6 + $0x9f8] sm:$0xff]
        %v3824 = vld [vmem:[#allocation6 + $0xa00] sm:$0xff]
        %v3825 = vld [vmem:[#allocation6 + $0xa08] sm:$0xff]
        %v3826 = vld [vmem:[#allocation6 + $0xa10] sm:$0xff]
        %v3827 = vld [vmem:[#allocation6 + $0xa18] sm:$0xff]
        %v3828 = vld [vmem:[#allocation6 + $0xa20] sm:$0xff]
        %v3829 = vld [vmem:[#allocation6 + $0xa28] sm:$0xff]
        %v3830 = vld [vmem:[#allocation6 + $0xa30] sm:$0xff]
        %v3831 = vld [vmem:[#allocation6 + $0xa38] sm:$0xff]
        %v3832 = vld [vmem:[#allocation6 + $0xa40] sm:$0xff]
        %v3833 = vld [vmem:[#allocation6 + $0xa48] sm:$0xff]
        %v3834 = vld [vmem:[#allocation6 + $0xa50] sm:$0xff]
        %v3835 = vld [vmem:[#allocation6 + $0xa58] sm:$0xff]
        %v3836 = vld [vmem:[#allocation6 + $0xa60] sm:$0xff]
        %v3837 = vld [vmem:[#allocation6 + $0xa68] sm:$0xff]
        %v3838 = vld [vmem:[#allocation6 + $0xa70] sm:$0xff]
        %v3839 = vld [vmem:[#allocation6 + $0xa78] sm:$0xff]
        %v3840 = vld [vmem:[#allocation6 + $0xa80] sm:$0xff]
        %v3841 = vld [vmem:[#allocation6 + $0xa88] sm:$0xff]
        %v3842 = vld [vmem:[#allocation6 + $0xa90] sm:$0xff]
        %v3843 = vld [vmem:[#allocation6 + $0xa98] sm:$0xff]
        %v3844 = vld [vmem:[#allocation6 + $0xaa0] sm:$0xff]
        %v3845 = vld [vmem:[#allocation6 + $0xaa8] sm:$0xff]
        %v3846 = vld [vmem:[#allocation6 + $0xab0] sm:$0xff]
        %v3847 = vld [vmem:[#allocation6 + $0xab8] sm:$0xff]
        %v3848 = vld [vmem:[#allocation6 + $0xac0] sm:$0xff]
        %v3849 = vld [vmem:[#allocation6 + $0xac8] sm:$0xff]
        %v3850 = vld [vmem:[#allocation6 + $0xad0] sm:$0xff]
        %v3851 = vld [vmem:[#allocation6 + $0xad8] sm:$0xff]
        %v3852 = vld [vmem:[#allocation6 + $0xae0] sm:$0xff]
        %v3853 = vld [vmem:[#allocation6 + $0xae8] sm:$0xff]
        %v3854 = vld [vmem:[#allocation6 + $0xaf0] sm:$0xff]
        %v3855 = vld [vmem:[#allocation6 + $0xaf8] sm:$0xff]
        %v3856 = vld [vmem:[#allocation6 + $0xb00] sm:$0xff]
        %v3857 = vld [vmem:[#allocation6 + $0xb08] sm:$0xff]
        %v3858 = vld [vmem:[#allocation6 + $0xb10] sm:$0xff]
        %v3859 = vld [vmem:[#allocation6 + $0xb18] sm:$0xff]
        %v3860 = vld [vmem:[#allocation6 + $0xb20] sm:$0xff]
        %v3861 = vld [vmem:[#allocation6 + $0xb28] sm:$0xff]
        %v3862 = vld [vmem:[#allocation6 + $0xb30] sm:$0xff]
        %v3863 = vld [vmem:[#allocation6 + $0xb38] sm:$0xff]
        %v3864 = vld [vmem:[#allocation6 + $0xb40] sm:$0xff]
        %v3865 = vld [vmem:[#allocation6 + $0xb48] sm:$0xff]
        %v3866 = vld [vmem:[#allocation6 + $0xb50] sm:$0xff]
        %v3867 = vld [vmem:[#allocation6 + $0xb58] sm:$0xff]
        %v3868 = vld [vmem:[#allocation6 + $0xb60] sm:$0xff]
        %v3869 = vld [vmem:[#allocation6 + $0xb68] sm:$0xff]
        %v3870 = vld [vmem:[#allocation6 + $0xb70] sm:$0xff]
        %v3871 = vld [vmem:[#allocation6 + $0xb78] sm:$0xff]
        %v3872 = vld [vmem:[#allocation6 + $0xb80] sm:$0xff]
        %v3873 = vld [vmem:[#allocation6 + $0xb88] sm:$0xff]
        %v3874 = vld [vmem:[#allocation6 + $0xb90] sm:$0xff]
        %v3875 = vld [vmem:[#allocation6 + $0xb98] sm:$0xff]
        %v3876 = vld [vmem:[#allocation6 + $0xba0] sm:$0xff]
        %v3877 = vld [vmem:[#allocation6 + $0xba8] sm:$0xff]
        %v3878 = vld [vmem:[#allocation6 + $0xbb0] sm:$0xff]
        %v3879 = vld [vmem:[#allocation6 + $0xbb8] sm:$0xff]
        %v3880 = vld [vmem:[#allocation6 + $0xbc0] sm:$0xff]
        %v3881 = vld [vmem:[#allocation6 + $0xbc8] sm:$0xff]
        %v3882 = vld [vmem:[#allocation6 + $0xbd0] sm:$0xff]
        %v3883 = vld [vmem:[#allocation6 + $0xbd8] sm:$0xff]
        %v3884 = vld [vmem:[#allocation3] sm:$0xff]
        %v3885 = vld [vmem:[#allocation3 + $0x8] sm:$0xff]
        %v3886 = vld [vmem:[#allocation3 + $0x10] sm:$0xff]
        %v3887 = vld [vmem:[#allocation3 + $0x18] sm:$0xff]
        %v3888 = vld [vmem:[#allocation3 + $0x20] sm:$0xff]
        %v3889 = vld [vmem:[#allocation3 + $0x28] sm:$0xff]
        %v3890 = vld [vmem:[#allocation3 + $0x30] sm:$0xff]
        %v3891 = vld [vmem:[#allocation3 + $0x38] sm:$0xff]
        %v3892 = vld [vmem:[#allocation3 + $0x40] sm:$0xff]
        %v3893 = vld [vmem:[#allocation3 + $0x48] sm:$0xff]
        %v3894 = vld [vmem:[#allocation3 + $0x50] sm:$0xff]
        %v3895 = vld [vmem:[#allocation3 + $0x58] sm:$0xff]
        %v3896 = vld [vmem:[#allocation3 + $0x60] sm:$0xff]
        %v3897 = vld [vmem:[#allocation3 + $0x68] sm:$0xff]
        %v3898 = vld [vmem:[#allocation3 + $0x70] sm:$0xff]
        %v3899 = vld [vmem:[#allocation3 + $0x78] sm:$0xff]
        %v3900 = vld [vmem:[#allocation3 + $0x80] sm:$0xff]
        %v3901 = vld [vmem:[#allocation3 + $0x88] sm:$0xff]
        %v3902 = vld [vmem:[#allocation3 + $0x90] sm:$0xff]
        %v3903 = vld [vmem:[#allocation3 + $0x98] sm:$0xff]
        %v3904 = vld [vmem:[#allocation3 + $0xa0] sm:$0xff]
        %v3905 = vld [vmem:[#allocation3 + $0xa8] sm:$0xff]
        %v3906 = vld [vmem:[#allocation3 + $0xb0] sm:$0xff]
        %v3907 = vld [vmem:[#allocation3 + $0xb8] sm:$0xff]
        %v3908 = vld [vmem:[#allocation3 + $0xc0] sm:$0xff]
        %v3909 = vld [vmem:[#allocation3 + $0xc8] sm:$0xff]
        %v3910 = vld [vmem:[#allocation3 + $0xd0] sm:$0xff]
        %v3911 = vld [vmem:[#allocation3 + $0xd8] sm:$0xff]
        %v3912 = vld [vmem:[#allocation3 + $0xe0] sm:$0xff]
        %v3913 = vld [vmem:[#allocation3 + $0xe8] sm:$0xff]
        %v3914 = vld [vmem:[#allocation3 + $0xf0] sm:$0xff]
        %v3915 = vld [vmem:[#allocation3 + $0xf8] sm:$0xff]
        %v3916 = vld [vmem:[#allocation3 + $0x100] sm:$0xff]
        %v3917 = vld [vmem:[#allocation3 + $0x108] sm:$0xff]
        %v3918 = vld [vmem:[#allocation3 + $0x110] sm:$0xff]
        %v3919 = vld [vmem:[#allocation3 + $0x118] sm:$0xff]
        %v3920 = vld [vmem:[#allocation3 + $0x120] sm:$0xff]
        %v3921 = vld [vmem:[#allocation3 + $0x128] sm:$0xff]
        %v3922 = vld [vmem:[#allocation3 + $0x130] sm:$0xff]
        %v3923 = vld [vmem:[#allocation3 + $0x138] sm:$0xff]
        %v3924 = vld [vmem:[#allocation3 + $0x140] sm:$0xff]
        %v3925 = vld [vmem:[#allocation3 + $0x148] sm:$0xff]
        %v3926 = vld [vmem:[#allocation3 + $0x150] sm:$0xff]
        %v3927 = vld [vmem:[#allocation3 + $0x158] sm:$0xff]
        %v3928 = vld [vmem:[#allocation3 + $0x160] sm:$0xff]
        %v3929 = vld [vmem:[#allocation3 + $0x168] sm:$0xff]
        %v3930 = vld [vmem:[#allocation3 + $0x170] sm:$0xff]
        %v3931 = vld [vmem:[#allocation3 + $0x178] sm:$0xff]
        %v3932 = vld [vmem:[#allocation3 + $0x180] sm:$0xff]
        %v3933 = vld [vmem:[#allocation3 + $0x188] sm:$0xff]
        %v3934 = vld [vmem:[#allocation3 + $0x190] sm:$0xff]
        %v3935 = vld [vmem:[#allocation3 + $0x198] sm:$0xff]
        %v3936 = vld [vmem:[#allocation3 + $0x1a0] sm:$0xff]
        %v3937 = vld [vmem:[#allocation3 + $0x1a8] sm:$0xff]
        %v3938 = vld [vmem:[#allocation3 + $0x1b0] sm:$0xff]
        %v3939 = vld [vmem:[#allocation3 + $0x1b8] sm:$0xff]
        %v3940 = vld [vmem:[#allocation3 + $0x1c0] sm:$0xff]
        %v3941 = vld [vmem:[#allocation3 + $0x1c8] sm:$0xff]
        %v3942 = vld [vmem:[#allocation3 + $0x1d0] sm:$0xff]
        %v3943 = vld [vmem:[#allocation3 + $0x1d8] sm:$0xff]
        %v3944 = vld [vmem:[#allocation3 + $0x1e0] sm:$0xff]
        %v3945 = vld [vmem:[#allocation3 + $0x1e8] sm:$0xff]
        %v3946 = vld [vmem:[#allocation3 + $0x1f0] sm:$0xff]
        %v3947 = vld [vmem:[#allocation3 + $0x1f8] sm:$0xff]
        %v3948 = vld [vmem:[#allocation3 + $0x200] sm:$0xff]
        %v3949 = vld [vmem:[#allocation3 + $0x208] sm:$0xff]
        %v3950 = vld [vmem:[#allocation3 + $0x210] sm:$0xff]
        %v3951 = vld [vmem:[#allocation3 + $0x218] sm:$0xff]
        %v3952 = vld [vmem:[#allocation3 + $0x220] sm:$0xff]
        %v3953 = vld [vmem:[#allocation3 + $0x228] sm:$0xff]
        %v3954 = vld [vmem:[#allocation3 + $0x230] sm:$0xff]
        %v3955 = vld [vmem:[#allocation3 + $0x238] sm:$0xff]
        %v3956 = vld [vmem:[#allocation3 + $0x240] sm:$0xff]
        %v3957 = vld [vmem:[#allocation3 + $0x248] sm:$0xff]
        %v3958 = vld [vmem:[#allocation3 + $0x250] sm:$0xff]
        %v3959 = vld [vmem:[#allocation3 + $0x258] sm:$0xff]
        %v3960 = vld [vmem:[#allocation3 + $0x260] sm:$0xff]
        %v3961 = vld [vmem:[#allocation3 + $0x268] sm:$0xff]
        %v3962 = vld [vmem:[#allocation3 + $0x270] sm:$0xff]
        %v3963 = vld [vmem:[#allocation3 + $0x278] sm:$0xff]
        %v3964 = vld [vmem:[#allocation3 + $0x280] sm:$0xff]
        %v3965 = vld [vmem:[#allocation3 + $0x288] sm:$0xff]
        %v3966 = vld [vmem:[#allocation3 + $0x290] sm:$0xff]
        %v3967 = vld [vmem:[#allocation3 + $0x298] sm:$0xff]
        %v3968 = vld [vmem:[#allocation3 + $0x2a0] sm:$0xff]
        %v3969 = vld [vmem:[#allocation3 + $0x2a8] sm:$0xff]
        %v3970 = vld [vmem:[#allocation3 + $0x2b0] sm:$0xff]
        %v3971 = vld [vmem:[#allocation3 + $0x2b8] sm:$0xff]
        %v3972 = vld [vmem:[#allocation3 + $0x2c0] sm:$0xff]
        %v3973 = vld [vmem:[#allocation3 + $0x2c8] sm:$0xff]
        %v3974 = vld [vmem:[#allocation3 + $0x2d0] sm:$0xff]
        %v3975 = vld [vmem:[#allocation3 + $0x2d8] sm:$0xff]
        %v3976 = vld [vmem:[#allocation3 + $0x2e0] sm:$0xff]
        %v3977 = vld [vmem:[#allocation3 + $0x2e8] sm:$0xff]
        %v3978 = vld [vmem:[#allocation3 + $0x2f0] sm:$0xff]
        %v3979 = vld [vmem:[#allocation3 + $0x2f8] sm:$0xff]
        %v3980 = vld [vmem:[#allocation3 + $0x300] sm:$0xff]
        %v3981 = vld [vmem:[#allocation3 + $0x308] sm:$0xff]
        %v3982 = vld [vmem:[#allocation3 + $0x310] sm:$0xff]
        %v3983 = vld [vmem:[#allocation3 + $0x318] sm:$0xff]
        %v3984 = vld [vmem:[#allocation3 + $0x320] sm:$0xff]
        %v3985 = vld [vmem:[#allocation3 + $0x328] sm:$0xff]
        %v3986 = vld [vmem:[#allocation3 + $0x330] sm:$0xff]
        %v3987 = vld [vmem:[#allocation3 + $0x338] sm:$0xff]
        %v3988 = vld [vmem:[#allocation3 + $0x340] sm:$0xff]
        %v3989 = vld [vmem:[#allocation3 + $0x348] sm:$0xff]
        %v3990 = vld [vmem:[#allocation3 + $0x350] sm:$0xff]
        %v3991 = vld [vmem:[#allocation3 + $0x358] sm:$0xff]
        %v3992 = vld [vmem:[#allocation3 + $0x360] sm:$0xff]
        %v3993 = vld [vmem:[#allocation3 + $0x368] sm:$0xff]
        %v3994 = vld [vmem:[#allocation3 + $0x370] sm:$0xff]
        %v3995 = vld [vmem:[#allocation3 + $0x378] sm:$0xff]
        %v3996 = vld [vmem:[#allocation3 + $0x380] sm:$0xff]
        %v3997 = vld [vmem:[#allocation3 + $0x388] sm:$0xff]
        %v3998 = vld [vmem:[#allocation3 + $0x390] sm:$0xff]
        %v3999 = vld [vmem:[#allocation3 + $0x398] sm:$0xff]
        %v4000 = vld [vmem:[#allocation3 + $0x3a0] sm:$0xff]
        %v4001 = vld [vmem:[#allocation3 + $0x3a8] sm:$0xff]
        %v4002 = vld [vmem:[#allocation3 + $0x3b0] sm:$0xff]
        %v4003 = vld [vmem:[#allocation3 + $0x3b8] sm:$0xff]
        %v4004 = vld [vmem:[#allocation3 + $0x3c0] sm:$0xff]
        %v4005 = vld [vmem:[#allocation3 + $0x3c8] sm:$0xff]
        %v4006 = vld [vmem:[#allocation3 + $0x3d0] sm:$0xff]
        %v4007 = vld [vmem:[#allocation3 + $0x3d8] sm:$0xff]
        %v4008 = vld [vmem:[#allocation3 + $0x3e0] sm:$0xff]
        %v4009 = vld [vmem:[#allocation3 + $0x3e8] sm:$0xff]
        %v4010 = vld [vmem:[#allocation3 + $0x3f0] sm:$0xff]
        %v4011 = vld [vmem:[#allocation3 + $0x3f8] sm:$0xff]
        %v4012 = vld [vmem:[#allocation3 + $0x400] sm:$0xff]
        %v4013 = vld [vmem:[#allocation3 + $0x408] sm:$0xff]
        %v4014 = vld [vmem:[#allocation3 + $0x410] sm:$0xff]
        %v4015 = vld [vmem:[#allocation3 + $0x418] sm:$0xff]
        %v4016 = vld [vmem:[#allocation3 + $0x420] sm:$0xff]
        %v4017 = vld [vmem:[#allocation3 + $0x428] sm:$0xff]
        %v4018 = vld [vmem:[#allocation3 + $0x430] sm:$0xff]
        %v4019 = vld [vmem:[#allocation3 + $0x438] sm:$0xff]
        %v4020 = vld [vmem:[#allocation3 + $0x440] sm:$0xff]
        %v4021 = vld [vmem:[#allocation3 + $0x448] sm:$0xff]
        %v4022 = vld [vmem:[#allocation3 + $0x450] sm:$0xff]
        %v4023 = vld [vmem:[#allocation3 + $0x458] sm:$0xff]
        %v4024 = vld [vmem:[#allocation3 + $0x460] sm:$0xff]
        %v4025 = vld [vmem:[#allocation3 + $0x468] sm:$0xff]
        %v4026 = vld [vmem:[#allocation3 + $0x470] sm:$0xff]
        %v4027 = vld [vmem:[#allocation3 + $0x478] sm:$0xff]
        %v4028 = vld [vmem:[#allocation3 + $0x480] sm:$0xff]
        %v4029 = vld [vmem:[#allocation3 + $0x488] sm:$0xff]
        %v4030 = vld [vmem:[#allocation3 + $0x490] sm:$0xff]
        %v4031 = vld [vmem:[#allocation3 + $0x498] sm:$0xff]
        %v4032 = vld [vmem:[#allocation3 + $0x4a0] sm:$0xff]
        %v4033 = vld [vmem:[#allocation3 + $0x4a8] sm:$0xff]
        %v4034 = vld [vmem:[#allocation3 + $0x4b0] sm:$0xff]
        %v4035 = vld [vmem:[#allocation3 + $0x4b8] sm:$0xff]
        %v4036 = vld [vmem:[#allocation3 + $0x4c0] sm:$0xff]
        %v4037 = vld [vmem:[#allocation3 + $0x4c8] sm:$0xff]
        %v4038 = vld [vmem:[#allocation3 + $0x4d0] sm:$0xff]
        %v4039 = vld [vmem:[#allocation3 + $0x4d8] sm:$0xff]
        %v4040 = vld [vmem:[#allocation3 + $0x4e0] sm:$0xff]
        %v4041 = vld [vmem:[#allocation3 + $0x4e8] sm:$0xff]
        %v4042 = vld [vmem:[#allocation3 + $0x4f0] sm:$0xff]
        %v4043 = vld [vmem:[#allocation3 + $0x4f8] sm:$0xff]
        %v4044 = vld [vmem:[#allocation3 + $0x500] sm:$0xff]
        %v4045 = vld [vmem:[#allocation3 + $0x508] sm:$0xff]
        %v4046 = vld [vmem:[#allocation3 + $0x510] sm:$0xff]
        %v4047 = vld [vmem:[#allocation3 + $0x518] sm:$0xff]
        %v4048 = vld [vmem:[#allocation3 + $0x520] sm:$0xff]
        %v4049 = vld [vmem:[#allocation3 + $0x528] sm:$0xff]
        %v4050 = vld [vmem:[#allocation3 + $0x530] sm:$0xff]
        %v4051 = vld [vmem:[#allocation3 + $0x538] sm:$0xff]
        %v4052 = vld [vmem:[#allocation3 + $0x540] sm:$0xff]
        %v4053 = vld [vmem:[#allocation3 + $0x548] sm:$0xff]
        %v4054 = vld [vmem:[#allocation3 + $0x550] sm:$0xff]
        %v4055 = vld [vmem:[#allocation3 + $0x558] sm:$0xff]
        %v4056 = vld [vmem:[#allocation3 + $0x560] sm:$0xff]
        %v4057 = vld [vmem:[#allocation3 + $0x568] sm:$0xff]
        %v4058 = vld [vmem:[#allocation3 + $0x570] sm:$0xff]
        %v4059 = vld [vmem:[#allocation3 + $0x578] sm:$0xff]
        %v4060 = vld [vmem:[#allocation3 + $0x580] sm:$0xff]
        %v4061 = vld [vmem:[#allocation3 + $0x588] sm:$0xff]
        %v4062 = vld [vmem:[#allocation3 + $0x590] sm:$0xff]
        %v4063 = vld [vmem:[#allocation3 + $0x598] sm:$0xff]
        %v4064 = vld [vmem:[#allocation3 + $0x5a0] sm:$0xff]
        %v4065 = vld [vmem:[#allocation3 + $0x5a8] sm:$0xff]
        %v4066 = vld [vmem:[#allocation3 + $0x5b0] sm:$0xff]
        %v4067 = vld [vmem:[#allocation3 + $0x5b8] sm:$0xff]
        %v4068 = vld [vmem:[#allocation3 + $0x5c0] sm:$0xff]
        %v4069 = vld [vmem:[#allocation3 + $0x5c8] sm:$0xff]
        %v4070 = vld [vmem:[#allocation3 + $0x5d0] sm:$0xff]
        %v4071 = vld [vmem:[#allocation3 + $0x5d8] sm:$0xff]
        %v4072 = vld [vmem:[#allocation3 + $0x5e0] sm:$0xff]
        %v4073 = vld [vmem:[#allocation3 + $0x5e8] sm:$0xff]
        %v4074 = vld [vmem:[#allocation3 + $0x5f0] sm:$0xff]
        %v4075 = vld [vmem:[#allocation3 + $0x5f8] sm:$0xff]
        %v4076 = vld [vmem:[#allocation3 + $0x600] sm:$0xff]
        %v4077 = vld [vmem:[#allocation3 + $0x608] sm:$0xff]
        %v4078 = vld [vmem:[#allocation3 + $0x610] sm:$0xff]
        %v4079 = vld [vmem:[#allocation3 + $0x618] sm:$0xff]
        %v4080 = vld [vmem:[#allocation3 + $0x620] sm:$0xff]
        %v4081 = vld [vmem:[#allocation3 + $0x628] sm:$0xff]
        %v4082 = vld [vmem:[#allocation3 + $0x630] sm:$0xff]
        %v4083 = vld [vmem:[#allocation3 + $0x638] sm:$0xff]
        %v4084 = vld [vmem:[#allocation3 + $0x640] sm:$0xff]
        %v4085 = vld [vmem:[#allocation3 + $0x648] sm:$0xff]
        %v4086 = vld [vmem:[#allocation3 + $0x650] sm:$0xff]
        %v4087 = vld [vmem:[#allocation3 + $0x658] sm:$0xff]
        %v4088 = vld [vmem:[#allocation3 + $0x660] sm:$0xff]
        %v4089 = vld [vmem:[#allocation3 + $0x668] sm:$0xff]
        %v4090 = vld [vmem:[#allocation3 + $0x670] sm:$0xff]
        %v4091 = vld [vmem:[#allocation3 + $0x678] sm:$0xff]
        %v4092 = vld [vmem:[#allocation3 + $0x680] sm:$0xff]
        %v4093 = vld [vmem:[#allocation3 + $0x688] sm:$0xff]
        %v4094 = vld [vmem:[#allocation3 + $0x690] sm:$0xff]
        %v4095 = vld [vmem:[#allocation3 + $0x698] sm:$0xff]
        %v4096 = vld [vmem:[#allocation3 + $0x6a0] sm:$0xff]
        %v4097 = vld [vmem:[#allocation3 + $0x6a8] sm:$0xff]
        %v4098 = vld [vmem:[#allocation3 + $0x6b0] sm:$0xff]
        %v4099 = vld [vmem:[#allocation3 + $0x6b8] sm:$0xff]
        %v4100 = vld [vmem:[#allocation3 + $0x6c0] sm:$0xff]
        %v4101 = vld [vmem:[#allocation3 + $0x6c8] sm:$0xff]
        %v4102 = vld [vmem:[#allocation3 + $0x6d0] sm:$0xff]
        %v4103 = vld [vmem:[#allocation3 + $0x6d8] sm:$0xff]
        %v4104 = vld [vmem:[#allocation3 + $0x6e0] sm:$0xff]
        %v4105 = vld [vmem:[#allocation3 + $0x6e8] sm:$0xff]
        %v4106 = vld [vmem:[#allocation3 + $0x6f0] sm:$0xff]
        %v4107 = vld [vmem:[#allocation3 + $0x6f8] sm:$0xff]
        %v4108 = vld [vmem:[#allocation3 + $0x700] sm:$0xff]
        %v4109 = vld [vmem:[#allocation3 + $0x708] sm:$0xff]
        %v4110 = vld [vmem:[#allocation3 + $0x710] sm:$0xff]
        %v4111 = vld [vmem:[#allocation3 + $0x718] sm:$0xff]
        %v4112 = vld [vmem:[#allocation3 + $0x720] sm:$0xff]
        %v4113 = vld [vmem:[#allocation3 + $0x728] sm:$0xff]
        %v4114 = vld [vmem:[#allocation3 + $0x730] sm:$0xff]
        %v4115 = vld [vmem:[#allocation3 + $0x738] sm:$0xff]
        %v4116 = vld [vmem:[#allocation3 + $0x740] sm:$0xff]
        %v4117 = vld [vmem:[#allocation3 + $0x748] sm:$0xff]
        %v4118 = vld [vmem:[#allocation3 + $0x750] sm:$0xff]
        %v4119 = vld [vmem:[#allocation3 + $0x758] sm:$0xff]
        %v4120 = vld [vmem:[#allocation3 + $0x760] sm:$0xff]
        %v4121 = vld [vmem:[#allocation3 + $0x768] sm:$0xff]
        %v4122 = vld [vmem:[#allocation3 + $0x770] sm:$0xff]
        %v4123 = vld [vmem:[#allocation3 + $0x778] sm:$0xff]
        %v4124 = vld [vmem:[#allocation3 + $0x780] sm:$0xff]
        %v4125 = vld [vmem:[#allocation3 + $0x788] sm:$0xff]
        %v4126 = vld [vmem:[#allocation3 + $0x790] sm:$0xff]
        %v4127 = vld [vmem:[#allocation3 + $0x798] sm:$0xff]
        %v4128 = vld [vmem:[#allocation3 + $0x7a0] sm:$0xff]
        %v4129 = vld [vmem:[#allocation3 + $0x7a8] sm:$0xff]
        %v4130 = vld [vmem:[#allocation3 + $0x7b0] sm:$0xff]
        %v4131 = vld [vmem:[#allocation3 + $0x7b8] sm:$0xff]
        %v4132 = vld [vmem:[#allocation3 + $0x7c0] sm:$0xff]
        %v4133 = vld [vmem:[#allocation3 + $0x7c8] sm:$0xff]
        %v4134 = vld [vmem:[#allocation3 + $0x7d0] sm:$0xff]
        %v4135 = vld [vmem:[#allocation3 + $0x7d8] sm:$0xff]
        %v4136 = vld [vmem:[#allocation3 + $0x7e0] sm:$0xff]
        %v4137 = vld [vmem:[#allocation3 + $0x7e8] sm:$0xff]
        %v4138 = vld [vmem:[#allocation3 + $0x7f0] sm:$0xff]
        %v4139 = vld [vmem:[#allocation3 + $0x7f8] sm:$0xff]
        %v4140 = vld [vmem:[#allocation3 + $0x800] sm:$0xff]
        %v4141 = vld [vmem:[#allocation3 + $0x808] sm:$0xff]
        %v4142 = vld [vmem:[#allocation3 + $0x810] sm:$0xff]
        %v4143 = vld [vmem:[#allocation3 + $0x818] sm:$0xff]
        %v4144 = vld [vmem:[#allocation3 + $0x820] sm:$0xff]
        %v4145 = vld [vmem:[#allocation3 + $0x828] sm:$0xff]
        %v4146 = vld [vmem:[#allocation3 + $0x830] sm:$0xff]
        %v4147 = vld [vmem:[#allocation3 + $0x838] sm:$0xff]
        %v4148 = vld [vmem:[#allocation3 + $0x840] sm:$0xff]
        %v4149 = vld [vmem:[#allocation3 + $0x848] sm:$0xff]
        %v4150 = vld [vmem:[#allocation3 + $0x850] sm:$0xff]
        %v4151 = vld [vmem:[#allocation3 + $0x858] sm:$0xff]
        %v4152 = vld [vmem:[#allocation3 + $0x860] sm:$0xff]
        %v4153 = vld [vmem:[#allocation3 + $0x868] sm:$0xff]
        %v4154 = vld [vmem:[#allocation3 + $0x870] sm:$0xff]
        %v4155 = vld [vmem:[#allocation3 + $0x878] sm:$0xff]
        %v4156 = vld [vmem:[#allocation3 + $0x880] sm:$0xff]
        %v4157 = vld [vmem:[#allocation3 + $0x888] sm:$0xff]
        %v4158 = vld [vmem:[#allocation3 + $0x890] sm:$0xff]
        %v4159 = vld [vmem:[#allocation3 + $0x898] sm:$0xff]
        %v4160 = vld [vmem:[#allocation3 + $0x8a0] sm:$0xff]
        %v4161 = vld [vmem:[#allocation3 + $0x8a8] sm:$0xff]
        %v4162 = vld [vmem:[#allocation3 + $0x8b0] sm:$0xff]
        %v4163 = vld [vmem:[#allocation3 + $0x8b8] sm:$0xff]
        %v4164 = vld [vmem:[#allocation3 + $0x8c0] sm:$0xff]
        %v4165 = vld [vmem:[#allocation3 + $0x8c8] sm:$0xff]
        %v4166 = vld [vmem:[#allocation3 + $0x8d0] sm:$0xff]
        %v4167 = vld [vmem:[#allocation3 + $0x8d8] sm:$0xff]
        %v4168 = vld [vmem:[#allocation3 + $0x8e0] sm:$0xff]
        %v4169 = vld [vmem:[#allocation3 + $0x8e8] sm:$0xff]
        %v4170 = vld [vmem:[#allocation3 + $0x8f0] sm:$0xff]
        %v4171 = vld [vmem:[#allocation3 + $0x8f8] sm:$0xff]
        %v4172 = vld [vmem:[#allocation3 + $0x900] sm:$0xff]
        %v4173 = vld [vmem:[#allocation3 + $0x908] sm:$0xff]
        %v4174 = vld [vmem:[#allocation3 + $0x910] sm:$0xff]
        %v4175 = vld [vmem:[#allocation3 + $0x918] sm:$0xff]
        %v4176 = vld [vmem:[#allocation3 + $0x920] sm:$0xff]
        %v4177 = vld [vmem:[#allocation3 + $0x928] sm:$0xff]
        %v4178 = vld [vmem:[#allocation3 + $0x930] sm:$0xff]
        %v4179 = vld [vmem:[#allocation3 + $0x938] sm:$0xff]
        %v4180 = vld [vmem:[#allocation3 + $0x940] sm:$0xff]
        %v4181 = vld [vmem:[#allocation3 + $0x948] sm:$0xff]
        %v4182 = vld [vmem:[#allocation3 + $0x950] sm:$0xff]
        %v4183 = vld [vmem:[#allocation3 + $0x958] sm:$0xff]
        %v4184 = vld [vmem:[%s4] sm:$0xff]
        %v4185 = vld [vmem:[%s4 + $0x8] sm:$0xff]
        %v4186 = vld [vmem:[%s4 + $0x10] sm:$0xff]
        %v4187 = vld [vmem:[%s4 + $0x18] sm:$0xff]
        %v4188 = vld [vmem:[%s4 + $0x20] sm:$0xff]
        %v4189 = vld [vmem:[%s4 + $0x28] sm:$0xff]
        %v4190 = vld [vmem:[%s4 + $0x30] sm:$0xff]
        %v4191 = vld [vmem:[%s4 + $0x38] sm:$0xff]
        %v4192 = vld [vmem:[%s4 + $0x40] sm:$0xff]
        %v4193 = vld [vmem:[%s4 + $0x48] sm:$0xff]
        %v4194 = vld [vmem:[%s4 + $0x50] sm:$0xff]
        %v4195 = vld [vmem:[%s4 + $0x58] sm:$0xff]
        %v4196 = vld [vmem:[%s4 + $0x60] sm:$0xff]
        %v4197 = vld [vmem:[%s4 + $0x68] sm:$0xff]
        %v4198 = vld [vmem:[%s4 + $0x70] sm:$0xff]
        %v4199 = vld [vmem:[%s4 + $0x78] sm:$0xff]
        %v4200 = vld [vmem:[%s4 + $0x80] sm:$0xff]
        %v4201 = vld [vmem:[%s4 + $0x88] sm:$0xff]
        %v4202 = vld [vmem:[%s4 + $0x90] sm:$0xff]
        %v4203 = vld [vmem:[%s4 + $0x98] sm:$0xff]
        %4205 = vset.pattern.permute.xlu0 0
        %4206 = vperm.xlu0 %4205, %v4184
        %v4207 = vpop.permute.xlu0 %4206
        %4210 = vset.pattern.permute.xlu0 0
        %4211 = vperm.xlu0 %4210, %v4185
        %v4212 = vpop.permute.xlu0 %4211
        %4215 = vset.pattern.permute.xlu0 0
        %4216 = vperm.xlu0 %4215, %v4186
        %v4217 = vpop.permute.xlu0 %4216
        %4220 = vset.pattern.permute.xlu0 0
        %4221 = vperm.xlu0 %4220, %v4187
        %v4222 = vpop.permute.xlu0 %4221
        %4225 = vset.pattern.permute.xlu0 0
        %4226 = vperm.xlu0 %4225, %v4188
        %v4227 = vpop.permute.xlu0 %4226
        %4230 = vset.pattern.permute.xlu0 0
        %4231 = vperm.xlu0 %4230, %v4189
        %v4232 = vpop.permute.xlu0 %4231
        %4235 = vset.pattern.permute.xlu0 0
        %4236 = vperm.xlu0 %4235, %v4190
        %v4237 = vpop.permute.xlu0 %4236
        %4240 = vset.pattern.permute.xlu0 0
        %4241 = vperm.xlu0 %4240, %v4191
        %v4242 = vpop.permute.xlu0 %4241
        %4245 = vset.pattern.permute.xlu0 0
        %4246 = vperm.xlu0 %4245, %v4192
        %v4247 = vpop.permute.xlu0 %4246
        %4250 = vset.pattern.permute.xlu0 0
        %4251 = vperm.xlu0 %4250, %v4193
        %v4252 = vpop.permute.xlu0 %4251
        %4255 = vset.pattern.permute.xlu0 0
        %4256 = vperm.xlu0 %4255, %v4194
        %v4257 = vpop.permute.xlu0 %4256
        %4260 = vset.pattern.permute.xlu0 0
        %4261 = vperm.xlu0 %4260, %v4195
        %v4262 = vpop.permute.xlu0 %4261
        %4265 = vset.pattern.permute.xlu0 0
        %4266 = vperm.xlu0 %4265, %v4196
        %v4267 = vpop.permute.xlu0 %4266
        %4270 = vset.pattern.permute.xlu0 0
        %4271 = vperm.xlu0 %4270, %v4197
        %v4272 = vpop.permute.xlu0 %4271
        %4275 = vset.pattern.permute.xlu0 0
        %4276 = vperm.xlu0 %4275, %v4198
        %v4277 = vpop.permute.xlu0 %4276
        %4280 = vset.pattern.permute.xlu0 0
        %4281 = vperm.xlu0 %4280, %v4199
        %v4282 = vpop.permute.xlu0 %4281
        %4285 = vset.pattern.permute.xlu0 0
        %4286 = vperm.xlu0 %4285, %v4200
        %v4287 = vpop.permute.xlu0 %4286
        %4290 = vset.pattern.permute.xlu0 0
        %4291 = vperm.xlu0 %4290, %v4201
        %v4292 = vpop.permute.xlu0 %4291
        %4295 = vset.pattern.permute.xlu0 0
        %4296 = vperm.xlu0 %4295, %v4202
        %v4297 = vpop.permute.xlu0 %4296
        %4300 = vset.pattern.permute.xlu0 0
        %4301 = vperm.xlu0 %4300, %v4203
        %v4302 = vpop.permute.xlu0 %4301
        %vm4304 = vcmask 785408
        %v4306 = vsel %vm4304, %v3522, 0
        %v4309 = vsel %vm4304, %v3541, 0
        %v4312 = vsel %vm4304, %v3560, 0
        %v4315 = vsel %vm4304, %v3579, 0
        %v4318 = vsel %vm4304, %v3598, 0
        %v4321 = vsel %vm4304, %v3617, 0
        %v4324 = vsel %vm4304, %v3636, 0
        %v4327 = vsel %vm4304, %v3655, 0
        %v4330 = vsel %vm4304, %v3674, 0
        %v4333 = vsel %vm4304, %v3693, 0
        %v4336 = vsel %vm4304, %v3712, 0
        %v4339 = vsel %vm4304, %v3731, 0
        %v4342 = vsel %vm4304, %v3750, 0
        %v4345 = vsel %vm4304, %v3769, 0
        %v4348 = vsel %vm4304, %v3788, 0
        %v4351 = vsel %vm4304, %v3807, 0
        %v4354 = vsel %vm4304, %v3826, 0
        %v4357 = vsel %vm4304, %v3845, 0
        %v4360 = vsel %vm4304, %v3864, 0
        %v4363 = vsel %vm4304, %v3883, 0
        %4365 = vmatprep.subr.mxu0 0.0
        %4366 = vmatpush1.msra.mxu0 %v3899
        %4367 = vmatprep.subr.mxu0 0.0
        %4368 = vmatpush1.msra.mxu0 %v3898
        %4369 = vmatprep.subr.mxu0 0.0
        %4370 = vmatpush1.msra.mxu0 %v3897
        %4371 = vmatprep.subr.mxu0 0.0
        %4372 = vmatpush1.msra.mxu0 %v3896
        %4373 = vmatprep.subr.mxu0 0.0
        %4374 = vmatpush1.msra.mxu0 %v3895
        %4375 = vmatprep.subr.mxu0 0.0
        %4376 = vmatpush1.msra.mxu0 %v3894
        %4377 = vmatprep.subr.mxu0 0.0
        %4378 = vmatpush1.msra.mxu0 %v3893
        %4379 = vmatprep.subr.mxu0 0.0
        %4380 = vmatpush1.msra.mxu0 %v3892
        %4381 = vmatprep.subr.mxu0 0.0
        %4382 = vmatpush1.msra.mxu0 %v3891
        %4383 = vmatprep.subr.mxu0 0.0
        %4384 = vmatpush1.msra.mxu0 %v3890
        %4385 = vmatprep.subr.mxu0 0.0
        %4386 = vmatpush1.msra.mxu0 %v3889
        %4387 = vmatprep.subr.mxu0 0.0
        %4388 = vmatpush1.msra.mxu0 %v3888
        %4389 = vmatprep.subr.mxu0 0.0
        %4390 = vmatpush1.msra.mxu0 %v3887
        %4391 = vmatprep.subr.mxu0 0.0
        %4392 = vmatpush1.msra.mxu0 %v3886
        %4393 = vmatprep.subr.mxu0 0.0
        %4394 = vmatpush1.msra.mxu0 %v3885
        %4395 = vmatprep.subr.mxu0 0.0
        %4396 = vmatpush1.msra.mxu0 %v3884
        %4397 = vmatprep.subr.mxu0 0.0
        %4398 = vmatpush2.msra.mxu0 %v3915
        %4399 = vmatprep.subr.mxu0 0.0
        %4400 = vmatpush2.msra.mxu0 %v3914
        %4401 = vmatprep.subr.mxu0 0.0
        %4402 = vmatpush2.msra.mxu0 %v3913
        %4403 = vmatprep.subr.mxu0 0.0
        %4404 = vmatpush2.msra.mxu0 %v3912
        %4405 = vmatprep.subr.mxu0 0.0
        %4406 = vmatpush2.msra.mxu0 %v3911
        %4407 = vmatprep.subr.mxu0 0.0
        %4408 = vmatpush2.msra.mxu0 %v3910
        %4409 = vmatprep.subr.mxu0 0.0
        %4410 = vmatpush2.msra.mxu0 %v3909
        %4411 = vmatprep.subr.mxu0 0.0
        %4412 = vmatpush2.msra.mxu0 %v3908
        %4413 = vmatprep.subr.mxu0 0.0
        %4414 = vmatpush2.msra.mxu0 %v3907
        %4415 = vmatprep.subr.mxu0 0.0
        %4416 = vmatpush2.msra.mxu0 %v3906
        %4417 = vmatprep.subr.mxu0 0.0
        %4418 = vmatpush2.msra.mxu0 %v3905
        %4419 = vmatprep.subr.mxu0 0.0
        %4420 = vmatpush2.msra.mxu0 %v3904
        %4421 = vmatprep.subr.mxu0 0.0
        %4422 = vmatpush2.msra.mxu0 %v3903
        %4423 = vmatprep.subr.mxu0 0.0
        %4424 = vmatpush2.msra.mxu0 %v3902
        %4425 = vmatprep.subr.mxu0 0.0
        %4426 = vmatpush2.msra.mxu0 %v3901
        %4427 = vmatprep.subr.mxu0 0.0
        %4428 = vmatpush2.msra.mxu0 %v3900
        %4429 = vmatprep.mubr.f32.mxu0 %v3505
        %4430 = vmatmul.mubr.f32.gmra.mxu0 %v3504
        %v4431 = vpop.f32.mrf.mxu0
        %v4432 = vadd.f32 %v4207, %v4431
        %v4433 = vpop.f32.mrf.mxu0
        %4434 = vmatprep.mubr.f32.mxu0 %v3524
        %4435 = vmatmul.mubr.f32.gmra.mxu0 %v3523
        %v4436 = vpop.f32.mrf.mxu0
        %v4437 = vadd.f32 %v4212, %v4436
        %v4438 = vpop.f32.mrf.mxu0
        %4439 = vmatprep.mubr.f32.mxu0 %v3543
        %4440 = vmatmul.mubr.f32.gmra.mxu0 %v3542
        %v4441 = vpop.f32.mrf.mxu0
        %v4442 = vadd.f32 %v4217, %v4441
        %v4443 = vpop.f32.mrf.mxu0
        %4444 = vmatprep.mubr.f32.mxu0 %v3562
        %4445 = vmatmul.mubr.f32.gmra.mxu0 %v3561
        %v4446 = vpop.f32.mrf.mxu0
        %v4447 = vadd.f32 %v4222, %v4446
        %v4448 = vpop.f32.mrf.mxu0
        %4449 = vmatprep.mubr.f32.mxu0 %v3581
        %4450 = vmatmul.mubr.f32.gmra.mxu0 %v3580
        %v4451 = vpop.f32.mrf.mxu0
        %v4452 = vadd.f32 %v4227, %v4451
        %v4453 = vpop.f32.mrf.mxu0
        %4454 = vmatprep.mubr.f32.mxu0 %v3600
        %4455 = vmatmul.mubr.f32.gmra.mxu0 %v3599
        %v4456 = vpop.f32.mrf.mxu0
        %v4457 = vadd.f32 %v4232, %v4456
        %v4458 = vpop.f32.mrf.mxu0
        %4459 = vmatprep.mubr.f32.mxu0 %v3619
        %4460 = vmatmul.mubr.f32.gmra.mxu0 %v3618
        %v4461 = vpop.f32.mrf.mxu0
        %v4462 = vadd.f32 %v4237, %v4461
        %v4463 = vpop.f32.mrf.mxu0
        %4464 = vmatprep.mubr.f32.mxu0 %v3638
        %4465 = vmatmul.mubr.f32.gmra.mxu0 %v3637
        %v4466 = vpop.f32.mrf.mxu0
        %v4467 = vadd.f32 %v4242, %v4466
        %v4468 = vpop.f32.mrf.mxu0
        %4469 = vmatprep.mubr.f32.mxu0 %v3657
        %4470 = vmatmul.mubr.f32.gmra.mxu0 %v3656
        %v4471 = vpop.f32.mrf.mxu0
        %v4472 = vadd.f32 %v4247, %v4471
        %v4473 = vpop.f32.mrf.mxu0
        %4474 = vmatprep.mubr.f32.mxu0 %v3676
        %4475 = vmatmul.mubr.f32.gmra.mxu0 %v3675
        %v4476 = vpop.f32.mrf.mxu0
        %v4477 = vadd.f32 %v4252, %v4476
        %v4478 = vpop.f32.mrf.mxu0
        %4479 = vmatprep.mubr.f32.mxu0 %v3695
        %4480 = vmatmul.mubr.f32.gmra.mxu0 %v3694
        %v4481 = vpop.f32.mrf.mxu0
        %v4482 = vadd.f32 %v4257, %v4481
        %v4483 = vpop.f32.mrf.mxu0
        %4484 = vmatprep.mubr.f32.mxu0 %v3714
        %4485 = vmatmul.mubr.f32.gmra.mxu0 %v3713
        %v4486 = vpop.f32.mrf.mxu0
        %v4487 = vadd.f32 %v4262, %v4486
        %v4488 = vpop.f32.mrf.mxu0
        %4489 = vmatprep.mubr.f32.mxu0 %v3733
        %4490 = vmatmul.mubr.f32.gmra.mxu0 %v3732
        %v4491 = vpop.f32.mrf.mxu0
        %v4492 = vadd.f32 %v4267, %v4491
        %v4493 = vpop.f32.mrf.mxu0
        %4494 = vmatprep.mubr.f32.mxu0 %v3752
        %4495 = vmatmul.mubr.f32.gmra.mxu0 %v3751
        %v4496 = vpop.f32.mrf.mxu0
        %v4497 = vadd.f32 %v4272, %v4496
        %v4498 = vpop.f32.mrf.mxu0
        %4499 = vmatprep.mubr.f32.mxu0 %v3771
        %4500 = vmatmul.mubr.f32.gmra.mxu0 %v3770
        %v4501 = vpop.f32.mrf.mxu0
        %v4502 = vadd.f32 %v4277, %v4501
        %v4503 = vpop.f32.mrf.mxu0
        %4504 = vmatprep.mubr.f32.mxu0 %v3790
        %4505 = vmatmul.mubr.f32.gmra.mxu0 %v3789
        %v4506 = vpop.f32.mrf.mxu0
        %v4507 = vadd.f32 %v4282, %v4506
        %v4508 = vpop.f32.mrf.mxu0
        %4509 = vmatprep.mubr.f32.mxu0 %v3809
        %4510 = vmatmul.mubr.f32.gmra.mxu0 %v3808
        %v4511 = vpop.f32.mrf.mxu0
        %v4512 = vadd.f32 %v4287, %v4511
        %v4513 = vpop.f32.mrf.mxu0
        %4514 = vmatprep.mubr.f32.mxu0 %v3828
        %4515 = vmatmul.mubr.f32.gmra.mxu0 %v3827
        %v4516 = vpop.f32.mrf.mxu0
        %v4517 = vadd.f32 %v4292, %v4516
        %v4518 = vpop.f32.mrf.mxu0
        %4519 = vmatprep.mubr.f32.mxu0 %v3847
        %4520 = vmatmul.mubr.f32.gmra.mxu0 %v3846
        %v4521 = vpop.f32.mrf.mxu0
        %v4522 = vadd.f32 %v4297, %v4521
        %v4523 = vpop.f32.mrf.mxu0
        %4524 = vmatprep.mubr.f32.mxu0 %v3866
        %4525 = vmatmul.mubr.f32.gmra.mxu0 %v3865
        %v4526 = vpop.f32.mrf.mxu0
        %v4527 = vadd.f32 %v4302, %v4526
        %v4528 = vpop.f32.mrf.mxu0
        %4529 = vdwg.mxu0
        %4530 = vmatprep.subr.mxu0 0.0
        %4531 = vmatpush1.msra.mxu0 %v3931
        %4532 = vmatprep.subr.mxu0 0.0
        %4533 = vmatpush1.msra.mxu0 %v3930
        %4534 = vmatprep.subr.mxu0 0.0
        %4535 = vmatpush1.msra.mxu0 %v3929
        %4536 = vmatprep.subr.mxu0 0.0
        %4537 = vmatpush1.msra.mxu0 %v3928
        %4538 = vmatprep.subr.mxu0 0.0
        %4539 = vmatpush1.msra.mxu0 %v3927
        %4540 = vmatprep.subr.mxu0 0.0
        %4541 = vmatpush1.msra.mxu0 %v3926
        %4542 = vmatprep.subr.mxu0 0.0
        %4543 = vmatpush1.msra.mxu0 %v3925
        %4544 = vmatprep.subr.mxu0 0.0
        %4545 = vmatpush1.msra.mxu0 %v3924
        %4546 = vmatprep.subr.mxu0 0.0
        %4547 = vmatpush1.msra.mxu0 %v3923
        %4548 = vmatprep.subr.mxu0 0.0
        %4549 = vmatpush1.msra.mxu0 %v3922
        %4550 = vmatprep.subr.mxu0 0.0
        %4551 = vmatpush1.msra.mxu0 %v3921
        %4552 = vmatprep.subr.mxu0 0.0
        %4553 = vmatpush1.msra.mxu0 %v3920
        %4554 = vmatprep.subr.mxu0 0.0
        %4555 = vmatpush1.msra.mxu0 %v3919
        %4556 = vmatprep.subr.mxu0 0.0
        %4557 = vmatpush1.msra.mxu0 %v3918
        %4558 = vmatprep.subr.mxu0 0.0
        %4559 = vmatpush1.msra.mxu0 %v3917
        %4560 = vmatprep.subr.mxu0 0.0
        %4561 = vmatpush1.msra.mxu0 %v3916
        %4562 = vmatprep.subr.mxu0 0.0
        %4563 = vmatpush2.msra.mxu0 %v3947
        %4564 = vmatprep.subr.mxu0 0.0
        %4565 = vmatpush2.msra.mxu0 %v3946
        %4566 = vmatprep.subr.mxu0 0.0
        %4567 = vmatpush2.msra.mxu0 %v3945
        %4568 = vmatprep.subr.mxu0 0.0
        %4569 = vmatpush2.msra.mxu0 %v3944
        %4570 = vmatprep.subr.mxu0 0.0
        %4571 = vmatpush2.msra.mxu0 %v3943
        %4572 = vmatprep.subr.mxu0 0.0
        %4573 = vmatpush2.msra.mxu0 %v3942
        %4574 = vmatprep.subr.mxu0 0.0
        %4575 = vmatpush2.msra.mxu0 %v3941
        %4576 = vmatprep.subr.mxu0 0.0
        %4577 = vmatpush2.msra.mxu0 %v3940
        %4578 = vmatprep.subr.mxu0 0.0
        %4579 = vmatpush2.msra.mxu0 %v3939
        %4580 = vmatprep.subr.mxu0 0.0
        %4581 = vmatpush2.msra.mxu0 %v3938
        %4582 = vmatprep.subr.mxu0 0.0
        %4583 = vmatpush2.msra.mxu0 %v3937
        %4584 = vmatprep.subr.mxu0 0.0
        %4585 = vmatpush2.msra.mxu0 %v3936
        %4586 = vmatprep.subr.mxu0 0.0
        %4587 = vmatpush2.msra.mxu0 %v3935
        %4588 = vmatprep.subr.mxu0 0.0
        %4589 = vmatpush2.msra.mxu0 %v3934
        %4590 = vmatprep.subr.mxu0 0.0
        %4591 = vmatpush2.msra.mxu0 %v3933
        %4592 = vmatprep.subr.mxu0 0.0
        %4593 = vmatpush2.msra.mxu0 %v3932
        %4594 = vmatprep.mubr.f32.mxu0 %v3507
        %4595 = vmatmul.mubr.f32.gmra.mxu0 %v3506
        %v4596 = vpop.f32.mrf.mxu0
        %v4597 = vadd.f32 %v4432, %v4596
        %v4598 = vpop.f32.mrf.mxu0
        %4599 = vmatprep.mubr.f32.mxu0 %v3526
        %4600 = vmatmul.mubr.f32.gmra.mxu0 %v3525
        %v4601 = vpop.f32.mrf.mxu0
        %v4602 = vadd.f32 %v4437, %v4601
        %v4603 = vpop.f32.mrf.mxu0
        %4604 = vmatprep.mubr.f32.mxu0 %v3545
        %4605 = vmatmul.mubr.f32.gmra.mxu0 %v3544
        %v4606 = vpop.f32.mrf.mxu0
        %v4607 = vadd.f32 %v4442, %v4606
        %v4608 = vpop.f32.mrf.mxu0
        %4609 = vmatprep.mubr.f32.mxu0 %v3564
        %4610 = vmatmul.mubr.f32.gmra.mxu0 %v3563
        %v4611 = vpop.f32.mrf.mxu0
        %v4612 = vadd.f32 %v4447, %v4611
        %v4613 = vpop.f32.mrf.mxu0
        %4614 = vmatprep.mubr.f32.mxu0 %v3583
        %4615 = vmatmul.mubr.f32.gmra.mxu0 %v3582
        %v4616 = vpop.f32.mrf.mxu0
        %v4617 = vadd.f32 %v4452, %v4616
        %v4618 = vpop.f32.mrf.mxu0
        %4619 = vmatprep.mubr.f32.mxu0 %v3602
        %4620 = vmatmul.mubr.f32.gmra.mxu0 %v3601
        %v4621 = vpop.f32.mrf.mxu0
        %v4622 = vadd.f32 %v4457, %v4621
        %v4623 = vpop.f32.mrf.mxu0
        %4624 = vmatprep.mubr.f32.mxu0 %v3621
        %4625 = vmatmul.mubr.f32.gmra.mxu0 %v3620
        %v4626 = vpop.f32.mrf.mxu0
        %v4627 = vadd.f32 %v4462, %v4626
        %v4628 = vpop.f32.mrf.mxu0
        %4629 = vmatprep.mubr.f32.mxu0 %v3640
        %4630 = vmatmul.mubr.f32.gmra.mxu0 %v3639
        %v4631 = vpop.f32.mrf.mxu0
        %v4632 = vadd.f32 %v4467, %v4631
        %v4633 = vpop.f32.mrf.mxu0
        %4634 = vmatprep.mubr.f32.mxu0 %v3659
        %4635 = vmatmul.mubr.f32.gmra.mxu0 %v3658
        %v4636 = vpop.f32.mrf.mxu0
        %v4637 = vadd.f32 %v4472, %v4636
        %v4638 = vpop.f32.mrf.mxu0
        %4639 = vmatprep.mubr.f32.mxu0 %v3678
        %4640 = vmatmul.mubr.f32.gmra.mxu0 %v3677
        %v4641 = vpop.f32.mrf.mxu0
        %v4642 = vadd.f32 %v4477, %v4641
        %v4643 = vpop.f32.mrf.mxu0
        %4644 = vmatprep.mubr.f32.mxu0 %v3697
        %4645 = vmatmul.mubr.f32.gmra.mxu0 %v3696
        %v4646 = vpop.f32.mrf.mxu0
        %v4647 = vadd.f32 %v4482, %v4646
        %v4648 = vpop.f32.mrf.mxu0
        %4649 = vmatprep.mubr.f32.mxu0 %v3716
        %4650 = vmatmul.mubr.f32.gmra.mxu0 %v3715
        %v4651 = vpop.f32.mrf.mxu0
        %v4652 = vadd.f32 %v4487, %v4651
        %v4653 = vpop.f32.mrf.mxu0
        %4654 = vmatprep.mubr.f32.mxu0 %v3735
        %4655 = vmatmul.mubr.f32.gmra.mxu0 %v3734
        %v4656 = vpop.f32.mrf.mxu0
        %v4657 = vadd.f32 %v4492, %v4656
        %v4658 = vpop.f32.mrf.mxu0
        %4659 = vmatprep.mubr.f32.mxu0 %v3754
        %4660 = vmatmul.mubr.f32.gmra.mxu0 %v3753
        %v4661 = vpop.f32.mrf.mxu0
        %v4662 = vadd.f32 %v4497, %v4661
        %v4663 = vpop.f32.mrf.mxu0
        %4664 = vmatprep.mubr.f32.mxu0 %v3773
        %4665 = vmatmul.mubr.f32.gmra.mxu0 %v3772
        %v4666 = vpop.f32.mrf.mxu0
        %v4667 = vadd.f32 %v4502, %v4666
        %v4668 = vpop.f32.mrf.mxu0
        %4669 = vmatprep.mubr.f32.mxu0 %v3792
        %4670 = vmatmul.mubr.f32.gmra.mxu0 %v3791
        %v4671 = vpop.f32.mrf.mxu0
        %v4672 = vadd.f32 %v4507, %v4671
        %v4673 = vpop.f32.mrf.mxu0
        %4674 = vmatprep.mubr.f32.mxu0 %v3811
        %4675 = vmatmul.mubr.f32.gmra.mxu0 %v3810
        %v4676 = vpop.f32.mrf.mxu0
        %v4677 = vadd.f32 %v4512, %v4676
        %v4678 = vpop.f32.mrf.mxu0
        %4679 = vmatprep.mubr.f32.mxu0 %v3830
        %4680 = vmatmul.mubr.f32.gmra.mxu0 %v3829
        %v4681 = vpop.f32.mrf.mxu0
        %v4682 = vadd.f32 %v4517, %v4681
        %v4683 = vpop.f32.mrf.mxu0
        %4684 = vmatprep.mubr.f32.mxu0 %v3849
        %4685 = vmatmul.mubr.f32.gmra.mxu0 %v3848
        %v4686 = vpop.f32.mrf.mxu0
        %v4687 = vadd.f32 %v4522, %v4686
        %v4688 = vpop.f32.mrf.mxu0
        %4689 = vmatprep.mubr.f32.mxu0 %v3868
        %4690 = vmatmul.mubr.f32.gmra.mxu0 %v3867
        %v4691 = vpop.f32.mrf.mxu0
        %v4692 = vadd.f32 %v4527, %v4691
        %v4693 = vpop.f32.mrf.mxu0
        %4694 = vdwg.mxu0
        %4695 = vmatprep.subr.mxu0 0.0
        %4696 = vmatpush1.msra.mxu0 %v3963
        %4697 = vmatprep.subr.mxu0 0.0
        %4698 = vmatpush1.msra.mxu0 %v3962
        %4699 = vmatprep.subr.mxu0 0.0
        %4700 = vmatpush1.msra.mxu0 %v3961
        %4701 = vmatprep.subr.mxu0 0.0
        %4702 = vmatpush1.msra.mxu0 %v3960
        %4703 = vmatprep.subr.mxu0 0.0
        %4704 = vmatpush1.msra.mxu0 %v3959
        %4705 = vmatprep.subr.mxu0 0.0
        %4706 = vmatpush1.msra.mxu0 %v3958
        %4707 = vmatprep.subr.mxu0 0.0
        %4708 = vmatpush1.msra.mxu0 %v3957
        %4709 = vmatprep.subr.mxu0 0.0
        %4710 = vmatpush1.msra.mxu0 %v3956
        %4711 = vmatprep.subr.mxu0 0.0
        %4712 = vmatpush1.msra.mxu0 %v3955
        %4713 = vmatprep.subr.mxu0 0.0
        %4714 = vmatpush1.msra.mxu0 %v3954
        %4715 = vmatprep.subr.mxu0 0.0
        %4716 = vmatpush1.msra.mxu0 %v3953
        %4717 = vmatprep.subr.mxu0 0.0
        %4718 = vmatpush1.msra.mxu0 %v3952
        %4719 = vmatprep.subr.mxu0 0.0
        %4720 = vmatpush1.msra.mxu0 %v3951
        %4721 = vmatprep.subr.mxu0 0.0
        %4722 = vmatpush1.msra.mxu0 %v3950
        %4723 = vmatprep.subr.mxu0 0.0
        %4724 = vmatpush1.msra.mxu0 %v3949
        %4725 = vmatprep.subr.mxu0 0.0
        %4726 = vmatpush1.msra.mxu0 %v3948
        %4727 = vmatprep.subr.mxu0 0.0
        %4728 = vmatpush2.msra.mxu0 %v3979
        %4729 = vmatprep.subr.mxu0 0.0
        %4730 = vmatpush2.msra.mxu0 %v3978
        %4731 = vmatprep.subr.mxu0 0.0
        %4732 = vmatpush2.msra.mxu0 %v3977
        %4733 = vmatprep.subr.mxu0 0.0
        %4734 = vmatpush2.msra.mxu0 %v3976
        %4735 = vmatprep.subr.mxu0 0.0
        %4736 = vmatpush2.msra.mxu0 %v3975
        %4737 = vmatprep.subr.mxu0 0.0
        %4738 = vmatpush2.msra.mxu0 %v3974
        %4739 = vmatprep.subr.mxu0 0.0
        %4740 = vmatpush2.msra.mxu0 %v3973
        %4741 = vmatprep.subr.mxu0 0.0
        %4742 = vmatpush2.msra.mxu0 %v3972
        %4743 = vmatprep.subr.mxu0 0.0
        %4744 = vmatpush2.msra.mxu0 %v3971
        %4745 = vmatprep.subr.mxu0 0.0
        %4746 = vmatpush2.msra.mxu0 %v3970
        %4747 = vmatprep.subr.mxu0 0.0
        %4748 = vmatpush2.msra.mxu0 %v3969
        %4749 = vmatprep.subr.mxu0 0.0
        %4750 = vmatpush2.msra.mxu0 %v3968
        %4751 = vmatprep.subr.mxu0 0.0
        %4752 = vmatpush2.msra.mxu0 %v3967
        %4753 = vmatprep.subr.mxu0 0.0
        %4754 = vmatpush2.msra.mxu0 %v3966
        %4755 = vmatprep.subr.mxu0 0.0
        %4756 = vmatpush2.msra.mxu0 %v3965
        %4757 = vmatprep.subr.mxu0 0.0
        %4758 = vmatpush2.msra.mxu0 %v3964
        %4759 = vmatprep.mubr.f32.mxu0 %v3509
        %4760 = vmatmul.mubr.f32.gmra.mxu0 %v3508
        %v4761 = vpop.f32.mrf.mxu0
        %v4762 = vadd.f32 %v4597, %v4761
        %v4763 = vpop.f32.mrf.mxu0
        %4764 = vmatprep.mubr.f32.mxu0 %v3528
        %4765 = vmatmul.mubr.f32.gmra.mxu0 %v3527
        %v4766 = vpop.f32.mrf.mxu0
        %v4767 = vadd.f32 %v4602, %v4766
        %v4768 = vpop.f32.mrf.mxu0
        %4769 = vmatprep.mubr.f32.mxu0 %v3547
        %4770 = vmatmul.mubr.f32.gmra.mxu0 %v3546
        %v4771 = vpop.f32.mrf.mxu0
        %v4772 = vadd.f32 %v4607, %v4771
        %v4773 = vpop.f32.mrf.mxu0
        %4774 = vmatprep.mubr.f32.mxu0 %v3566
        %4775 = vmatmul.mubr.f32.gmra.mxu0 %v3565
        %v4776 = vpop.f32.mrf.mxu0
        %v4777 = vadd.f32 %v4612, %v4776
        %v4778 = vpop.f32.mrf.mxu0
        %4779 = vmatprep.mubr.f32.mxu0 %v3585
        %4780 = vmatmul.mubr.f32.gmra.mxu0 %v3584
        %v4781 = vpop.f32.mrf.mxu0
        %v4782 = vadd.f32 %v4617, %v4781
        %v4783 = vpop.f32.mrf.mxu0
        %4784 = vmatprep.mubr.f32.mxu0 %v3604
        %4785 = vmatmul.mubr.f32.gmra.mxu0 %v3603
        %v4786 = vpop.f32.mrf.mxu0
        %v4787 = vadd.f32 %v4622, %v4786
        %v4788 = vpop.f32.mrf.mxu0
        %4789 = vmatprep.mubr.f32.mxu0 %v3623
        %4790 = vmatmul.mubr.f32.gmra.mxu0 %v3622
        %v4791 = vpop.f32.mrf.mxu0
        %v4792 = vadd.f32 %v4627, %v4791
        %v4793 = vpop.f32.mrf.mxu0
        %4794 = vmatprep.mubr.f32.mxu0 %v3642
        %4795 = vmatmul.mubr.f32.gmra.mxu0 %v3641
        %v4796 = vpop.f32.mrf.mxu0
        %v4797 = vadd.f32 %v4632, %v4796
        %v4798 = vpop.f32.mrf.mxu0
        %4799 = vmatprep.mubr.f32.mxu0 %v3661
        %4800 = vmatmul.mubr.f32.gmra.mxu0 %v3660
        %v4801 = vpop.f32.mrf.mxu0
        %v4802 = vadd.f32 %v4637, %v4801
        %v4803 = vpop.f32.mrf.mxu0
        %4804 = vmatprep.mubr.f32.mxu0 %v3680
        %4805 = vmatmul.mubr.f32.gmra.mxu0 %v3679
        %v4806 = vpop.f32.mrf.mxu0
        %v4807 = vadd.f32 %v4642, %v4806
        %v4808 = vpop.f32.mrf.mxu0
        %4809 = vmatprep.mubr.f32.mxu0 %v3699
        %4810 = vmatmul.mubr.f32.gmra.mxu0 %v3698
        %v4811 = vpop.f32.mrf.mxu0
        %v4812 = vadd.f32 %v4647, %v4811
        %v4813 = vpop.f32.mrf.mxu0
        %4814 = vmatprep.mubr.f32.mxu0 %v3718
        %4815 = vmatmul.mubr.f32.gmra.mxu0 %v3717
        %v4816 = vpop.f32.mrf.mxu0
        %v4817 = vadd.f32 %v4652, %v4816
        %v4818 = vpop.f32.mrf.mxu0
        %4819 = vmatprep.mubr.f32.mxu0 %v3737
        %4820 = vmatmul.mubr.f32.gmra.mxu0 %v3736
        %v4821 = vpop.f32.mrf.mxu0
        %v4822 = vadd.f32 %v4657, %v4821
        %v4823 = vpop.f32.mrf.mxu0
        %4824 = vmatprep.mubr.f32.mxu0 %v3756
        %4825 = vmatmul.mubr.f32.gmra.mxu0 %v3755
        %v4826 = vpop.f32.mrf.mxu0
        %v4827 = vadd.f32 %v4662, %v4826
        %v4828 = vpop.f32.mrf.mxu0
        %4829 = vmatprep.mubr.f32.mxu0 %v3775
        %4830 = vmatmul.mubr.f32.gmra.mxu0 %v3774
        %v4831 = vpop.f32.mrf.mxu0
        %v4832 = vadd.f32 %v4667, %v4831
        %v4833 = vpop.f32.mrf.mxu0
        %4834 = vmatprep.mubr.f32.mxu0 %v3794
        %4835 = vmatmul.mubr.f32.gmra.mxu0 %v3793
        %v4836 = vpop.f32.mrf.mxu0
        %v4837 = vadd.f32 %v4672, %v4836
        %v4838 = vpop.f32.mrf.mxu0
        %4839 = vmatprep.mubr.f32.mxu0 %v3813
        %4840 = vmatmul.mubr.f32.gmra.mxu0 %v3812
        %v4841 = vpop.f32.mrf.mxu0
        %v4842 = vadd.f32 %v4677, %v4841
        %v4843 = vpop.f32.mrf.mxu0
        %4844 = vmatprep.mubr.f32.mxu0 %v3832
        %4845 = vmatmul.mubr.f32.gmra.mxu0 %v3831
        %v4846 = vpop.f32.mrf.mxu0
        %v4847 = vadd.f32 %v4682, %v4846
        %v4848 = vpop.f32.mrf.mxu0
        %4849 = vmatprep.mubr.f32.mxu0 %v3851
        %4850 = vmatmul.mubr.f32.gmra.mxu0 %v3850
        %v4851 = vpop.f32.mrf.mxu0
        %v4852 = vadd.f32 %v4687, %v4851
        %v4853 = vpop.f32.mrf.mxu0
        %4854 = vmatprep.mubr.f32.mxu0 %v3870
        %4855 = vmatmul.mubr.f32.gmra.mxu0 %v3869
        %v4856 = vpop.f32.mrf.mxu0
        %v4857 = vadd.f32 %v4692, %v4856
        %v4858 = vpop.f32.mrf.mxu0
        %4859 = vdwg.mxu0
        %4860 = vmatprep.subr.mxu0 0.0
        %4861 = vmatpush1.msra.mxu0 %v3995
        %4862 = vmatprep.subr.mxu0 0.0
        %4863 = vmatpush1.msra.mxu0 %v3994
        %4864 = vmatprep.subr.mxu0 0.0
        %4865 = vmatpush1.msra.mxu0 %v3993
        %4866 = vmatprep.subr.mxu0 0.0
        %4867 = vmatpush1.msra.mxu0 %v3992
        %4868 = vmatprep.subr.mxu0 0.0
        %4869 = vmatpush1.msra.mxu0 %v3991
        %4870 = vmatprep.subr.mxu0 0.0
        %4871 = vmatpush1.msra.mxu0 %v3990
        %4872 = vmatprep.subr.mxu0 0.0
        %4873 = vmatpush1.msra.mxu0 %v3989
        %4874 = vmatprep.subr.mxu0 0.0
        %4875 = vmatpush1.msra.mxu0 %v3988
        %4876 = vmatprep.subr.mxu0 0.0
        %4877 = vmatpush1.msra.mxu0 %v3987
        %4878 = vmatprep.subr.mxu0 0.0
        %4879 = vmatpush1.msra.mxu0 %v3986
        %4880 = vmatprep.subr.mxu0 0.0
        %4881 = vmatpush1.msra.mxu0 %v3985
        %4882 = vmatprep.subr.mxu0 0.0
        %4883 = vmatpush1.msra.mxu0 %v3984
        %4884 = vmatprep.subr.mxu0 0.0
        %4885 = vmatpush1.msra.mxu0 %v3983
        %4886 = vmatprep.subr.mxu0 0.0
        %4887 = vmatpush1.msra.mxu0 %v3982
        %4888 = vmatprep.subr.mxu0 0.0
        %4889 = vmatpush1.msra.mxu0 %v3981
        %4890 = vmatprep.subr.mxu0 0.0
        %4891 = vmatpush1.msra.mxu0 %v3980
        %4892 = vmatprep.subr.mxu0 0.0
        %4893 = vmatpush2.msra.mxu0 %v4011
        %4894 = vmatprep.subr.mxu0 0.0
        %4895 = vmatpush2.msra.mxu0 %v4010
        %4896 = vmatprep.subr.mxu0 0.0
        %4897 = vmatpush2.msra.mxu0 %v4009
        %4898 = vmatprep.subr.mxu0 0.0
        %4899 = vmatpush2.msra.mxu0 %v4008
        %4900 = vmatprep.subr.mxu0 0.0
        %4901 = vmatpush2.msra.mxu0 %v4007
        %4902 = vmatprep.subr.mxu0 0.0
        %4903 = vmatpush2.msra.mxu0 %v4006
        %4904 = vmatprep.subr.mxu0 0.0
        %4905 = vmatpush2.msra.mxu0 %v4005
        %4906 = vmatprep.subr.mxu0 0.0
        %4907 = vmatpush2.msra.mxu0 %v4004
        %4908 = vmatprep.subr.mxu0 0.0
        %4909 = vmatpush2.msra.mxu0 %v4003
        %4910 = vmatprep.subr.mxu0 0.0
        %4911 = vmatpush2.msra.mxu0 %v4002
        %4912 = vmatprep.subr.mxu0 0.0
        %4913 = vmatpush2.msra.mxu0 %v4001
        %4914 = vmatprep.subr.mxu0 0.0
        %4915 = vmatpush2.msra.mxu0 %v4000
        %4916 = vmatprep.subr.mxu0 0.0
        %4917 = vmatpush2.msra.mxu0 %v3999
        %4918 = vmatprep.subr.mxu0 0.0
        %4919 = vmatpush2.msra.mxu0 %v3998
        %4920 = vmatprep.subr.mxu0 0.0
        %4921 = vmatpush2.msra.mxu0 %v3997
        %4922 = vmatprep.subr.mxu0 0.0
        %4923 = vmatpush2.msra.mxu0 %v3996
        %4924 = vmatprep.mubr.f32.mxu0 %v3511
        %4925 = vmatmul.mubr.f32.gmra.mxu0 %v3510
        %v4926 = vpop.f32.mrf.mxu0
        %v4927 = vadd.f32 %v4762, %v4926
        %v4928 = vpop.f32.mrf.mxu0
        %4929 = vmatprep.mubr.f32.mxu0 %v3530
        %4930 = vmatmul.mubr.f32.gmra.mxu0 %v3529
        %v4931 = vpop.f32.mrf.mxu0
        %v4932 = vadd.f32 %v4767, %v4931
        %v4933 = vpop.f32.mrf.mxu0
        %4934 = vmatprep.mubr.f32.mxu0 %v3549
        %4935 = vmatmul.mubr.f32.gmra.mxu0 %v3548
        %v4936 = vpop.f32.mrf.mxu0
        %v4937 = vadd.f32 %v4772, %v4936
        %v4938 = vpop.f32.mrf.mxu0
        %4939 = vmatprep.mubr.f32.mxu0 %v3568
        %4940 = vmatmul.mubr.f32.gmra.mxu0 %v3567
        %v4941 = vpop.f32.mrf.mxu0
        %v4942 = vadd.f32 %v4777, %v4941
        %v4943 = vpop.f32.mrf.mxu0
        %4944 = vmatprep.mubr.f32.mxu0 %v3587
        %4945 = vmatmul.mubr.f32.gmra.mxu0 %v3586
        %v4946 = vpop.f32.mrf.mxu0
        %v4947 = vadd.f32 %v4782, %v4946
        %v4948 = vpop.f32.mrf.mxu0
        %4949 = vmatprep.mubr.f32.mxu0 %v3606
        %4950 = vmatmul.mubr.f32.gmra.mxu0 %v3605
        %v4951 = vpop.f32.mrf.mxu0
        %v4952 = vadd.f32 %v4787, %v4951
        %v4953 = vpop.f32.mrf.mxu0
        %4954 = vmatprep.mubr.f32.mxu0 %v3625
        %4955 = vmatmul.mubr.f32.gmra.mxu0 %v3624
        %v4956 = vpop.f32.mrf.mxu0
        %v4957 = vadd.f32 %v4792, %v4956
        %v4958 = vpop.f32.mrf.mxu0
        %4959 = vmatprep.mubr.f32.mxu0 %v3644
        %4960 = vmatmul.mubr.f32.gmra.mxu0 %v3643
        %v4961 = vpop.f32.mrf.mxu0
        %v4962 = vadd.f32 %v4797, %v4961
        %v4963 = vpop.f32.mrf.mxu0
        %4964 = vmatprep.mubr.f32.mxu0 %v3663
        %4965 = vmatmul.mubr.f32.gmra.mxu0 %v3662
        %v4966 = vpop.f32.mrf.mxu0
        %v4967 = vadd.f32 %v4802, %v4966
        %v4968 = vpop.f32.mrf.mxu0
        %4969 = vmatprep.mubr.f32.mxu0 %v3682
        %4970 = vmatmul.mubr.f32.gmra.mxu0 %v3681
        %v4971 = vpop.f32.mrf.mxu0
        %v4972 = vadd.f32 %v4807, %v4971
        %v4973 = vpop.f32.mrf.mxu0
        %4974 = vmatprep.mubr.f32.mxu0 %v3701
        %4975 = vmatmul.mubr.f32.gmra.mxu0 %v3700
        %v4976 = vpop.f32.mrf.mxu0
        %v4977 = vadd.f32 %v4812, %v4976
        %v4978 = vpop.f32.mrf.mxu0
        %4979 = vmatprep.mubr.f32.mxu0 %v3720
        %4980 = vmatmul.mubr.f32.gmra.mxu0 %v3719
        %v4981 = vpop.f32.mrf.mxu0
        %v4982 = vadd.f32 %v4817, %v4981
        %v4983 = vpop.f32.mrf.mxu0
        %4984 = vmatprep.mubr.f32.mxu0 %v3739
        %4985 = vmatmul.mubr.f32.gmra.mxu0 %v3738
        %v4986 = vpop.f32.mrf.mxu0
        %v4987 = vadd.f32 %v4822, %v4986
        %v4988 = vpop.f32.mrf.mxu0
        %4989 = vmatprep.mubr.f32.mxu0 %v3758
        %4990 = vmatmul.mubr.f32.gmra.mxu0 %v3757
        %v4991 = vpop.f32.mrf.mxu0
        %v4992 = vadd.f32 %v4827, %v4991
        %v4993 = vpop.f32.mrf.mxu0
        %4994 = vmatprep.mubr.f32.mxu0 %v3777
        %4995 = vmatmul.mubr.f32.gmra.mxu0 %v3776
        %v4996 = vpop.f32.mrf.mxu0
        %v4997 = vadd.f32 %v4832, %v4996
        %v4998 = vpop.f32.mrf.mxu0
        %4999 = vmatprep.mubr.f32.mxu0 %v3796
        %5000 = vmatmul.mubr.f32.gmra.mxu0 %v3795
        %v5001 = vpop.f32.mrf.mxu0
        %v5002 = vadd.f32 %v4837, %v5001
        %v5003 = vpop.f32.mrf.mxu0
        %5004 = vmatprep.mubr.f32.mxu0 %v3815
        %5005 = vmatmul.mubr.f32.gmra.mxu0 %v3814
        %v5006 = vpop.f32.mrf.mxu0
        %v5007 = vadd.f32 %v4842, %v5006
        %v5008 = vpop.f32.mrf.mxu0
        %5009 = vmatprep.mubr.f32.mxu0 %v3834
        %5010 = vmatmul.mubr.f32.gmra.mxu0 %v3833
        %v5011 = vpop.f32.mrf.mxu0
        %v5012 = vadd.f32 %v4847, %v5011
        %v5013 = vpop.f32.mrf.mxu0
        %5014 = vmatprep.mubr.f32.mxu0 %v3853
        %5015 = vmatmul.mubr.f32.gmra.mxu0 %v3852
        %v5016 = vpop.f32.mrf.mxu0
        %v5017 = vadd.f32 %v4852, %v5016
        %v5018 = vpop.f32.mrf.mxu0
        %5019 = vmatprep.mubr.f32.mxu0 %v3872
        %5020 = vmatmul.mubr.f32.gmra.mxu0 %v3871
        %v5021 = vpop.f32.mrf.mxu0
        %v5022 = vadd.f32 %v4857, %v5021
        %v5023 = vpop.f32.mrf.mxu0
        %5024 = vdwg.mxu0
        %5025 = vmatprep.subr.mxu0 0.0
        %5026 = vmatpush1.msra.mxu0 %v4027
        %5027 = vmatprep.subr.mxu0 0.0
        %5028 = vmatpush1.msra.mxu0 %v4026
        %5029 = vmatprep.subr.mxu0 0.0
        %5030 = vmatpush1.msra.mxu0 %v4025
        %5031 = vmatprep.subr.mxu0 0.0
        %5032 = vmatpush1.msra.mxu0 %v4024
        %5033 = vmatprep.subr.mxu0 0.0
        %5034 = vmatpush1.msra.mxu0 %v4023
        %5035 = vmatprep.subr.mxu0 0.0
        %5036 = vmatpush1.msra.mxu0 %v4022
        %5037 = vmatprep.subr.mxu0 0.0
        %5038 = vmatpush1.msra.mxu0 %v4021
        %5039 = vmatprep.subr.mxu0 0.0
        %5040 = vmatpush1.msra.mxu0 %v4020
        %5041 = vmatprep.subr.mxu0 0.0
        %5042 = vmatpush1.msra.mxu0 %v4019
        %5043 = vmatprep.subr.mxu0 0.0
        %5044 = vmatpush1.msra.mxu0 %v4018
        %5045 = vmatprep.subr.mxu0 0.0
        %5046 = vmatpush1.msra.mxu0 %v4017
        %5047 = vmatprep.subr.mxu0 0.0
        %5048 = vmatpush1.msra.mxu0 %v4016
        %5049 = vmatprep.subr.mxu0 0.0
        %5050 = vmatpush1.msra.mxu0 %v4015
        %5051 = vmatprep.subr.mxu0 0.0
        %5052 = vmatpush1.msra.mxu0 %v4014
        %5053 = vmatprep.subr.mxu0 0.0
        %5054 = vmatpush1.msra.mxu0 %v4013
        %5055 = vmatprep.subr.mxu0 0.0
        %5056 = vmatpush1.msra.mxu0 %v4012
        %5057 = vmatprep.subr.mxu0 0.0
        %5058 = vmatpush2.msra.mxu0 %v4043
        %5059 = vmatprep.subr.mxu0 0.0
        %5060 = vmatpush2.msra.mxu0 %v4042
        %5061 = vmatprep.subr.mxu0 0.0
        %5062 = vmatpush2.msra.mxu0 %v4041
        %5063 = vmatprep.subr.mxu0 0.0
        %5064 = vmatpush2.msra.mxu0 %v4040
        %5065 = vmatprep.subr.mxu0 0.0
        %5066 = vmatpush2.msra.mxu0 %v4039
        %5067 = vmatprep.subr.mxu0 0.0
        %5068 = vmatpush2.msra.mxu0 %v4038
        %5069 = vmatprep.subr.mxu0 0.0
        %5070 = vmatpush2.msra.mxu0 %v4037
        %5071 = vmatprep.subr.mxu0 0.0
        %5072 = vmatpush2.msra.mxu0 %v4036
        %5073 = vmatprep.subr.mxu0 0.0
        %5074 = vmatpush2.msra.mxu0 %v4035
        %5075 = vmatprep.subr.mxu0 0.0
        %5076 = vmatpush2.msra.mxu0 %v4034
        %5077 = vmatprep.subr.mxu0 0.0
        %5078 = vmatpush2.msra.mxu0 %v4033
        %5079 = vmatprep.subr.mxu0 0.0
        %5080 = vmatpush2.msra.mxu0 %v4032
        %5081 = vmatprep.subr.mxu0 0.0
        %5082 = vmatpush2.msra.mxu0 %v4031
        %5083 = vmatprep.subr.mxu0 0.0
        %5084 = vmatpush2.msra.mxu0 %v4030
        %5085 = vmatprep.subr.mxu0 0.0
        %5086 = vmatpush2.msra.mxu0 %v4029
        %5087 = vmatprep.subr.mxu0 0.0
        %5088 = vmatpush2.msra.mxu0 %v4028
        %5089 = vmatprep.mubr.f32.mxu0 %v3513
        %5090 = vmatmul.mubr.f32.gmra.mxu0 %v3512
        %v5091 = vpop.f32.mrf.mxu0
        %v5092 = vadd.f32 %v4927, %v5091
        %v5093 = vpop.f32.mrf.mxu0
        %5094 = vmatprep.mubr.f32.mxu0 %v3532
        %5095 = vmatmul.mubr.f32.gmra.mxu0 %v3531
        %v5096 = vpop.f32.mrf.mxu0
        %v5097 = vadd.f32 %v4932, %v5096
        %v5098 = vpop.f32.mrf.mxu0
        %5099 = vmatprep.mubr.f32.mxu0 %v3551
        %5100 = vmatmul.mubr.f32.gmra.mxu0 %v3550
        %v5101 = vpop.f32.mrf.mxu0
        %v5102 = vadd.f32 %v4937, %v5101
        %v5103 = vpop.f32.mrf.mxu0
        %5104 = vmatprep.mubr.f32.mxu0 %v3570
        %5105 = vmatmul.mubr.f32.gmra.mxu0 %v3569
        %v5106 = vpop.f32.mrf.mxu0
        %v5107 = vadd.f32 %v4942, %v5106
        %v5108 = vpop.f32.mrf.mxu0
        %5109 = vmatprep.mubr.f32.mxu0 %v3589
        %5110 = vmatmul.mubr.f32.gmra.mxu0 %v3588
        %v5111 = vpop.f32.mrf.mxu0
        %v5112 = vadd.f32 %v4947, %v5111
        %v5113 = vpop.f32.mrf.mxu0
        %5114 = vmatprep.mubr.f32.mxu0 %v3608
        %5115 = vmatmul.mubr.f32.gmra.mxu0 %v3607
        %v5116 = vpop.f32.mrf.mxu0
        %v5117 = vadd.f32 %v4952, %v5116
        %v5118 = vpop.f32.mrf.mxu0
        %5119 = vmatprep.mubr.f32.mxu0 %v3627
        %5120 = vmatmul.mubr.f32.gmra.mxu0 %v3626
        %v5121 = vpop.f32.mrf.mxu0
        %v5122 = vadd.f32 %v4957, %v5121
        %v5123 = vpop.f32.mrf.mxu0
        %5124 = vmatprep.mubr.f32.mxu0 %v3646
        %5125 = vmatmul.mubr.f32.gmra.mxu0 %v3645
        %v5126 = vpop.f32.mrf.mxu0
        %v5127 = vadd.f32 %v4962, %v5126
        %v5128 = vpop.f32.mrf.mxu0
        %5129 = vmatprep.mubr.f32.mxu0 %v3665
        %5130 = vmatmul.mubr.f32.gmra.mxu0 %v3664
        %v5131 = vpop.f32.mrf.mxu0
        %v5132 = vadd.f32 %v4967, %v5131
        %v5133 = vpop.f32.mrf.mxu0
        %5134 = vmatprep.mubr.f32.mxu0 %v3684
        %5135 = vmatmul.mubr.f32.gmra.mxu0 %v3683
        %v5136 = vpop.f32.mrf.mxu0
        %v5137 = vadd.f32 %v4972, %v5136
        %v5138 = vpop.f32.mrf.mxu0
        %5139 = vmatprep.mubr.f32.mxu0 %v3703
        %5140 = vmatmul.mubr.f32.gmra.mxu0 %v3702
        %v5141 = vpop.f32.mrf.mxu0
        %v5142 = vadd.f32 %v4977, %v5141
        %v5143 = vpop.f32.mrf.mxu0
        %5144 = vmatprep.mubr.f32.mxu0 %v3722
        %5145 = vmatmul.mubr.f32.gmra.mxu0 %v3721
        %v5146 = vpop.f32.mrf.mxu0
        %v5147 = vadd.f32 %v4982, %v5146
        %v5148 = vpop.f32.mrf.mxu0
        %5149 = vmatprep.mubr.f32.mxu0 %v3741
        %5150 = vmatmul.mubr.f32.gmra.mxu0 %v3740
        %v5151 = vpop.f32.mrf.mxu0
        %v5152 = vadd.f32 %v4987, %v5151
        %v5153 = vpop.f32.mrf.mxu0
        %5154 = vmatprep.mubr.f32.mxu0 %v3760
        %5155 = vmatmul.mubr.f32.gmra.mxu0 %v3759
        %v5156 = vpop.f32.mrf.mxu0
        %v5157 = vadd.f32 %v4992, %v5156
        %v5158 = vpop.f32.mrf.mxu0
        %5159 = vmatprep.mubr.f32.mxu0 %v3779
        %5160 = vmatmul.mubr.f32.gmra.mxu0 %v3778
        %v5161 = vpop.f32.mrf.mxu0
        %v5162 = vadd.f32 %v4997, %v5161
        %v5163 = vpop.f32.mrf.mxu0
        %5164 = vmatprep.mubr.f32.mxu0 %v3798
        %5165 = vmatmul.mubr.f32.gmra.mxu0 %v3797
        %v5166 = vpop.f32.mrf.mxu0
        %v5167 = vadd.f32 %v5002, %v5166
        %v5168 = vpop.f32.mrf.mxu0
        %5169 = vmatprep.mubr.f32.mxu0 %v3817
        %5170 = vmatmul.mubr.f32.gmra.mxu0 %v3816
        %v5171 = vpop.f32.mrf.mxu0
        %v5172 = vadd.f32 %v5007, %v5171
        %v5173 = vpop.f32.mrf.mxu0
        %5174 = vmatprep.mubr.f32.mxu0 %v3836
        %5175 = vmatmul.mubr.f32.gmra.mxu0 %v3835
        %v5176 = vpop.f32.mrf.mxu0
        %v5177 = vadd.f32 %v5012, %v5176
        %v5178 = vpop.f32.mrf.mxu0
        %5179 = vmatprep.mubr.f32.mxu0 %v3855
        %5180 = vmatmul.mubr.f32.gmra.mxu0 %v3854
        %v5181 = vpop.f32.mrf.mxu0
        %v5182 = vadd.f32 %v5017, %v5181
        %v5183 = vpop.f32.mrf.mxu0
        %5184 = vmatprep.mubr.f32.mxu0 %v3874
        %5185 = vmatmul.mubr.f32.gmra.mxu0 %v3873
        %v5186 = vpop.f32.mrf.mxu0
        %v5187 = vadd.f32 %v5022, %v5186
        %v5188 = vpop.f32.mrf.mxu0
        %5189 = vdwg.mxu0
        %5190 = vmatprep.subr.mxu0 0.0
        %5191 = vmatpush1.msra.mxu0 %v4059
        %5192 = vmatprep.subr.mxu0 0.0
        %5193 = vmatpush1.msra.mxu0 %v4058
        %5194 = vmatprep.subr.mxu0 0.0
        %5195 = vmatpush1.msra.mxu0 %v4057
        %5196 = vmatprep.subr.mxu0 0.0
        %5197 = vmatpush1.msra.mxu0 %v4056
        %5198 = vmatprep.subr.mxu0 0.0
        %5199 = vmatpush1.msra.mxu0 %v4055
        %5200 = vmatprep.subr.mxu0 0.0
        %5201 = vmatpush1.msra.mxu0 %v4054
        %5202 = vmatprep.subr.mxu0 0.0
        %5203 = vmatpush1.msra.mxu0 %v4053
        %5204 = vmatprep.subr.mxu0 0.0
        %5205 = vmatpush1.msra.mxu0 %v4052
        %5206 = vmatprep.subr.mxu0 0.0
        %5207 = vmatpush1.msra.mxu0 %v4051
        %5208 = vmatprep.subr.mxu0 0.0
        %5209 = vmatpush1.msra.mxu0 %v4050
        %5210 = vmatprep.subr.mxu0 0.0
        %5211 = vmatpush1.msra.mxu0 %v4049
        %5212 = vmatprep.subr.mxu0 0.0
        %5213 = vmatpush1.msra.mxu0 %v4048
        %5214 = vmatprep.subr.mxu0 0.0
        %5215 = vmatpush1.msra.mxu0 %v4047
        %5216 = vmatprep.subr.mxu0 0.0
        %5217 = vmatpush1.msra.mxu0 %v4046
        %5218 = vmatprep.subr.mxu0 0.0
        %5219 = vmatpush1.msra.mxu0 %v4045
        %5220 = vmatprep.subr.mxu0 0.0
        %5221 = vmatpush1.msra.mxu0 %v4044
        %5222 = vmatprep.subr.mxu0 0.0
        %5223 = vmatpush2.msra.mxu0 %v4075
        %5224 = vmatprep.subr.mxu0 0.0
        %5225 = vmatpush2.msra.mxu0 %v4074
        %5226 = vmatprep.subr.mxu0 0.0
        %5227 = vmatpush2.msra.mxu0 %v4073
        %5228 = vmatprep.subr.mxu0 0.0
        %5229 = vmatpush2.msra.mxu0 %v4072
        %5230 = vmatprep.subr.mxu0 0.0
        %5231 = vmatpush2.msra.mxu0 %v4071
        %5232 = vmatprep.subr.mxu0 0.0
        %5233 = vmatpush2.msra.mxu0 %v4070
        %5234 = vmatprep.subr.mxu0 0.0
        %5235 = vmatpush2.msra.mxu0 %v4069
        %5236 = vmatprep.subr.mxu0 0.0
        %5237 = vmatpush2.msra.mxu0 %v4068
        %5238 = vmatprep.subr.mxu0 0.0
        %5239 = vmatpush2.msra.mxu0 %v4067
        %5240 = vmatprep.subr.mxu0 0.0
        %5241 = vmatpush2.msra.mxu0 %v4066
        %5242 = vmatprep.subr.mxu0 0.0
        %5243 = vmatpush2.msra.mxu0 %v4065
        %5244 = vmatprep.subr.mxu0 0.0
        %5245 = vmatpush2.msra.mxu0 %v4064
        %5246 = vmatprep.subr.mxu0 0.0
        %5247 = vmatpush2.msra.mxu0 %v4063
        %5248 = vmatprep.subr.mxu0 0.0
        %5249 = vmatpush2.msra.mxu0 %v4062
        %5250 = vmatprep.subr.mxu0 0.0
        %5251 = vmatpush2.msra.mxu0 %v4061
        %5252 = vmatprep.subr.mxu0 0.0
        %5253 = vmatpush2.msra.mxu0 %v4060
        %5254 = vmatprep.mubr.f32.mxu0 %v3515
        %5255 = vmatmul.mubr.f32.gmra.mxu0 %v3514
        %v5256 = vpop.f32.mrf.mxu0
        %v5257 = vadd.f32 %v5092, %v5256
        %v5258 = vpop.f32.mrf.mxu0
        %5259 = vmatprep.mubr.f32.mxu0 %v3534
        %5260 = vmatmul.mubr.f32.gmra.mxu0 %v3533
        %v5261 = vpop.f32.mrf.mxu0
        %v5262 = vadd.f32 %v5097, %v5261
        %v5263 = vpop.f32.mrf.mxu0
        %5264 = vmatprep.mubr.f32.mxu0 %v3553
        %5265 = vmatmul.mubr.f32.gmra.mxu0 %v3552
        %v5266 = vpop.f32.mrf.mxu0
        %v5267 = vadd.f32 %v5102, %v5266
        %v5268 = vpop.f32.mrf.mxu0
        %5269 = vmatprep.mubr.f32.mxu0 %v3572
        %5270 = vmatmul.mubr.f32.gmra.mxu0 %v3571
        %v5271 = vpop.f32.mrf.mxu0
        %v5272 = vadd.f32 %v5107, %v5271
        %v5273 = vpop.f32.mrf.mxu0
        %5274 = vmatprep.mubr.f32.mxu0 %v3591
        %5275 = vmatmul.mubr.f32.gmra.mxu0 %v3590
        %v5276 = vpop.f32.mrf.mxu0
        %v5277 = vadd.f32 %v5112, %v5276
        %v5278 = vpop.f32.mrf.mxu0
        %5279 = vmatprep.mubr.f32.mxu0 %v3610
        %5280 = vmatmul.mubr.f32.gmra.mxu0 %v3609
        %v5281 = vpop.f32.mrf.mxu0
        %v5282 = vadd.f32 %v5117, %v5281
        %v5283 = vpop.f32.mrf.mxu0
        %5284 = vmatprep.mubr.f32.mxu0 %v3629
        %5285 = vmatmul.mubr.f32.gmra.mxu0 %v3628
        %v5286 = vpop.f32.mrf.mxu0
        %v5287 = vadd.f32 %v5122, %v5286
        %v5288 = vpop.f32.mrf.mxu0
        %5289 = vmatprep.mubr.f32.mxu0 %v3648
        %5290 = vmatmul.mubr.f32.gmra.mxu0 %v3647
        %v5291 = vpop.f32.mrf.mxu0
        %v5292 = vadd.f32 %v5127, %v5291
        %v5293 = vpop.f32.mrf.mxu0
        %5294 = vmatprep.mubr.f32.mxu0 %v3667
        %5295 = vmatmul.mubr.f32.gmra.mxu0 %v3666
        %v5296 = vpop.f32.mrf.mxu0
        %v5297 = vadd.f32 %v5132, %v5296
        %v5298 = vpop.f32.mrf.mxu0
        %5299 = vmatprep.mubr.f32.mxu0 %v3686
        %5300 = vmatmul.mubr.f32.gmra.mxu0 %v3685
        %v5301 = vpop.f32.mrf.mxu0
        %v5302 = vadd.f32 %v5137, %v5301
        %v5303 = vpop.f32.mrf.mxu0
        %5304 = vmatprep.mubr.f32.mxu0 %v3705
        %5305 = vmatmul.mubr.f32.gmra.mxu0 %v3704
        %v5306 = vpop.f32.mrf.mxu0
        %v5307 = vadd.f32 %v5142, %v5306
        %v5308 = vpop.f32.mrf.mxu0
        %5309 = vmatprep.mubr.f32.mxu0 %v3724
        %5310 = vmatmul.mubr.f32.gmra.mxu0 %v3723
        %v5311 = vpop.f32.mrf.mxu0
        %v5312 = vadd.f32 %v5147, %v5311
        %v5313 = vpop.f32.mrf.mxu0
        %5314 = vmatprep.mubr.f32.mxu0 %v3743
        %5315 = vmatmul.mubr.f32.gmra.mxu0 %v3742
        %v5316 = vpop.f32.mrf.mxu0
        %v5317 = vadd.f32 %v5152, %v5316
        %v5318 = vpop.f32.mrf.mxu0
        %5319 = vmatprep.mubr.f32.mxu0 %v3762
        %5320 = vmatmul.mubr.f32.gmra.mxu0 %v3761
        %v5321 = vpop.f32.mrf.mxu0
        %v5322 = vadd.f32 %v5157, %v5321
        %v5323 = vpop.f32.mrf.mxu0
        %5324 = vmatprep.mubr.f32.mxu0 %v3781
        %5325 = vmatmul.mubr.f32.gmra.mxu0 %v3780
        %v5326 = vpop.f32.mrf.mxu0
        %v5327 = vadd.f32 %v5162, %v5326
        %v5328 = vpop.f32.mrf.mxu0
        %5329 = vmatprep.mubr.f32.mxu0 %v3800
        %5330 = vmatmul.mubr.f32.gmra.mxu0 %v3799
        %v5331 = vpop.f32.mrf.mxu0
        %v5332 = vadd.f32 %v5167, %v5331
        %v5333 = vpop.f32.mrf.mxu0
        %5334 = vmatprep.mubr.f32.mxu0 %v3819
        %5335 = vmatmul.mubr.f32.gmra.mxu0 %v3818
        %v5336 = vpop.f32.mrf.mxu0
        %v5337 = vadd.f32 %v5172, %v5336
        %v5338 = vpop.f32.mrf.mxu0
        %5339 = vmatprep.mubr.f32.mxu0 %v3838
        %5340 = vmatmul.mubr.f32.gmra.mxu0 %v3837
        %v5341 = vpop.f32.mrf.mxu0
        %v5342 = vadd.f32 %v5177, %v5341
        %v5343 = vpop.f32.mrf.mxu0
        %5344 = vmatprep.mubr.f32.mxu0 %v3857
        %5345 = vmatmul.mubr.f32.gmra.mxu0 %v3856
        %v5346 = vpop.f32.mrf.mxu0
        %v5347 = vadd.f32 %v5182, %v5346
        %v5348 = vpop.f32.mrf.mxu0
        %5349 = vmatprep.mubr.f32.mxu0 %v3876
        %5350 = vmatmul.mubr.f32.gmra.mxu0 %v3875
        %v5351 = vpop.f32.mrf.mxu0
        %v5352 = vadd.f32 %v5187, %v5351
        %v5353 = vpop.f32.mrf.mxu0
        %5354 = vdwg.mxu0
        %5355 = vmatprep.subr.mxu0 0.0
        %5356 = vmatpush1.msra.mxu0 %v4091
        %5357 = vmatprep.subr.mxu0 0.0
        %5358 = vmatpush1.msra.mxu0 %v4090
        %5359 = vmatprep.subr.mxu0 0.0
        %5360 = vmatpush1.msra.mxu0 %v4089
        %5361 = vmatprep.subr.mxu0 0.0
        %5362 = vmatpush1.msra.mxu0 %v4088
        %5363 = vmatprep.subr.mxu0 0.0
        %5364 = vmatpush1.msra.mxu0 %v4087
        %5365 = vmatprep.subr.mxu0 0.0
        %5366 = vmatpush1.msra.mxu0 %v4086
        %5367 = vmatprep.subr.mxu0 0.0
        %5368 = vmatpush1.msra.mxu0 %v4085
        %5369 = vmatprep.subr.mxu0 0.0
        %5370 = vmatpush1.msra.mxu0 %v4084
        %5371 = vmatprep.subr.mxu0 0.0
        %5372 = vmatpush1.msra.mxu0 %v4083
        %5373 = vmatprep.subr.mxu0 0.0
        %5374 = vmatpush1.msra.mxu0 %v4082
        %5375 = vmatprep.subr.mxu0 0.0
        %5376 = vmatpush1.msra.mxu0 %v4081
        %5377 = vmatprep.subr.mxu0 0.0
        %5378 = vmatpush1.msra.mxu0 %v4080
        %5379 = vmatprep.subr.mxu0 0.0
        %5380 = vmatpush1.msra.mxu0 %v4079
        %5381 = vmatprep.subr.mxu0 0.0
        %5382 = vmatpush1.msra.mxu0 %v4078
        %5383 = vmatprep.subr.mxu0 0.0
        %5384 = vmatpush1.msra.mxu0 %v4077
        %5385 = vmatprep.subr.mxu0 0.0
        %5386 = vmatpush1.msra.mxu0 %v4076
        %5387 = vmatprep.subr.mxu0 0.0
        %5388 = vmatpush2.msra.mxu0 %v4107
        %5389 = vmatprep.subr.mxu0 0.0
        %5390 = vmatpush2.msra.mxu0 %v4106
        %5391 = vmatprep.subr.mxu0 0.0
        %5392 = vmatpush2.msra.mxu0 %v4105
        %5393 = vmatprep.subr.mxu0 0.0
        %5394 = vmatpush2.msra.mxu0 %v4104
        %5395 = vmatprep.subr.mxu0 0.0
        %5396 = vmatpush2.msra.mxu0 %v4103
        %5397 = vmatprep.subr.mxu0 0.0
        %5398 = vmatpush2.msra.mxu0 %v4102
        %5399 = vmatprep.subr.mxu0 0.0
        %5400 = vmatpush2.msra.mxu0 %v4101
        %5401 = vmatprep.subr.mxu0 0.0
        %5402 = vmatpush2.msra.mxu0 %v4100
        %5403 = vmatprep.subr.mxu0 0.0
        %5404 = vmatpush2.msra.mxu0 %v4099
        %5405 = vmatprep.subr.mxu0 0.0
        %5406 = vmatpush2.msra.mxu0 %v4098
        %5407 = vmatprep.subr.mxu0 0.0
        %5408 = vmatpush2.msra.mxu0 %v4097
        %5409 = vmatprep.subr.mxu0 0.0
        %5410 = vmatpush2.msra.mxu0 %v4096
        %5411 = vmatprep.subr.mxu0 0.0
        %5412 = vmatpush2.msra.mxu0 %v4095
        %5413 = vmatprep.subr.mxu0 0.0
        %5414 = vmatpush2.msra.mxu0 %v4094
        %5415 = vmatprep.subr.mxu0 0.0
        %5416 = vmatpush2.msra.mxu0 %v4093
        %5417 = vmatprep.subr.mxu0 0.0
        %5418 = vmatpush2.msra.mxu0 %v4092
        %5419 = vmatprep.mubr.f32.mxu0 %v3517
        %5420 = vmatmul.mubr.f32.gmra.mxu0 %v3516
        %v5421 = vpop.f32.mrf.mxu0
        %v5422 = vadd.f32 %v5257, %v5421
        %v5423 = vpop.f32.mrf.mxu0
        %5424 = vmatprep.mubr.f32.mxu0 %v3536
        %5425 = vmatmul.mubr.f32.gmra.mxu0 %v3535
        %v5426 = vpop.f32.mrf.mxu0
        %v5427 = vadd.f32 %v5262, %v5426
        %v5428 = vpop.f32.mrf.mxu0
        %5429 = vmatprep.mubr.f32.mxu0 %v3555
        %5430 = vmatmul.mubr.f32.gmra.mxu0 %v3554
        %v5431 = vpop.f32.mrf.mxu0
        %v5432 = vadd.f32 %v5267, %v5431
        %v5433 = vpop.f32.mrf.mxu0
        %5434 = vmatprep.mubr.f32.mxu0 %v3574
        %5435 = vmatmul.mubr.f32.gmra.mxu0 %v3573
        %v5436 = vpop.f32.mrf.mxu0
        %v5437 = vadd.f32 %v5272, %v5436
        %v5438 = vpop.f32.mrf.mxu0
        %5439 = vmatprep.mubr.f32.mxu0 %v3593
        %5440 = vmatmul.mubr.f32.gmra.mxu0 %v3592
        %v5441 = vpop.f32.mrf.mxu0
        %v5442 = vadd.f32 %v5277, %v5441
        %v5443 = vpop.f32.mrf.mxu0
        %5444 = vmatprep.mubr.f32.mxu0 %v3612
        %5445 = vmatmul.mubr.f32.gmra.mxu0 %v3611
        %v5446 = vpop.f32.mrf.mxu0
        %v5447 = vadd.f32 %v5282, %v5446
        %v5448 = vpop.f32.mrf.mxu0
        %5449 = vmatprep.mubr.f32.mxu0 %v3631
        %5450 = vmatmul.mubr.f32.gmra.mxu0 %v3630
        %v5451 = vpop.f32.mrf.mxu0
        %v5452 = vadd.f32 %v5287, %v5451
        %v5453 = vpop.f32.mrf.mxu0
        %5454 = vmatprep.mubr.f32.mxu0 %v3650
        %5455 = vmatmul.mubr.f32.gmra.mxu0 %v3649
        %v5456 = vpop.f32.mrf.mxu0
        %v5457 = vadd.f32 %v5292, %v5456
        %v5458 = vpop.f32.mrf.mxu0
        %5459 = vmatprep.mubr.f32.mxu0 %v3669
        %5460 = vmatmul.mubr.f32.gmra.mxu0 %v3668
        %v5461 = vpop.f32.mrf.mxu0
        %v5462 = vadd.f32 %v5297, %v5461
        %v5463 = vpop.f32.mrf.mxu0
        %5464 = vmatprep.mubr.f32.mxu0 %v3688
        %5465 = vmatmul.mubr.f32.gmra.mxu0 %v3687
        %v5466 = vpop.f32.mrf.mxu0
        %v5467 = vadd.f32 %v5302, %v5466
        %v5468 = vpop.f32.mrf.mxu0
        %5469 = vmatprep.mubr.f32.mxu0 %v3707
        %5470 = vmatmul.mubr.f32.gmra.mxu0 %v3706
        %v5471 = vpop.f32.mrf.mxu0
        %v5472 = vadd.f32 %v5307, %v5471
        %v5473 = vpop.f32.mrf.mxu0
        %5474 = vmatprep.mubr.f32.mxu0 %v3726
        %5475 = vmatmul.mubr.f32.gmra.mxu0 %v3725
        %v5476 = vpop.f32.mrf.mxu0
        %v5477 = vadd.f32 %v5312, %v5476
        %v5478 = vpop.f32.mrf.mxu0
        %5479 = vmatprep.mubr.f32.mxu0 %v3745
        %5480 = vmatmul.mubr.f32.gmra.mxu0 %v3744
        %v5481 = vpop.f32.mrf.mxu0
        %v5482 = vadd.f32 %v5317, %v5481
        %v5483 = vpop.f32.mrf.mxu0
        %5484 = vmatprep.mubr.f32.mxu0 %v3764
        %5485 = vmatmul.mubr.f32.gmra.mxu0 %v3763
        %v5486 = vpop.f32.mrf.mxu0
        %v5487 = vadd.f32 %v5322, %v5486
        %v5488 = vpop.f32.mrf.mxu0
        %5489 = vmatprep.mubr.f32.mxu0 %v3783
        %5490 = vmatmul.mubr.f32.gmra.mxu0 %v3782
        %v5491 = vpop.f32.mrf.mxu0
        %v5492 = vadd.f32 %v5327, %v5491
        %v5493 = vpop.f32.mrf.mxu0
        %5494 = vmatprep.mubr.f32.mxu0 %v3802
        %5495 = vmatmul.mubr.f32.gmra.mxu0 %v3801
        %v5496 = vpop.f32.mrf.mxu0
        %v5497 = vadd.f32 %v5332, %v5496
        %v5498 = vpop.f32.mrf.mxu0
        %5499 = vmatprep.mubr.f32.mxu0 %v3821
        %5500 = vmatmul.mubr.f32.gmra.mxu0 %v3820
        %v5501 = vpop.f32.mrf.mxu0
        %v5502 = vadd.f32 %v5337, %v5501
        %v5503 = vpop.f32.mrf.mxu0
        %5504 = vmatprep.mubr.f32.mxu0 %v3840
        %5505 = vmatmul.mubr.f32.gmra.mxu0 %v3839
        %v5506 = vpop.f32.mrf.mxu0
        %v5507 = vadd.f32 %v5342, %v5506
        %v5508 = vpop.f32.mrf.mxu0
        %5509 = vmatprep.mubr.f32.mxu0 %v3859
        %5510 = vmatmul.mubr.f32.gmra.mxu0 %v3858
        %v5511 = vpop.f32.mrf.mxu0
        %v5512 = vadd.f32 %v5347, %v5511
        %v5513 = vpop.f32.mrf.mxu0
        %5514 = vmatprep.mubr.f32.mxu0 %v3878
        %5515 = vmatmul.mubr.f32.gmra.mxu0 %v3877
        %v5516 = vpop.f32.mrf.mxu0
        %v5517 = vadd.f32 %v5352, %v5516
        %v5518 = vpop.f32.mrf.mxu0
        %5519 = vdwg.mxu0
        %5520 = vmatprep.subr.mxu0 0.0
        %5521 = vmatpush1.msra.mxu0 %v4123
        %5522 = vmatprep.subr.mxu0 0.0
        %5523 = vmatpush1.msra.mxu0 %v4122
        %5524 = vmatprep.subr.mxu0 0.0
        %5525 = vmatpush1.msra.mxu0 %v4121
        %5526 = vmatprep.subr.mxu0 0.0
        %5527 = vmatpush1.msra.mxu0 %v4120
        %5528 = vmatprep.subr.mxu0 0.0
        %5529 = vmatpush1.msra.mxu0 %v4119
        %5530 = vmatprep.subr.mxu0 0.0
        %5531 = vmatpush1.msra.mxu0 %v4118
        %5532 = vmatprep.subr.mxu0 0.0
        %5533 = vmatpush1.msra.mxu0 %v4117
        %5534 = vmatprep.subr.mxu0 0.0
        %5535 = vmatpush1.msra.mxu0 %v4116
        %5536 = vmatprep.subr.mxu0 0.0
        %5537 = vmatpush1.msra.mxu0 %v4115
        %5538 = vmatprep.subr.mxu0 0.0
        %5539 = vmatpush1.msra.mxu0 %v4114
        %5540 = vmatprep.subr.mxu0 0.0
        %5541 = vmatpush1.msra.mxu0 %v4113
        %5542 = vmatprep.subr.mxu0 0.0
        %5543 = vmatpush1.msra.mxu0 %v4112
        %5544 = vmatprep.subr.mxu0 0.0
        %5545 = vmatpush1.msra.mxu0 %v4111
        %5546 = vmatprep.subr.mxu0 0.0
        %5547 = vmatpush1.msra.mxu0 %v4110
        %5548 = vmatprep.subr.mxu0 0.0
        %5549 = vmatpush1.msra.mxu0 %v4109
        %5550 = vmatprep.subr.mxu0 0.0
        %5551 = vmatpush1.msra.mxu0 %v4108
        %5552 = vmatprep.subr.mxu0 0.0
        %5553 = vmatpush2.msra.mxu0 %v4139
        %5554 = vmatprep.subr.mxu0 0.0
        %5555 = vmatpush2.msra.mxu0 %v4138
        %5556 = vmatprep.subr.mxu0 0.0
        %5557 = vmatpush2.msra.mxu0 %v4137
        %5558 = vmatprep.subr.mxu0 0.0
        %5559 = vmatpush2.msra.mxu0 %v4136
        %5560 = vmatprep.subr.mxu0 0.0
        %5561 = vmatpush2.msra.mxu0 %v4135
        %5562 = vmatprep.subr.mxu0 0.0
        %5563 = vmatpush2.msra.mxu0 %v4134
        %5564 = vmatprep.subr.mxu0 0.0
        %5565 = vmatpush2.msra.mxu0 %v4133
        %5566 = vmatprep.subr.mxu0 0.0
        %5567 = vmatpush2.msra.mxu0 %v4132
        %5568 = vmatprep.subr.mxu0 0.0
        %5569 = vmatpush2.msra.mxu0 %v4131
        %5570 = vmatprep.subr.mxu0 0.0
        %5571 = vmatpush2.msra.mxu0 %v4130
        %5572 = vmatprep.subr.mxu0 0.0
        %5573 = vmatpush2.msra.mxu0 %v4129
        %5574 = vmatprep.subr.mxu0 0.0
        %5575 = vmatpush2.msra.mxu0 %v4128
        %5576 = vmatprep.subr.mxu0 0.0
        %5577 = vmatpush2.msra.mxu0 %v4127
        %5578 = vmatprep.subr.mxu0 0.0
        %5579 = vmatpush2.msra.mxu0 %v4126
        %5580 = vmatprep.subr.mxu0 0.0
        %5581 = vmatpush2.msra.mxu0 %v4125
        %5582 = vmatprep.subr.mxu0 0.0
        %5583 = vmatpush2.msra.mxu0 %v4124
        %5584 = vmatprep.mubr.f32.mxu0 %v3519
        %5585 = vmatmul.mubr.f32.gmra.mxu0 %v3518
        %v5586 = vpop.f32.mrf.mxu0
        %v5587 = vadd.f32 %v5422, %v5586
        %v5588 = vpop.f32.mrf.mxu0
        %5589 = vmatprep.mubr.f32.mxu0 %v3538
        %5590 = vmatmul.mubr.f32.gmra.mxu0 %v3537
        %v5591 = vpop.f32.mrf.mxu0
        %v5592 = vadd.f32 %v5427, %v5591
        %v5593 = vpop.f32.mrf.mxu0
        %5594 = vmatprep.mubr.f32.mxu0 %v3557
        %5595 = vmatmul.mubr.f32.gmra.mxu0 %v3556
        %v5596 = vpop.f32.mrf.mxu0
        %v5597 = vadd.f32 %v5432, %v5596
        %v5598 = vpop.f32.mrf.mxu0
        %5599 = vmatprep.mubr.f32.mxu0 %v3576
        %5600 = vmatmul.mubr.f32.gmra.mxu0 %v3575
        %v5601 = vpop.f32.mrf.mxu0
        %v5602 = vadd.f32 %v5437, %v5601
        %v5603 = vpop.f32.mrf.mxu0
        %5604 = vmatprep.mubr.f32.mxu0 %v3595
        %5605 = vmatmul.mubr.f32.gmra.mxu0 %v3594
        %v5606 = vpop.f32.mrf.mxu0
        %v5607 = vadd.f32 %v5442, %v5606
        %v5608 = vpop.f32.mrf.mxu0
        %5609 = vmatprep.mubr.f32.mxu0 %v3614
        %5610 = vmatmul.mubr.f32.gmra.mxu0 %v3613
        %v5611 = vpop.f32.mrf.mxu0
        %v5612 = vadd.f32 %v5447, %v5611
        %v5613 = vpop.f32.mrf.mxu0
        %5614 = vmatprep.mubr.f32.mxu0 %v3633
        %5615 = vmatmul.mubr.f32.gmra.mxu0 %v3632
        %v5616 = vpop.f32.mrf.mxu0
        %v5617 = vadd.f32 %v5452, %v5616
        %v5618 = vpop.f32.mrf.mxu0
        %5619 = vmatprep.mubr.f32.mxu0 %v3652
        %5620 = vmatmul.mubr.f32.gmra.mxu0 %v3651
        %v5621 = vpop.f32.mrf.mxu0
        %v5622 = vadd.f32 %v5457, %v5621
        %v5623 = vpop.f32.mrf.mxu0
        %5624 = vmatprep.mubr.f32.mxu0 %v3671
        %5625 = vmatmul.mubr.f32.gmra.mxu0 %v3670
        %v5626 = vpop.f32.mrf.mxu0
        %v5627 = vadd.f32 %v5462, %v5626
        %v5628 = vpop.f32.mrf.mxu0
        %5629 = vmatprep.mubr.f32.mxu0 %v3690
        %5630 = vmatmul.mubr.f32.gmra.mxu0 %v3689
        %v5631 = vpop.f32.mrf.mxu0
        %v5632 = vadd.f32 %v5467, %v5631
        %v5633 = vpop.f32.mrf.mxu0
        %5634 = vmatprep.mubr.f32.mxu0 %v3709
        %5635 = vmatmul.mubr.f32.gmra.mxu0 %v3708
        %v5636 = vpop.f32.mrf.mxu0
        %v5637 = vadd.f32 %v5472, %v5636
        %v5638 = vpop.f32.mrf.mxu0
        %5639 = vmatprep.mubr.f32.mxu0 %v3728
        %5640 = vmatmul.mubr.f32.gmra.mxu0 %v3727
        %v5641 = vpop.f32.mrf.mxu0
        %v5642 = vadd.f32 %v5477, %v5641
        %v5643 = vpop.f32.mrf.mxu0
        %5644 = vmatprep.mubr.f32.mxu0 %v3747
        %5645 = vmatmul.mubr.f32.gmra.mxu0 %v3746
        %v5646 = vpop.f32.mrf.mxu0
        %v5647 = vadd.f32 %v5482, %v5646
        %v5648 = vpop.f32.mrf.mxu0
        %5649 = vmatprep.mubr.f32.mxu0 %v3766
        %5650 = vmatmul.mubr.f32.gmra.mxu0 %v3765
        %v5651 = vpop.f32.mrf.mxu0
        %v5652 = vadd.f32 %v5487, %v5651
        %v5653 = vpop.f32.mrf.mxu0
        %5654 = vmatprep.mubr.f32.mxu0 %v3785
        %5655 = vmatmul.mubr.f32.gmra.mxu0 %v3784
        %v5656 = vpop.f32.mrf.mxu0
        %v5657 = vadd.f32 %v5492, %v5656
        %v5658 = vpop.f32.mrf.mxu0
        %5659 = vmatprep.mubr.f32.mxu0 %v3804
        %5660 = vmatmul.mubr.f32.gmra.mxu0 %v3803
        %v5661 = vpop.f32.mrf.mxu0
        %v5662 = vadd.f32 %v5497, %v5661
        %v5663 = vpop.f32.mrf.mxu0
        %5664 = vmatprep.mubr.f32.mxu0 %v3823
        %5665 = vmatmul.mubr.f32.gmra.mxu0 %v3822
        %v5666 = vpop.f32.mrf.mxu0
        %v5667 = vadd.f32 %v5502, %v5666
        %v5668 = vpop.f32.mrf.mxu0
        %5669 = vmatprep.mubr.f32.mxu0 %v3842
        %5670 = vmatmul.mubr.f32.gmra.mxu0 %v3841
        %v5671 = vpop.f32.mrf.mxu0
        %v5672 = vadd.f32 %v5507, %v5671
        %v5673 = vpop.f32.mrf.mxu0
        %5674 = vmatprep.mubr.f32.mxu0 %v3861
        %5675 = vmatmul.mubr.f32.gmra.mxu0 %v3860
        %v5676 = vpop.f32.mrf.mxu0
        %v5677 = vadd.f32 %v5512, %v5676
        %v5678 = vpop.f32.mrf.mxu0
        %5679 = vmatprep.mubr.f32.mxu0 %v3880
        %5680 = vmatmul.mubr.f32.gmra.mxu0 %v3879
        %v5681 = vpop.f32.mrf.mxu0
        %v5682 = vadd.f32 %v5517, %v5681
        %v5683 = vpop.f32.mrf.mxu0
        %5684 = vdwg.mxu0
        %5685 = vmatprep.subr.mxu0 0.0
        %5686 = vmatpush1.msra.mxu0 %v4155
        %5687 = vmatprep.subr.mxu0 0.0
        %5688 = vmatpush1.msra.mxu0 %v4154
        %5689 = vmatprep.subr.mxu0 0.0
        %5690 = vmatpush1.msra.mxu0 %v4153
        %5691 = vmatprep.subr.mxu0 0.0
        %5692 = vmatpush1.msra.mxu0 %v4152
        %5693 = vmatprep.subr.mxu0 0.0
        %5694 = vmatpush1.msra.mxu0 %v4151
        %5695 = vmatprep.subr.mxu0 0.0
        %5696 = vmatpush1.msra.mxu0 %v4150
        %5697 = vmatprep.subr.mxu0 0.0
        %5698 = vmatpush1.msra.mxu0 %v4149
        %5699 = vmatprep.subr.mxu0 0.0
        %5700 = vmatpush1.msra.mxu0 %v4148
        %5701 = vmatprep.subr.mxu0 0.0
        %5702 = vmatpush1.msra.mxu0 %v4147
        %5703 = vmatprep.subr.mxu0 0.0
        %5704 = vmatpush1.msra.mxu0 %v4146
        %5705 = vmatprep.subr.mxu0 0.0
        %5706 = vmatpush1.msra.mxu0 %v4145
        %5707 = vmatprep.subr.mxu0 0.0
        %5708 = vmatpush1.msra.mxu0 %v4144
        %5709 = vmatprep.subr.mxu0 0.0
        %5710 = vmatpush1.msra.mxu0 %v4143
        %5711 = vmatprep.subr.mxu0 0.0
        %5712 = vmatpush1.msra.mxu0 %v4142
        %5713 = vmatprep.subr.mxu0 0.0
        %5714 = vmatpush1.msra.mxu0 %v4141
        %5715 = vmatprep.subr.mxu0 0.0
        %5716 = vmatpush1.msra.mxu0 %v4140
        %5717 = vmatprep.subr.mxu0 0.0
        %5718 = vmatpush2.msra.mxu0 %v4171
        %5719 = vmatprep.subr.mxu0 0.0
        %5720 = vmatpush2.msra.mxu0 %v4170
        %5721 = vmatprep.subr.mxu0 0.0
        %5722 = vmatpush2.msra.mxu0 %v4169
        %5723 = vmatprep.subr.mxu0 0.0
        %5724 = vmatpush2.msra.mxu0 %v4168
        %5725 = vmatprep.subr.mxu0 0.0
        %5726 = vmatpush2.msra.mxu0 %v4167
        %5727 = vmatprep.subr.mxu0 0.0
        %5728 = vmatpush2.msra.mxu0 %v4166
        %5729 = vmatprep.subr.mxu0 0.0
        %5730 = vmatpush2.msra.mxu0 %v4165
        %5731 = vmatprep.subr.mxu0 0.0
        %5732 = vmatpush2.msra.mxu0 %v4164
        %5733 = vmatprep.subr.mxu0 0.0
        %5734 = vmatpush2.msra.mxu0 %v4163
        %5735 = vmatprep.subr.mxu0 0.0
        %5736 = vmatpush2.msra.mxu0 %v4162
        %5737 = vmatprep.subr.mxu0 0.0
        %5738 = vmatpush2.msra.mxu0 %v4161
        %5739 = vmatprep.subr.mxu0 0.0
        %5740 = vmatpush2.msra.mxu0 %v4160
        %5741 = vmatprep.subr.mxu0 0.0
        %5742 = vmatpush2.msra.mxu0 %v4159
        %5743 = vmatprep.subr.mxu0 0.0
        %5744 = vmatpush2.msra.mxu0 %v4158
        %5745 = vmatprep.subr.mxu0 0.0
        %5746 = vmatpush2.msra.mxu0 %v4157
        %5747 = vmatprep.subr.mxu0 0.0
        %5748 = vmatpush2.msra.mxu0 %v4156
        %5749 = vmatprep.mubr.f32.mxu0 %v3521
        %5750 = vmatmul.mubr.f32.gmra.mxu0 %v3520
        %v5751 = vpop.f32.mrf.mxu0
        %v5752 = vadd.f32 %v5587, %v5751
        %v5753 = vpop.f32.mrf.mxu0
        %5754 = vmatprep.mubr.f32.mxu0 %v3540
        %5755 = vmatmul.mubr.f32.gmra.mxu0 %v3539
        %v5756 = vpop.f32.mrf.mxu0
        %v5757 = vadd.f32 %v5592, %v5756
        %v5758 = vpop.f32.mrf.mxu0
        %5759 = vmatprep.mubr.f32.mxu0 %v3559
        %5760 = vmatmul.mubr.f32.gmra.mxu0 %v3558
        %v5761 = vpop.f32.mrf.mxu0
        %v5762 = vadd.f32 %v5597, %v5761
        %v5763 = vpop.f32.mrf.mxu0
        %5764 = vmatprep.mubr.f32.mxu0 %v3578
        %5765 = vmatmul.mubr.f32.gmra.mxu0 %v3577
        %v5766 = vpop.f32.mrf.mxu0
        %v5767 = vadd.f32 %v5602, %v5766
        %v5768 = vpop.f32.mrf.mxu0
        %5769 = vmatprep.mubr.f32.mxu0 %v3597
        %5770 = vmatmul.mubr.f32.gmra.mxu0 %v3596
        %v5771 = vpop.f32.mrf.mxu0
        %v5772 = vadd.f32 %v5607, %v5771
        %v5773 = vpop.f32.mrf.mxu0
        %5774 = vmatprep.mubr.f32.mxu0 %v3616
        %5775 = vmatmul.mubr.f32.gmra.mxu0 %v3615
        %v5776 = vpop.f32.mrf.mxu0
        %v5777 = vadd.f32 %v5612, %v5776
        %v5778 = vpop.f32.mrf.mxu0
        %5779 = vmatprep.mubr.f32.mxu0 %v3635
        %5780 = vmatmul.mubr.f32.gmra.mxu0 %v3634
        %v5781 = vpop.f32.mrf.mxu0
        %v5782 = vadd.f32 %v5617, %v5781
        %v5783 = vpop.f32.mrf.mxu0
        %5784 = vmatprep.mubr.f32.mxu0 %v3654
        %5785 = vmatmul.mubr.f32.gmra.mxu0 %v3653
        %v5786 = vpop.f32.mrf.mxu0
        %v5787 = vadd.f32 %v5622, %v5786
        %v5788 = vpop.f32.mrf.mxu0
        %5789 = vmatprep.mubr.f32.mxu0 %v3673
        %5790 = vmatmul.mubr.f32.gmra.mxu0 %v3672
        %v5791 = vpop.f32.mrf.mxu0
        %v5792 = vadd.f32 %v5627, %v5791
        %v5793 = vpop.f32.mrf.mxu0
        %5794 = vmatprep.mubr.f32.mxu0 %v3692
        %5795 = vmatmul.mubr.f32.gmra.mxu0 %v3691
        %v5796 = vpop.f32.mrf.mxu0
        %v5797 = vadd.f32 %v5632, %v5796
        %v5798 = vpop.f32.mrf.mxu0
        %5799 = vmatprep.mubr.f32.mxu0 %v3711
        %5800 = vmatmul.mubr.f32.gmra.mxu0 %v3710
        %v5801 = vpop.f32.mrf.mxu0
        %v5802 = vadd.f32 %v5637, %v5801
        %v5803 = vpop.f32.mrf.mxu0
        %5804 = vmatprep.mubr.f32.mxu0 %v3730
        %5805 = vmatmul.mubr.f32.gmra.mxu0 %v3729
        %v5806 = vpop.f32.mrf.mxu0
        %v5807 = vadd.f32 %v5642, %v5806
        %v5808 = vpop.f32.mrf.mxu0
        %5809 = vmatprep.mubr.f32.mxu0 %v3749
        %5810 = vmatmul.mubr.f32.gmra.mxu0 %v3748
        %v5811 = vpop.f32.mrf.mxu0
        %v5812 = vadd.f32 %v5647, %v5811
        %v5813 = vpop.f32.mrf.mxu0
        %5814 = vmatprep.mubr.f32.mxu0 %v3768
        %5815 = vmatmul.mubr.f32.gmra.mxu0 %v3767
        %v5816 = vpop.f32.mrf.mxu0
        %v5817 = vadd.f32 %v5652, %v5816
        %v5818 = vpop.f32.mrf.mxu0
        %5819 = vmatprep.mubr.f32.mxu0 %v3787
        %5820 = vmatmul.mubr.f32.gmra.mxu0 %v3786
        %v5821 = vpop.f32.mrf.mxu0
        %v5822 = vadd.f32 %v5657, %v5821
        %v5823 = vpop.f32.mrf.mxu0
        %5824 = vmatprep.mubr.f32.mxu0 %v3806
        %5825 = vmatmul.mubr.f32.gmra.mxu0 %v3805
        %v5826 = vpop.f32.mrf.mxu0
        %v5827 = vadd.f32 %v5662, %v5826
        %v5828 = vpop.f32.mrf.mxu0
        %5829 = vmatprep.mubr.f32.mxu0 %v3825
        %5830 = vmatmul.mubr.f32.gmra.mxu0 %v3824
        %v5831 = vpop.f32.mrf.mxu0
        %v5832 = vadd.f32 %v5667, %v5831
        %v5833 = vpop.f32.mrf.mxu0
        %5834 = vmatprep.mubr.f32.mxu0 %v3844
        %5835 = vmatmul.mubr.f32.gmra.mxu0 %v3843
        %v5836 = vpop.f32.mrf.mxu0
        %v5837 = vadd.f32 %v5672, %v5836
        %v5838 = vpop.f32.mrf.mxu0
        %5839 = vmatprep.mubr.f32.mxu0 %v3863
        %5840 = vmatmul.mubr.f32.gmra.mxu0 %v3862
        %v5841 = vpop.f32.mrf.mxu0
        %v5842 = vadd.f32 %v5677, %v5841
        %v5843 = vpop.f32.mrf.mxu0
        %5844 = vmatprep.mubr.f32.mxu0 %v3882
        %5845 = vmatmul.mubr.f32.gmra.mxu0 %v3881
        %v5846 = vpop.f32.mrf.mxu0
        %v5847 = vadd.f32 %v5682, %v5846
        %v5848 = vpop.f32.mrf.mxu0
        %5849 = vdwg.mxu0
        %5850 = vmatprep.subr.mxu0 0.0
        %5851 = vmatpush1.msra.mxu0 0.0
        %5852 = vmatprep.subr.mxu0 0.0
        %5853 = vmatpush1.msra.mxu0 0.0
        %5854 = vmatprep.subr.mxu0 0.0
        %5855 = vmatpush1.msra.mxu0 0.0
        %5856 = vmatprep.subr.mxu0 0.0
        %5857 = vmatpush1.msra.mxu0 0.0
        %5858 = vmatprep.subr.mxu0 0.0
        %5859 = vmatpush1.msra.mxu0 %v4183
        %5860 = vmatprep.subr.mxu0 0.0
        %5861 = vmatpush1.msra.mxu0 %v4182
        %5862 = vmatprep.subr.mxu0 0.0
        %5863 = vmatpush1.msra.mxu0 %v4181
        %5864 = vmatprep.subr.mxu0 0.0
        %5865 = vmatpush1.msra.mxu0 %v4180
        %5866 = vmatprep.subr.mxu0 0.0
        %5867 = vmatpush1.msra.mxu0 %v4179
        %5868 = vmatprep.subr.mxu0 0.0
        %5869 = vmatpush1.msra.mxu0 %v4178
        %5870 = vmatprep.subr.mxu0 0.0
        %5871 = vmatpush1.msra.mxu0 %v4177
        %5872 = vmatprep.subr.mxu0 0.0
        %5873 = vmatpush1.msra.mxu0 %v4176
        %5874 = vmatprep.subr.mxu0 0.0
        %5875 = vmatpush1.msra.mxu0 %v4175
        %5876 = vmatprep.subr.mxu0 0.0
        %5877 = vmatpush1.msra.mxu0 %v4174
        %5878 = vmatprep.subr.mxu0 0.0
        %5879 = vmatpush1.msra.mxu0 %v4173
        %5880 = vmatprep.subr.mxu0 0.0
        %5881 = vmatpush1.msra.mxu0 %v4172
        %5882 = vmatprep.subr.mxu0 0.0
        %5883 = vmatpush2.msra.mxu0 0.0
        %5884 = vmatprep.subr.mxu0 0.0
        %5885 = vmatpush2.msra.mxu0 0.0
        %5886 = vmatprep.subr.mxu0 0.0
        %5887 = vmatpush2.msra.mxu0 0.0
        %5888 = vmatprep.subr.mxu0 0.0
        %5889 = vmatpush2.msra.mxu0 0.0
        %5890 = vmatprep.subr.mxu0 0.0
        %5891 = vmatpush2.msra.mxu0 0.0
        %5892 = vmatprep.subr.mxu0 0.0
        %5893 = vmatpush2.msra.mxu0 0.0
        %5894 = vmatprep.subr.mxu0 0.0
        %5895 = vmatpush2.msra.mxu0 0.0
        %5896 = vmatprep.subr.mxu0 0.0
        %5897 = vmatpush2.msra.mxu0 0.0
        %5898 = vmatprep.subr.mxu0 0.0
        %5899 = vmatpush2.msra.mxu0 0.0
        %5900 = vmatprep.subr.mxu0 0.0
        %5901 = vmatpush2.msra.mxu0 0.0
        %5902 = vmatprep.subr.mxu0 0.0
        %5903 = vmatpush2.msra.mxu0 0.0
        %5904 = vmatprep.subr.mxu0 0.0
        %5905 = vmatpush2.msra.mxu0 0.0
        %5906 = vmatprep.subr.mxu0 0.0
        %5907 = vmatpush2.msra.mxu0 0.0
        %5908 = vmatprep.subr.mxu0 0.0
        %5909 = vmatpush2.msra.mxu0 0.0
        %5910 = vmatprep.subr.mxu0 0.0
        %5911 = vmatpush2.msra.mxu0 0.0
        %5912 = vmatprep.subr.mxu0 0.0
        %5913 = vmatpush2.msra.mxu0 0.0
        %5914 = vmatprep.mubr.f32.mxu0 0.0
        %5915 = vmatmul.mubr.f32.gmra.mxu0 %v4306
        %v5916 = vpop.f32.mrf.mxu0
        %v5917 = vadd.f32 %v5752, %v5916
        %v5918 = vpop.f32.mrf.mxu0
        %5919 = vmatprep.mubr.f32.mxu0 0.0
        %5920 = vmatmul.mubr.f32.gmra.mxu0 %v4309
        %v5921 = vpop.f32.mrf.mxu0
        %v5922 = vadd.f32 %v5757, %v5921
        %v5923 = vpop.f32.mrf.mxu0
        %5924 = vmatprep.mubr.f32.mxu0 0.0
        %5925 = vmatmul.mubr.f32.gmra.mxu0 %v4312
        %v5926 = vpop.f32.mrf.mxu0
        %v5927 = vadd.f32 %v5762, %v5926
        %v5928 = vpop.f32.mrf.mxu0
        %5929 = vmatprep.mubr.f32.mxu0 0.0
        %5930 = vmatmul.mubr.f32.gmra.mxu0 %v4315
        %v5931 = vpop.f32.mrf.mxu0
        %v5932 = vadd.f32 %v5767, %v5931
        %v5933 = vpop.f32.mrf.mxu0
        %5934 = vmatprep.mubr.f32.mxu0 0.0
        %5935 = vmatmul.mubr.f32.gmra.mxu0 %v4318
        %v5936 = vpop.f32.mrf.mxu0
        %v5937 = vadd.f32 %v5772, %v5936
        %v5938 = vpop.f32.mrf.mxu0
        %5939 = vmatprep.mubr.f32.mxu0 0.0
        %5940 = vmatmul.mubr.f32.gmra.mxu0 %v4321
        %v5941 = vpop.f32.mrf.mxu0
        %v5942 = vadd.f32 %v5777, %v5941
        %v5943 = vpop.f32.mrf.mxu0
        %5944 = vmatprep.mubr.f32.mxu0 0.0
        %5945 = vmatmul.mubr.f32.gmra.mxu0 %v4324
        %v5946 = vpop.f32.mrf.mxu0
        %v5947 = vadd.f32 %v5782, %v5946
        %v5948 = vpop.f32.mrf.mxu0
        %5949 = vmatprep.mubr.f32.mxu0 0.0
        %5950 = vmatmul.mubr.f32.gmra.mxu0 %v4327
        %v5951 = vpop.f32.mrf.mxu0
        %v5952 = vadd.f32 %v5787, %v5951
        %v5953 = vpop.f32.mrf.mxu0
        %5954 = vmatprep.mubr.f32.mxu0 0.0
        %5955 = vmatmul.mubr.f32.gmra.mxu0 %v4330
        %v5956 = vpop.f32.mrf.mxu0
        %v5957 = vadd.f32 %v5792, %v5956
        %v5958 = vpop.f32.mrf.mxu0
        %5959 = vmatprep.mubr.f32.mxu0 0.0
        %5960 = vmatmul.mubr.f32.gmra.mxu0 %v4333
        %v5961 = vpop.f32.mrf.mxu0
        %v5962 = vadd.f32 %v5797, %v5961
        %v5963 = vpop.f32.mrf.mxu0
        %5964 = vmatprep.mubr.f32.mxu0 0.0
        %5965 = vmatmul.mubr.f32.gmra.mxu0 %v4336
        %v5966 = vpop.f32.mrf.mxu0
        %v5967 = vadd.f32 %v5802, %v5966
        %v5968 = vpop.f32.mrf.mxu0
        %5969 = vmatprep.mubr.f32.mxu0 0.0
        %5970 = vmatmul.mubr.f32.gmra.mxu0 %v4339
        %v5971 = vpop.f32.mrf.mxu0
        %v5972 = vadd.f32 %v5807, %v5971
        %v5973 = vpop.f32.mrf.mxu0
        %5974 = vmatprep.mubr.f32.mxu0 0.0
        %5975 = vmatmul.mubr.f32.gmra.mxu0 %v4342
        %v5976 = vpop.f32.mrf.mxu0
        %v5977 = vadd.f32 %v5812, %v5976
        %v5978 = vpop.f32.mrf.mxu0
        %5979 = vmatprep.mubr.f32.mxu0 0.0
        %5980 = vmatmul.mubr.f32.gmra.mxu0 %v4345
        %v5981 = vpop.f32.mrf.mxu0
        %v5982 = vadd.f32 %v5817, %v5981
        %v5983 = vpop.f32.mrf.mxu0
        %5984 = vmatprep.mubr.f32.mxu0 0.0
        %5985 = vmatmul.mubr.f32.gmra.mxu0 %v4348
        %v5986 = vpop.f32.mrf.mxu0
        %v5987 = vadd.f32 %v5822, %v5986
        %v5988 = vpop.f32.mrf.mxu0
        %5989 = vmatprep.mubr.f32.mxu0 0.0
        %5990 = vmatmul.mubr.f32.gmra.mxu0 %v4351
        %v5991 = vpop.f32.mrf.mxu0
        %v5992 = vadd.f32 %v5827, %v5991
        %v5993 = vpop.f32.mrf.mxu0
        %5994 = vmatprep.mubr.f32.mxu0 0.0
        %5995 = vmatmul.mubr.f32.gmra.mxu0 %v4354
        %v5996 = vpop.f32.mrf.mxu0
        %v5997 = vadd.f32 %v5832, %v5996
        %v5998 = vpop.f32.mrf.mxu0
        %5999 = vmatprep.mubr.f32.mxu0 0.0
        %6000 = vmatmul.mubr.f32.gmra.mxu0 %v4357
        %v6001 = vpop.f32.mrf.mxu0
        %v6002 = vadd.f32 %v5837, %v6001
        %v6003 = vpop.f32.mrf.mxu0
        %6004 = vmatprep.mubr.f32.mxu0 0.0
        %6005 = vmatmul.mubr.f32.gmra.mxu0 %v4360
        %v6006 = vpop.f32.mrf.mxu0
        %v6007 = vadd.f32 %v5842, %v6006
        %v6008 = vpop.f32.mrf.mxu0
        %6009 = vmatprep.mubr.f32.mxu0 0.0
        %6010 = vmatmul.mubr.f32.gmra.mxu0 %v4363
        %v6011 = vpop.f32.mrf.mxu0
        %v6012 = vadd.f32 %v5847, %v6011
        %v6013 = vpop.f32.mrf.mxu0
        %6014 = vdwg.mxu0
        %v6016 = vsel %vm2731, %v5917, 0
        %v6019 = vsel %vm2731, %v5922, 0
        %v6022 = vsel %vm2731, %v5927, 0
        %v6025 = vsel %vm2731, %v5932, 0
        %v6028 = vsel %vm2731, %v5937, 0
        %v6031 = vsel %vm2731, %v5942, 0
        %v6034 = vsel %vm2731, %v5947, 0
        %v6037 = vsel %vm2731, %v5952, 0
        %v6040 = vsel %vm2731, %v5957, 0
        %v6043 = vsel %vm2731, %v5962, 0
        %v6046 = vsel %vm2731, %v5967, 0
        %v6049 = vsel %vm2731, %v5972, 0
        %v6052 = vsel %vm2731, %v5977, 0
        %v6055 = vsel %vm2731, %v5982, 0
        %v6058 = vsel %vm2731, %v5987, 0
        %v6061 = vsel %vm2731, %v5992, 0
        %v6064 = vsel %vm2731, %v5997, 0
        %v6067 = vsel %vm2731, %v6002, 0
        %v6070 = vsel %vm2731, %v6007, 0
        %v6073 = vsel %vm2731, %v6012, 0
        %vm6075 = vcmask 1041408
        %v6077 = vsel %vm6075, %v1841, 0
        %6079 = vmatprep.subr.mxu0 0.0
        %6080 = vmatpush1.msra.mxu0 0.0
        %6081 = vmatprep.subr.mxu0 0.0
        %6082 = vmatpush1.msra.mxu0 0.0
        %6083 = vmatprep.subr.mxu0 0.0
        %6084 = vmatpush1.msra.mxu0 0.0
        %6085 = vmatprep.subr.mxu0 0.0
        %6086 = vmatpush1.msra.mxu0 0.0
        %6087 = vmatprep.subr.mxu0 0.0
        %6088 = vmatpush1.msra.mxu0 0.0
        %6089 = vmatprep.subr.mxu0 0.0
        %6090 = vmatpush1.msra.mxu0 0.0
        %6091 = vmatprep.subr.mxu0 0.0
        %6092 = vmatpush1.msra.mxu0 0.0
        %6093 = vmatprep.subr.mxu0 0.0
        %6094 = vmatpush1.msra.mxu0 0.0
        %6095 = vmatprep.subr.mxu0 0.0
        %6096 = vmatpush1.msra.mxu0 0.0
        %6097 = vmatprep.subr.mxu0 0.0
        %6098 = vmatpush1.msra.mxu0 0.0
        %6099 = vmatprep.subr.mxu0 0.0
        %6100 = vmatpush1.msra.mxu0 0.0
        %6101 = vmatprep.subr.mxu0 0.0
        %6102 = vmatpush1.msra.mxu0 0.0
        %6103 = vmatprep.subr.mxu0 0.0
        %6104 = vmatpush1.msra.mxu0 0.0
        %6105 = vmatprep.subr.mxu0 0.0
        %6106 = vmatpush1.msra.mxu0 0.0
        %6107 = vmatprep.subr.mxu0 0.0
        %6108 = vmatpush1.msra.mxu0 %v6077
        %6109 = vmatprep.subr.mxu0 0.0
        %6110 = vmatpush1.msra.mxu0 %v1840
        %6111 = vmatprep.subr.mxu0 0.0
        %6112 = vmatpush2.msra.mxu0 0.0
        %6113 = vmatprep.subr.mxu0 0.0
        %6114 = vmatpush2.msra.mxu0 0.0
        %6115 = vmatprep.subr.mxu0 0.0
        %6116 = vmatpush2.msra.mxu0 0.0
        %6117 = vmatprep.subr.mxu0 0.0
        %6118 = vmatpush2.msra.mxu0 0.0
        %6119 = vmatprep.subr.mxu0 0.0
        %6120 = vmatpush2.msra.mxu0 0.0
        %6121 = vmatprep.subr.mxu0 0.0
        %6122 = vmatpush2.msra.mxu0 0.0
        %6123 = vmatprep.subr.mxu0 0.0
        %6124 = vmatpush2.msra.mxu0 0.0
        %6125 = vmatprep.subr.mxu0 0.0
        %6126 = vmatpush2.msra.mxu0 0.0
        %6127 = vmatprep.subr.mxu0 0.0
        %6128 = vmatpush2.msra.mxu0 0.0
        %6129 = vmatprep.subr.mxu0 0.0
        %6130 = vmatpush2.msra.mxu0 0.0
        %6131 = vmatprep.subr.mxu0 0.0
        %6132 = vmatpush2.msra.mxu0 0.0
        %6133 = vmatprep.subr.mxu0 0.0
        %6134 = vmatpush2.msra.mxu0 0.0
        %6135 = vmatprep.subr.mxu0 0.0
        %6136 = vmatpush2.msra.mxu0 0.0
        %6137 = vmatprep.subr.mxu0 0.0
        %6138 = vmatpush2.msra.mxu0 0.0
        %6139 = vmatprep.subr.mxu0 0.0
        %6140 = vmatpush2.msra.mxu0 0.0
        %6141 = vmatprep.subr.mxu0 0.0
        %6142 = vmatpush2.msra.mxu0 0.0
        %6143 = vmatprep.mubr.f32.mxu0 0.0
        %6144 = vmatmul.mubr.f32.gmra.mxu0 %v6016
        %v6145 = vpop.f32.mrf.mxu0
        %v6146 = vadd.f32 0.0, %v6145
        %v6147 = vpop.f32.mrf.mxu0
        %6148 = vmatprep.mubr.f32.mxu0 0.0
        %6149 = vmatmul.mubr.f32.gmra.mxu0 %v6019
        %v6150 = vpop.f32.mrf.mxu0
        %v6151 = vadd.f32 0.0, %v6150
        %v6152 = vpop.f32.mrf.mxu0
        %6153 = vmatprep.mubr.f32.mxu0 0.0
        %6154 = vmatmul.mubr.f32.gmra.mxu0 %v6022
        %v6155 = vpop.f32.mrf.mxu0
        %v6156 = vadd.f32 0.0, %v6155
        %v6157 = vpop.f32.mrf.mxu0
        %6158 = vmatprep.mubr.f32.mxu0 0.0
        %6159 = vmatmul.mubr.f32.gmra.mxu0 %v6025
        %v6160 = vpop.f32.mrf.mxu0
        %v6161 = vadd.f32 0.0, %v6160
        %v6162 = vpop.f32.mrf.mxu0
        %6163 = vmatprep.mubr.f32.mxu0 0.0
        %6164 = vmatmul.mubr.f32.gmra.mxu0 %v6028
        %v6165 = vpop.f32.mrf.mxu0
        %v6166 = vadd.f32 0.0, %v6165
        %v6167 = vpop.f32.mrf.mxu0
        %6168 = vmatprep.mubr.f32.mxu0 0.0
        %6169 = vmatmul.mubr.f32.gmra.mxu0 %v6031
        %v6170 = vpop.f32.mrf.mxu0
        %v6171 = vadd.f32 0.0, %v6170
        %v6172 = vpop.f32.mrf.mxu0
        %6173 = vmatprep.mubr.f32.mxu0 0.0
        %6174 = vmatmul.mubr.f32.gmra.mxu0 %v6034
        %v6175 = vpop.f32.mrf.mxu0
        %v6176 = vadd.f32 0.0, %v6175
        %v6177 = vpop.f32.mrf.mxu0
        %6178 = vmatprep.mubr.f32.mxu0 0.0
        %6179 = vmatmul.mubr.f32.gmra.mxu0 %v6037
        %v6180 = vpop.f32.mrf.mxu0
        %v6181 = vadd.f32 0.0, %v6180
        %v6182 = vpop.f32.mrf.mxu0
        %6183 = vmatprep.mubr.f32.mxu0 0.0
        %6184 = vmatmul.mubr.f32.gmra.mxu0 %v6040
        %v6185 = vpop.f32.mrf.mxu0
        %v6186 = vadd.f32 0.0, %v6185
        %v6187 = vpop.f32.mrf.mxu0
        %6188 = vmatprep.mubr.f32.mxu0 0.0
        %6189 = vmatmul.mubr.f32.gmra.mxu0 %v6043
        %v6190 = vpop.f32.mrf.mxu0
        %v6191 = vadd.f32 0.0, %v6190
        %v6192 = vpop.f32.mrf.mxu0
        %6193 = vmatprep.mubr.f32.mxu0 0.0
        %6194 = vmatmul.mubr.f32.gmra.mxu0 %v6046
        %v6195 = vpop.f32.mrf.mxu0
        %v6196 = vadd.f32 0.0, %v6195
        %v6197 = vpop.f32.mrf.mxu0
        %6198 = vmatprep.mubr.f32.mxu0 0.0
        %6199 = vmatmul.mubr.f32.gmra.mxu0 %v6049
        %v6200 = vpop.f32.mrf.mxu0
        %v6201 = vadd.f32 0.0, %v6200
        %v6202 = vpop.f32.mrf.mxu0
        %6203 = vmatprep.mubr.f32.mxu0 0.0
        %6204 = vmatmul.mubr.f32.gmra.mxu0 %v6052
        %v6205 = vpop.f32.mrf.mxu0
        %v6206 = vadd.f32 0.0, %v6205
        %v6207 = vpop.f32.mrf.mxu0
        %6208 = vmatprep.mubr.f32.mxu0 0.0
        %6209 = vmatmul.mubr.f32.gmra.mxu0 %v6055
        %v6210 = vpop.f32.mrf.mxu0
        %v6211 = vadd.f32 0.0, %v6210
        %v6212 = vpop.f32.mrf.mxu0
        %6213 = vmatprep.mubr.f32.mxu0 0.0
        %6214 = vmatmul.mubr.f32.gmra.mxu0 %v6058
        %v6215 = vpop.f32.mrf.mxu0
        %v6216 = vadd.f32 0.0, %v6215
        %v6217 = vpop.f32.mrf.mxu0
        %6218 = vmatprep.mubr.f32.mxu0 0.0
        %6219 = vmatmul.mubr.f32.gmra.mxu0 %v6061
        %v6220 = vpop.f32.mrf.mxu0
        %v6221 = vadd.f32 0.0, %v6220
        %v6222 = vpop.f32.mrf.mxu0
        %6223 = vmatprep.mubr.f32.mxu0 0.0
        %6224 = vmatmul.mubr.f32.gmra.mxu0 %v6064
        %v6225 = vpop.f32.mrf.mxu0
        %v6226 = vadd.f32 0.0, %v6225
        %v6227 = vpop.f32.mrf.mxu0
        %6228 = vmatprep.mubr.f32.mxu0 0.0
        %6229 = vmatmul.mubr.f32.gmra.mxu0 %v6067
        %v6230 = vpop.f32.mrf.mxu0
        %v6231 = vadd.f32 0.0, %v6230
        %v6232 = vpop.f32.mrf.mxu0
        %6233 = vmatprep.mubr.f32.mxu0 0.0
        %6234 = vmatmul.mubr.f32.gmra.mxu0 %v6070
        %v6235 = vpop.f32.mrf.mxu0
        %v6236 = vadd.f32 0.0, %v6235
        %v6237 = vpop.f32.mrf.mxu0
        %6238 = vmatprep.mubr.f32.mxu0 0.0
        %6239 = vmatmul.mubr.f32.gmra.mxu0 %v6073
        %v6240 = vpop.f32.mrf.mxu0
        %v6241 = vadd.f32 0.0, %v6240
        %v6242 = vpop.f32.mrf.mxu0
        %6243 = vdwg.mxu0
        %v6245 = vsel %vm6075, %v1850, 0
        %6247 = vmatprep.subr.mxu0 0.0
        %6248 = vmatpush1.msra.mxu0 0.0
        %6249 = vmatprep.subr.mxu0 0.0
        %6250 = vmatpush1.msra.mxu0 0.0
        %6251 = vmatprep.subr.mxu0 0.0
        %6252 = vmatpush1.msra.mxu0 0.0
        %6253 = vmatprep.subr.mxu0 0.0
        %6254 = vmatpush1.msra.mxu0 0.0
        %6255 = vmatprep.subr.mxu0 0.0
        %6256 = vmatpush1.msra.mxu0 0.0
        %6257 = vmatprep.subr.mxu0 0.0
        %6258 = vmatpush1.msra.mxu0 0.0
        %6259 = vmatprep.subr.mxu0 0.0
        %6260 = vmatpush1.msra.mxu0 0.0
        %6261 = vmatprep.subr.mxu0 0.0
        %6262 = vmatpush1.msra.mxu0 0.0
        %6263 = vmatprep.subr.mxu0 0.0
        %6264 = vmatpush1.msra.mxu0 0.0
        %6265 = vmatprep.subr.mxu0 0.0
        %6266 = vmatpush1.msra.mxu0 0.0
        %6267 = vmatprep.subr.mxu0 0.0
        %6268 = vmatpush1.msra.mxu0 0.0
        %6269 = vmatprep.subr.mxu0 0.0
        %6270 = vmatpush1.msra.mxu0 0.0
        %6271 = vmatprep.subr.mxu0 0.0
        %6272 = vmatpush1.msra.mxu0 0.0
        %6273 = vmatprep.subr.mxu0 0.0
        %6274 = vmatpush1.msra.mxu0 0.0
        %6275 = vmatprep.subr.mxu0 0.0
        %6276 = vmatpush1.msra.mxu0 %v6245
        %6277 = vmatprep.subr.mxu0 0.0
        %6278 = vmatpush1.msra.mxu0 %v1849
        %6279 = vmatprep.subr.mxu0 0.0
        %6280 = vmatpush2.msra.mxu0 0.0
        %6281 = vmatprep.subr.mxu0 0.0
        %6282 = vmatpush2.msra.mxu0 0.0
        %6283 = vmatprep.subr.mxu0 0.0
        %6284 = vmatpush2.msra.mxu0 0.0
        %6285 = vmatprep.subr.mxu0 0.0
        %6286 = vmatpush2.msra.mxu0 0.0
        %6287 = vmatprep.subr.mxu0 0.0
        %6288 = vmatpush2.msra.mxu0 0.0
        %6289 = vmatprep.subr.mxu0 0.0
        %6290 = vmatpush2.msra.mxu0 0.0
        %6291 = vmatprep.subr.mxu0 0.0
        %6292 = vmatpush2.msra.mxu0 0.0
        %6293 = vmatprep.subr.mxu0 0.0
        %6294 = vmatpush2.msra.mxu0 0.0
        %6295 = vmatprep.subr.mxu0 0.0
        %6296 = vmatpush2.msra.mxu0 0.0
        %6297 = vmatprep.subr.mxu0 0.0
        %6298 = vmatpush2.msra.mxu0 0.0
        %6299 = vmatprep.subr.mxu0 0.0
        %6300 = vmatpush2.msra.mxu0 0.0
        %6301 = vmatprep.subr.mxu0 0.0
        %6302 = vmatpush2.msra.mxu0 0.0
        %6303 = vmatprep.subr.mxu0 0.0
        %6304 = vmatpush2.msra.mxu0 0.0
        %6305 = vmatprep.subr.mxu0 0.0
        %6306 = vmatpush2.msra.mxu0 0.0
        %6307 = vmatprep.subr.mxu0 0.0
        %6308 = vmatpush2.msra.mxu0 0.0
        %6309 = vmatprep.subr.mxu0 0.0
        %6310 = vmatpush2.msra.mxu0 0.0
        %6311 = vmatprep.mubr.f32.mxu0 0.0
        %6312 = vmatmul.mubr.f32.gmra.mxu0 %v6016
        %v6313 = vpop.f32.mrf.mxu0
        %v6314 = vadd.f32 0.0, %v6313
        %v6315 = vpop.f32.mrf.mxu0
        %6316 = vmatprep.mubr.f32.mxu0 0.0
        %6317 = vmatmul.mubr.f32.gmra.mxu0 %v6019
        %v6318 = vpop.f32.mrf.mxu0
        %v6319 = vadd.f32 0.0, %v6318
        %v6320 = vpop.f32.mrf.mxu0
        %6321 = vmatprep.mubr.f32.mxu0 0.0
        %6322 = vmatmul.mubr.f32.gmra.mxu0 %v6022
        %v6323 = vpop.f32.mrf.mxu0
        %v6324 = vadd.f32 0.0, %v6323
        %v6325 = vpop.f32.mrf.mxu0
        %6326 = vmatprep.mubr.f32.mxu0 0.0
        %6327 = vmatmul.mubr.f32.gmra.mxu0 %v6025
        %v6328 = vpop.f32.mrf.mxu0
        %v6329 = vadd.f32 0.0, %v6328
        %v6330 = vpop.f32.mrf.mxu0
        %6331 = vmatprep.mubr.f32.mxu0 0.0
        %6332 = vmatmul.mubr.f32.gmra.mxu0 %v6028
        %v6333 = vpop.f32.mrf.mxu0
        %v6334 = vadd.f32 0.0, %v6333
        %v6335 = vpop.f32.mrf.mxu0
        %6336 = vmatprep.mubr.f32.mxu0 0.0
        %6337 = vmatmul.mubr.f32.gmra.mxu0 %v6031
        %v6338 = vpop.f32.mrf.mxu0
        %v6339 = vadd.f32 0.0, %v6338
        %v6340 = vpop.f32.mrf.mxu0
        %6341 = vmatprep.mubr.f32.mxu0 0.0
        %6342 = vmatmul.mubr.f32.gmra.mxu0 %v6034
        %v6343 = vpop.f32.mrf.mxu0
        %v6344 = vadd.f32 0.0, %v6343
        %v6345 = vpop.f32.mrf.mxu0
        %6346 = vmatprep.mubr.f32.mxu0 0.0
        %6347 = vmatmul.mubr.f32.gmra.mxu0 %v6037
        %v6348 = vpop.f32.mrf.mxu0
        %v6349 = vadd.f32 0.0, %v6348
        %v6350 = vpop.f32.mrf.mxu0
        %6351 = vmatprep.mubr.f32.mxu0 0.0
        %6352 = vmatmul.mubr.f32.gmra.mxu0 %v6040
        %v6353 = vpop.f32.mrf.mxu0
        %v6354 = vadd.f32 0.0, %v6353
        %v6355 = vpop.f32.mrf.mxu0
        %6356 = vmatprep.mubr.f32.mxu0 0.0
        %6357 = vmatmul.mubr.f32.gmra.mxu0 %v6043
        %v6358 = vpop.f32.mrf.mxu0
        %v6359 = vadd.f32 0.0, %v6358
        %v6360 = vpop.f32.mrf.mxu0
        %6361 = vmatprep.mubr.f32.mxu0 0.0
        %6362 = vmatmul.mubr.f32.gmra.mxu0 %v6046
        %v6363 = vpop.f32.mrf.mxu0
        %v6364 = vadd.f32 0.0, %v6363
        %v6365 = vpop.f32.mrf.mxu0
        %6366 = vmatprep.mubr.f32.mxu0 0.0
        %6367 = vmatmul.mubr.f32.gmra.mxu0 %v6049
        %v6368 = vpop.f32.mrf.mxu0
        %v6369 = vadd.f32 0.0, %v6368
        %v6370 = vpop.f32.mrf.mxu0
        %6371 = vmatprep.mubr.f32.mxu0 0.0
        %6372 = vmatmul.mubr.f32.gmra.mxu0 %v6052
        %v6373 = vpop.f32.mrf.mxu0
        %v6374 = vadd.f32 0.0, %v6373
        %v6375 = vpop.f32.mrf.mxu0
        %6376 = vmatprep.mubr.f32.mxu0 0.0
        %6377 = vmatmul.mubr.f32.gmra.mxu0 %v6055
        %v6378 = vpop.f32.mrf.mxu0
        %v6379 = vadd.f32 0.0, %v6378
        %v6380 = vpop.f32.mrf.mxu0
        %6381 = vmatprep.mubr.f32.mxu0 0.0
        %6382 = vmatmul.mubr.f32.gmra.mxu0 %v6058
        %v6383 = vpop.f32.mrf.mxu0
        %v6384 = vadd.f32 0.0, %v6383
        %v6385 = vpop.f32.mrf.mxu0
        %6386 = vmatprep.mubr.f32.mxu0 0.0
        %6387 = vmatmul.mubr.f32.gmra.mxu0 %v6061
        %v6388 = vpop.f32.mrf.mxu0
        %v6389 = vadd.f32 0.0, %v6388
        %v6390 = vpop.f32.mrf.mxu0
        %6391 = vmatprep.mubr.f32.mxu0 0.0
        %6392 = vmatmul.mubr.f32.gmra.mxu0 %v6064
        %v6393 = vpop.f32.mrf.mxu0
        %v6394 = vadd.f32 0.0, %v6393
        %v6395 = vpop.f32.mrf.mxu0
        %6396 = vmatprep.mubr.f32.mxu0 0.0
        %6397 = vmatmul.mubr.f32.gmra.mxu0 %v6067
        %v6398 = vpop.f32.mrf.mxu0
        %v6399 = vadd.f32 0.0, %v6398
        %v6400 = vpop.f32.mrf.mxu0
        %6401 = vmatprep.mubr.f32.mxu0 0.0
        %6402 = vmatmul.mubr.f32.gmra.mxu0 %v6070
        %v6403 = vpop.f32.mrf.mxu0
        %v6404 = vadd.f32 0.0, %v6403
        %v6405 = vpop.f32.mrf.mxu0
        %6406 = vmatprep.mubr.f32.mxu0 0.0
        %6407 = vmatmul.mubr.f32.gmra.mxu0 %v6073
        %v6408 = vpop.f32.mrf.mxu0
        %v6409 = vadd.f32 0.0, %v6408
        %v6410 = vpop.f32.mrf.mxu0
        %6411 = vdwg.mxu0
        %v6412 = vmax.f32 %v6146, %v6314
        %v6413 = vmax.f32 %v6151, %v6319
        %v6414 = vmax.f32 %v6156, %v6324
        %v6415 = vmax.f32 %v6161, %v6329
        %v6416 = vmax.f32 %v6166, %v6334
        %v6417 = vmax.f32 %v6171, %v6339
        %v6418 = vmax.f32 %v6176, %v6344
        %v6419 = vmax.f32 %v6181, %v6349
        %v6420 = vmax.f32 %v6186, %v6354
        %v6421 = vmax.f32 %v6191, %v6359
        %v6422 = vmax.f32 %v6196, %v6364
        %v6423 = vmax.f32 %v6201, %v6369
        %v6424 = vmax.f32 %v6206, %v6374
        %v6425 = vmax.f32 %v6211, %v6379
        %v6426 = vmax.f32 %v6216, %v6384
        %v6427 = vmax.f32 %v6221, %v6389
        %v6428 = vmax.f32 %v6226, %v6394
        %v6429 = vmax.f32 %v6231, %v6399
        %v6430 = vmax.f32 %v6236, %v6404
        %v6431 = vmax.f32 %v6241, %v6409
        %v6432 = vsel %vm1084, %v2326, 0
        %v6434 = vsel %vm1084, %v2328, 0
        %v6436 = vsel %vm1084, %v2330, 0
        %v6438 = vsel %vm1084, %v2332, 0
        %v6440 = vsel %vm1084, %v2334, 0
        %v6442 = vsel %vm1084, %v2336, 0
        %v6444 = vsel %vm1084, %v2338, 0
        %v6446 = vsel %vm1084, %v2340, 0
        %v6448 = vsel %vm1084, %v2342, 0
        %v6450 = vsel %vm1084, %v2344, 0
        %6452 = vmatprep.subr.mxu0 0.0
        %6453 = vmatpush1.msra.mxu0 %v6427
        %6454 = vmatprep.subr.mxu0 0.0
        %6455 = vmatpush1.msra.mxu0 %v6426
        %6456 = vmatprep.subr.mxu0 0.0
        %6457 = vmatpush1.msra.mxu0 %v6425
        %6458 = vmatprep.subr.mxu0 0.0
        %6459 = vmatpush1.msra.mxu0 %v6424
        %6460 = vmatprep.subr.mxu0 0.0
        %6461 = vmatpush1.msra.mxu0 %v6423
        %6462 = vmatprep.subr.mxu0 0.0
        %6463 = vmatpush1.msra.mxu0 %v6422
        %6464 = vmatprep.subr.mxu0 0.0
        %6465 = vmatpush1.msra.mxu0 %v6421
        %6466 = vmatprep.subr.mxu0 0.0
        %6467 = vmatpush1.msra.mxu0 %v6420
        %6468 = vmatprep.subr.mxu0 0.0
        %6469 = vmatpush1.msra.mxu0 %v6419
        %6470 = vmatprep.subr.mxu0 0.0
        %6471 = vmatpush1.msra.mxu0 %v6418
        %6472 = vmatprep.subr.mxu0 0.0
        %6473 = vmatpush1.msra.mxu0 %v6417
        %6474 = vmatprep.subr.mxu0 0.0
        %6475 = vmatpush1.msra.mxu0 %v6416
        %6476 = vmatprep.subr.mxu0 0.0
        %6477 = vmatpush1.msra.mxu0 %v6415
        %6478 = vmatprep.subr.mxu0 0.0
        %6479 = vmatpush1.msra.mxu0 %v6414
        %6480 = vmatprep.subr.mxu0 0.0
        %6481 = vmatpush1.msra.mxu0 %v6413
        %6482 = vmatprep.subr.mxu0 0.0
        %6483 = vmatpush1.msra.mxu0 %v6412
        %6484 = vmatprep.subr.mxu0 0.0
        %6485 = vmatpush2.msra.mxu0 0.0
        %6486 = vmatprep.subr.mxu0 0.0
        %6487 = vmatpush2.msra.mxu0 0.0
        %6488 = vmatprep.subr.mxu0 0.0
        %6489 = vmatpush2.msra.mxu0 0.0
        %6490 = vmatprep.subr.mxu0 0.0
        %6491 = vmatpush2.msra.mxu0 0.0
        %6492 = vmatprep.subr.mxu0 0.0
        %6493 = vmatpush2.msra.mxu0 0.0
        %6494 = vmatprep.subr.mxu0 0.0
        %6495 = vmatpush2.msra.mxu0 0.0
        %6496 = vmatprep.subr.mxu0 0.0
        %6497 = vmatpush2.msra.mxu0 0.0
        %6498 = vmatprep.subr.mxu0 0.0
        %6499 = vmatpush2.msra.mxu0 0.0
        %6500 = vmatprep.subr.mxu0 0.0
        %6501 = vmatpush2.msra.mxu0 0.0
        %6502 = vmatprep.subr.mxu0 0.0
        %6503 = vmatpush2.msra.mxu0 0.0
        %6504 = vmatprep.subr.mxu0 0.0
        %6505 = vmatpush2.msra.mxu0 0.0
        %6506 = vmatprep.subr.mxu0 0.0
        %6507 = vmatpush2.msra.mxu0 0.0
        %6508 = vmatprep.subr.mxu0 0.0
        %6509 = vmatpush2.msra.mxu0 %v6431
        %6510 = vmatprep.subr.mxu0 0.0
        %6511 = vmatpush2.msra.mxu0 %v6430
        %6512 = vmatprep.subr.mxu0 0.0
        %6513 = vmatpush2.msra.mxu0 %v6429
        %6514 = vmatprep.subr.mxu0 0.0
        %6515 = vmatpush2.msra.mxu0 %v6428
        %6516 = vmatprep.mubr.f32.mxu0 %v6432
        %6517 = vmatmul.mubr.f32.gmra.mxu0 %v2325
        %v6518 = vpop.f32.mrf.mxu0
        %v6519 = vadd.f32 0.0, %v6518
        %v6520 = vpop.f32.mrf.mxu0
        %6521 = vmatprep.mubr.f32.mxu0 %v6434
        %6522 = vmatmul.mubr.f32.gmra.mxu0 %v2327
        %v6523 = vpop.f32.mrf.mxu0
        %v6524 = vadd.f32 0.0, %v6523
        %v6525 = vpop.f32.mrf.mxu0
        %6526 = vmatprep.mubr.f32.mxu0 %v6436
        %6527 = vmatmul.mubr.f32.gmra.mxu0 %v2329
        %v6528 = vpop.f32.mrf.mxu0
        %v6529 = vadd.f32 0.0, %v6528
        %v6530 = vpop.f32.mrf.mxu0
        %6531 = vmatprep.mubr.f32.mxu0 %v6438
        %6532 = vmatmul.mubr.f32.gmra.mxu0 %v2331
        %v6533 = vpop.f32.mrf.mxu0
        %v6534 = vadd.f32 0.0, %v6533
        %v6535 = vpop.f32.mrf.mxu0
        %6536 = vmatprep.mubr.f32.mxu0 %v6440
        %6537 = vmatmul.mubr.f32.gmra.mxu0 %v2333
        %v6538 = vpop.f32.mrf.mxu0
        %v6539 = vadd.f32 0.0, %v6538
        %v6540 = vpop.f32.mrf.mxu0
        %6541 = vmatprep.mubr.f32.mxu0 %v6442
        %6542 = vmatmul.mubr.f32.gmra.mxu0 %v2335
        %v6543 = vpop.f32.mrf.mxu0
        %v6544 = vadd.f32 0.0, %v6543
        %v6545 = vpop.f32.mrf.mxu0
        %6546 = vmatprep.mubr.f32.mxu0 %v6444
        %6547 = vmatmul.mubr.f32.gmra.mxu0 %v2337
        %v6548 = vpop.f32.mrf.mxu0
        %v6549 = vadd.f32 0.0, %v6548
        %v6550 = vpop.f32.mrf.mxu0
        %6551 = vmatprep.mubr.f32.mxu0 %v6446
        %6552 = vmatmul.mubr.f32.gmra.mxu0 %v2339
        %v6553 = vpop.f32.mrf.mxu0
        %v6554 = vadd.f32 0.0, %v6553
        %v6555 = vpop.f32.mrf.mxu0
        %6556 = vmatprep.mubr.f32.mxu0 %v6448
        %6557 = vmatmul.mubr.f32.gmra.mxu0 %v2341
        %v6558 = vpop.f32.mrf.mxu0
        %v6559 = vadd.f32 0.0, %v6558
        %v6560 = vpop.f32.mrf.mxu0
        %6561 = vmatprep.mubr.f32.mxu0 %v6450
        %6562 = vmatmul.mubr.f32.gmra.mxu0 %v2343
        %v6563 = vpop.f32.mrf.mxu0
        %v6564 = vadd.f32 0.0, %v6563
        %v6565 = vpop.f32.mrf.mxu0
        %6566 = vdwg.mxu0
        %v6567 = vsel %vm1084, %v2381, 0
        %v6569 = vsel %vm1084, %v2383, 0
        %v6571 = vsel %vm1084, %v2385, 0
        %v6573 = vsel %vm1084, %v2387, 0
        %v6575 = vsel %vm1084, %v2389, 0
        %v6577 = vsel %vm1084, %v2391, 0
        %v6579 = vsel %vm1084, %v2393, 0
        %v6581 = vsel %vm1084, %v2395, 0
        %v6583 = vsel %vm1084, %v2397, 0
        %v6585 = vsel %vm1084, %v2399, 0
        %6587 = vmatprep.subr.mxu0 0.0
        %6588 = vmatpush1.msra.mxu0 %v6427
        %6589 = vmatprep.subr.mxu0 0.0
        %6590 = vmatpush1.msra.mxu0 %v6426
        %6591 = vmatprep.subr.mxu0 0.0
        %6592 = vmatpush1.msra.mxu0 %v6425
        %6593 = vmatprep.subr.mxu0 0.0
        %6594 = vmatpush1.msra.mxu0 %v6424
        %6595 = vmatprep.subr.mxu0 0.0
        %6596 = vmatpush1.msra.mxu0 %v6423
        %6597 = vmatprep.subr.mxu0 0.0
        %6598 = vmatpush1.msra.mxu0 %v6422
        %6599 = vmatprep.subr.mxu0 0.0
        %6600 = vmatpush1.msra.mxu0 %v6421
        %6601 = vmatprep.subr.mxu0 0.0
        %6602 = vmatpush1.msra.mxu0 %v6420
        %6603 = vmatprep.subr.mxu0 0.0
        %6604 = vmatpush1.msra.mxu0 %v6419
        %6605 = vmatprep.subr.mxu0 0.0
        %6606 = vmatpush1.msra.mxu0 %v6418
        %6607 = vmatprep.subr.mxu0 0.0
        %6608 = vmatpush1.msra.mxu0 %v6417
        %6609 = vmatprep.subr.mxu0 0.0
        %6610 = vmatpush1.msra.mxu0 %v6416
        %6611 = vmatprep.subr.mxu0 0.0
        %6612 = vmatpush1.msra.mxu0 %v6415
        %6613 = vmatprep.subr.mxu0 0.0
        %6614 = vmatpush1.msra.mxu0 %v6414
        %6615 = vmatprep.subr.mxu0 0.0
        %6616 = vmatpush1.msra.mxu0 %v6413
        %6617 = vmatprep.subr.mxu0 0.0
        %6618 = vmatpush1.msra.mxu0 %v6412
        %6619 = vmatprep.subr.mxu0 0.0
        %6620 = vmatpush2.msra.mxu0 0.0
        %6621 = vmatprep.subr.mxu0 0.0
        %6622 = vmatpush2.msra.mxu0 0.0
        %6623 = vmatprep.subr.mxu0 0.0
        %6624 = vmatpush2.msra.mxu0 0.0
        %6625 = vmatprep.subr.mxu0 0.0
        %6626 = vmatpush2.msra.mxu0 0.0
        %6627 = vmatprep.subr.mxu0 0.0
        %6628 = vmatpush2.msra.mxu0 0.0
        %6629 = vmatprep.subr.mxu0 0.0
        %6630 = vmatpush2.msra.mxu0 0.0
        %6631 = vmatprep.subr.mxu0 0.0
        %6632 = vmatpush2.msra.mxu0 0.0
        %6633 = vmatprep.subr.mxu0 0.0
        %6634 = vmatpush2.msra.mxu0 0.0
        %6635 = vmatprep.subr.mxu0 0.0
        %6636 = vmatpush2.msra.mxu0 0.0
        %6637 = vmatprep.subr.mxu0 0.0
        %6638 = vmatpush2.msra.mxu0 0.0
        %6639 = vmatprep.subr.mxu0 0.0
        %6640 = vmatpush2.msra.mxu0 0.0
        %6641 = vmatprep.subr.mxu0 0.0
        %6642 = vmatpush2.msra.mxu0 0.0
        %6643 = vmatprep.subr.mxu0 0.0
        %6644 = vmatpush2.msra.mxu0 %v6431
        %6645 = vmatprep.subr.mxu0 0.0
        %6646 = vmatpush2.msra.mxu0 %v6430
        %6647 = vmatprep.subr.mxu0 0.0
        %6648 = vmatpush2.msra.mxu0 %v6429
        %6649 = vmatprep.subr.mxu0 0.0
        %6650 = vmatpush2.msra.mxu0 %v6428
        %6651 = vmatprep.mubr.f32.mxu0 %v6567
        %6652 = vmatmul.mubr.f32.gmra.mxu0 %v2380
        %v6653 = vpop.f32.mrf.mxu0
        %v6654 = vadd.f32 0.0, %v6653
        %v6655 = vpop.f32.mrf.mxu0
        %6656 = vmatprep.mubr.f32.mxu0 %v6569
        %6657 = vmatmul.mubr.f32.gmra.mxu0 %v2382
        %v6658 = vpop.f32.mrf.mxu0
        %v6659 = vadd.f32 0.0, %v6658
        %v6660 = vpop.f32.mrf.mxu0
        %6661 = vmatprep.mubr.f32.mxu0 %v6571
        %6662 = vmatmul.mubr.f32.gmra.mxu0 %v2384
        %v6663 = vpop.f32.mrf.mxu0
        %v6664 = vadd.f32 0.0, %v6663
        %v6665 = vpop.f32.mrf.mxu0
        %6666 = vmatprep.mubr.f32.mxu0 %v6573
        %6667 = vmatmul.mubr.f32.gmra.mxu0 %v2386
        %v6668 = vpop.f32.mrf.mxu0
        %v6669 = vadd.f32 0.0, %v6668
        %v6670 = vpop.f32.mrf.mxu0
        %6671 = vmatprep.mubr.f32.mxu0 %v6575
        %6672 = vmatmul.mubr.f32.gmra.mxu0 %v2388
        %v6673 = vpop.f32.mrf.mxu0
        %v6674 = vadd.f32 0.0, %v6673
        %v6675 = vpop.f32.mrf.mxu0
        %6676 = vmatprep.mubr.f32.mxu0 %v6577
        %6677 = vmatmul.mubr.f32.gmra.mxu0 %v2390
        %v6678 = vpop.f32.mrf.mxu0
        %v6679 = vadd.f32 0.0, %v6678
        %v6680 = vpop.f32.mrf.mxu0
        %6681 = vmatprep.mubr.f32.mxu0 %v6579
        %6682 = vmatmul.mubr.f32.gmra.mxu0 %v2392
        %v6683 = vpop.f32.mrf.mxu0
        %v6684 = vadd.f32 0.0, %v6683
        %v6685 = vpop.f32.mrf.mxu0
        %6686 = vmatprep.mubr.f32.mxu0 %v6581
        %6687 = vmatmul.mubr.f32.gmra.mxu0 %v2394
        %v6688 = vpop.f32.mrf.mxu0
        %v6689 = vadd.f32 0.0, %v6688
        %v6690 = vpop.f32.mrf.mxu0
        %6691 = vmatprep.mubr.f32.mxu0 %v6583
        %6692 = vmatmul.mubr.f32.gmra.mxu0 %v2396
        %v6693 = vpop.f32.mrf.mxu0
        %v6694 = vadd.f32 0.0, %v6693
        %v6695 = vpop.f32.mrf.mxu0
        %6696 = vmatprep.mubr.f32.mxu0 %v6585
        %6697 = vmatmul.mubr.f32.gmra.mxu0 %v2398
        %v6698 = vpop.f32.mrf.mxu0
        %v6699 = vadd.f32 0.0, %v6698
        %v6700 = vpop.f32.mrf.mxu0
        %6701 = vdwg.mxu0
        %v6702 = vmax.f32 %v6519, %v6654
        %v6703 = vmax.f32 %v6524, %v6659
        %v6704 = vmax.f32 %v6529, %v6664
        %v6705 = vmax.f32 %v6534, %v6669
        %v6706 = vmax.f32 %v6539, %v6674
        %v6707 = vmax.f32 %v6544, %v6679
        %v6708 = vmax.f32 %v6549, %v6684
        %v6709 = vmax.f32 %v6554, %v6689
        %v6710 = vmax.f32 %v6559, %v6694
        %v6711 = vmax.f32 %v6564, %v6699
        %v6712 = vmax.f32 %v6702, 0.0
        %v6713 = vmax.f32 %v6703, 0.0
        %v6714 = vmax.f32 %v6704, 0.0
        %v6715 = vmax.f32 %v6705, 0.0
        %v6716 = vmax.f32 %v6706, 0.0
        %v6717 = vmax.f32 %v6707, 0.0
        %v6718 = vmax.f32 %v6708, 0.0
        %v6719 = vmax.f32 %v6709, 0.0
        %v6720 = vmax.f32 %v6710, 0.0
        %v6721 = vmax.f32 %v6711, 0.0
        %v6722 = vld [vmem:[%s6] sm:$0xff]
        %v6723 = vld [vmem:[%s6 + $0x8] sm:$0xff]
        %v6724 = vld [vmem:[%s6 + $0x10] sm:$0xff]
        %v6725 = vld [vmem:[%s6 + $0x18] sm:$0xff]
        %v6726 = vld [vmem:[%s6 + $0x20] sm:$0xff]
        %v6727 = vld [vmem:[%s6 + $0x28] sm:$0xff]
        %v6728 = vld [vmem:[%s6 + $0x30] sm:$0xff]
        %v6729 = vld [vmem:[%s6 + $0x38] sm:$0xff]
        %v6730 = vld [vmem:[%s6 + $0x40] sm:$0xff]
        %v6731 = vld [vmem:[%s6 + $0x48] sm:$0xff]
        %v6732 = vld [vmem:[%s6 + $0x50] sm:$0xff]
        %v6733 = vld [vmem:[%s6 + $0x58] sm:$0xff]
        %v6734 = vld [vmem:[%s6 + $0x60] sm:$0xff]
        %v6735 = vld [vmem:[%s6 + $0x68] sm:$0xff]
        %v6736 = vld [vmem:[%s6 + $0x70] sm:$0xff]
        %v6737 = vld [vmem:[%s5] sm:$0xff]
        %v6738 = vld [vmem:[%s5 + $0x8] sm:$0xff]
        %v6739 = vld [vmem:[%s5 + $0x10] sm:$0xff]
        %v6740 = vld [vmem:[%s5 + $0x18] sm:$0xff]
        %v6741 = vld [vmem:[%s5 + $0x20] sm:$0xff]
        %v6742 = vld [vmem:[%s5 + $0x28] sm:$0xff]
        %v6743 = vld [vmem:[%s5 + $0x30] sm:$0xff]
        %v6744 = vld [vmem:[%s5 + $0x38] sm:$0xff]
        %v6745 = vld [vmem:[%s5 + $0x40] sm:$0xff]
        %v6746 = vld [vmem:[%s5 + $0x48] sm:$0xff]
        %v6747 = vld [vmem:[%s5 + $0x50] sm:$0xff]
        %v6748 = vld [vmem:[%s5 + $0x58] sm:$0xff]
        %v6749 = vld [vmem:[%s5 + $0x60] sm:$0xff]
        %v6750 = vld [vmem:[%s5 + $0x68] sm:$0xff]
        %v6751 = vld [vmem:[%s5 + $0x70] sm:$0xff]
        %vm6752 = vcmask 654336
        %v6754 = vsel %vm6752, %v6737, 0
        %v6757 = vsel %vm6752, %v6738, 0
        %v6760 = vsel %vm6752, %v6739, 0
        %v6763 = vsel %vm6752, %v6740, 0
        %v6766 = vsel %vm6752, %v6741, 0
        %v6769 = vsel %vm6752, %v6742, 0
        %v6772 = vsel %vm6752, %v6743, 0
        %v6775 = vsel %vm6752, %v6744, 0
        %v6778 = vsel %vm6752, %v6745, 0
        %v6781 = vsel %vm6752, %v6746, 0
        %v6784 = vsel %vm6752, %v6747, 0
        %v6787 = vsel %vm6752, %v6748, 0
        %v6790 = vsel %vm6752, %v6749, 0
        %v6793 = vsel %vm6752, %v6750, 0
        %v6796 = vsel %vm6752, %v6751, 0
        %6798 = vmatprep.subr.mxu0 0.0
        %6799 = vmatpush1.msra.mxu0 0.0
        %6800 = vmatprep.subr.mxu0 0.0
        %6801 = vmatpush1.msra.mxu0 0.0
        %6802 = vmatprep.subr.mxu0 0.0
        %6803 = vmatpush1.msra.mxu0 0.0
        %6804 = vmatprep.subr.mxu0 0.0
        %6805 = vmatpush1.msra.mxu0 0.0
        %6806 = vmatprep.subr.mxu0 0.0
        %6807 = vmatpush1.msra.mxu0 0.0
        %6808 = vmatprep.subr.mxu0 0.0
        %6809 = vmatpush1.msra.mxu0 0.0
        %6810 = vmatprep.subr.mxu0 0.0
        %6811 = vmatpush1.msra.mxu0 %v6721
        %6812 = vmatprep.subr.mxu0 0.0
        %6813 = vmatpush1.msra.mxu0 %v6720
        %6814 = vmatprep.subr.mxu0 0.0
        %6815 = vmatpush1.msra.mxu0 %v6719
        %6816 = vmatprep.subr.mxu0 0.0
        %6817 = vmatpush1.msra.mxu0 %v6718
        %6818 = vmatprep.subr.mxu0 0.0
        %6819 = vmatpush1.msra.mxu0 %v6717
        %6820 = vmatprep.subr.mxu0 0.0
        %6821 = vmatpush1.msra.mxu0 %v6716
        %6822 = vmatprep.subr.mxu0 0.0
        %6823 = vmatpush1.msra.mxu0 %v6715
        %6824 = vmatprep.subr.mxu0 0.0
        %6825 = vmatpush1.msra.mxu0 %v6714
        %6826 = vmatprep.subr.mxu0 0.0
        %6827 = vmatpush1.msra.mxu0 %v6713
        %6828 = vmatprep.subr.mxu0 0.0
        %6829 = vmatpush1.msra.mxu0 %v6712
        %6830 = vmatprep.subr.mxu0 0.0
        %6831 = vmatpush2.msra.mxu0 0.0
        %6832 = vmatprep.subr.mxu0 0.0
        %6833 = vmatpush2.msra.mxu0 0.0
        %6834 = vmatprep.subr.mxu0 0.0
        %6835 = vmatpush2.msra.mxu0 0.0
        %6836 = vmatprep.subr.mxu0 0.0
        %6837 = vmatpush2.msra.mxu0 0.0
        %6838 = vmatprep.subr.mxu0 0.0
        %6839 = vmatpush2.msra.mxu0 0.0
        %6840 = vmatprep.subr.mxu0 0.0
        %6841 = vmatpush2.msra.mxu0 0.0
        %6842 = vmatprep.subr.mxu0 0.0
        %6843 = vmatpush2.msra.mxu0 0.0
        %6844 = vmatprep.subr.mxu0 0.0
        %6845 = vmatpush2.msra.mxu0 0.0
        %6846 = vmatprep.subr.mxu0 0.0
        %6847 = vmatpush2.msra.mxu0 0.0
        %6848 = vmatprep.subr.mxu0 0.0
        %6849 = vmatpush2.msra.mxu0 0.0
        %6850 = vmatprep.subr.mxu0 0.0
        %6851 = vmatpush2.msra.mxu0 0.0
        %6852 = vmatprep.subr.mxu0 0.0
        %6853 = vmatpush2.msra.mxu0 0.0
        %6854 = vmatprep.subr.mxu0 0.0
        %6855 = vmatpush2.msra.mxu0 0.0
        %6856 = vmatprep.subr.mxu0 0.0
        %6857 = vmatpush2.msra.mxu0 0.0
        %6858 = vmatprep.subr.mxu0 0.0
        %6859 = vmatpush2.msra.mxu0 0.0
        %6860 = vmatprep.subr.mxu0 0.0
        %6861 = vmatpush2.msra.mxu0 0.0
        %6862 = vmatprep.mubr.f32.mxu0 0.0
        %6863 = vmatmul.mubr.f32.gmra.mxu0 %v6754
        %v6864 = vpop.f32.mrf.mxu0
        %v6865 = vadd.f32 0.0, %v6864
        %v6866 = vpop.f32.mrf.mxu0
        %6867 = vmatprep.mubr.f32.mxu0 0.0
        %6868 = vmatmul.mubr.f32.gmra.mxu0 %v6757
        %v6869 = vpop.f32.mrf.mxu0
        %v6870 = vadd.f32 0.0, %v6869
        %v6871 = vpop.f32.mrf.mxu0
        %6872 = vmatprep.mubr.f32.mxu0 0.0
        %6873 = vmatmul.mubr.f32.gmra.mxu0 %v6760
        %v6874 = vpop.f32.mrf.mxu0
        %v6875 = vadd.f32 0.0, %v6874
        %v6876 = vpop.f32.mrf.mxu0
        %6877 = vmatprep.mubr.f32.mxu0 0.0
        %6878 = vmatmul.mubr.f32.gmra.mxu0 %v6763
        %v6879 = vpop.f32.mrf.mxu0
        %v6880 = vadd.f32 0.0, %v6879
        %v6881 = vpop.f32.mrf.mxu0
        %6882 = vmatprep.mubr.f32.mxu0 0.0
        %6883 = vmatmul.mubr.f32.gmra.mxu0 %v6766
        %v6884 = vpop.f32.mrf.mxu0
        %v6885 = vadd.f32 0.0, %v6884
        %v6886 = vpop.f32.mrf.mxu0
        %6887 = vmatprep.mubr.f32.mxu0 0.0
        %6888 = vmatmul.mubr.f32.gmra.mxu0 %v6769
        %v6889 = vpop.f32.mrf.mxu0
        %v6890 = vadd.f32 0.0, %v6889
        %v6891 = vpop.f32.mrf.mxu0
        %6892 = vmatprep.mubr.f32.mxu0 0.0
        %6893 = vmatmul.mubr.f32.gmra.mxu0 %v6772
        %v6894 = vpop.f32.mrf.mxu0
        %v6895 = vadd.f32 0.0, %v6894
        %v6896 = vpop.f32.mrf.mxu0
        %6897 = vmatprep.mubr.f32.mxu0 0.0
        %6898 = vmatmul.mubr.f32.gmra.mxu0 %v6775
        %v6899 = vpop.f32.mrf.mxu0
        %v6900 = vadd.f32 0.0, %v6899
        %v6901 = vpop.f32.mrf.mxu0
        %6902 = vmatprep.mubr.f32.mxu0 0.0
        %6903 = vmatmul.mubr.f32.gmra.mxu0 %v6778
        %v6904 = vpop.f32.mrf.mxu0
        %v6905 = vadd.f32 0.0, %v6904
        %v6906 = vpop.f32.mrf.mxu0
        %6907 = vmatprep.mubr.f32.mxu0 0.0
        %6908 = vmatmul.mubr.f32.gmra.mxu0 %v6781
        %v6909 = vpop.f32.mrf.mxu0
        %v6910 = vadd.f32 0.0, %v6909
        %v6911 = vpop.f32.mrf.mxu0
        %6912 = vmatprep.mubr.f32.mxu0 0.0
        %6913 = vmatmul.mubr.f32.gmra.mxu0 %v6784
        %v6914 = vpop.f32.mrf.mxu0
        %v6915 = vadd.f32 0.0, %v6914
        %v6916 = vpop.f32.mrf.mxu0
        %6917 = vmatprep.mubr.f32.mxu0 0.0
        %6918 = vmatmul.mubr.f32.gmra.mxu0 %v6787
        %v6919 = vpop.f32.mrf.mxu0
        %v6920 = vadd.f32 0.0, %v6919
        %v6921 = vpop.f32.mrf.mxu0
        %6922 = vmatprep.mubr.f32.mxu0 0.0
        %6923 = vmatmul.mubr.f32.gmra.mxu0 %v6790
        %v6924 = vpop.f32.mrf.mxu0
        %v6925 = vadd.f32 0.0, %v6924
        %v6926 = vpop.f32.mrf.mxu0
        %6927 = vmatprep.mubr.f32.mxu0 0.0
        %6928 = vmatmul.mubr.f32.gmra.mxu0 %v6793
        %v6929 = vpop.f32.mrf.mxu0
        %v6930 = vadd.f32 0.0, %v6929
        %v6931 = vpop.f32.mrf.mxu0
        %6932 = vmatprep.mubr.f32.mxu0 0.0
        %6933 = vmatmul.mubr.f32.gmra.mxu0 %v6796
        %v6934 = vpop.f32.mrf.mxu0
        %v6935 = vadd.f32 0.0, %v6934
        %v6936 = vpop.f32.mrf.mxu0
        %6937 = vdwg.mxu0
        %v6938 = vadd.f32 %v6722, %v6865
        %v6939 = vadd.f32 %v6723, %v6870
        %v6940 = vadd.f32 %v6724, %v6875
        %v6941 = vadd.f32 %v6725, %v6880
        %v6942 = vadd.f32 %v6726, %v6885
        %v6943 = vadd.f32 %v6727, %v6890
        %v6944 = vadd.f32 %v6728, %v6895
        %v6945 = vadd.f32 %v6729, %v6900
        %v6946 = vadd.f32 %v6730, %v6905
        %v6947 = vadd.f32 %v6731, %v6910
        %v6948 = vadd.f32 %v6732, %v6915
        %v6949 = vadd.f32 %v6733, %v6920
        %v6950 = vadd.f32 %v6734, %v6925
        %v6951 = vadd.f32 %v6735, %v6930
        %v6952 = vadd.f32 %v6736, %v6935
        %s6953 = scalar_lea.vmem %s5, 120
        %v6954 = vld [vmem:[%s6953] sm:$0xff]
        %v6955 = vld [vmem:[%s6953 + $0x8] sm:$0xff]
        %v6956 = vld [vmem:[%s6953 + $0x10] sm:$0xff]
        %v6957 = vld [vmem:[%s6953 + $0x18] sm:$0xff]
        %v6958 = vld [vmem:[%s6953 + $0x20] sm:$0xff]
        %v6959 = vld [vmem:[%s6953 + $0x28] sm:$0xff]
        %v6960 = vld [vmem:[%s6953 + $0x30] sm:$0xff]
        %v6961 = vld [vmem:[%s6953 + $0x38] sm:$0xff]
        %v6962 = vld [vmem:[%s6953 + $0x40] sm:$0xff]
        %v6963 = vld [vmem:[%s6953 + $0x48] sm:$0xff]
        %v6964 = vld [vmem:[%s6953 + $0x50] sm:$0xff]
        %v6965 = vld [vmem:[%s6953 + $0x58] sm:$0xff]
        %v6966 = vld [vmem:[%s6953 + $0x60] sm:$0xff]
        %v6967 = vld [vmem:[%s6953 + $0x68] sm:$0xff]
        %v6968 = vld [vmem:[%s6953 + $0x70] sm:$0xff]
        %6979 = vrot.lane.b32.xlu0 %v6712, 127
        %v6980 = vpop.permute.xlu0 %6979
        %6981 = vrot.lane.b32.xlu0 %v6713, 127
        %v6982 = vpop.permute.xlu0 %6981
        %6983 = vrot.lane.b32.xlu0 %v6714, 127
        %v6984 = vpop.permute.xlu0 %6983
        %6985 = vrot.lane.b32.xlu0 %v6715, 127
        %v6986 = vpop.permute.xlu0 %6985
        %6987 = vrot.lane.b32.xlu0 %v6716, 127
        %v6988 = vpop.permute.xlu0 %6987
        %6989 = vrot.lane.b32.xlu0 %v6717, 127
        %v6990 = vpop.permute.xlu0 %6989
        %6991 = vrot.lane.b32.xlu0 %v6718, 127
        %v6992 = vpop.permute.xlu0 %6991
        %6993 = vrot.lane.b32.xlu0 %v6719, 127
        %v6994 = vpop.permute.xlu0 %6993
        %6995 = vrot.lane.b32.xlu0 %v6720, 127
        %v6996 = vpop.permute.xlu0 %6995
        %6997 = vrot.lane.b32.xlu0 %v6721, 127
        %v6998 = vpop.permute.xlu0 %6997
        %v7010 = vsel %vm6752, %v6954, 0
        %v7013 = vsel %vm6752, %v6955, 0
        %v7016 = vsel %vm6752, %v6956, 0
        %v7019 = vsel %vm6752, %v6957, 0
        %v7022 = vsel %vm6752, %v6958, 0
        %v7025 = vsel %vm6752, %v6959, 0
        %v7028 = vsel %vm6752, %v6960, 0
        %v7031 = vsel %vm6752, %v6961, 0
        %v7034 = vsel %vm6752, %v6962, 0
        %v7037 = vsel %vm6752, %v6963, 0
        %v7040 = vsel %vm6752, %v6964, 0
        %v7043 = vsel %vm6752, %v6965, 0
        %v7046 = vsel %vm6752, %v6966, 0
        %v7049 = vsel %vm6752, %v6967, 0
        %v7052 = vsel %vm6752, %v6968, 0
        %7054 = vmatprep.subr.mxu0 0.0
        %7055 = vmatpush1.msra.mxu0 0.0
        %7056 = vmatprep.subr.mxu0 0.0
        %7057 = vmatpush1.msra.mxu0 0.0
        %7058 = vmatprep.subr.mxu0 0.0
        %7059 = vmatpush1.msra.mxu0 0.0
        %7060 = vmatprep.subr.mxu0 0.0
        %7061 = vmatpush1.msra.mxu0 0.0
        %7062 = vmatprep.subr.mxu0 0.0
        %7063 = vmatpush1.msra.mxu0 0.0
        %7064 = vmatprep.subr.mxu0 0.0
        %7065 = vmatpush1.msra.mxu0 0.0
        %7066 = vmatprep.subr.mxu0 0.0
        %7067 = vmatpush1.msra.mxu0 %v6998
        %7068 = vmatprep.subr.mxu0 0.0
        %7069 = vmatpush1.msra.mxu0 %v6996
        %7070 = vmatprep.subr.mxu0 0.0
        %7071 = vmatpush1.msra.mxu0 %v6994
        %7072 = vmatprep.subr.mxu0 0.0
        %7073 = vmatpush1.msra.mxu0 %v6992
        %7074 = vmatprep.subr.mxu0 0.0
        %7075 = vmatpush1.msra.mxu0 %v6990
        %7076 = vmatprep.subr.mxu0 0.0
        %7077 = vmatpush1.msra.mxu0 %v6988
        %7078 = vmatprep.subr.mxu0 0.0
        %7079 = vmatpush1.msra.mxu0 %v6986
        %7080 = vmatprep.subr.mxu0 0.0
        %7081 = vmatpush1.msra.mxu0 %v6984
        %7082 = vmatprep.subr.mxu0 0.0
        %7083 = vmatpush1.msra.mxu0 %v6982
        %7084 = vmatprep.subr.mxu0 0.0
        %7085 = vmatpush1.msra.mxu0 %v6980
        %7086 = vmatprep.subr.mxu0 0.0
        %7087 = vmatpush2.msra.mxu0 0.0
        %7088 = vmatprep.subr.mxu0 0.0
        %7089 = vmatpush2.msra.mxu0 0.0
        %7090 = vmatprep.subr.mxu0 0.0
        %7091 = vmatpush2.msra.mxu0 0.0
        %7092 = vmatprep.subr.mxu0 0.0
        %7093 = vmatpush2.msra.mxu0 0.0
        %7094 = vmatprep.subr.mxu0 0.0
        %7095 = vmatpush2.msra.mxu0 0.0
        %7096 = vmatprep.subr.mxu0 0.0
        %7097 = vmatpush2.msra.mxu0 0.0
        %7098 = vmatprep.subr.mxu0 0.0
        %7099 = vmatpush2.msra.mxu0 0.0
        %7100 = vmatprep.subr.mxu0 0.0
        %7101 = vmatpush2.msra.mxu0 0.0
        %7102 = vmatprep.subr.mxu0 0.0
        %7103 = vmatpush2.msra.mxu0 0.0
        %7104 = vmatprep.subr.mxu0 0.0
        %7105 = vmatpush2.msra.mxu0 0.0
        %7106 = vmatprep.subr.mxu0 0.0
        %7107 = vmatpush2.msra.mxu0 0.0
        %7108 = vmatprep.subr.mxu0 0.0
        %7109 = vmatpush2.msra.mxu0 0.0
        %7110 = vmatprep.subr.mxu0 0.0
        %7111 = vmatpush2.msra.mxu0 0.0
        %7112 = vmatprep.subr.mxu0 0.0
        %7113 = vmatpush2.msra.mxu0 0.0
        %7114 = vmatprep.subr.mxu0 0.0
        %7115 = vmatpush2.msra.mxu0 0.0
        %7116 = vmatprep.subr.mxu0 0.0
        %7117 = vmatpush2.msra.mxu0 0.0
        %7118 = vmatprep.mubr.f32.mxu0 0.0
        %7119 = vmatmul.mubr.f32.gmra.mxu0 %v7010
        %v7120 = vpop.f32.mrf.mxu0
        %v7121 = vadd.f32 0.0, %v7120
        %v7122 = vpop.f32.mrf.mxu0
        %7123 = vmatprep.mubr.f32.mxu0 0.0
        %7124 = vmatmul.mubr.f32.gmra.mxu0 %v7013
        %v7125 = vpop.f32.mrf.mxu0
        %v7126 = vadd.f32 0.0, %v7125
        %v7127 = vpop.f32.mrf.mxu0
        %7128 = vmatprep.mubr.f32.mxu0 0.0
        %7129 = vmatmul.mubr.f32.gmra.mxu0 %v7016
        %v7130 = vpop.f32.mrf.mxu0
        %v7131 = vadd.f32 0.0, %v7130
        %v7132 = vpop.f32.mrf.mxu0
        %7133 = vmatprep.mubr.f32.mxu0 0.0
        %7134 = vmatmul.mubr.f32.gmra.mxu0 %v7019
        %v7135 = vpop.f32.mrf.mxu0
        %v7136 = vadd.f32 0.0, %v7135
        %v7137 = vpop.f32.mrf.mxu0
        %7138 = vmatprep.mubr.f32.mxu0 0.0
        %7139 = vmatmul.mubr.f32.gmra.mxu0 %v7022
        %v7140 = vpop.f32.mrf.mxu0
        %v7141 = vadd.f32 0.0, %v7140
        %v7142 = vpop.f32.mrf.mxu0
        %7143 = vmatprep.mubr.f32.mxu0 0.0
        %7144 = vmatmul.mubr.f32.gmra.mxu0 %v7025
        %v7145 = vpop.f32.mrf.mxu0
        %v7146 = vadd.f32 0.0, %v7145
        %v7147 = vpop.f32.mrf.mxu0
        %7148 = vmatprep.mubr.f32.mxu0 0.0
        %7149 = vmatmul.mubr.f32.gmra.mxu0 %v7028
        %v7150 = vpop.f32.mrf.mxu0
        %v7151 = vadd.f32 0.0, %v7150
        %v7152 = vpop.f32.mrf.mxu0
        %7153 = vmatprep.mubr.f32.mxu0 0.0
        %7154 = vmatmul.mubr.f32.gmra.mxu0 %v7031
        %v7155 = vpop.f32.mrf.mxu0
        %v7156 = vadd.f32 0.0, %v7155
        %v7157 = vpop.f32.mrf.mxu0
        %7158 = vmatprep.mubr.f32.mxu0 0.0
        %7159 = vmatmul.mubr.f32.gmra.mxu0 %v7034
        %v7160 = vpop.f32.mrf.mxu0
        %v7161 = vadd.f32 0.0, %v7160
        %v7162 = vpop.f32.mrf.mxu0
        %7163 = vmatprep.mubr.f32.mxu0 0.0
        %7164 = vmatmul.mubr.f32.gmra.mxu0 %v7037
        %v7165 = vpop.f32.mrf.mxu0
        %v7166 = vadd.f32 0.0, %v7165
        %v7167 = vpop.f32.mrf.mxu0
        %7168 = vmatprep.mubr.f32.mxu0 0.0
        %7169 = vmatmul.mubr.f32.gmra.mxu0 %v7040
        %v7170 = vpop.f32.mrf.mxu0
        %v7171 = vadd.f32 0.0, %v7170
        %v7172 = vpop.f32.mrf.mxu0
        %7173 = vmatprep.mubr.f32.mxu0 0.0
        %7174 = vmatmul.mubr.f32.gmra.mxu0 %v7043
        %v7175 = vpop.f32.mrf.mxu0
        %v7176 = vadd.f32 0.0, %v7175
        %v7177 = vpop.f32.mrf.mxu0
        %7178 = vmatprep.mubr.f32.mxu0 0.0
        %7179 = vmatmul.mubr.f32.gmra.mxu0 %v7046
        %v7180 = vpop.f32.mrf.mxu0
        %v7181 = vadd.f32 0.0, %v7180
        %v7182 = vpop.f32.mrf.mxu0
        %7183 = vmatprep.mubr.f32.mxu0 0.0
        %7184 = vmatmul.mubr.f32.gmra.mxu0 %v7049
        %v7185 = vpop.f32.mrf.mxu0
        %v7186 = vadd.f32 0.0, %v7185
        %v7187 = vpop.f32.mrf.mxu0
        %7188 = vmatprep.mubr.f32.mxu0 0.0
        %7189 = vmatmul.mubr.f32.gmra.mxu0 %v7052
        %v7190 = vpop.f32.mrf.mxu0
        %v7191 = vadd.f32 0.0, %v7190
        %v7192 = vpop.f32.mrf.mxu0
        %7193 = vdwg.mxu0
        %v7194 = vadd.f32 %v6938, %v7121
        %v7195 = vadd.f32 %v6939, %v7126
        %v7196 = vadd.f32 %v6940, %v7131
        %v7197 = vadd.f32 %v6941, %v7136
        %v7198 = vadd.f32 %v6942, %v7141
        %v7199 = vadd.f32 %v6943, %v7146
        %v7200 = vadd.f32 %v6944, %v7151
        %v7201 = vadd.f32 %v6945, %v7156
        %v7202 = vadd.f32 %v6946, %v7161
        %v7203 = vadd.f32 %v6947, %v7166
        %v7204 = vadd.f32 %v6948, %v7171
        %v7205 = vadd.f32 %v6949, %v7176
        %v7206 = vadd.f32 %v6950, %v7181
        %v7207 = vadd.f32 %v6951, %v7186
        %v7208 = vadd.f32 %v6952, %v7191
        %s7209 = scalar_lea.vmem %s5, 240
        %v7210 = vld [vmem:[%s7209] sm:$0xff]
        %v7211 = vld [vmem:[%s7209 + $0x8] sm:$0xff]
        %v7212 = vld [vmem:[%s7209 + $0x10] sm:$0xff]
        %v7213 = vld [vmem:[%s7209 + $0x18] sm:$0xff]
        %v7214 = vld [vmem:[%s7209 + $0x20] sm:$0xff]
        %v7215 = vld [vmem:[%s7209 + $0x28] sm:$0xff]
        %v7216 = vld [vmem:[%s7209 + $0x30] sm:$0xff]
        %v7217 = vld [vmem:[%s7209 + $0x38] sm:$0xff]
        %v7218 = vld [vmem:[%s7209 + $0x40] sm:$0xff]
        %v7219 = vld [vmem:[%s7209 + $0x48] sm:$0xff]
        %v7220 = vld [vmem:[%s7209 + $0x50] sm:$0xff]
        %v7221 = vld [vmem:[%s7209 + $0x58] sm:$0xff]
        %v7222 = vld [vmem:[%s7209 + $0x60] sm:$0xff]
        %v7223 = vld [vmem:[%s7209 + $0x68] sm:$0xff]
        %v7224 = vld [vmem:[%s7209 + $0x70] sm:$0xff]
        %7225 = vrot.lane.b32.xlu0 %v6712, 126
        %v7226 = vpop.permute.xlu0 %7225
        %7227 = vrot.lane.b32.xlu0 %v6713, 126
        %v7228 = vpop.permute.xlu0 %7227
        %7229 = vrot.lane.b32.xlu0 %v6714, 126
        %v7230 = vpop.permute.xlu0 %7229
        %7231 = vrot.lane.b32.xlu0 %v6715, 126
        %v7232 = vpop.permute.xlu0 %7231
        %7233 = vrot.lane.b32.xlu0 %v6716, 126
        %v7234 = vpop.permute.xlu0 %7233
        %7235 = vrot.lane.b32.xlu0 %v6717, 126
        %v7236 = vpop.permute.xlu0 %7235
        %7237 = vrot.lane.b32.xlu0 %v6718, 126
        %v7238 = vpop.permute.xlu0 %7237
        %7239 = vrot.lane.b32.xlu0 %v6719, 126
        %v7240 = vpop.permute.xlu0 %7239
        %7241 = vrot.lane.b32.xlu0 %v6720, 126
        %v7242 = vpop.permute.xlu0 %7241
        %7243 = vrot.lane.b32.xlu0 %v6721, 126
        %v7244 = vpop.permute.xlu0 %7243
        %v7256 = vsel %vm6752, %v7210, 0
        %v7259 = vsel %vm6752, %v7211, 0
        %v7262 = vsel %vm6752, %v7212, 0
        %v7265 = vsel %vm6752, %v7213, 0
        %v7268 = vsel %vm6752, %v7214, 0
        %v7271 = vsel %vm6752, %v7215, 0
        %v7274 = vsel %vm6752, %v7216, 0
        %v7277 = vsel %vm6752, %v7217, 0
        %v7280 = vsel %vm6752, %v7218, 0
        %v7283 = vsel %vm6752, %v7219, 0
        %v7286 = vsel %vm6752, %v7220, 0
        %v7289 = vsel %vm6752, %v7221, 0
        %v7292 = vsel %vm6752, %v7222, 0
        %v7295 = vsel %vm6752, %v7223, 0
        %v7298 = vsel %vm6752, %v7224, 0
        %7300 = vmatprep.subr.mxu0 0.0
        %7301 = vmatpush1.msra.mxu0 0.0
        %7302 = vmatprep.subr.mxu0 0.0
        %7303 = vmatpush1.msra.mxu0 0.0
        %7304 = vmatprep.subr.mxu0 0.0
        %7305 = vmatpush1.msra.mxu0 0.0
        %7306 = vmatprep.subr.mxu0 0.0
        %7307 = vmatpush1.msra.mxu0 0.0
        %7308 = vmatprep.subr.mxu0 0.0
        %7309 = vmatpush1.msra.mxu0 0.0
        %7310 = vmatprep.subr.mxu0 0.0
        %7311 = vmatpush1.msra.mxu0 0.0
        %7312 = vmatprep.subr.mxu0 0.0
        %7313 = vmatpush1.msra.mxu0 %v7244
        %7314 = vmatprep.subr.mxu0 0.0
        %7315 = vmatpush1.msra.mxu0 %v7242
        %7316 = vmatprep.subr.mxu0 0.0
        %7317 = vmatpush1.msra.mxu0 %v7240
        %7318 = vmatprep.subr.mxu0 0.0
        %7319 = vmatpush1.msra.mxu0 %v7238
        %7320 = vmatprep.subr.mxu0 0.0
        %7321 = vmatpush1.msra.mxu0 %v7236
        %7322 = vmatprep.subr.mxu0 0.0
        %7323 = vmatpush1.msra.mxu0 %v7234
        %7324 = vmatprep.subr.mxu0 0.0
        %7325 = vmatpush1.msra.mxu0 %v7232
        %7326 = vmatprep.subr.mxu0 0.0
        %7327 = vmatpush1.msra.mxu0 %v7230
        %7328 = vmatprep.subr.mxu0 0.0
        %7329 = vmatpush1.msra.mxu0 %v7228
        %7330 = vmatprep.subr.mxu0 0.0
        %7331 = vmatpush1.msra.mxu0 %v7226
        %7332 = vmatprep.subr.mxu0 0.0
        %7333 = vmatpush2.msra.mxu0 0.0
        %7334 = vmatprep.subr.mxu0 0.0
        %7335 = vmatpush2.msra.mxu0 0.0
        %7336 = vmatprep.subr.mxu0 0.0
        %7337 = vmatpush2.msra.mxu0 0.0
        %7338 = vmatprep.subr.mxu0 0.0
        %7339 = vmatpush2.msra.mxu0 0.0
        %7340 = vmatprep.subr.mxu0 0.0
        %7341 = vmatpush2.msra.mxu0 0.0
        %7342 = vmatprep.subr.mxu0 0.0
        %7343 = vmatpush2.msra.mxu0 0.0
        %7344 = vmatprep.subr.mxu0 0.0
        %7345 = vmatpush2.msra.mxu0 0.0
        %7346 = vmatprep.subr.mxu0 0.0
        %7347 = vmatpush2.msra.mxu0 0.0
        %7348 = vmatprep.subr.mxu0 0.0
        %7349 = vmatpush2.msra.mxu0 0.0
        %7350 = vmatprep.subr.mxu0 0.0
        %7351 = vmatpush2.msra.mxu0 0.0
        %7352 = vmatprep.subr.mxu0 0.0
        %7353 = vmatpush2.msra.mxu0 0.0
        %7354 = vmatprep.subr.mxu0 0.0
        %7355 = vmatpush2.msra.mxu0 0.0
        %7356 = vmatprep.subr.mxu0 0.0
        %7357 = vmatpush2.msra.mxu0 0.0
        %7358 = vmatprep.subr.mxu0 0.0
        %7359 = vmatpush2.msra.mxu0 0.0
        %7360 = vmatprep.subr.mxu0 0.0
        %7361 = vmatpush2.msra.mxu0 0.0
        %7362 = vmatprep.subr.mxu0 0.0
        %7363 = vmatpush2.msra.mxu0 0.0
        %7364 = vmatprep.mubr.f32.mxu0 0.0
        %7365 = vmatmul.mubr.f32.gmra.mxu0 %v7256
        %v7366 = vpop.f32.mrf.mxu0
        %v7367 = vadd.f32 0.0, %v7366
        %v7368 = vpop.f32.mrf.mxu0
        %7369 = vmatprep.mubr.f32.mxu0 0.0
        %7370 = vmatmul.mubr.f32.gmra.mxu0 %v7259
        %v7371 = vpop.f32.mrf.mxu0
        %v7372 = vadd.f32 0.0, %v7371
        %v7373 = vpop.f32.mrf.mxu0
        %7374 = vmatprep.mubr.f32.mxu0 0.0
        %7375 = vmatmul.mubr.f32.gmra.mxu0 %v7262
        %v7376 = vpop.f32.mrf.mxu0
        %v7377 = vadd.f32 0.0, %v7376
        %v7378 = vpop.f32.mrf.mxu0
        %7379 = vmatprep.mubr.f32.mxu0 0.0
        %7380 = vmatmul.mubr.f32.gmra.mxu0 %v7265
        %v7381 = vpop.f32.mrf.mxu0
        %v7382 = vadd.f32 0.0, %v7381
        %v7383 = vpop.f32.mrf.mxu0
        %7384 = vmatprep.mubr.f32.mxu0 0.0
        %7385 = vmatmul.mubr.f32.gmra.mxu0 %v7268
        %v7386 = vpop.f32.mrf.mxu0
        %v7387 = vadd.f32 0.0, %v7386
        %v7388 = vpop.f32.mrf.mxu0
        %7389 = vmatprep.mubr.f32.mxu0 0.0
        %7390 = vmatmul.mubr.f32.gmra.mxu0 %v7271
        %v7391 = vpop.f32.mrf.mxu0
        %v7392 = vadd.f32 0.0, %v7391
        %v7393 = vpop.f32.mrf.mxu0
        %7394 = vmatprep.mubr.f32.mxu0 0.0
        %7395 = vmatmul.mubr.f32.gmra.mxu0 %v7274
        %v7396 = vpop.f32.mrf.mxu0
        %v7397 = vadd.f32 0.0, %v7396
        %v7398 = vpop.f32.mrf.mxu0
        %7399 = vmatprep.mubr.f32.mxu0 0.0
        %7400 = vmatmul.mubr.f32.gmra.mxu0 %v7277
        %v7401 = vpop.f32.mrf.mxu0
        %v7402 = vadd.f32 0.0, %v7401
        %v7403 = vpop.f32.mrf.mxu0
        %7404 = vmatprep.mubr.f32.mxu0 0.0
        %7405 = vmatmul.mubr.f32.gmra.mxu0 %v7280
        %v7406 = vpop.f32.mrf.mxu0
        %v7407 = vadd.f32 0.0, %v7406
        %v7408 = vpop.f32.mrf.mxu0
        %7409 = vmatprep.mubr.f32.mxu0 0.0
        %7410 = vmatmul.mubr.f32.gmra.mxu0 %v7283
        %v7411 = vpop.f32.mrf.mxu0
        %v7412 = vadd.f32 0.0, %v7411
        %v7413 = vpop.f32.mrf.mxu0
        %7414 = vmatprep.mubr.f32.mxu0 0.0
        %7415 = vmatmul.mubr.f32.gmra.mxu0 %v7286
        %v7416 = vpop.f32.mrf.mxu0
        %v7417 = vadd.f32 0.0, %v7416
        %v7418 = vpop.f32.mrf.mxu0
        %7419 = vmatprep.mubr.f32.mxu0 0.0
        %7420 = vmatmul.mubr.f32.gmra.mxu0 %v7289
        %v7421 = vpop.f32.mrf.mxu0
        %v7422 = vadd.f32 0.0, %v7421
        %v7423 = vpop.f32.mrf.mxu0
        %7424 = vmatprep.mubr.f32.mxu0 0.0
        %7425 = vmatmul.mubr.f32.gmra.mxu0 %v7292
        %v7426 = vpop.f32.mrf.mxu0
        %v7427 = vadd.f32 0.0, %v7426
        %v7428 = vpop.f32.mrf.mxu0
        %7429 = vmatprep.mubr.f32.mxu0 0.0
        %7430 = vmatmul.mubr.f32.gmra.mxu0 %v7295
        %v7431 = vpop.f32.mrf.mxu0
        %v7432 = vadd.f32 0.0, %v7431
        %v7433 = vpop.f32.mrf.mxu0
        %7434 = vmatprep.mubr.f32.mxu0 0.0
        %7435 = vmatmul.mubr.f32.gmra.mxu0 %v7298
        %v7436 = vpop.f32.mrf.mxu0
        %v7437 = vadd.f32 0.0, %v7436
        %v7438 = vpop.f32.mrf.mxu0
        %7439 = vdwg.mxu0
        %v7440 = vadd.f32 %v7194, %v7367
        %v7441 = vadd.f32 %v7195, %v7372
        %v7442 = vadd.f32 %v7196, %v7377
        %v7443 = vadd.f32 %v7197, %v7382
        %v7444 = vadd.f32 %v7198, %v7387
        %v7445 = vadd.f32 %v7199, %v7392
        %v7446 = vadd.f32 %v7200, %v7397
        %v7447 = vadd.f32 %v7201, %v7402
        %v7448 = vadd.f32 %v7202, %v7407
        %v7449 = vadd.f32 %v7203, %v7412
        %v7450 = vadd.f32 %v7204, %v7417
        %v7451 = vadd.f32 %v7205, %v7422
        %v7452 = vadd.f32 %v7206, %v7427
        %v7453 = vadd.f32 %v7207, %v7432
        %v7454 = vadd.f32 %v7208, %v7437
        %s7455 = scalar_lea.vmem %s5, 360
        %v7456 = vld [vmem:[%s7455] sm:$0xff]
        %v7457 = vld [vmem:[%s7455 + $0x8] sm:$0xff]
        %v7458 = vld [vmem:[%s7455 + $0x10] sm:$0xff]
        %v7459 = vld [vmem:[%s7455 + $0x18] sm:$0xff]
        %v7460 = vld [vmem:[%s7455 + $0x20] sm:$0xff]
        %v7461 = vld [vmem:[%s7455 + $0x28] sm:$0xff]
        %v7462 = vld [vmem:[%s7455 + $0x30] sm:$0xff]
        %v7463 = vld [vmem:[%s7455 + $0x38] sm:$0xff]
        %v7464 = vld [vmem:[%s7455 + $0x40] sm:$0xff]
        %v7465 = vld [vmem:[%s7455 + $0x48] sm:$0xff]
        %v7466 = vld [vmem:[%s7455 + $0x50] sm:$0xff]
        %v7467 = vld [vmem:[%s7455 + $0x58] sm:$0xff]
        %v7468 = vld [vmem:[%s7455 + $0x60] sm:$0xff]
        %v7469 = vld [vmem:[%s7455 + $0x68] sm:$0xff]
        %v7470 = vld [vmem:[%s7455 + $0x70] sm:$0xff]
        %7471 = vrot.lane.b32.xlu0 %v6712, 125
        %v7472 = vpop.permute.xlu0 %7471
        %7473 = vrot.lane.b32.xlu0 %v6713, 125
        %v7474 = vpop.permute.xlu0 %7473
        %7475 = vrot.lane.b32.xlu0 %v6714, 125
        %v7476 = vpop.permute.xlu0 %7475
        %7477 = vrot.lane.b32.xlu0 %v6715, 125
        %v7478 = vpop.permute.xlu0 %7477
        %7479 = vrot.lane.b32.xlu0 %v6716, 125
        %v7480 = vpop.permute.xlu0 %7479
        %7481 = vrot.lane.b32.xlu0 %v6717, 125
        %v7482 = vpop.permute.xlu0 %7481
        %7483 = vrot.lane.b32.xlu0 %v6718, 125
        %v7484 = vpop.permute.xlu0 %7483
        %7485 = vrot.lane.b32.xlu0 %v6719, 125
        %v7486 = vpop.permute.xlu0 %7485
        %7487 = vrot.lane.b32.xlu0 %v6720, 125
        %v7488 = vpop.permute.xlu0 %7487
        %7489 = vrot.lane.b32.xlu0 %v6721, 125
        %v7490 = vpop.permute.xlu0 %7489
        %v7502 = vsel %vm6752, %v7456, 0
        %v7505 = vsel %vm6752, %v7457, 0
        %v7508 = vsel %vm6752, %v7458, 0
        %v7511 = vsel %vm6752, %v7459, 0
        %v7514 = vsel %vm6752, %v7460, 0
        %v7517 = vsel %vm6752, %v7461, 0
        %v7520 = vsel %vm6752, %v7462, 0
        %v7523 = vsel %vm6752, %v7463, 0
        %v7526 = vsel %vm6752, %v7464, 0
        %v7529 = vsel %vm6752, %v7465, 0
        %v7532 = vsel %vm6752, %v7466, 0
        %v7535 = vsel %vm6752, %v7467, 0
        %v7538 = vsel %vm6752, %v7468, 0
        %v7541 = vsel %vm6752, %v7469, 0
        %v7544 = vsel %vm6752, %v7470, 0
        %7546 = vmatprep.subr.mxu0 0.0
        %7547 = vmatpush1.msra.mxu0 0.0
        %7548 = vmatprep.subr.mxu0 0.0
        %7549 = vmatpush1.msra.mxu0 0.0
        %7550 = vmatprep.subr.mxu0 0.0
        %7551 = vmatpush1.msra.mxu0 0.0
        %7552 = vmatprep.subr.mxu0 0.0
        %7553 = vmatpush1.msra.mxu0 0.0
        %7554 = vmatprep.subr.mxu0 0.0
        %7555 = vmatpush1.msra.mxu0 0.0
        %7556 = vmatprep.subr.mxu0 0.0
        %7557 = vmatpush1.msra.mxu0 0.0
        %7558 = vmatprep.subr.mxu0 0.0
        %7559 = vmatpush1.msra.mxu0 %v7490
        %7560 = vmatprep.subr.mxu0 0.0
        %7561 = vmatpush1.msra.mxu0 %v7488
        %7562 = vmatprep.subr.mxu0 0.0
        %7563 = vmatpush1.msra.mxu0 %v7486
        %7564 = vmatprep.subr.mxu0 0.0
        %7565 = vmatpush1.msra.mxu0 %v7484
        %7566 = vmatprep.subr.mxu0 0.0
        %7567 = vmatpush1.msra.mxu0 %v7482
        %7568 = vmatprep.subr.mxu0 0.0
        %7569 = vmatpush1.msra.mxu0 %v7480
        %7570 = vmatprep.subr.mxu0 0.0
        %7571 = vmatpush1.msra.mxu0 %v7478
        %7572 = vmatprep.subr.mxu0 0.0
        %7573 = vmatpush1.msra.mxu0 %v7476
        %7574 = vmatprep.subr.mxu0 0.0
        %7575 = vmatpush1.msra.mxu0 %v7474
        %7576 = vmatprep.subr.mxu0 0.0
        %7577 = vmatpush1.msra.mxu0 %v7472
        %7578 = vmatprep.subr.mxu0 0.0
        %7579 = vmatpush2.msra.mxu0 0.0
        %7580 = vmatprep.subr.mxu0 0.0
        %7581 = vmatpush2.msra.mxu0 0.0
        %7582 = vmatprep.subr.mxu0 0.0
        %7583 = vmatpush2.msra.mxu0 0.0
        %7584 = vmatprep.subr.mxu0 0.0
        %7585 = vmatpush2.msra.mxu0 0.0
        %7586 = vmatprep.subr.mxu0 0.0
        %7587 = vmatpush2.msra.mxu0 0.0
        %7588 = vmatprep.subr.mxu0 0.0
        %7589 = vmatpush2.msra.mxu0 0.0
        %7590 = vmatprep.subr.mxu0 0.0
        %7591 = vmatpush2.msra.mxu0 0.0
        %7592 = vmatprep.subr.mxu0 0.0
        %7593 = vmatpush2.msra.mxu0 0.0
        %7594 = vmatprep.subr.mxu0 0.0
        %7595 = vmatpush2.msra.mxu0 0.0
        %7596 = vmatprep.subr.mxu0 0.0
        %7597 = vmatpush2.msra.mxu0 0.0
        %7598 = vmatprep.subr.mxu0 0.0
        %7599 = vmatpush2.msra.mxu0 0.0
        %7600 = vmatprep.subr.mxu0 0.0
        %7601 = vmatpush2.msra.mxu0 0.0
        %7602 = vmatprep.subr.mxu0 0.0
        %7603 = vmatpush2.msra.mxu0 0.0
        %7604 = vmatprep.subr.mxu0 0.0
        %7605 = vmatpush2.msra.mxu0 0.0
        %7606 = vmatprep.subr.mxu0 0.0
        %7607 = vmatpush2.msra.mxu0 0.0
        %7608 = vmatprep.subr.mxu0 0.0
        %7609 = vmatpush2.msra.mxu0 0.0
        %7610 = vmatprep.mubr.f32.mxu0 0.0
        %7611 = vmatmul.mubr.f32.gmra.mxu0 %v7502
        %v7612 = vpop.f32.mrf.mxu0
        %v7613 = vadd.f32 0.0, %v7612
        %v7614 = vpop.f32.mrf.mxu0
        %7615 = vmatprep.mubr.f32.mxu0 0.0
        %7616 = vmatmul.mubr.f32.gmra.mxu0 %v7505
        %v7617 = vpop.f32.mrf.mxu0
        %v7618 = vadd.f32 0.0, %v7617
        %v7619 = vpop.f32.mrf.mxu0
        %7620 = vmatprep.mubr.f32.mxu0 0.0
        %7621 = vmatmul.mubr.f32.gmra.mxu0 %v7508
        %v7622 = vpop.f32.mrf.mxu0
        %v7623 = vadd.f32 0.0, %v7622
        %v7624 = vpop.f32.mrf.mxu0
        %7625 = vmatprep.mubr.f32.mxu0 0.0
        %7626 = vmatmul.mubr.f32.gmra.mxu0 %v7511
        %v7627 = vpop.f32.mrf.mxu0
        %v7628 = vadd.f32 0.0, %v7627
        %v7629 = vpop.f32.mrf.mxu0
        %7630 = vmatprep.mubr.f32.mxu0 0.0
        %7631 = vmatmul.mubr.f32.gmra.mxu0 %v7514
        %v7632 = vpop.f32.mrf.mxu0
        %v7633 = vadd.f32 0.0, %v7632
        %v7634 = vpop.f32.mrf.mxu0
        %7635 = vmatprep.mubr.f32.mxu0 0.0
        %7636 = vmatmul.mubr.f32.gmra.mxu0 %v7517
        %v7637 = vpop.f32.mrf.mxu0
        %v7638 = vadd.f32 0.0, %v7637
        %v7639 = vpop.f32.mrf.mxu0
        %7640 = vmatprep.mubr.f32.mxu0 0.0
        %7641 = vmatmul.mubr.f32.gmra.mxu0 %v7520
        %v7642 = vpop.f32.mrf.mxu0
        %v7643 = vadd.f32 0.0, %v7642
        %v7644 = vpop.f32.mrf.mxu0
        %7645 = vmatprep.mubr.f32.mxu0 0.0
        %7646 = vmatmul.mubr.f32.gmra.mxu0 %v7523
        %v7647 = vpop.f32.mrf.mxu0
        %v7648 = vadd.f32 0.0, %v7647
        %v7649 = vpop.f32.mrf.mxu0
        %7650 = vmatprep.mubr.f32.mxu0 0.0
        %7651 = vmatmul.mubr.f32.gmra.mxu0 %v7526
        %v7652 = vpop.f32.mrf.mxu0
        %v7653 = vadd.f32 0.0, %v7652
        %v7654 = vpop.f32.mrf.mxu0
        %7655 = vmatprep.mubr.f32.mxu0 0.0
        %7656 = vmatmul.mubr.f32.gmra.mxu0 %v7529
        %v7657 = vpop.f32.mrf.mxu0
        %v7658 = vadd.f32 0.0, %v7657
        %v7659 = vpop.f32.mrf.mxu0
        %7660 = vmatprep.mubr.f32.mxu0 0.0
        %7661 = vmatmul.mubr.f32.gmra.mxu0 %v7532
        %v7662 = vpop.f32.mrf.mxu0
        %v7663 = vadd.f32 0.0, %v7662
        %v7664 = vpop.f32.mrf.mxu0
        %7665 = vmatprep.mubr.f32.mxu0 0.0
        %7666 = vmatmul.mubr.f32.gmra.mxu0 %v7535
        %v7667 = vpop.f32.mrf.mxu0
        %v7668 = vadd.f32 0.0, %v7667
        %v7669 = vpop.f32.mrf.mxu0
        %7670 = vmatprep.mubr.f32.mxu0 0.0
        %7671 = vmatmul.mubr.f32.gmra.mxu0 %v7538
        %v7672 = vpop.f32.mrf.mxu0
        %v7673 = vadd.f32 0.0, %v7672
        %v7674 = vpop.f32.mrf.mxu0
        %7675 = vmatprep.mubr.f32.mxu0 0.0
        %7676 = vmatmul.mubr.f32.gmra.mxu0 %v7541
        %v7677 = vpop.f32.mrf.mxu0
        %v7678 = vadd.f32 0.0, %v7677
        %v7679 = vpop.f32.mrf.mxu0
        %7680 = vmatprep.mubr.f32.mxu0 0.0
        %7681 = vmatmul.mubr.f32.gmra.mxu0 %v7544
        %v7682 = vpop.f32.mrf.mxu0
        %v7683 = vadd.f32 0.0, %v7682
        %v7684 = vpop.f32.mrf.mxu0
        %7685 = vdwg.mxu0
        %v7686 = vadd.f32 %v7440, %v7613
        %v7687 = vadd.f32 %v7441, %v7618
        %v7688 = vadd.f32 %v7442, %v7623
        %v7689 = vadd.f32 %v7443, %v7628
        %v7690 = vadd.f32 %v7444, %v7633
        %v7691 = vadd.f32 %v7445, %v7638
        %v7692 = vadd.f32 %v7446, %v7643
        %v7693 = vadd.f32 %v7447, %v7648
        %v7694 = vadd.f32 %v7448, %v7653
        %v7695 = vadd.f32 %v7449, %v7658
        %v7696 = vadd.f32 %v7450, %v7663
        %v7697 = vadd.f32 %v7451, %v7668
        %v7698 = vadd.f32 %v7452, %v7673
        %v7699 = vadd.f32 %v7453, %v7678
        %v7700 = vadd.f32 %v7454, %v7683
        %s7701 = scalar_lea.vmem %s5, 480
        %v7702 = vld [vmem:[%s7701] sm:$0xff]
        %v7703 = vld [vmem:[%s7701 + $0x8] sm:$0xff]
        %v7704 = vld [vmem:[%s7701 + $0x10] sm:$0xff]
        %v7705 = vld [vmem:[%s7701 + $0x18] sm:$0xff]
        %v7706 = vld [vmem:[%s7701 + $0x20] sm:$0xff]
        %v7707 = vld [vmem:[%s7701 + $0x28] sm:$0xff]
        %v7708 = vld [vmem:[%s7701 + $0x30] sm:$0xff]
        %v7709 = vld [vmem:[%s7701 + $0x38] sm:$0xff]
        %v7710 = vld [vmem:[%s7701 + $0x40] sm:$0xff]
        %v7711 = vld [vmem:[%s7701 + $0x48] sm:$0xff]
        %v7712 = vld [vmem:[%s7701 + $0x50] sm:$0xff]
        %v7713 = vld [vmem:[%s7701 + $0x58] sm:$0xff]
        %v7714 = vld [vmem:[%s7701 + $0x60] sm:$0xff]
        %v7715 = vld [vmem:[%s7701 + $0x68] sm:$0xff]
        %v7716 = vld [vmem:[%s7701 + $0x70] sm:$0xff]
        %7717 = vrot.lane.b32.xlu0 %v6712, 124
        %v7718 = vpop.permute.xlu0 %7717
        %7719 = vrot.lane.b32.xlu0 %v6713, 124
        %v7720 = vpop.permute.xlu0 %7719
        %7721 = vrot.lane.b32.xlu0 %v6714, 124
        %v7722 = vpop.permute.xlu0 %7721
        %7723 = vrot.lane.b32.xlu0 %v6715, 124
        %v7724 = vpop.permute.xlu0 %7723
        %7725 = vrot.lane.b32.xlu0 %v6716, 124
        %v7726 = vpop.permute.xlu0 %7725
        %7727 = vrot.lane.b32.xlu0 %v6717, 124
        %v7728 = vpop.permute.xlu0 %7727
        %7729 = vrot.lane.b32.xlu0 %v6718, 124
        %v7730 = vpop.permute.xlu0 %7729
        %7731 = vrot.lane.b32.xlu0 %v6719, 124
        %v7732 = vpop.permute.xlu0 %7731
        %7733 = vrot.lane.b32.xlu0 %v6720, 124
        %v7734 = vpop.permute.xlu0 %7733
        %7735 = vrot.lane.b32.xlu0 %v6721, 124
        %v7736 = vpop.permute.xlu0 %7735
        %v7748 = vsel %vm6752, %v7702, 0
        %v7751 = vsel %vm6752, %v7703, 0
        %v7754 = vsel %vm6752, %v7704, 0
        %v7757 = vsel %vm6752, %v7705, 0
        %v7760 = vsel %vm6752, %v7706, 0
        %v7763 = vsel %vm6752, %v7707, 0
        %v7766 = vsel %vm6752, %v7708, 0
        %v7769 = vsel %vm6752, %v7709, 0
        %v7772 = vsel %vm6752, %v7710, 0
        %v7775 = vsel %vm6752, %v7711, 0
        %v7778 = vsel %vm6752, %v7712, 0
        %v7781 = vsel %vm6752, %v7713, 0
        %v7784 = vsel %vm6752, %v7714, 0
        %v7787 = vsel %vm6752, %v7715, 0
        %v7790 = vsel %vm6752, %v7716, 0
        %7792 = vmatprep.subr.mxu0 0.0
        %7793 = vmatpush1.msra.mxu0 0.0
        %7794 = vmatprep.subr.mxu0 0.0
        %7795 = vmatpush1.msra.mxu0 0.0
        %7796 = vmatprep.subr.mxu0 0.0
        %7797 = vmatpush1.msra.mxu0 0.0
        %7798 = vmatprep.subr.mxu0 0.0
        %7799 = vmatpush1.msra.mxu0 0.0
        %7800 = vmatprep.subr.mxu0 0.0
        %7801 = vmatpush1.msra.mxu0 0.0
        %7802 = vmatprep.subr.mxu0 0.0
        %7803 = vmatpush1.msra.mxu0 0.0
        %7804 = vmatprep.subr.mxu0 0.0
        %7805 = vmatpush1.msra.mxu0 %v7736
        %7806 = vmatprep.subr.mxu0 0.0
        %7807 = vmatpush1.msra.mxu0 %v7734
        %7808 = vmatprep.subr.mxu0 0.0
        %7809 = vmatpush1.msra.mxu0 %v7732
        %7810 = vmatprep.subr.mxu0 0.0
        %7811 = vmatpush1.msra.mxu0 %v7730
        %7812 = vmatprep.subr.mxu0 0.0
        %7813 = vmatpush1.msra.mxu0 %v7728
        %7814 = vmatprep.subr.mxu0 0.0
        %7815 = vmatpush1.msra.mxu0 %v7726
        %7816 = vmatprep.subr.mxu0 0.0
        %7817 = vmatpush1.msra.mxu0 %v7724
        %7818 = vmatprep.subr.mxu0 0.0
        %7819 = vmatpush1.msra.mxu0 %v7722
        %7820 = vmatprep.subr.mxu0 0.0
        %7821 = vmatpush1.msra.mxu0 %v7720
        %7822 = vmatprep.subr.mxu0 0.0
        %7823 = vmatpush1.msra.mxu0 %v7718
        %7824 = vmatprep.subr.mxu0 0.0
        %7825 = vmatpush2.msra.mxu0 0.0
        %7826 = vmatprep.subr.mxu0 0.0
        %7827 = vmatpush2.msra.mxu0 0.0
        %7828 = vmatprep.subr.mxu0 0.0
        %7829 = vmatpush2.msra.mxu0 0.0
        %7830 = vmatprep.subr.mxu0 0.0
        %7831 = vmatpush2.msra.mxu0 0.0
        %7832 = vmatprep.subr.mxu0 0.0
        %7833 = vmatpush2.msra.mxu0 0.0
        %7834 = vmatprep.subr.mxu0 0.0
        %7835 = vmatpush2.msra.mxu0 0.0
        %7836 = vmatprep.subr.mxu0 0.0
        %7837 = vmatpush2.msra.mxu0 0.0
        %7838 = vmatprep.subr.mxu0 0.0
        %7839 = vmatpush2.msra.mxu0 0.0
        %7840 = vmatprep.subr.mxu0 0.0
        %7841 = vmatpush2.msra.mxu0 0.0
        %7842 = vmatprep.subr.mxu0 0.0
        %7843 = vmatpush2.msra.mxu0 0.0
        %7844 = vmatprep.subr.mxu0 0.0
        %7845 = vmatpush2.msra.mxu0 0.0
        %7846 = vmatprep.subr.mxu0 0.0
        %7847 = vmatpush2.msra.mxu0 0.0
        %7848 = vmatprep.subr.mxu0 0.0
        %7849 = vmatpush2.msra.mxu0 0.0
        %7850 = vmatprep.subr.mxu0 0.0
        %7851 = vmatpush2.msra.mxu0 0.0
        %7852 = vmatprep.subr.mxu0 0.0
        %7853 = vmatpush2.msra.mxu0 0.0
        %7854 = vmatprep.subr.mxu0 0.0
        %7855 = vmatpush2.msra.mxu0 0.0
        %7856 = vmatprep.mubr.f32.mxu0 0.0
        %7857 = vmatmul.mubr.f32.gmra.mxu0 %v7748
        %v7858 = vpop.f32.mrf.mxu0
        %v7859 = vadd.f32 0.0, %v7858
        %v7860 = vpop.f32.mrf.mxu0
        %7861 = vmatprep.mubr.f32.mxu0 0.0
        %7862 = vmatmul.mubr.f32.gmra.mxu0 %v7751
        %v7863 = vpop.f32.mrf.mxu0
        %v7864 = vadd.f32 0.0, %v7863
        %v7865 = vpop.f32.mrf.mxu0
        %7866 = vmatprep.mubr.f32.mxu0 0.0
        %7867 = vmatmul.mubr.f32.gmra.mxu0 %v7754
        %v7868 = vpop.f32.mrf.mxu0
        %v7869 = vadd.f32 0.0, %v7868
        %v7870 = vpop.f32.mrf.mxu0
        %7871 = vmatprep.mubr.f32.mxu0 0.0
        %7872 = vmatmul.mubr.f32.gmra.mxu0 %v7757
        %v7873 = vpop.f32.mrf.mxu0
        %v7874 = vadd.f32 0.0, %v7873
        %v7875 = vpop.f32.mrf.mxu0
        %7876 = vmatprep.mubr.f32.mxu0 0.0
        %7877 = vmatmul.mubr.f32.gmra.mxu0 %v7760
        %v7878 = vpop.f32.mrf.mxu0
        %v7879 = vadd.f32 0.0, %v7878
        %v7880 = vpop.f32.mrf.mxu0
        %7881 = vmatprep.mubr.f32.mxu0 0.0
        %7882 = vmatmul.mubr.f32.gmra.mxu0 %v7763
        %v7883 = vpop.f32.mrf.mxu0
        %v7884 = vadd.f32 0.0, %v7883
        %v7885 = vpop.f32.mrf.mxu0
        %7886 = vmatprep.mubr.f32.mxu0 0.0
        %7887 = vmatmul.mubr.f32.gmra.mxu0 %v7766
        %v7888 = vpop.f32.mrf.mxu0
        %v7889 = vadd.f32 0.0, %v7888
        %v7890 = vpop.f32.mrf.mxu0
        %7891 = vmatprep.mubr.f32.mxu0 0.0
        %7892 = vmatmul.mubr.f32.gmra.mxu0 %v7769
        %v7893 = vpop.f32.mrf.mxu0
        %v7894 = vadd.f32 0.0, %v7893
        %v7895 = vpop.f32.mrf.mxu0
        %7896 = vmatprep.mubr.f32.mxu0 0.0
        %7897 = vmatmul.mubr.f32.gmra.mxu0 %v7772
        %v7898 = vpop.f32.mrf.mxu0
        %v7899 = vadd.f32 0.0, %v7898
        %v7900 = vpop.f32.mrf.mxu0
        %7901 = vmatprep.mubr.f32.mxu0 0.0
        %7902 = vmatmul.mubr.f32.gmra.mxu0 %v7775
        %v7903 = vpop.f32.mrf.mxu0
        %v7904 = vadd.f32 0.0, %v7903
        %v7905 = vpop.f32.mrf.mxu0
        %7906 = vmatprep.mubr.f32.mxu0 0.0
        %7907 = vmatmul.mubr.f32.gmra.mxu0 %v7778
        %v7908 = vpop.f32.mrf.mxu0
        %v7909 = vadd.f32 0.0, %v7908
        %v7910 = vpop.f32.mrf.mxu0
        %7911 = vmatprep.mubr.f32.mxu0 0.0
        %7912 = vmatmul.mubr.f32.gmra.mxu0 %v7781
        %v7913 = vpop.f32.mrf.mxu0
        %v7914 = vadd.f32 0.0, %v7913
        %v7915 = vpop.f32.mrf.mxu0
        %7916 = vmatprep.mubr.f32.mxu0 0.0
        %7917 = vmatmul.mubr.f32.gmra.mxu0 %v7784
        %v7918 = vpop.f32.mrf.mxu0
        %v7919 = vadd.f32 0.0, %v7918
        %v7920 = vpop.f32.mrf.mxu0
        %7921 = vmatprep.mubr.f32.mxu0 0.0
        %7922 = vmatmul.mubr.f32.gmra.mxu0 %v7787
        %v7923 = vpop.f32.mrf.mxu0
        %v7924 = vadd.f32 0.0, %v7923
        %v7925 = vpop.f32.mrf.mxu0
        %7926 = vmatprep.mubr.f32.mxu0 0.0
        %7927 = vmatmul.mubr.f32.gmra.mxu0 %v7790
        %v7928 = vpop.f32.mrf.mxu0
        %v7929 = vadd.f32 0.0, %v7928
        %v7930 = vpop.f32.mrf.mxu0
        %7931 = vdwg.mxu0
        %v7932 = vadd.f32 %v7686, %v7859
        %v7933 = vadd.f32 %v7687, %v7864
        %v7934 = vadd.f32 %v7688, %v7869
        %v7935 = vadd.f32 %v7689, %v7874
        %v7936 = vadd.f32 %v7690, %v7879
        %v7937 = vadd.f32 %v7691, %v7884
        %v7938 = vadd.f32 %v7692, %v7889
        %v7939 = vadd.f32 %v7693, %v7894
        %v7940 = vadd.f32 %v7694, %v7899
        %v7941 = vadd.f32 %v7695, %v7904
        %v7942 = vadd.f32 %v7696, %v7909
        %v7943 = vadd.f32 %v7697, %v7914
        %v7944 = vadd.f32 %v7698, %v7919
        %v7945 = vadd.f32 %v7699, %v7924
        %v7946 = vadd.f32 %v7700, %v7929
        %v7947 = vmax.f32 %v7932, 0.0
        %v7948 = vmax.f32 %v7933, 0.0
        %v7949 = vmax.f32 %v7934, 0.0
        %v7950 = vmax.f32 %v7935, 0.0
        %v7951 = vmax.f32 %v7936, 0.0
        %v7952 = vmax.f32 %v7937, 0.0
        %v7953 = vmax.f32 %v7938, 0.0
        %v7954 = vmax.f32 %v7939, 0.0
        %v7955 = vmax.f32 %v7940, 0.0
        %v7956 = vmax.f32 %v7941, 0.0
        %v7957 = vmax.f32 %v7942, 0.0
        %v7958 = vmax.f32 %v7943, 0.0
        %v7959 = vmax.f32 %v7944, 0.0
        %v7960 = vmax.f32 %v7945, 0.0
        %v7961 = vmax.f32 %v7946, 0.0
        %v7962 = vld [vmem:[#allocation8] sm:$0xff]
        %v7963 = vld [vmem:[#allocation8 + $0x8] sm:$0xff]
        %v7964 = vld [vmem:[#allocation8 + $0x10] sm:$0xff]
        %v7965 = vld [vmem:[#allocation8 + $0x18] sm:$0xff]
        %v7966 = vld [vmem:[#allocation8 + $0x20] sm:$0xff]
        %v7967 = vld [vmem:[#allocation8 + $0x28] sm:$0xff]
        %v7968 = vld [vmem:[#allocation8 + $0x30] sm:$0xff]
        %v7969 = vld [vmem:[#allocation8 + $0x38] sm:$0xff]
        %v7970 = vld [vmem:[#allocation8 + $0x40] sm:$0xff]
        %v7971 = vld [vmem:[#allocation8 + $0x48] sm:$0xff]
        %v7972 = vld [vmem:[#allocation8 + $0x50] sm:$0xf]
        %v7973 = vld [vmem:[%s8] sm:$0xff]
        %v7974 = vld [vmem:[%s8 + $0x8] sm:$0xff]
        %v7975 = vld [vmem:[%s8 + $0x10] sm:$0xff]
        %v7976 = vld [vmem:[%s8 + $0x18] sm:$0xff]
        %v7977 = vld [vmem:[%s8 + $0x20] sm:$0xff]
        %v7978 = vld [vmem:[%s8 + $0x28] sm:$0xff]
        %v7979 = vld [vmem:[%s8 + $0x30] sm:$0xff]
        %v7980 = vld [vmem:[%s8 + $0x38] sm:$0xff]
        %v7981 = vld [vmem:[%s8 + $0x40] sm:$0xff]
        %v7982 = vld [vmem:[%s8 + $0x48] sm:$0xff]
        %v7983 = vld [vmem:[%s8 + $0x50] sm:$0xf]
        %vm7984 = vcmask 982016
        %v7986 = vsel %vm7984, %v7962, 0
        %v7989 = vsel %vm7984, %v7963, 0
        %v7992 = vsel %vm7984, %v7964, 0
        %v7995 = vsel %vm7984, %v7965, 0
        %v7998 = vsel %vm7984, %v7966, 0
        %v8001 = vsel %vm7984, %v7967, 0
        %v8004 = vsel %vm7984, %v7968, 0
        %v8007 = vsel %vm7984, %v7969, 0
        %v8010 = vsel %vm7984, %v7970, 0
        %v8013 = vsel %vm7984, %v7971, 0
        %v8016 = vsel %vm7984, %v7972, 0
        %8018 = vmatprep.subr.mxu0 0.0
        %8019 = vmatpush1.msra.mxu0 0.0
        %8020 = vmatprep.subr.mxu0 0.0
        %8021 = vmatpush1.msra.mxu0 %v7961
        %8022 = vmatprep.subr.mxu0 0.0
        %8023 = vmatpush1.msra.mxu0 %v7960
        %8024 = vmatprep.subr.mxu0 0.0
        %8025 = vmatpush1.msra.mxu0 %v7959
        %8026 = vmatprep.subr.mxu0 0.0
        %8027 = vmatpush1.msra.mxu0 %v7958
        %8028 = vmatprep.subr.mxu0 0.0
        %8029 = vmatpush1.msra.mxu0 %v7957
        %8030 = vmatprep.subr.mxu0 0.0
        %8031 = vmatpush1.msra.mxu0 %v7956
        %8032 = vmatprep.subr.mxu0 0.0
        %8033 = vmatpush1.msra.mxu0 %v7955
        %8034 = vmatprep.subr.mxu0 0.0
        %8035 = vmatpush1.msra.mxu0 %v7954
        %8036 = vmatprep.subr.mxu0 0.0
        %8037 = vmatpush1.msra.mxu0 %v7953
        %8038 = vmatprep.subr.mxu0 0.0
        %8039 = vmatpush1.msra.mxu0 %v7952
        %8040 = vmatprep.subr.mxu0 0.0
        %8041 = vmatpush1.msra.mxu0 %v7951
        %8042 = vmatprep.subr.mxu0 0.0
        %8043 = vmatpush1.msra.mxu0 %v7950
        %8044 = vmatprep.subr.mxu0 0.0
        %8045 = vmatpush1.msra.mxu0 %v7949
        %8046 = vmatprep.subr.mxu0 0.0
        %8047 = vmatpush1.msra.mxu0 %v7948
        %8048 = vmatprep.subr.mxu0 0.0
        %8049 = vmatpush1.msra.mxu0 %v7947
        %8050 = vmatprep.subr.mxu0 0.0
        %8051 = vmatpush2.msra.mxu0 0.0
        %8052 = vmatprep.subr.mxu0 0.0
        %8053 = vmatpush2.msra.mxu0 0.0
        %8054 = vmatprep.subr.mxu0 0.0
        %8055 = vmatpush2.msra.mxu0 0.0
        %8056 = vmatprep.subr.mxu0 0.0
        %8057 = vmatpush2.msra.mxu0 0.0
        %8058 = vmatprep.subr.mxu0 0.0
        %8059 = vmatpush2.msra.mxu0 0.0
        %8060 = vmatprep.subr.mxu0 0.0
        %8061 = vmatpush2.msra.mxu0 0.0
        %8062 = vmatprep.subr.mxu0 0.0
        %8063 = vmatpush2.msra.mxu0 0.0
        %8064 = vmatprep.subr.mxu0 0.0
        %8065 = vmatpush2.msra.mxu0 0.0
        %8066 = vmatprep.subr.mxu0 0.0
        %8067 = vmatpush2.msra.mxu0 0.0
        %8068 = vmatprep.subr.mxu0 0.0
        %8069 = vmatpush2.msra.mxu0 0.0
        %8070 = vmatprep.subr.mxu0 0.0
        %8071 = vmatpush2.msra.mxu0 0.0
        %8072 = vmatprep.subr.mxu0 0.0
        %8073 = vmatpush2.msra.mxu0 0.0
        %8074 = vmatprep.subr.mxu0 0.0
        %8075 = vmatpush2.msra.mxu0 0.0
        %8076 = vmatprep.subr.mxu0 0.0
        %8077 = vmatpush2.msra.mxu0 0.0
        %8078 = vmatprep.subr.mxu0 0.0
        %8079 = vmatpush2.msra.mxu0 0.0
        %8080 = vmatprep.subr.mxu0 0.0
        %8081 = vmatpush2.msra.mxu0 0.0
        %8082 = vmatprep.mubr.f32.mxu0 0.0
        %8083 = vmatmul.mubr.f32.gmra.mxu0 %v7986
        %v8084 = vpop.f32.mrf.mxu0
        %v8085 = vadd.f32 %v7973, %v8084
        %v8086 = vpop.f32.mrf.mxu0
        %8087 = vmatprep.mubr.f32.mxu0 0.0
        %8088 = vmatmul.mubr.f32.gmra.mxu0 %v7989
        %v8089 = vpop.f32.mrf.mxu0
        %v8090 = vadd.f32 %v7974, %v8089
        %v8091 = vpop.f32.mrf.mxu0
        %8092 = vmatprep.mubr.f32.mxu0 0.0
        %8093 = vmatmul.mubr.f32.gmra.mxu0 %v7992
        %v8094 = vpop.f32.mrf.mxu0
        %v8095 = vadd.f32 %v7975, %v8094
        %v8096 = vpop.f32.mrf.mxu0
        %8097 = vmatprep.mubr.f32.mxu0 0.0
        %8098 = vmatmul.mubr.f32.gmra.mxu0 %v7995
        %v8099 = vpop.f32.mrf.mxu0
        %v8100 = vadd.f32 %v7976, %v8099
        %v8101 = vpop.f32.mrf.mxu0
        %8102 = vmatprep.mubr.f32.mxu0 0.0
        %8103 = vmatmul.mubr.f32.gmra.mxu0 %v7998
        %v8104 = vpop.f32.mrf.mxu0
        %v8105 = vadd.f32 %v7977, %v8104
        %v8106 = vpop.f32.mrf.mxu0
        %8107 = vmatprep.mubr.f32.mxu0 0.0
        %8108 = vmatmul.mubr.f32.gmra.mxu0 %v8001
        %v8109 = vpop.f32.mrf.mxu0
        %v8110 = vadd.f32 %v7978, %v8109
        %v8111 = vpop.f32.mrf.mxu0
        %8112 = vmatprep.mubr.f32.mxu0 0.0
        %8113 = vmatmul.mubr.f32.gmra.mxu0 %v8004
        %v8114 = vpop.f32.mrf.mxu0
        %v8115 = vadd.f32 %v7979, %v8114
        %v8116 = vpop.f32.mrf.mxu0
        %8117 = vmatprep.mubr.f32.mxu0 0.0
        %8118 = vmatmul.mubr.f32.gmra.mxu0 %v8007
        %v8119 = vpop.f32.mrf.mxu0
        %v8120 = vadd.f32 %v7980, %v8119
        %v8121 = vpop.f32.mrf.mxu0
        %8122 = vmatprep.mubr.f32.mxu0 0.0
        %8123 = vmatmul.mubr.f32.gmra.mxu0 %v8010
        %v8124 = vpop.f32.mrf.mxu0
        %v8125 = vadd.f32 %v7981, %v8124
        %v8126 = vpop.f32.mrf.mxu0
        %8127 = vmatprep.mubr.f32.mxu0 0.0
        %8128 = vmatmul.mubr.f32.gmra.mxu0 %v8013
        %v8129 = vpop.f32.mrf.mxu0
        %v8130 = vadd.f32 %v7982, %v8129
        %v8131 = vpop.f32.mrf.mxu0
        %8132 = vmatprep.mubr.f32.mxu0 0.0
        %8133 = vmatmul.mubr.f32.gmra.mxu0 %v8016
        %v8134 = vpop.f32.mrf.mxu0
        %v8135 = vadd.f32 %v7983, %v8134
        %v8136 = vpop.f32.mrf.mxu0
        %8137 = vdwg.mxu0
        %v8138 = vmax.f32 %v8085, 0.0
        %v8139 = vmax.f32 %v8090, 0.0
        %v8140 = vmax.f32 %v8095, 0.0
        %v8141 = vmax.f32 %v8100, 0.0
        %v8142 = vmax.f32 %v8105, 0.0
        %v8143 = vmax.f32 %v8110, 0.0
        %v8144 = vmax.f32 %v8115, 0.0
        %v8145 = vmax.f32 %v8120, 0.0
        %v8146 = vmax.f32 %v8125, 0.0
        %v8147 = vmax.f32 %v8130, 0.0
        %v8148 = vmax.f32 %v8135, 0.0
        %v8149 = vld [vmem:[#allocation9] sm:$0xff]
        %v8150 = vld [vmem:[#allocation9 + $0x8] sm:$0x3]
        %v8151 = vld [vmem:[%s10] sm:$0xff]
        %v8152 = vld [vmem:[%s10 + $0x8] sm:$0x3]
        %vm8153 = vcmask 687104
        %v8155 = vsel %vm8153, %v8149, 0
        %v8158 = vsel %vm8153, %v8150, 0
        %v8161 = vsel %vm1916, %v8148, 0
        %8163 = vmatprep.subr.mxu0 0.0
        %8164 = vmatpush1.msra.mxu0 0.0
        %8165 = vmatprep.subr.mxu0 0.0
        %8166 = vmatpush1.msra.mxu0 0.0
        %8167 = vmatprep.subr.mxu0 0.0
        %8168 = vmatpush1.msra.mxu0 0.0
        %8169 = vmatprep.subr.mxu0 0.0
        %8170 = vmatpush1.msra.mxu0 0.0
        %8171 = vmatprep.subr.mxu0 0.0
        %8172 = vmatpush1.msra.mxu0 0.0
        %8173 = vmatprep.subr.mxu0 0.0
        %8174 = vmatpush1.msra.mxu0 %v8161
        %8175 = vmatprep.subr.mxu0 0.0
        %8176 = vmatpush1.msra.mxu0 %v8147
        %8177 = vmatprep.subr.mxu0 0.0
        %8178 = vmatpush1.msra.mxu0 %v8146
        %8179 = vmatprep.subr.mxu0 0.0
        %8180 = vmatpush1.msra.mxu0 %v8145
        %8181 = vmatprep.subr.mxu0 0.0
        %8182 = vmatpush1.msra.mxu0 %v8144
        %8183 = vmatprep.subr.mxu0 0.0
        %8184 = vmatpush1.msra.mxu0 %v8143
        %8185 = vmatprep.subr.mxu0 0.0
        %8186 = vmatpush1.msra.mxu0 %v8142
        %8187 = vmatprep.subr.mxu0 0.0
        %8188 = vmatpush1.msra.mxu0 %v8141
        %8189 = vmatprep.subr.mxu0 0.0
        %8190 = vmatpush1.msra.mxu0 %v8140
        %8191 = vmatprep.subr.mxu0 0.0
        %8192 = vmatpush1.msra.mxu0 %v8139
        %8193 = vmatprep.subr.mxu0 0.0
        %8194 = vmatpush1.msra.mxu0 %v8138
        %8195 = vmatprep.subr.mxu0 0.0
        %8196 = vmatpush2.msra.mxu0 0.0
        %8197 = vmatprep.subr.mxu0 0.0
        %8198 = vmatpush2.msra.mxu0 0.0
        %8199 = vmatprep.subr.mxu0 0.0
        %8200 = vmatpush2.msra.mxu0 0.0
        %8201 = vmatprep.subr.mxu0 0.0
        %8202 = vmatpush2.msra.mxu0 0.0
        %8203 = vmatprep.subr.mxu0 0.0
        %8204 = vmatpush2.msra.mxu0 0.0
        %8205 = vmatprep.subr.mxu0 0.0
        %8206 = vmatpush2.msra.mxu0 0.0
        %8207 = vmatprep.subr.mxu0 0.0
        %8208 = vmatpush2.msra.mxu0 0.0
        %8209 = vmatprep.subr.mxu0 0.0
        %8210 = vmatpush2.msra.mxu0 0.0
        %8211 = vmatprep.subr.mxu0 0.0
        %8212 = vmatpush2.msra.mxu0 0.0
        %8213 = vmatprep.subr.mxu0 0.0
        %8214 = vmatpush2.msra.mxu0 0.0
        %8215 = vmatprep.subr.mxu0 0.0
        %8216 = vmatpush2.msra.mxu0 0.0
        %8217 = vmatprep.subr.mxu0 0.0
        %8218 = vmatpush2.msra.mxu0 0.0
        %8219 = vmatprep.subr.mxu0 0.0
        %8220 = vmatpush2.msra.mxu0 0.0
        %8221 = vmatprep.subr.mxu0 0.0
        %8222 = vmatpush2.msra.mxu0 0.0
        %8223 = vmatprep.subr.mxu0 0.0
        %8224 = vmatpush2.msra.mxu0 0.0
        %8225 = vmatprep.subr.mxu0 0.0
        %8226 = vmatpush2.msra.mxu0 0.0
        %8227 = vmatprep.mubr.f32.mxu0 0.0
        %8228 = vmatmul.mubr.f32.gmra.mxu0 %v8155
        %v8229 = vpop.f32.mrf.mxu0
        %v8230 = vadd.f32 %v8151, %v8229
        %v8231 = vpop.f32.mrf.mxu0
        %8232 = vmatprep.mubr.f32.mxu0 0.0
        %8233 = vmatmul.mubr.f32.gmra.mxu0 %v8158
        %v8234 = vpop.f32.mrf.mxu0
        %v8235 = vadd.f32 %v8152, %v8234
        %v8236 = vpop.f32.mrf.mxu0
        %8237 = vdwg.mxu0
        %vm8238 = vcmask 7168
        %v8239 = vsel %vm8238, %v8230, -inf
        %vm8240 = vcmask 1024
        %v8241 = vsel %vm8240, %v8235, -inf
        %v8242 = vmax.f32 %v8239, %v8241
        %v8243 = vrot.slane %v8242, 4
        %v8244 = vmax.f32 %v8242, %v8243
        %v8245 = vrot.slane %v8244, 2
        %v8246 = vmax.f32 %v8244, %v8245
        %v8247 = vrot.slane %v8246, 1
        %v8248 = vmax.f32 %v8246, %v8247
        %v8249 = vsub.f32 %v8230, %v8248
        %v8250 = vsub.f32 %v8235, %v8248
        %v8251 = vmul.f32 %v8249, 1.442695
        %v8252 = vpow.pop %v8251
        %v8253 = vmul.f32 %v8250, 1.442695
        %v8254 = vpow.pop %v8253
        %v8255 = vsel %vm8238, %v8252, 0.0
        %v8256 = vsel %vm8240, %v8254, 0.0
        %v8257 = vadd.f32 %v8255, %v8256
        %v8258 = vrot.slane %v8257, 4
        %v8259 = vadd.f32 %v8257, %v8258
        %v8260 = vrot.slane %v8259, 2
        %v8261 = vadd.f32 %v8259, %v8260
        %v8262 = vrot.slane %v8261, 1
        %v8263 = vadd.f32 %v8261, %v8262
        %v8264 = vlog2.pop %v8263
        %v8265 = vmul.f32 %v8264, 0.6931472
        %v8266 = vadd.f32 %v8265, %v8248
        %v8267 = vsub.f32 %v8230, %v8266
        %v8268 = vsub.f32 %v8235, %v8266
        %8269 = vst.msk [vmem:[%s445] sm:$0xff] %vm8238, %v8267
        %8270 = vst.msk [vmem:[%s445 + $0x8] sm:$0x3] %vm8240, %v8268
        %p8271 = scmp.lt.s32.totalorder %s25, 1
        %s8272 = scalar_select %p8271, %s25, 1
        %s8273 = smul.addr %s8272, 2
        %s8274 = smul.addr %s8273, 8
        %s8275 = scalar_lea.vmem %s11, %s8274
        // Predicated region
        $region81: #{net_forward.1} parent=63 // pred_check
          %p8276 = pneg %p279
        $region82: #{net_forward.1} parent=63 // pred_check_branch
          %8278 = sbr.rel (%p8276) target = $region84
        $region83: #{net_forward.1} parent=63 // pred_region
          _
        $region84: #{net_forward.1} parent=63 // pred_fallthru
          _
      $region64: #{net_forward.1} parent=5 // pred_fallthru
        _
      %p8279 = scmp.le.s32.totalorder 2, %s20
      // Predicated region
      $region85: #{net_forward.1} parent=5 // pred_check
        %p8280 = pneg %p8279
      $region86: #{net_forward.1} parent=5 // pred_check_branch
        %8282 = sbr.rel (%p8280) target = $region88
      $region87: #{net_forward.1} parent=5 // pred_region
        %s8283 = ssub.s32 %s20, 2
        // Predicated region
        $region89: #{net_forward.1} parent=87 // pred_check
          %p8284 = pneg %p285
        $region90: #{net_forward.1} parent=87 // pred_check_branch
          %8286 = sbr.rel (%p8284) target = $region92
        $region91: #{net_forward.1} parent=87 // pred_region
          %p8287 = scmp.lt.s32.totalorder %s26, 1
          %s8288 = scalar_select %p8287, %s26, 1
          %s8289 = smul.addr %s8288, 2
          %s8290 = smul.addr %s8289, 8
          %s8291 = scalar_lea.vmem %s11, %s8290
        $region92: #{net_forward.1} parent=87 // pred_fallthru
          _
      $region88: #{net_forward.1} parent=5 // pred_fallthru
        _
    $region6: #{net_forward.1} parent=1 // loop_footer
      %s24 = sadd.s32 1, %s20
    $region7: #{net_forward.1} parent=1 // loop_footer_branch
      %19 = sbr.rel target = $region3
    $region8: #{net_forward.1} parent=1 // loop_exit
      _
    %8292 = vsyncpa [#allocation5], 1
    %s8293 = scalar_lea.sflag [#allocation5], 1
    %8294 = vsyncpa %s8293, 1
    %8295 = vsyncpa [#allocation7], 1
    %8296 = vsyncpa [#allocation10], 1

</llo_original>
